<compile_context>
chip_gen: v6e
topology: v6e:2x2x1
jax: 0.10.0
libtpu: 0.0.40
codegen_flags: <defaults>
</compile_context>

<pallas_src>
import jax
import jax.numpy as jnp
from jax.experimental import pallas as pl
from jax.experimental.pallas import tpu as pltpu

# ----------------------------- model configuration ---------------------------
B = 2                      # batch
CIN = 3                    # input channels (RGB)
HIN = WIN = 32             # input spatial size

C_STEM = 16                # stem conv output channels (3x3, stride 2)
C1 = 16                    # block 1: depthwise-separable, 16 -> 16, s1, residual
E2, C2 = 64, 24            # block 2: expand 64, 16 -> 24, s2
E3 = 72                    # block 3: expand 72, 24 -> 24, s1, residual
E4, C4, SE4 = 96, 40, 24   # block 4: expand 96, 24 -> 40, s2, squeeze-excite
E5, SE5 = 120, 32          # block 5: expand 120, 40 -> 40, s1, SE, residual
FEAT = 960                 # 1x1 head conv features (matches mobilenetv3_large_100)

R16, R8, R4 = 16, 8, 4     # spatial resolutions after stem / block2 / block4
N16 = R16 * R16            # 256 rows per image at 16x16
N8 = R8 * R8               # 64  rows per image at 8x8
N4 = R4 * R4               # 16  rows per image at 4x4
OUT_TILE = 8               # output rows written per image (full sublane group)

# BN-folded biases for every conv / FC, packed at 128-lane-aligned offsets.
_LAYER_WIDTHS = [
    ("stem", C_STEM), ("dw1", C1), ("pw1", C1),
    ("exp2", E2), ("dw2", E2), ("pw2", C2),
    ("exp3", E3), ("dw3", E3), ("pw3", C2),
    ("exp4", E4), ("dw4", E4), ("se4r", SE4), ("se4e", E4), ("pw4", C4),
    ("exp5", E5), ("dw5", E5), ("se5r", SE5), ("se5e", E5), ("pw5", C4),
    ("head", FEAT),
]
_BIAS_OFF = {}
_off = 0
for _n, _w in _LAYER_WIDTHS:
    _BIAS_OFF[_n] = (_off, _w)
    _off += ((_w + 127) // 128) * 128        # 128-lane-aligned slot per layer
BIAS_TOTAL = _off                            # 3456


# ----------------------------- in-kernel helpers ------------------------------
def _relu(x):
    return jnp.maximum(x, 0.0)


def _hswish(x):
    return x * jnp.clip(x + 3.0, 0.0, 6.0) * (1.0 / 6.0)


def _hsigmoid(x):
    return jnp.clip(x + 3.0, 0.0, 6.0) * (1.0 / 6.0)


def _dw3x3(x, w_ref, mask_ref, width):
    """3x3 depthwise conv, stride 1, pad 1, on flattened [H*W, C] rows (1 image).

    Each tap is a static sublane rotation (pltpu.roll) of the whole slab; the
    precomputed mask column kills rows whose rotated source is not the true
    spatial neighbour (image borders / array wrap-around).  All f32 (VPU).
    """
    n = x.shape[0]
    acc = x * w_ref[4:5, :]                       # centre tap, always in-bounds
    for t in range(9):
        if t == 4:
            continue
        dy, dx = t // 3 - 1, t % 3 - 1
        off = dy * width + dx                     # row offset of the neighbour
        shifted = pltpu.roll(x, (-off) % n, axis=0)   # shifted[r] = x[(r+off) % n]
        acc = acc + shifted * mask_ref[:, t:t + 1] * w_ref[t:t + 1, :]
    return acc


def _se_module(x, w_r_ref, b_r, w_e_ref, b_e):
    """Squeeze-and-excite on one image: sublane-reduce pool -> FC/ReLU ->
    FC/hard-sigmoid -> [1,C] gate broadcast back over the rows (no MXU pool
    or broadcast matmuls)."""
    f32, bf16 = jnp.float32, jnp.bfloat16
    inv_n = 1.0 / x.shape[0]
    pooled = jnp.sum(x, axis=0, keepdims=True) * inv_n                     # [1, C]
    g = _relu(jnp.dot(pooled.astype(bf16), w_r_ref[...],
                      preferred_element_type=f32) + b_r)                   # [1, SE]
    g = _hsigmoid(jnp.dot(g.astype(bf16), w_e_ref[...],
                          preferred_element_type=f32) + b_e)               # [1, C]
    return x * g                                                           # sublane bcast


# ------------------------------- fused kernel ---------------------------------
def _mobilenet_kernel(
    stem_ref,                                    # [N16, 9*CIN] im2col'd input (bf16)
    m16_ref, m8_ref, m4_ref,                     # dw-conv boundary masks [N, 9] (f32)
    s16to8_ref, s8to4_ref,                       # stride-2 row-selection matmuls (bf16)
    bias_ref,                                    # packed, lane-aligned biases [1, BIAS_TOTAL]
    w_stem_ref,
    w_dw1_ref, w_pw1_ref,
    w_exp2_ref, w_dw2_ref, w_pw2_ref,
    w_exp3_ref, w_dw3_ref, w_pw3_ref,
    w_exp4_ref, w_dw4_ref, w_se4r_ref, w_se4e_ref, w_pw4_ref,
    w_exp5_ref, w_dw5_ref, w_se5r_ref, w_se5e_ref, w_pw5_ref,
    w_head_ref,
    o_ref,                                       # [OUT_TILE, FEAT]
):
    f32, bf16 = jnp.float32, jnp.bfloat16

    def bias(name):
        off, width = _BIAS_OFF[name]             # off is a multiple of 128
        return bias_ref[:, off:off + width]

    def mm(a, w_ref):
        # bf16 MXU operands, f32 accumulation.
        return jnp.dot(a.astype(bf16), w_ref[...], preferred_element_type=f32)

    # ---- stem: 3x3 / stride-2 conv (im2col'd outside) + BN + hard-swish ----
    x16 = _hswish(jnp.dot(stem_ref[...], w_stem_ref[...],
                          preferred_element_type=f32) + bias("stem"))   # [256, 16]

    # ---- block 1: depthwise-separable, 16 -> 16, stride 1, residual ----
    y = _relu(_dw3x3(x16, w_dw1_ref, m16_ref, R16) + bias("dw1"))
    y = mm(y, w_pw1_ref) + bias("pw1")
    x16 = x16 + y

    # ---- block 2: inverted residual, 16 -> 64 -> 24, stride 2 (16x16 -> 8x8) ----
    # Option-A reorder: bias/ReLU/pointwise run at full resolution (they are
    # per-row, so they commute with the 0/1 row selection); the selection
    # matmul then runs on 24 channels instead of 64.
    y = _relu(mm(x16, w_exp2_ref) + bias("exp2"))                       # [256, 64]
    y = _dw3x3(y, w_dw2_ref, m16_ref, R16)
    y = _relu(y + bias("dw2"))
    y = mm(y, w_pw2_ref) + bias("pw2")                                  # [256, 24]
    x8 = jnp.dot(s16to8_ref[...], y.astype(bf16),
                 preferred_element_type=f32)                            # [64, 24]

    # ---- block 3: inverted residual, 24 -> 72 -> 24, stride 1, residual ----
    y = _relu(mm(x8, w_exp3_ref) + bias("exp3"))
    y = _relu(_dw3x3(y, w_dw3_ref, m8_ref, R8) + bias("dw3"))
    x8 = x8 + mm(y, w_pw3_ref) + bias("pw3")

    # ---- block 4: inverted residual + SE, 24 -> 96 -> 40, stride 2 (8x8 -> 4x4) ----
    y = _hswish(mm(x8, w_exp4_ref) + bias("exp4"))                      # [64, 96]
    y = _dw3x3(y, w_dw4_ref, m8_ref, R8)
    y = jnp.dot(s8to4_ref[...], y.astype(bf16),
                preferred_element_type=f32)                             # [16, 96]
    y = _hswish(y + bias("dw4"))
    y = _se_module(y, w_se4r_ref, bias("se4r"), w_se4e_ref, bias("se4e"))
    x4 = mm(y, w_pw4_ref) + bias("pw4")                                 # [16, 40]

    # ---- block 5: inverted residual + SE, 40 -> 120 -> 40, stride 1, residual ----
    y = _hswish(mm(x4, w_exp5_ref) + bias("exp5"))
    y = _hswish(_dw3x3(y, w_dw5_ref, m4_ref, R4) + bias("dw5"))
    y = _se_module(y, w_se5r_ref, bias("se5r"), w_se5e_ref, bias("se5e"))
    x4 = x4 + mm(y, w_pw5_ref) + bias("pw5")

    # ---- 1x1 head conv -> 960 features, hard-swish, global average pool ----
    feat = _hswish(mm(x4, w_head_ref) + bias("head"))                   # [16, 960]
    pooled = jnp.sum(feat, axis=0, keepdims=True) * (1.0 / N4)          # [1, 960]
    # Lane-dense, unmasked full-block store; valid row is replicated and the
    # wrapper strided-slices one row per image.
    o_ref[...] = jnp.broadcast_to(pooled, (OUT_TILE, FEAT))


# ------------------------- constants built once at init -----------------------
def _build_dw_masks(res):
    """[res*res, 9] validity mask per 3x3 tap (row-major over h, w), one image."""
    r = jnp.arange(res * res)
    h = r // res
    w = r % res
    cols = []
    for dy in (-1, 0, 1):
        for dx in (-1, 0, 1):
            ok = (h + dy >= 0) & (h + dy < res) & (w + dx >= 0) & (w + dx < res)
            cols.append(ok)
    return jnp.stack(cols, axis=1).astype(jnp.float32)


def _build_subsample(res):
    """Row-selection matrix implementing stride-2 spatial subsampling (1 image)."""
    half = res // 2
    n_out, n_in = half * half, res * res
    j = jnp.arange(n_out)
    ho = j // half
    wo = j % half
    src = (2 * ho) * res + (2 * wo)
    return (src[:, None] == jnp.arange(n_in)[None, :]).astype(jnp.float32)


def init_params(key):
    keys = jax.random.split(key, 21)
    ks = iter(keys[:20])
    bf16 = jnp.bfloat16

    def dense(k, fin, fout, dtype=bf16):
        w = jax.random.normal(k, (fin, fout), jnp.float32) * (2.0 / fin) ** 0.5
        return w.astype(dtype)

    p = {}
    p['w_stem'] = dense(next(ks), 9 * CIN, C_STEM)
    p['w_dw1'] = dense(next(ks), 9, C1, jnp.float32)     # depthwise taps: VPU, keep f32
    p['w_pw1'] = dense(next(ks), C1, C1)
    p['w_exp2'] = dense(next(ks), C1, E2)
    p['w_dw2'] = dense(next(ks), 9, E2, jnp.float32)
    p['w_pw2'] = dense(next(ks), E2, C2)
    p['w_exp3'] = dense(next(ks), C2, E3)
    p['w_dw3'] = dense(next(ks), 9, E3, jnp.float32)
    p['w_pw3'] = dense(next(ks), E3, C2)
    p['w_exp4'] = dense(next(ks), C2, E4)
    p['w_dw4'] = dense(next(ks), 9, E4, jnp.float32)
    p['w_se4r'] = dense(next(ks), E4, SE4)
    p['w_se4e'] = dense(next(ks), SE4, E4)
    p['w_pw4'] = dense(next(ks), E4, C4)
    p['w_exp5'] = dense(next(ks), C4, E5)
    p['w_dw5'] = dense(next(ks), 9, E5, jnp.float32)
    p['w_se5r'] = dense(next(ks), E5, SE5)
    p['w_se5e'] = dense(next(ks), SE5, E5)
    p['w_pw5'] = dense(next(ks), E5, C4)
    p['w_head'] = dense(next(ks), C4, FEAT)
    # BN-folded biases, one lane-aligned packed vector (f32, added on the VPU).
    p['bias_pack'] = jax.random.normal(keys[20], (1, BIAS_TOTAL), jnp.float32) * 0.02

    # Precomputed structural constants (per image; shared across the batch grid).
    p['mask16'] = _build_dw_masks(R16)
    p['mask8'] = _build_dw_masks(R8)
    p['mask4'] = _build_dw_masks(R4)
    p['sel16to8'] = _build_subsample(R16).astype(bf16)   # 0/1 exact in bf16
    p['sel8to4'] = _build_subsample(R8).astype(bf16)
    return p


# ------------------------------ forward pass ----------------------------------
def _stem_im2col(x):
    """One-time glue: NCHW image -> [B*16*16, 9*CIN] patches for the 3x3/s2 stem.

    TODO(synk): if real PyTorch Conv2d weights were loaded, they would need the
    matching (dy, dx, cin) -> row permutation of w_stem; also consider
    CompilerParams(allow_input_fusion=...) to fuse this producer into the call.
    """
    b = x.shape[0]
    xn = jnp.transpose(x, (0, 2, 3, 1))                       # NHWC
    xp = jnp.pad(xn, ((0, 0), (1, 1), (1, 1), (0, 0)))
    ho = wo = HIN // 2
    taps = []
    for dy in range(3):
        for dx in range(3):
            taps.append(xp[:, dy:dy + 2 * ho:2, dx:dx + 2 * wo:2, :])
    pat = jnp.concatenate(taps, axis=-1)                      # [B, 16, 16, 9*CIN]
    return pat.reshape(b * ho * wo, 9 * CIN)


_CONST_NAMES = [
    'mask16', 'mask8', 'mask4', 'sel16to8', 'sel8to4', 'bias_pack',
    'w_stem',
    'w_dw1', 'w_pw1',
    'w_exp2', 'w_dw2', 'w_pw2',
    'w_exp3', 'w_dw3', 'w_pw3',
    'w_exp4', 'w_dw4', 'w_se4r', 'w_se4e', 'w_pw4',
    'w_exp5', 'w_dw5', 'w_se5r', 'w_se5e', 'w_pw5',
    'w_head',
]


@jax.jit
def mobilenet_forward(params, x):
    bsz = x.shape[0]
    # Matmul-only operand -> feed the MXU bf16 (accumulation stays f32 in-kernel).
    stem_in = _stem_im2col(x).astype(jnp.bfloat16)            # [bsz*256, 27]
    consts = [params[n] for n in _CONST_NAMES]

    in_specs = [pl.BlockSpec((N16, 9 * CIN), lambda b: (b, 0))]           # per image
    in_specs += [pl.BlockSpec(a.shape, lambda b: (0, 0)) for a in consts]  # resident

    out = pl.pallas_call(
        _mobilenet_kernel,
        grid=(bsz,),                                          # one image per step
        in_specs=in_specs,
        out_specs=pl.BlockSpec((OUT_TILE, FEAT), lambda b: (b, 0)),
        out_shape=jax.ShapeDtypeStruct((bsz * OUT_TILE, FEAT), jnp.float32),
        compiler_params=pltpu.CompilerParams(
            dimension_semantics=("parallel",)),               # v7x: 2nd TensorCore
    )(stem_in, *consts)
    return out[::OUT_TILE]                                    # [bsz, FEAT] pooled features


if __name__ == "__main__":
    key = jax.random.PRNGKey(0)
    k_param, k_x = jax.random.split(key)
    params = init_params(k_param)
    x = jax.random.normal(k_x, (B, CIN, HIN, WIN), jnp.float32)   # NCHW, like PyTorch

    out = mobilenet_forward(params, x)
    jax.block_until_ready(out)
    assert out.shape == (B, FEAT)
    assert bool(jnp.all(jnp.isfinite(out)))
    print("KERNEL_OK")
</pallas_src>

<mosaic_0001>
module attributes {stable_mosaic.version = 11 : i64} {
  func.func @_mobilenet_kernel(%arg0: i32, %arg1: memref<256x27xbf16, #tpu.memory_space<vmem>>, %arg2: memref<256x9xf32, #tpu.memory_space<vmem>>, %arg3: memref<64x9xf32, #tpu.memory_space<vmem>>, %arg4: memref<16x9xf32, #tpu.memory_space<vmem>>, %arg5: memref<64x256xbf16, #tpu.memory_space<vmem>>, %arg6: memref<16x64xbf16, #tpu.memory_space<vmem>>, %arg7: memref<1x3456xf32, #tpu.memory_space<vmem>>, %arg8: memref<27x16xbf16, #tpu.memory_space<vmem>>, %arg9: memref<9x16xf32, #tpu.memory_space<vmem>>, %arg10: memref<16x16xbf16, #tpu.memory_space<vmem>>, %arg11: memref<16x64xbf16, #tpu.memory_space<vmem>>, %arg12: memref<9x64xf32, #tpu.memory_space<vmem>>, %arg13: memref<64x24xbf16, #tpu.memory_space<vmem>>, %arg14: memref<24x72xbf16, #tpu.memory_space<vmem>>, %arg15: memref<9x72xf32, #tpu.memory_space<vmem>>, %arg16: memref<72x24xbf16, #tpu.memory_space<vmem>>, %arg17: memref<24x96xbf16, #tpu.memory_space<vmem>>, %arg18: memref<9x96xf32, #tpu.memory_space<vmem>>, %arg19: memref<96x24xbf16, #tpu.memory_space<vmem>>, %arg20: memref<24x96xbf16, #tpu.memory_space<vmem>>, %arg21: memref<96x40xbf16, #tpu.memory_space<vmem>>, %arg22: memref<40x120xbf16, #tpu.memory_space<vmem>>, %arg23: memref<9x120xf32, #tpu.memory_space<vmem>>, %arg24: memref<120x32xbf16, #tpu.memory_space<vmem>>, %arg25: memref<32x120xbf16, #tpu.memory_space<vmem>>, %arg26: memref<120x40xbf16, #tpu.memory_space<vmem>>, %arg27: memref<40x960xbf16, #tpu.memory_space<vmem>>, %arg28: memref<8x960xf32, #tpu.memory_space<vmem>>) attributes {dimension_semantics = [#tpu.dimension_semantics<parallel>], iteration_bounds = array<i64: 2>, scalar_prefetch = 0 : i64, scratch_operands = 0 : i64, tpu.core_type = #tpu.core_type<tc>, window_params = [{transform_indices = @transform_0, window_bounds = array<i64: 256, 27>}, {pipeline_mode = #tpu.pipeline_mode<synchronous>, transform_indices = @transform_1, window_bounds = array<i64: 256, 9>}, {pipeline_mode = #tpu.pipeline_mode<synchronous>, transform_indices = @transform_2, window_bounds = array<i64: 64, 9>}, {pipeline_mode = #tpu.pipeline_mode<synchronous>, transform_indices = @transform_3, window_bounds = array<i64: 16, 9>}, {pipeline_mode = #tpu.pipeline_mode<synchronous>, transform_indices = @transform_4, window_bounds = array<i64: 64, 256>}, {pipeline_mode = #tpu.pipeline_mode<synchronous>, transform_indices = @transform_5, window_bounds = array<i64: 16, 64>}, {pipeline_mode = #tpu.pipeline_mode<synchronous>, transform_indices = @transform_6, window_bounds = array<i64: 1, 3456>}, {pipeline_mode = #tpu.pipeline_mode<synchronous>, transform_indices = @transform_7, window_bounds = array<i64: 27, 16>}, {pipeline_mode = #tpu.pipeline_mode<synchronous>, transform_indices = @transform_8, window_bounds = array<i64: 9, 16>}, {pipeline_mode = #tpu.pipeline_mode<synchronous>, transform_indices = @transform_9, window_bounds = array<i64: 16, 16>}, {pipeline_mode = #tpu.pipeline_mode<synchronous>, transform_indices = @transform_10, window_bounds = array<i64: 16, 64>}, {pipeline_mode = #tpu.pipeline_mode<synchronous>, transform_indices = @transform_11, window_bounds = array<i64: 9, 64>}, {pipeline_mode = #tpu.pipeline_mode<synchronous>, transform_indices = @transform_12, window_bounds = array<i64: 64, 24>}, {pipeline_mode = #tpu.pipeline_mode<synchronous>, transform_indices = @transform_13, window_bounds = array<i64: 24, 72>}, {pipeline_mode = #tpu.pipeline_mode<synchronous>, transform_indices = @transform_14, window_bounds = array<i64: 9, 72>}, {pipeline_mode = #tpu.pipeline_mode<synchronous>, transform_indices = @transform_15, window_bounds = array<i64: 72, 24>}, {pipeline_mode = #tpu.pipeline_mode<synchronous>, transform_indices = @transform_16, window_bounds = array<i64: 24, 96>}, {pipeline_mode = #tpu.pipeline_mode<synchronous>, transform_indices = @transform_17, window_bounds = array<i64: 9, 96>}, {pipeline_mode = #tpu.pipeline_mode<synchronous>, transform_indices = @transform_18, window_bounds = array<i64: 96, 24>}, {pipeline_mode = #tpu.pipeline_mode<synchronous>, transform_indices = @transform_19, window_bounds = array<i64: 24, 96>}, {pipeline_mode = #tpu.pipeline_mode<synchronous>, transform_indices = @transform_20, window_bounds = array<i64: 96, 40>}, {pipeline_mode = #tpu.pipeline_mode<synchronous>, transform_indices = @transform_21, window_bounds = array<i64: 40, 120>}, {pipeline_mode = #tpu.pipeline_mode<synchronous>, transform_indices = @transform_22, window_bounds = array<i64: 9, 120>}, {pipeline_mode = #tpu.pipeline_mode<synchronous>, transform_indices = @transform_23, window_bounds = array<i64: 120, 32>}, {pipeline_mode = #tpu.pipeline_mode<synchronous>, transform_indices = @transform_24, window_bounds = array<i64: 32, 120>}, {pipeline_mode = #tpu.pipeline_mode<synchronous>, transform_indices = @transform_25, window_bounds = array<i64: 120, 40>}, {pipeline_mode = #tpu.pipeline_mode<synchronous>, transform_indices = @transform_26, window_bounds = array<i64: 40, 960>}, {transform_indices = @transform_27, window_bounds = array<i64: 8, 960>}]} {
    %c0 = arith.constant 0 : index
    %c0_0 = arith.constant 0 : index
    %0 = vector.load %arg1[%c0, %c0_0] : memref<256x27xbf16, #tpu.memory_space<vmem>>, vector<256x27xbf16>
    %c0_1 = arith.constant 0 : index
    %c0_2 = arith.constant 0 : index
    %1 = vector.load %arg8[%c0_1, %c0_2] : memref<27x16xbf16, #tpu.memory_space<vmem>>, vector<27x16xbf16>
    %cst = arith.constant dense<0.000000e+00> : vector<256x16xf32>
    %2 = tpu.matmul %0, %1, %cst {dimension_numbers = #tpu.dot_dimension_numbers<[1], [0], [0], [1], [0, 0, 1, 1], [], []>} : vector<256x27xbf16>, vector<27x16xbf16>, vector<256x16xf32> -> vector<256x16xf32>
    %c0_3 = arith.constant 0 : index
    %c0_4 = arith.constant 0 : index
    %3 = vector.load %arg7[%c0_3, %c0_4] : memref<1x3456xf32, #tpu.memory_space<vmem>>, vector<1x16xf32>
    %4 = vector.broadcast %3 : vector<1x16xf32> to vector<256x16xf32>
    %5 = arith.addf %2, %4 : vector<256x16xf32>
    %cst_5 = arith.constant 3.000000e+00 : f32
    %6 = vector.broadcast %cst_5 : f32 to vector<256x16xf32>
    %7 = arith.addf %5, %6 : vector<256x16xf32>
    %cst_6 = arith.constant 0.000000e+00 : f32
    %cst_7 = arith.constant 6.000000e+00 : f32
    %8 = vector.broadcast %cst_6 : f32 to vector<256x16xf32>
    %9 = arith.maximumf %8, %7 : vector<256x16xf32>
    %10 = vector.broadcast %cst_7 : f32 to vector<256x16xf32>
    %11 = arith.minimumf %10, %9 : vector<256x16xf32>
    %12 = arith.mulf %5, %11 : vector<256x16xf32>
    %cst_8 = arith.constant 0.166666672 : f32
    %13 = vector.broadcast %cst_8 : f32 to vector<256x16xf32>
    %14 = arith.mulf %12, %13 : vector<256x16xf32>
    %c4 = arith.constant 4 : index
    %c0_9 = arith.constant 0 : index
    %15 = vector.load %arg9[%c4, %c0_9] : memref<9x16xf32, #tpu.memory_space<vmem>>, vector<1x16xf32>
    %16 = vector.broadcast %15 : vector<1x16xf32> to vector<256x16xf32>
    %17 = arith.mulf %14, %16 : vector<256x16xf32>
    %c17_i32 = arith.constant 17 : i32
    %18 = tpu.dynamic_rotate %14 by %c17_i32 dim 0 : vector<256x16xf32>, i32 -> vector<256x16xf32>
    %c0_10 = arith.constant 0 : index
    %c0_11 = arith.constant 0 : index
    %19 = vector.load %arg2[%c0_10, %c0_11] : memref<256x9xf32, #tpu.memory_space<vmem>>, vector<256x1xf32>
    %20 = vector.broadcast %19 : vector<256x1xf32> to vector<256x16xf32>
    %21 = arith.mulf %18, %20 : vector<256x16xf32>
    %c0_12 = arith.constant 0 : index
    %c0_13 = arith.constant 0 : index
    %22 = vector.load %arg9[%c0_12, %c0_13] : memref<9x16xf32, #tpu.memory_space<vmem>>, vector<1x16xf32>
    %23 = vector.broadcast %22 : vector<1x16xf32> to vector<256x16xf32>
    %24 = arith.mulf %21, %23 : vector<256x16xf32>
    %25 = arith.addf %17, %24 : vector<256x16xf32>
    %c16_i32 = arith.constant 16 : i32
    %26 = tpu.dynamic_rotate %14 by %c16_i32 dim 0 : vector<256x16xf32>, i32 -> vector<256x16xf32>
    %c0_14 = arith.constant 0 : index
    %c1 = arith.constant 1 : index
    %27 = vector.load %arg2[%c0_14, %c1] : memref<256x9xf32, #tpu.memory_space<vmem>>, vector<256x1xf32>
    %28 = vector.broadcast %27 : vector<256x1xf32> to vector<256x16xf32>
    %29 = arith.mulf %26, %28 : vector<256x16xf32>
    %c1_15 = arith.constant 1 : index
    %c0_16 = arith.constant 0 : index
    %30 = vector.load %arg9[%c1_15, %c0_16] : memref<9x16xf32, #tpu.memory_space<vmem>>, vector<1x16xf32>
    %31 = vector.broadcast %30 : vector<1x16xf32> to vector<256x16xf32>
    %32 = arith.mulf %29, %31 : vector<256x16xf32>
    %33 = arith.addf %25, %32 : vector<256x16xf32>
    %c15_i32 = arith.constant 15 : i32
    %34 = tpu.dynamic_rotate %14 by %c15_i32 dim 0 : vector<256x16xf32>, i32 -> vector<256x16xf32>
    %c0_17 = arith.constant 0 : index
    %c2 = arith.constant 2 : index
    %35 = vector.load %arg2[%c0_17, %c2] : memref<256x9xf32, #tpu.memory_space<vmem>>, vector<256x1xf32>
    %36 = vector.broadcast %35 : vector<256x1xf32> to vector<256x16xf32>
    %37 = arith.mulf %34, %36 : vector<256x16xf32>
    %c2_18 = arith.constant 2 : index
    %c0_19 = arith.constant 0 : index
    %38 = vector.load %arg9[%c2_18, %c0_19] : memref<9x16xf32, #tpu.memory_space<vmem>>, vector<1x16xf32>
    %39 = vector.broadcast %38 : vector<1x16xf32> to vector<256x16xf32>
    %40 = arith.mulf %37, %39 : vector<256x16xf32>
    %41 = arith.addf %33, %40 : vector<256x16xf32>
    %c1_i32 = arith.constant 1 : i32
    %42 = tpu.dynamic_rotate %14 by %c1_i32 dim 0 : vector<256x16xf32>, i32 -> vector<256x16xf32>
    %c0_20 = arith.constant 0 : index
    %c3 = arith.constant 3 : index
    %43 = vector.load %arg2[%c0_20, %c3] : memref<256x9xf32, #tpu.memory_space<vmem>>, vector<256x1xf32>
    %44 = vector.broadcast %43 : vector<256x1xf32> to vector<256x16xf32>
    %45 = arith.mulf %42, %44 : vector<256x16xf32>
    %c3_21 = arith.constant 3 : index
    %c0_22 = arith.constant 0 : index
    %46 = vector.load %arg9[%c3_21, %c0_22] : memref<9x16xf32, #tpu.memory_space<vmem>>, vector<1x16xf32>
    %47 = vector.broadcast %46 : vector<1x16xf32> to vector<256x16xf32>
    %48 = arith.mulf %45, %47 : vector<256x16xf32>
    %49 = arith.addf %41, %48 : vector<256x16xf32>
    %c255_i32 = arith.constant 255 : i32
    %50 = tpu.dynamic_rotate %14 by %c255_i32 dim 0 : vector<256x16xf32>, i32 -> vector<256x16xf32>
    %c0_23 = arith.constant 0 : index
    %c5 = arith.constant 5 : index
    %51 = vector.load %arg2[%c0_23, %c5] : memref<256x9xf32, #tpu.memory_space<vmem>>, vector<256x1xf32>
    %52 = vector.broadcast %51 : vector<256x1xf32> to vector<256x16xf32>
    %53 = arith.mulf %50, %52 : vector<256x16xf32>
    %c5_24 = arith.constant 5 : index
    %c0_25 = arith.constant 0 : index
    %54 = vector.load %arg9[%c5_24, %c0_25] : memref<9x16xf32, #tpu.memory_space<vmem>>, vector<1x16xf32>
    %55 = vector.broadcast %54 : vector<1x16xf32> to vector<256x16xf32>
    %56 = arith.mulf %53, %55 : vector<256x16xf32>
    %57 = arith.addf %49, %56 : vector<256x16xf32>
    %c241_i32 = arith.constant 241 : i32
    %58 = tpu.dynamic_rotate %14 by %c241_i32 dim 0 : vector<256x16xf32>, i32 -> vector<256x16xf32>
    %c0_26 = arith.constant 0 : index
    %c6 = arith.constant 6 : index
    %59 = vector.load %arg2[%c0_26, %c6] : memref<256x9xf32, #tpu.memory_space<vmem>>, vector<256x1xf32>
    %60 = vector.broadcast %59 : vector<256x1xf32> to vector<256x16xf32>
    %61 = arith.mulf %58, %60 : vector<256x16xf32>
    %c6_27 = arith.constant 6 : index
    %c0_28 = arith.constant 0 : index
    %62 = vector.load %arg9[%c6_27, %c0_28] : memref<9x16xf32, #tpu.memory_space<vmem>>, vector<1x16xf32>
    %63 = vector.broadcast %62 : vector<1x16xf32> to vector<256x16xf32>
    %64 = arith.mulf %61, %63 : vector<256x16xf32>
    %65 = arith.addf %57, %64 : vector<256x16xf32>
    %c240_i32 = arith.constant 240 : i32
    %66 = tpu.dynamic_rotate %14 by %c240_i32 dim 0 : vector<256x16xf32>, i32 -> vector<256x16xf32>
    %c0_29 = arith.constant 0 : index
    %c7 = arith.constant 7 : index
    %67 = vector.load %arg2[%c0_29, %c7] : memref<256x9xf32, #tpu.memory_space<vmem>>, vector<256x1xf32>
    %68 = vector.broadcast %67 : vector<256x1xf32> to vector<256x16xf32>
    %69 = arith.mulf %66, %68 : vector<256x16xf32>
    %c7_30 = arith.constant 7 : index
    %c0_31 = arith.constant 0 : index
    %70 = vector.load %arg9[%c7_30, %c0_31] : memref<9x16xf32, #tpu.memory_space<vmem>>, vector<1x16xf32>
    %71 = vector.broadcast %70 : vector<1x16xf32> to vector<256x16xf32>
    %72 = arith.mulf %69, %71 : vector<256x16xf32>
    %73 = arith.addf %65, %72 : vector<256x16xf32>
    %c239_i32 = arith.constant 239 : i32
    %74 = tpu.dynamic_rotate %14 by %c239_i32 dim 0 : vector<256x16xf32>, i32 -> vector<256x16xf32>
    %c0_32 = arith.constant 0 : index
    %c8 = arith.constant 8 : index
    %75 = vector.load %arg2[%c0_32, %c8] : memref<256x9xf32, #tpu.memory_space<vmem>>, vector<256x1xf32>
    %76 = vector.broadcast %75 : vector<256x1xf32> to vector<256x16xf32>
    %77 = arith.mulf %74, %76 : vector<256x16xf32>
    %c8_33 = arith.constant 8 : index
    %c0_34 = arith.constant 0 : index
    %78 = vector.load %arg9[%c8_33, %c0_34] : memref<9x16xf32, #tpu.memory_space<vmem>>, vector<1x16xf32>
    %79 = vector.broadcast %78 : vector<1x16xf32> to vector<256x16xf32>
    %80 = arith.mulf %77, %79 : vector<256x16xf32>
    %81 = arith.addf %73, %80 : vector<256x16xf32>
    %c0_35 = arith.constant 0 : index
    %c128 = arith.constant 128 : index
    %82 = vector.load %arg7[%c0_35, %c128] : memref<1x3456xf32, #tpu.memory_space<vmem>>, vector<1x16xf32>
    %83 = vector.broadcast %82 : vector<1x16xf32> to vector<256x16xf32>
    %84 = arith.addf %81, %83 : vector<256x16xf32>
    %cst_36 = arith.constant 0.000000e+00 : f32
    %85 = vector.broadcast %cst_36 : f32 to vector<256x16xf32>
    %86 = arith.maximumf %84, %85 : vector<256x16xf32>
    %87 = arith.truncf %86 : vector<256x16xf32> to vector<256x16xbf16>
    %c0_37 = arith.constant 0 : index
    %c0_38 = arith.constant 0 : index
    %88 = vector.load %arg10[%c0_37, %c0_38] : memref<16x16xbf16, #tpu.memory_space<vmem>>, vector<16x16xbf16>
    %cst_39 = arith.constant dense<0.000000e+00> : vector<256x16xf32>
    %89 = tpu.matmul %87, %88, %cst_39 {dimension_numbers = #tpu.dot_dimension_numbers<[1], [0], [0], [1], [0, 0, 1, 1], [], []>} : vector<256x16xbf16>, vector<16x16xbf16>, vector<256x16xf32> -> vector<256x16xf32>
    %c0_40 = arith.constant 0 : index
    %c256 = arith.constant 256 : index
    %90 = vector.load %arg7[%c0_40, %c256] : memref<1x3456xf32, #tpu.memory_space<vmem>>, vector<1x16xf32>
    %91 = vector.broadcast %90 : vector<1x16xf32> to vector<256x16xf32>
    %92 = arith.addf %89, %91 : vector<256x16xf32>
    %93 = arith.addf %14, %92 : vector<256x16xf32>
    %94 = arith.truncf %93 : vector<256x16xf32> to vector<256x16xbf16>
    %c0_41 = arith.constant 0 : index
    %c0_42 = arith.constant 0 : index
    %95 = vector.load %arg11[%c0_41, %c0_42] : memref<16x64xbf16, #tpu.memory_space<vmem>>, vector<16x64xbf16>
    %cst_43 = arith.constant dense<0.000000e+00> : vector<256x64xf32>
    %96 = tpu.matmul %94, %95, %cst_43 {dimension_numbers = #tpu.dot_dimension_numbers<[1], [0], [0], [1], [0, 0, 1, 1], [], []>} : vector<256x16xbf16>, vector<16x64xbf16>, vector<256x64xf32> -> vector<256x64xf32>
    %c0_44 = arith.constant 0 : index
    %c384 = arith.constant 384 : index
    %97 = vector.load %arg7[%c0_44, %c384] : memref<1x3456xf32, #tpu.memory_space<vmem>>, vector<1x64xf32>
    %98 = vector.broadcast %97 : vector<1x64xf32> to vector<256x64xf32>
    %99 = arith.addf %96, %98 : vector<256x64xf32>
    %cst_45 = arith.constant 0.000000e+00 : f32
    %100 = vector.broadcast %cst_45 : f32 to vector<256x64xf32>
    %101 = arith.maximumf %99, %100 : vector<256x64xf32>
    %c4_46 = arith.constant 4 : index
    %c0_47 = arith.constant 0 : index
    %102 = vector.load %arg12[%c4_46, %c0_47] : memref<9x64xf32, #tpu.memory_space<vmem>>, vector<1x64xf32>
    %103 = vector.broadcast %102 : vector<1x64xf32> to vector<256x64xf32>
    %104 = arith.mulf %101, %103 : vector<256x64xf32>
    %c17_i32_48 = arith.constant 17 : i32
    %105 = tpu.dynamic_rotate %101 by %c17_i32_48 dim 0 : vector<256x64xf32>, i32 -> vector<256x64xf32>
    %c0_49 = arith.constant 0 : index
    %c0_50 = arith.constant 0 : index
    %106 = vector.load %arg2[%c0_49, %c0_50] : memref<256x9xf32, #tpu.memory_space<vmem>>, vector<256x1xf32>
    %107 = vector.broadcast %106 : vector<256x1xf32> to vector<256x64xf32>
    %108 = arith.mulf %105, %107 : vector<256x64xf32>
    %c0_51 = arith.constant 0 : index
    %c0_52 = arith.constant 0 : index
    %109 = vector.load %arg12[%c0_51, %c0_52] : memref<9x64xf32, #tpu.memory_space<vmem>>, vector<1x64xf32>
    %110 = vector.broadcast %109 : vector<1x64xf32> to vector<256x64xf32>
    %111 = arith.mulf %108, %110 : vector<256x64xf32>
    %112 = arith.addf %104, %111 : vector<256x64xf32>
    %c16_i32_53 = arith.constant 16 : i32
    %113 = tpu.dynamic_rotate %101 by %c16_i32_53 dim 0 : vector<256x64xf32>, i32 -> vector<256x64xf32>
    %c0_54 = arith.constant 0 : index
    %c1_55 = arith.constant 1 : index
    %114 = vector.load %arg2[%c0_54, %c1_55] : memref<256x9xf32, #tpu.memory_space<vmem>>, vector<256x1xf32>
    %115 = vector.broadcast %114 : vector<256x1xf32> to vector<256x64xf32>
    %116 = arith.mulf %113, %115 : vector<256x64xf32>
    %c1_56 = arith.constant 1 : index
    %c0_57 = arith.constant 0 : index
    %117 = vector.load %arg12[%c1_56, %c0_57] : memref<9x64xf32, #tpu.memory_space<vmem>>, vector<1x64xf32>
    %118 = vector.broadcast %117 : vector<1x64xf32> to vector<256x64xf32>
    %119 = arith.mulf %116, %118 : vector<256x64xf32>
    %120 = arith.addf %112, %119 : vector<256x64xf32>
    %c15_i32_58 = arith.constant 15 : i32
    %121 = tpu.dynamic_rotate %101 by %c15_i32_58 dim 0 : vector<256x64xf32>, i32 -> vector<256x64xf32>
    %c0_59 = arith.constant 0 : index
    %c2_60 = arith.constant 2 : index
    %122 = vector.load %arg2[%c0_59, %c2_60] : memref<256x9xf32, #tpu.memory_space<vmem>>, vector<256x1xf32>
    %123 = vector.broadcast %122 : vector<256x1xf32> to vector<256x64xf32>
    %124 = arith.mulf %121, %123 : vector<256x64xf32>
    %c2_61 = arith.constant 2 : index
    %c0_62 = arith.constant 0 : index
    %125 = vector.load %arg12[%c2_61, %c0_62] : memref<9x64xf32, #tpu.memory_space<vmem>>, vector<1x64xf32>
    %126 = vector.broadcast %125 : vector<1x64xf32> to vector<256x64xf32>
    %127 = arith.mulf %124, %126 : vector<256x64xf32>
    %128 = arith.addf %120, %127 : vector<256x64xf32>
    %c1_i32_63 = arith.constant 1 : i32
    %129 = tpu.dynamic_rotate %101 by %c1_i32_63 dim 0 : vector<256x64xf32>, i32 -> vector<256x64xf32>
    %c0_64 = arith.constant 0 : index
    %c3_65 = arith.constant 3 : index
    %130 = vector.load %arg2[%c0_64, %c3_65] : memref<256x9xf32, #tpu.memory_space<vmem>>, vector<256x1xf32>
    %131 = vector.broadcast %130 : vector<256x1xf32> to vector<256x64xf32>
    %132 = arith.mulf %129, %131 : vector<256x64xf32>
    %c3_66 = arith.constant 3 : index
    %c0_67 = arith.constant 0 : index
    %133 = vector.load %arg12[%c3_66, %c0_67] : memref<9x64xf32, #tpu.memory_space<vmem>>, vector<1x64xf32>
    %134 = vector.broadcast %133 : vector<1x64xf32> to vector<256x64xf32>
    %135 = arith.mulf %132, %134 : vector<256x64xf32>
    %136 = arith.addf %128, %135 : vector<256x64xf32>
    %c255_i32_68 = arith.constant 255 : i32
    %137 = tpu.dynamic_rotate %101 by %c255_i32_68 dim 0 : vector<256x64xf32>, i32 -> vector<256x64xf32>
    %c0_69 = arith.constant 0 : index
    %c5_70 = arith.constant 5 : index
    %138 = vector.load %arg2[%c0_69, %c5_70] : memref<256x9xf32, #tpu.memory_space<vmem>>, vector<256x1xf32>
    %139 = vector.broadcast %138 : vector<256x1xf32> to vector<256x64xf32>
    %140 = arith.mulf %137, %139 : vector<256x64xf32>
    %c5_71 = arith.constant 5 : index
    %c0_72 = arith.constant 0 : index
    %141 = vector.load %arg12[%c5_71, %c0_72] : memref<9x64xf32, #tpu.memory_space<vmem>>, vector<1x64xf32>
    %142 = vector.broadcast %141 : vector<1x64xf32> to vector<256x64xf32>
    %143 = arith.mulf %140, %142 : vector<256x64xf32>
    %144 = arith.addf %136, %143 : vector<256x64xf32>
    %c241_i32_73 = arith.constant 241 : i32
    %145 = tpu.dynamic_rotate %101 by %c241_i32_73 dim 0 : vector<256x64xf32>, i32 -> vector<256x64xf32>
    %c0_74 = arith.constant 0 : index
    %c6_75 = arith.constant 6 : index
    %146 = vector.load %arg2[%c0_74, %c6_75] : memref<256x9xf32, #tpu.memory_space<vmem>>, vector<256x1xf32>
    %147 = vector.broadcast %146 : vector<256x1xf32> to vector<256x64xf32>
    %148 = arith.mulf %145, %147 : vector<256x64xf32>
    %c6_76 = arith.constant 6 : index
    %c0_77 = arith.constant 0 : index
    %149 = vector.load %arg12[%c6_76, %c0_77] : memref<9x64xf32, #tpu.memory_space<vmem>>, vector<1x64xf32>
    %150 = vector.broadcast %149 : vector<1x64xf32> to vector<256x64xf32>
    %151 = arith.mulf %148, %150 : vector<256x64xf32>
    %152 = arith.addf %144, %151 : vector<256x64xf32>
    %c240_i32_78 = arith.constant 240 : i32
    %153 = tpu.dynamic_rotate %101 by %c240_i32_78 dim 0 : vector<256x64xf32>, i32 -> vector<256x64xf32>
    %c0_79 = arith.constant 0 : index
    %c7_80 = arith.constant 7 : index
    %154 = vector.load %arg2[%c0_79, %c7_80] : memref<256x9xf32, #tpu.memory_space<vmem>>, vector<256x1xf32>
    %155 = vector.broadcast %154 : vector<256x1xf32> to vector<256x64xf32>
    %156 = arith.mulf %153, %155 : vector<256x64xf32>
    %c7_81 = arith.constant 7 : index
    %c0_82 = arith.constant 0 : index
    %157 = vector.load %arg12[%c7_81, %c0_82] : memref<9x64xf32, #tpu.memory_space<vmem>>, vector<1x64xf32>
    %158 = vector.broadcast %157 : vector<1x64xf32> to vector<256x64xf32>
    %159 = arith.mulf %156, %158 : vector<256x64xf32>
    %160 = arith.addf %152, %159 : vector<256x64xf32>
    %c239_i32_83 = arith.constant 239 : i32
    %161 = tpu.dynamic_rotate %101 by %c239_i32_83 dim 0 : vector<256x64xf32>, i32 -> vector<256x64xf32>
    %c0_84 = arith.constant 0 : index
    %c8_85 = arith.constant 8 : index
    %162 = vector.load %arg2[%c0_84, %c8_85] : memref<256x9xf32, #tpu.memory_space<vmem>>, vector<256x1xf32>
    %163 = vector.broadcast %162 : vector<256x1xf32> to vector<256x64xf32>
    %164 = arith.mulf %161, %163 : vector<256x64xf32>
    %c8_86 = arith.constant 8 : index
    %c0_87 = arith.constant 0 : index
    %165 = vector.load %arg12[%c8_86, %c0_87] : memref<9x64xf32, #tpu.memory_space<vmem>>, vector<1x64xf32>
    %166 = vector.broadcast %165 : vector<1x64xf32> to vector<256x64xf32>
    %167 = arith.mulf %164, %166 : vector<256x64xf32>
    %168 = arith.addf %160, %167 : vector<256x64xf32>
    %c0_88 = arith.constant 0 : index
    %c512 = arith.constant 512 : index
    %169 = vector.load %arg7[%c0_88, %c512] : memref<1x3456xf32, #tpu.memory_space<vmem>>, vector<1x64xf32>
    %170 = vector.broadcast %169 : vector<1x64xf32> to vector<256x64xf32>
    %171 = arith.addf %168, %170 : vector<256x64xf32>
    %cst_89 = arith.constant 0.000000e+00 : f32
    %172 = vector.broadcast %cst_89 : f32 to vector<256x64xf32>
    %173 = arith.maximumf %171, %172 : vector<256x64xf32>
    %174 = arith.truncf %173 : vector<256x64xf32> to vector<256x64xbf16>
    %c0_90 = arith.constant 0 : index
    %c0_91 = arith.constant 0 : index
    %175 = vector.load %arg13[%c0_90, %c0_91] : memref<64x24xbf16, #tpu.memory_space<vmem>>, vector<64x24xbf16>
    %cst_92 = arith.constant dense<0.000000e+00> : vector<256x24xf32>
    %176 = tpu.matmul %174, %175, %cst_92 {dimension_numbers = #tpu.dot_dimension_numbers<[1], [0], [0], [1], [0, 0, 1, 1], [], []>} : vector<256x64xbf16>, vector<64x24xbf16>, vector<256x24xf32> -> vector<256x24xf32>
    %c0_93 = arith.constant 0 : index
    %c640 = arith.constant 640 : index
    %177 = vector.load %arg7[%c0_93, %c640] : memref<1x3456xf32, #tpu.memory_space<vmem>>, vector<1x24xf32>
    %178 = vector.broadcast %177 : vector<1x24xf32> to vector<256x24xf32>
    %179 = arith.addf %176, %178 : vector<256x24xf32>
    %c0_94 = arith.constant 0 : index
    %c0_95 = arith.constant 0 : index
    %180 = vector.load %arg5[%c0_94, %c0_95] : memref<64x256xbf16, #tpu.memory_space<vmem>>, vector<64x256xbf16>
    %181 = arith.truncf %179 : vector<256x24xf32> to vector<256x24xbf16>
    %cst_96 = arith.constant dense<0.000000e+00> : vector<64x24xf32>
    %182 = tpu.matmul %180, %181, %cst_96 {dimension_numbers = #tpu.dot_dimension_numbers<[1], [0], [0], [1], [0, 0, 1, 1], [], []>} : vector<64x256xbf16>, vector<256x24xbf16>, vector<64x24xf32> -> vector<64x24xf32>
    %183 = arith.truncf %182 : vector<64x24xf32> to vector<64x24xbf16>
    %c0_97 = arith.constant 0 : index
    %c0_98 = arith.constant 0 : index
    %184 = vector.load %arg14[%c0_97, %c0_98] : memref<24x72xbf16, #tpu.memory_space<vmem>>, vector<24x72xbf16>
    %cst_99 = arith.constant dense<0.000000e+00> : vector<64x72xf32>
    %185 = tpu.matmul %183, %184, %cst_99 {dimension_numbers = #tpu.dot_dimension_numbers<[1], [0], [0], [1], [0, 0, 1, 1], [], []>} : vector<64x24xbf16>, vector<24x72xbf16>, vector<64x72xf32> -> vector<64x72xf32>
    %c0_100 = arith.constant 0 : index
    %c768 = arith.constant 768 : index
    %186 = vector.load %arg7[%c0_100, %c768] : memref<1x3456xf32, #tpu.memory_space<vmem>>, vector<1x72xf32>
    %187 = vector.broadcast %186 : vector<1x72xf32> to vector<64x72xf32>
    %188 = arith.addf %185, %187 : vector<64x72xf32>
    %cst_101 = arith.constant 0.000000e+00 : f32
    %189 = vector.broadcast %cst_101 : f32 to vector<64x72xf32>
    %190 = arith.maximumf %188, %189 : vector<64x72xf32>
    %c4_102 = arith.constant 4 : index
    %c0_103 = arith.constant 0 : index
    %191 = vector.load %arg15[%c4_102, %c0_103] : memref<9x72xf32, #tpu.memory_space<vmem>>, vector<1x72xf32>
    %192 = vector.broadcast %191 : vector<1x72xf32> to vector<64x72xf32>
    %193 = arith.mulf %190, %192 : vector<64x72xf32>
    %c9_i32 = arith.constant 9 : i32
    %194 = tpu.dynamic_rotate %190 by %c9_i32 dim 0 : vector<64x72xf32>, i32 -> vector<64x72xf32>
    %c0_104 = arith.constant 0 : index
    %c0_105 = arith.constant 0 : index
    %195 = vector.load %arg3[%c0_104, %c0_105] : memref<64x9xf32, #tpu.memory_space<vmem>>, vector<64x1xf32>
    %196 = vector.broadcast %195 : vector<64x1xf32> to vector<64x72xf32>
    %197 = arith.mulf %194, %196 : vector<64x72xf32>
    %c0_106 = arith.constant 0 : index
    %c0_107 = arith.constant 0 : index
    %198 = vector.load %arg15[%c0_106, %c0_107] : memref<9x72xf32, #tpu.memory_space<vmem>>, vector<1x72xf32>
    %199 = vector.broadcast %198 : vector<1x72xf32> to vector<64x72xf32>
    %200 = arith.mulf %197, %199 : vector<64x72xf32>
    %201 = arith.addf %193, %200 : vector<64x72xf32>
    %c8_i32 = arith.constant 8 : i32
    %202 = tpu.dynamic_rotate %190 by %c8_i32 dim 0 : vector<64x72xf32>, i32 -> vector<64x72xf32>
    %c0_108 = arith.constant 0 : index
    %c1_109 = arith.constant 1 : index
    %203 = vector.load %arg3[%c0_108, %c1_109] : memref<64x9xf32, #tpu.memory_space<vmem>>, vector<64x1xf32>
    %204 = vector.broadcast %203 : vector<64x1xf32> to vector<64x72xf32>
    %205 = arith.mulf %202, %204 : vector<64x72xf32>
    %c1_110 = arith.constant 1 : index
    %c0_111 = arith.constant 0 : index
    %206 = vector.load %arg15[%c1_110, %c0_111] : memref<9x72xf32, #tpu.memory_space<vmem>>, vector<1x72xf32>
    %207 = vector.broadcast %206 : vector<1x72xf32> to vector<64x72xf32>
    %208 = arith.mulf %205, %207 : vector<64x72xf32>
    %209 = arith.addf %201, %208 : vector<64x72xf32>
    %c7_i32 = arith.constant 7 : i32
    %210 = tpu.dynamic_rotate %190 by %c7_i32 dim 0 : vector<64x72xf32>, i32 -> vector<64x72xf32>
    %c0_112 = arith.constant 0 : index
    %c2_113 = arith.constant 2 : index
    %211 = vector.load %arg3[%c0_112, %c2_113] : memref<64x9xf32, #tpu.memory_space<vmem>>, vector<64x1xf32>
    %212 = vector.broadcast %211 : vector<64x1xf32> to vector<64x72xf32>
    %213 = arith.mulf %210, %212 : vector<64x72xf32>
    %c2_114 = arith.constant 2 : index
    %c0_115 = arith.constant 0 : index
    %214 = vector.load %arg15[%c2_114, %c0_115] : memref<9x72xf32, #tpu.memory_space<vmem>>, vector<1x72xf32>
    %215 = vector.broadcast %214 : vector<1x72xf32> to vector<64x72xf32>
    %216 = arith.mulf %213, %215 : vector<64x72xf32>
    %217 = arith.addf %209, %216 : vector<64x72xf32>
    %c1_i32_116 = arith.constant 1 : i32
    %218 = tpu.dynamic_rotate %190 by %c1_i32_116 dim 0 : vector<64x72xf32>, i32 -> vector<64x72xf32>
    %c0_117 = arith.constant 0 : index
    %c3_118 = arith.constant 3 : index
    %219 = vector.load %arg3[%c0_117, %c3_118] : memref<64x9xf32, #tpu.memory_space<vmem>>, vector<64x1xf32>
    %220 = vector.broadcast %219 : vector<64x1xf32> to vector<64x72xf32>
    %221 = arith.mulf %218, %220 : vector<64x72xf32>
    %c3_119 = arith.constant 3 : index
    %c0_120 = arith.constant 0 : index
    %222 = vector.load %arg15[%c3_119, %c0_120] : memref<9x72xf32, #tpu.memory_space<vmem>>, vector<1x72xf32>
    %223 = vector.broadcast %222 : vector<1x72xf32> to vector<64x72xf32>
    %224 = arith.mulf %221, %223 : vector<64x72xf32>
    %225 = arith.addf %217, %224 : vector<64x72xf32>
    %c63_i32 = arith.constant 63 : i32
    %226 = tpu.dynamic_rotate %190 by %c63_i32 dim 0 : vector<64x72xf32>, i32 -> vector<64x72xf32>
    %c0_121 = arith.constant 0 : index
    %c5_122 = arith.constant 5 : index
    %227 = vector.load %arg3[%c0_121, %c5_122] : memref<64x9xf32, #tpu.memory_space<vmem>>, vector<64x1xf32>
    %228 = vector.broadcast %227 : vector<64x1xf32> to vector<64x72xf32>
    %229 = arith.mulf %226, %228 : vector<64x72xf32>
    %c5_123 = arith.constant 5 : index
    %c0_124 = arith.constant 0 : index
    %230 = vector.load %arg15[%c5_123, %c0_124] : memref<9x72xf32, #tpu.memory_space<vmem>>, vector<1x72xf32>
    %231 = vector.broadcast %230 : vector<1x72xf32> to vector<64x72xf32>
    %232 = arith.mulf %229, %231 : vector<64x72xf32>
    %233 = arith.addf %225, %232 : vector<64x72xf32>
    %c57_i32 = arith.constant 57 : i32
    %234 = tpu.dynamic_rotate %190 by %c57_i32 dim 0 : vector<64x72xf32>, i32 -> vector<64x72xf32>
    %c0_125 = arith.constant 0 : index
    %c6_126 = arith.constant 6 : index
    %235 = vector.load %arg3[%c0_125, %c6_126] : memref<64x9xf32, #tpu.memory_space<vmem>>, vector<64x1xf32>
    %236 = vector.broadcast %235 : vector<64x1xf32> to vector<64x72xf32>
    %237 = arith.mulf %234, %236 : vector<64x72xf32>
    %c6_127 = arith.constant 6 : index
    %c0_128 = arith.constant 0 : index
    %238 = vector.load %arg15[%c6_127, %c0_128] : memref<9x72xf32, #tpu.memory_space<vmem>>, vector<1x72xf32>
    %239 = vector.broadcast %238 : vector<1x72xf32> to vector<64x72xf32>
    %240 = arith.mulf %237, %239 : vector<64x72xf32>
    %241 = arith.addf %233, %240 : vector<64x72xf32>
    %c56_i32 = arith.constant 56 : i32
    %242 = tpu.dynamic_rotate %190 by %c56_i32 dim 0 : vector<64x72xf32>, i32 -> vector<64x72xf32>
    %c0_129 = arith.constant 0 : index
    %c7_130 = arith.constant 7 : index
    %243 = vector.load %arg3[%c0_129, %c7_130] : memref<64x9xf32, #tpu.memory_space<vmem>>, vector<64x1xf32>
    %244 = vector.broadcast %243 : vector<64x1xf32> to vector<64x72xf32>
    %245 = arith.mulf %242, %244 : vector<64x72xf32>
    %c7_131 = arith.constant 7 : index
    %c0_132 = arith.constant 0 : index
    %246 = vector.load %arg15[%c7_131, %c0_132] : memref<9x72xf32, #tpu.memory_space<vmem>>, vector<1x72xf32>
    %247 = vector.broadcast %246 : vector<1x72xf32> to vector<64x72xf32>
    %248 = arith.mulf %245, %247 : vector<64x72xf32>
    %249 = arith.addf %241, %248 : vector<64x72xf32>
    %c55_i32 = arith.constant 55 : i32
    %250 = tpu.dynamic_rotate %190 by %c55_i32 dim 0 : vector<64x72xf32>, i32 -> vector<64x72xf32>
    %c0_133 = arith.constant 0 : index
    %c8_134 = arith.constant 8 : index
    %251 = vector.load %arg3[%c0_133, %c8_134] : memref<64x9xf32, #tpu.memory_space<vmem>>, vector<64x1xf32>
    %252 = vector.broadcast %251 : vector<64x1xf32> to vector<64x72xf32>
    %253 = arith.mulf %250, %252 : vector<64x72xf32>
    %c8_135 = arith.constant 8 : index
    %c0_136 = arith.constant 0 : index
    %254 = vector.load %arg15[%c8_135, %c0_136] : memref<9x72xf32, #tpu.memory_space<vmem>>, vector<1x72xf32>
    %255 = vector.broadcast %254 : vector<1x72xf32> to vector<64x72xf32>
    %256 = arith.mulf %253, %255 : vector<64x72xf32>
    %257 = arith.addf %249, %256 : vector<64x72xf32>
    %c0_137 = arith.constant 0 : index
    %c896 = arith.constant 896 : index
    %258 = vector.load %arg7[%c0_137, %c896] : memref<1x3456xf32, #tpu.memory_space<vmem>>, vector<1x72xf32>
    %259 = vector.broadcast %258 : vector<1x72xf32> to vector<64x72xf32>
    %260 = arith.addf %257, %259 : vector<64x72xf32>
    %cst_138 = arith.constant 0.000000e+00 : f32
    %261 = vector.broadcast %cst_138 : f32 to vector<64x72xf32>
    %262 = arith.maximumf %260, %261 : vector<64x72xf32>
    %263 = arith.truncf %262 : vector<64x72xf32> to vector<64x72xbf16>
    %c0_139 = arith.constant 0 : index
    %c0_140 = arith.constant 0 : index
    %264 = vector.load %arg16[%c0_139, %c0_140] : memref<72x24xbf16, #tpu.memory_space<vmem>>, vector<72x24xbf16>
    %cst_141 = arith.constant dense<0.000000e+00> : vector<64x24xf32>
    %265 = tpu.matmul %263, %264, %cst_141 {dimension_numbers = #tpu.dot_dimension_numbers<[1], [0], [0], [1], [0, 0, 1, 1], [], []>} : vector<64x72xbf16>, vector<72x24xbf16>, vector<64x24xf32> -> vector<64x24xf32>
    %266 = arith.addf %182, %265 : vector<64x24xf32>
    %c0_142 = arith.constant 0 : index
    %c1024 = arith.constant 1024 : index
    %267 = vector.load %arg7[%c0_142, %c1024] : memref<1x3456xf32, #tpu.memory_space<vmem>>, vector<1x24xf32>
    %268 = vector.broadcast %267 : vector<1x24xf32> to vector<64x24xf32>
    %269 = arith.addf %266, %268 : vector<64x24xf32>
    %270 = arith.truncf %269 : vector<64x24xf32> to vector<64x24xbf16>
    %c0_143 = arith.constant 0 : index
    %c0_144 = arith.constant 0 : index
    %271 = vector.load %arg17[%c0_143, %c0_144] : memref<24x96xbf16, #tpu.memory_space<vmem>>, vector<24x96xbf16>
    %cst_145 = arith.constant dense<0.000000e+00> : vector<64x96xf32>
    %272 = tpu.matmul %270, %271, %cst_145 {dimension_numbers = #tpu.dot_dimension_numbers<[1], [0], [0], [1], [0, 0, 1, 1], [], []>} : vector<64x24xbf16>, vector<24x96xbf16>, vector<64x96xf32> -> vector<64x96xf32>
    %c0_146 = arith.constant 0 : index
    %c1152 = arith.constant 1152 : index
    %273 = vector.load %arg7[%c0_146, %c1152] : memref<1x3456xf32, #tpu.memory_space<vmem>>, vector<1x96xf32>
    %274 = vector.broadcast %273 : vector<1x96xf32> to vector<64x96xf32>
    %275 = arith.addf %272, %274 : vector<64x96xf32>
    %cst_147 = arith.constant 3.000000e+00 : f32
    %276 = vector.broadcast %cst_147 : f32 to vector<64x96xf32>
    %277 = arith.addf %275, %276 : vector<64x96xf32>
    %cst_148 = arith.constant 0.000000e+00 : f32
    %cst_149 = arith.constant 6.000000e+00 : f32
    %278 = vector.broadcast %cst_148 : f32 to vector<64x96xf32>
    %279 = arith.maximumf %278, %277 : vector<64x96xf32>
    %280 = vector.broadcast %cst_149 : f32 to vector<64x96xf32>
    %281 = arith.minimumf %280, %279 : vector<64x96xf32>
    %282 = arith.mulf %275, %281 : vector<64x96xf32>
    %cst_150 = arith.constant 0.166666672 : f32
    %283 = vector.broadcast %cst_150 : f32 to vector<64x96xf32>
    %284 = arith.mulf %282, %283 : vector<64x96xf32>
    %c4_151 = arith.constant 4 : index
    %c0_152 = arith.constant 0 : index
    %285 = vector.load %arg18[%c4_151, %c0_152] : memref<9x96xf32, #tpu.memory_space<vmem>>, vector<1x96xf32>
    %286 = vector.broadcast %285 : vector<1x96xf32> to vector<64x96xf32>
    %287 = arith.mulf %284, %286 : vector<64x96xf32>
    %c9_i32_153 = arith.constant 9 : i32
    %288 = tpu.dynamic_rotate %284 by %c9_i32_153 dim 0 : vector<64x96xf32>, i32 -> vector<64x96xf32>
    %c0_154 = arith.constant 0 : index
    %c0_155 = arith.constant 0 : index
    %289 = vector.load %arg3[%c0_154, %c0_155] : memref<64x9xf32, #tpu.memory_space<vmem>>, vector<64x1xf32>
    %290 = vector.broadcast %289 : vector<64x1xf32> to vector<64x96xf32>
    %291 = arith.mulf %288, %290 : vector<64x96xf32>
    %c0_156 = arith.constant 0 : index
    %c0_157 = arith.constant 0 : index
    %292 = vector.load %arg18[%c0_156, %c0_157] : memref<9x96xf32, #tpu.memory_space<vmem>>, vector<1x96xf32>
    %293 = vector.broadcast %292 : vector<1x96xf32> to vector<64x96xf32>
    %294 = arith.mulf %291, %293 : vector<64x96xf32>
    %295 = arith.addf %287, %294 : vector<64x96xf32>
    %c8_i32_158 = arith.constant 8 : i32
    %296 = tpu.dynamic_rotate %284 by %c8_i32_158 dim 0 : vector<64x96xf32>, i32 -> vector<64x96xf32>
    %c0_159 = arith.constant 0 : index
    %c1_160 = arith.constant 1 : index
    %297 = vector.load %arg3[%c0_159, %c1_160] : memref<64x9xf32, #tpu.memory_space<vmem>>, vector<64x1xf32>
    %298 = vector.broadcast %297 : vector<64x1xf32> to vector<64x96xf32>
    %299 = arith.mulf %296, %298 : vector<64x96xf32>
    %c1_161 = arith.constant 1 : index
    %c0_162 = arith.constant 0 : index
    %300 = vector.load %arg18[%c1_161, %c0_162] : memref<9x96xf32, #tpu.memory_space<vmem>>, vector<1x96xf32>
    %301 = vector.broadcast %300 : vector<1x96xf32> to vector<64x96xf32>
    %302 = arith.mulf %299, %301 : vector<64x96xf32>
    %303 = arith.addf %295, %302 : vector<64x96xf32>
    %c7_i32_163 = arith.constant 7 : i32
    %304 = tpu.dynamic_rotate %284 by %c7_i32_163 dim 0 : vector<64x96xf32>, i32 -> vector<64x96xf32>
    %c0_164 = arith.constant 0 : index
    %c2_165 = arith.constant 2 : index
    %305 = vector.load %arg3[%c0_164, %c2_165] : memref<64x9xf32, #tpu.memory_space<vmem>>, vector<64x1xf32>
    %306 = vector.broadcast %305 : vector<64x1xf32> to vector<64x96xf32>
    %307 = arith.mulf %304, %306 : vector<64x96xf32>
    %c2_166 = arith.constant 2 : index
    %c0_167 = arith.constant 0 : index
    %308 = vector.load %arg18[%c2_166, %c0_167] : memref<9x96xf32, #tpu.memory_space<vmem>>, vector<1x96xf32>
    %309 = vector.broadcast %308 : vector<1x96xf32> to vector<64x96xf32>
    %310 = arith.mulf %307, %309 : vector<64x96xf32>
    %311 = arith.addf %303, %310 : vector<64x96xf32>
    %c1_i32_168 = arith.constant 1 : i32
    %312 = tpu.dynamic_rotate %284 by %c1_i32_168 dim 0 : vector<64x96xf32>, i32 -> vector<64x96xf32>
    %c0_169 = arith.constant 0 : index
    %c3_170 = arith.constant 3 : index
    %313 = vector.load %arg3[%c0_169, %c3_170] : memref<64x9xf32, #tpu.memory_space<vmem>>, vector<64x1xf32>
    %314 = vector.broadcast %313 : vector<64x1xf32> to vector<64x96xf32>
    %315 = arith.mulf %312, %314 : vector<64x96xf32>
    %c3_171 = arith.constant 3 : index
    %c0_172 = arith.constant 0 : index
    %316 = vector.load %arg18[%c3_171, %c0_172] : memref<9x96xf32, #tpu.memory_space<vmem>>, vector<1x96xf32>
    %317 = vector.broadcast %316 : vector<1x96xf32> to vector<64x96xf32>
    %318 = arith.mulf %315, %317 : vector<64x96xf32>
    %319 = arith.addf %311, %318 : vector<64x96xf32>
    %c63_i32_173 = arith.constant 63 : i32
    %320 = tpu.dynamic_rotate %284 by %c63_i32_173 dim 0 : vector<64x96xf32>, i32 -> vector<64x96xf32>
    %c0_174 = arith.constant 0 : index
    %c5_175 = arith.constant 5 : index
    %321 = vector.load %arg3[%c0_174, %c5_175] : memref<64x9xf32, #tpu.memory_space<vmem>>, vector<64x1xf32>
    %322 = vector.broadcast %321 : vector<64x1xf32> to vector<64x96xf32>
    %323 = arith.mulf %320, %322 : vector<64x96xf32>
    %c5_176 = arith.constant 5 : index
    %c0_177 = arith.constant 0 : index
    %324 = vector.load %arg18[%c5_176, %c0_177] : memref<9x96xf32, #tpu.memory_space<vmem>>, vector<1x96xf32>
    %325 = vector.broadcast %324 : vector<1x96xf32> to vector<64x96xf32>
    %326 = arith.mulf %323, %325 : vector<64x96xf32>
    %327 = arith.addf %319, %326 : vector<64x96xf32>
    %c57_i32_178 = arith.constant 57 : i32
    %328 = tpu.dynamic_rotate %284 by %c57_i32_178 dim 0 : vector<64x96xf32>, i32 -> vector<64x96xf32>
    %c0_179 = arith.constant 0 : index
    %c6_180 = arith.constant 6 : index
    %329 = vector.load %arg3[%c0_179, %c6_180] : memref<64x9xf32, #tpu.memory_space<vmem>>, vector<64x1xf32>
    %330 = vector.broadcast %329 : vector<64x1xf32> to vector<64x96xf32>
    %331 = arith.mulf %328, %330 : vector<64x96xf32>
    %c6_181 = arith.constant 6 : index
    %c0_182 = arith.constant 0 : index
    %332 = vector.load %arg18[%c6_181, %c0_182] : memref<9x96xf32, #tpu.memory_space<vmem>>, vector<1x96xf32>
    %333 = vector.broadcast %332 : vector<1x96xf32> to vector<64x96xf32>
    %334 = arith.mulf %331, %333 : vector<64x96xf32>
    %335 = arith.addf %327, %334 : vector<64x96xf32>
    %c56_i32_183 = arith.constant 56 : i32
    %336 = tpu.dynamic_rotate %284 by %c56_i32_183 dim 0 : vector<64x96xf32>, i32 -> vector<64x96xf32>
    %c0_184 = arith.constant 0 : index
    %c7_185 = arith.constant 7 : index
    %337 = vector.load %arg3[%c0_184, %c7_185] : memref<64x9xf32, #tpu.memory_space<vmem>>, vector<64x1xf32>
    %338 = vector.broadcast %337 : vector<64x1xf32> to vector<64x96xf32>
    %339 = arith.mulf %336, %338 : vector<64x96xf32>
    %c7_186 = arith.constant 7 : index
    %c0_187 = arith.constant 0 : index
    %340 = vector.load %arg18[%c7_186, %c0_187] : memref<9x96xf32, #tpu.memory_space<vmem>>, vector<1x96xf32>
    %341 = vector.broadcast %340 : vector<1x96xf32> to vector<64x96xf32>
    %342 = arith.mulf %339, %341 : vector<64x96xf32>
    %343 = arith.addf %335, %342 : vector<64x96xf32>
    %c55_i32_188 = arith.constant 55 : i32
    %344 = tpu.dynamic_rotate %284 by %c55_i32_188 dim 0 : vector<64x96xf32>, i32 -> vector<64x96xf32>
    %c0_189 = arith.constant 0 : index
    %c8_190 = arith.constant 8 : index
    %345 = vector.load %arg3[%c0_189, %c8_190] : memref<64x9xf32, #tpu.memory_space<vmem>>, vector<64x1xf32>
    %346 = vector.broadcast %345 : vector<64x1xf32> to vector<64x96xf32>
    %347 = arith.mulf %344, %346 : vector<64x96xf32>
    %c8_191 = arith.constant 8 : index
    %c0_192 = arith.constant 0 : index
    %348 = vector.load %arg18[%c8_191, %c0_192] : memref<9x96xf32, #tpu.memory_space<vmem>>, vector<1x96xf32>
    %349 = vector.broadcast %348 : vector<1x96xf32> to vector<64x96xf32>
    %350 = arith.mulf %347, %349 : vector<64x96xf32>
    %351 = arith.addf %343, %350 : vector<64x96xf32>
    %c0_193 = arith.constant 0 : index
    %c0_194 = arith.constant 0 : index
    %352 = vector.load %arg6[%c0_193, %c0_194] : memref<16x64xbf16, #tpu.memory_space<vmem>>, vector<16x64xbf16>
    %353 = arith.truncf %351 : vector<64x96xf32> to vector<64x96xbf16>
    %cst_195 = arith.constant dense<0.000000e+00> : vector<16x96xf32>
    %354 = tpu.matmul %352, %353, %cst_195 {dimension_numbers = #tpu.dot_dimension_numbers<[1], [0], [0], [1], [0, 0, 1, 1], [], []>} : vector<16x64xbf16>, vector<64x96xbf16>, vector<16x96xf32> -> vector<16x96xf32>
    %c0_196 = arith.constant 0 : index
    %c1280 = arith.constant 1280 : index
    %355 = vector.load %arg7[%c0_196, %c1280] : memref<1x3456xf32, #tpu.memory_space<vmem>>, vector<1x96xf32>
    %356 = vector.broadcast %355 : vector<1x96xf32> to vector<16x96xf32>
    %357 = arith.addf %354, %356 : vector<16x96xf32>
    %cst_197 = arith.constant 3.000000e+00 : f32
    %358 = vector.broadcast %cst_197 : f32 to vector<16x96xf32>
    %359 = arith.addf %357, %358 : vector<16x96xf32>
    %cst_198 = arith.constant 0.000000e+00 : f32
    %cst_199 = arith.constant 6.000000e+00 : f32
    %360 = vector.broadcast %cst_198 : f32 to vector<16x96xf32>
    %361 = arith.maximumf %360, %359 : vector<16x96xf32>
    %362 = vector.broadcast %cst_199 : f32 to vector<16x96xf32>
    %363 = arith.minimumf %362, %361 : vector<16x96xf32>
    %364 = arith.mulf %357, %363 : vector<16x96xf32>
    %cst_200 = arith.constant 0.166666672 : f32
    %365 = vector.broadcast %cst_200 : f32 to vector<16x96xf32>
    %366 = arith.mulf %364, %365 : vector<16x96xf32>
    %c0_201 = arith.constant 0 : index
    %c1408 = arith.constant 1408 : index
    %367 = vector.load %arg7[%c0_201, %c1408] : memref<1x3456xf32, #tpu.memory_space<vmem>>, vector<1x24xf32>
    %c0_202 = arith.constant 0 : index
    %c1536 = arith.constant 1536 : index
    %368 = vector.load %arg7[%c0_202, %c1536] : memref<1x3456xf32, #tpu.memory_space<vmem>>, vector<1x96xf32>
    %cst_203 = arith.constant dense<0.000000e+00> : vector<96xf32>
    %369 = vector.multi_reduction <add>, %366, %cst_203 [0] : vector<16x96xf32> to vector<96xf32>
    %370 = vector.shape_cast %369 : vector<96xf32> to vector<1x96xf32>
    %cst_204 = arith.constant 6.250000e-02 : f32
    %371 = vector.broadcast %cst_204 : f32 to vector<1x96xf32>
    %372 = arith.mulf %370, %371 : vector<1x96xf32>
    %373 = arith.truncf %372 : vector<1x96xf32> to vector<1x96xbf16>
    %c0_205 = arith.constant 0 : index
    %c0_206 = arith.constant 0 : index
    %374 = vector.load %arg19[%c0_205, %c0_206] : memref<96x24xbf16, #tpu.memory_space<vmem>>, vector<96x24xbf16>
    %cst_207 = arith.constant dense<0.000000e+00> : vector<1x24xf32>
    %375 = tpu.matmul %373, %374, %cst_207 {dimension_numbers = #tpu.dot_dimension_numbers<[1], [0], [0], [1], [0, 0, 1, 1], [], []>} : vector<1x96xbf16>, vector<96x24xbf16>, vector<1x24xf32> -> vector<1x24xf32>
    %376 = arith.addf %375, %367 : vector<1x24xf32>
    %cst_208 = arith.constant 0.000000e+00 : f32
    %377 = vector.broadcast %cst_208 : f32 to vector<1x24xf32>
    %378 = arith.maximumf %376, %377 : vector<1x24xf32>
    %379 = arith.truncf %378 : vector<1x24xf32> to vector<1x24xbf16>
    %c0_209 = arith.constant 0 : index
    %c0_210 = arith.constant 0 : index
    %380 = vector.load %arg20[%c0_209, %c0_210] : memref<24x96xbf16, #tpu.memory_space<vmem>>, vector<24x96xbf16>
    %cst_211 = arith.constant dense<0.000000e+00> : vector<1x96xf32>
    %381 = tpu.matmul %379, %380, %cst_211 {dimension_numbers = #tpu.dot_dimension_numbers<[1], [0], [0], [1], [0, 0, 1, 1], [], []>} : vector<1x24xbf16>, vector<24x96xbf16>, vector<1x96xf32> -> vector<1x96xf32>
    %382 = arith.addf %381, %368 : vector<1x96xf32>
    %cst_212 = arith.constant 3.000000e+00 : f32
    %383 = vector.broadcast %cst_212 : f32 to vector<1x96xf32>
    %384 = arith.addf %382, %383 : vector<1x96xf32>
    %cst_213 = arith.constant 0.000000e+00 : f32
    %cst_214 = arith.constant 6.000000e+00 : f32
    %385 = vector.broadcast %cst_213 : f32 to vector<1x96xf32>
    %386 = arith.maximumf %385, %384 : vector<1x96xf32>
    %387 = vector.broadcast %cst_214 : f32 to vector<1x96xf32>
    %388 = arith.minimumf %387, %386 : vector<1x96xf32>
    %cst_215 = arith.constant 0.166666672 : f32
    %389 = vector.broadcast %cst_215 : f32 to vector<1x96xf32>
    %390 = arith.mulf %388, %389 : vector<1x96xf32>
    %391 = vector.broadcast %390 : vector<1x96xf32> to vector<16x96xf32>
    %392 = arith.mulf %366, %391 : vector<16x96xf32>
    %393 = arith.truncf %392 : vector<16x96xf32> to vector<16x96xbf16>
    %c0_216 = arith.constant 0 : index
    %c0_217 = arith.constant 0 : index
    %394 = vector.load %arg21[%c0_216, %c0_217] : memref<96x40xbf16, #tpu.memory_space<vmem>>, vector<96x40xbf16>
    %cst_218 = arith.constant dense<0.000000e+00> : vector<16x40xf32>
    %395 = tpu.matmul %393, %394, %cst_218 {dimension_numbers = #tpu.dot_dimension_numbers<[1], [0], [0], [1], [0, 0, 1, 1], [], []>} : vector<16x96xbf16>, vector<96x40xbf16>, vector<16x40xf32> -> vector<16x40xf32>
    %c0_219 = arith.constant 0 : index
    %c1664 = arith.constant 1664 : index
    %396 = vector.load %arg7[%c0_219, %c1664] : memref<1x3456xf32, #tpu.memory_space<vmem>>, vector<1x40xf32>
    %397 = vector.broadcast %396 : vector<1x40xf32> to vector<16x40xf32>
    %398 = arith.addf %395, %397 : vector<16x40xf32>
    %399 = arith.truncf %398 : vector<16x40xf32> to vector<16x40xbf16>
    %c0_220 = arith.constant 0 : index
    %c0_221 = arith.constant 0 : index
    %400 = vector.load %arg22[%c0_220, %c0_221] : memref<40x120xbf16, #tpu.memory_space<vmem>>, vector<40x120xbf16>
    %cst_222 = arith.constant dense<0.000000e+00> : vector<16x120xf32>
    %401 = tpu.matmul %399, %400, %cst_222 {dimension_numbers = #tpu.dot_dimension_numbers<[1], [0], [0], [1], [0, 0, 1, 1], [], []>} : vector<16x40xbf16>, vector<40x120xbf16>, vector<16x120xf32> -> vector<16x120xf32>
    %c0_223 = arith.constant 0 : index
    %c1792 = arith.constant 1792 : index
    %402 = vector.load %arg7[%c0_223, %c1792] : memref<1x3456xf32, #tpu.memory_space<vmem>>, vector<1x120xf32>
    %403 = vector.broadcast %402 : vector<1x120xf32> to vector<16x120xf32>
    %404 = arith.addf %401, %403 : vector<16x120xf32>
    %cst_224 = arith.constant 3.000000e+00 : f32
    %405 = vector.broadcast %cst_224 : f32 to vector<16x120xf32>
    %406 = arith.addf %404, %405 : vector<16x120xf32>
    %cst_225 = arith.constant 0.000000e+00 : f32
    %cst_226 = arith.constant 6.000000e+00 : f32
    %407 = vector.broadcast %cst_225 : f32 to vector<16x120xf32>
    %408 = arith.maximumf %407, %406 : vector<16x120xf32>
    %409 = vector.broadcast %cst_226 : f32 to vector<16x120xf32>
    %410 = arith.minimumf %409, %408 : vector<16x120xf32>
    %411 = arith.mulf %404, %410 : vector<16x120xf32>
    %cst_227 = arith.constant 0.166666672 : f32
    %412 = vector.broadcast %cst_227 : f32 to vector<16x120xf32>
    %413 = arith.mulf %411, %412 : vector<16x120xf32>
    %c4_228 = arith.constant 4 : index
    %c0_229 = arith.constant 0 : index
    %414 = vector.load %arg23[%c4_228, %c0_229] : memref<9x120xf32, #tpu.memory_space<vmem>>, vector<1x120xf32>
    %415 = vector.broadcast %414 : vector<1x120xf32> to vector<16x120xf32>
    %416 = arith.mulf %413, %415 : vector<16x120xf32>
    %c5_i32 = arith.constant 5 : i32
    %417 = tpu.dynamic_rotate %413 by %c5_i32 dim 0 : vector<16x120xf32>, i32 -> vector<16x120xf32>
    %c0_230 = arith.constant 0 : index
    %c0_231 = arith.constant 0 : index
    %418 = vector.load %arg4[%c0_230, %c0_231] : memref<16x9xf32, #tpu.memory_space<vmem>>, vector<16x1xf32>
    %419 = vector.broadcast %418 : vector<16x1xf32> to vector<16x120xf32>
    %420 = arith.mulf %417, %419 : vector<16x120xf32>
    %c0_232 = arith.constant 0 : index
    %c0_233 = arith.constant 0 : index
    %421 = vector.load %arg23[%c0_232, %c0_233] : memref<9x120xf32, #tpu.memory_space<vmem>>, vector<1x120xf32>
    %422 = vector.broadcast %421 : vector<1x120xf32> to vector<16x120xf32>
    %423 = arith.mulf %420, %422 : vector<16x120xf32>
    %424 = arith.addf %416, %423 : vector<16x120xf32>
    %c4_i32 = arith.constant 4 : i32
    %425 = tpu.dynamic_rotate %413 by %c4_i32 dim 0 : vector<16x120xf32>, i32 -> vector<16x120xf32>
    %c0_234 = arith.constant 0 : index
    %c1_235 = arith.constant 1 : index
    %426 = vector.load %arg4[%c0_234, %c1_235] : memref<16x9xf32, #tpu.memory_space<vmem>>, vector<16x1xf32>
    %427 = vector.broadcast %426 : vector<16x1xf32> to vector<16x120xf32>
    %428 = arith.mulf %425, %427 : vector<16x120xf32>
    %c1_236 = arith.constant 1 : index
    %c0_237 = arith.constant 0 : index
    %429 = vector.load %arg23[%c1_236, %c0_237] : memref<9x120xf32, #tpu.memory_space<vmem>>, vector<1x120xf32>
    %430 = vector.broadcast %429 : vector<1x120xf32> to vector<16x120xf32>
    %431 = arith.mulf %428, %430 : vector<16x120xf32>
    %432 = arith.addf %424, %431 : vector<16x120xf32>
    %c3_i32 = arith.constant 3 : i32
    %433 = tpu.dynamic_rotate %413 by %c3_i32 dim 0 : vector<16x120xf32>, i32 -> vector<16x120xf32>
    %c0_238 = arith.constant 0 : index
    %c2_239 = arith.constant 2 : index
    %434 = vector.load %arg4[%c0_238, %c2_239] : memref<16x9xf32, #tpu.memory_space<vmem>>, vector<16x1xf32>
    %435 = vector.broadcast %434 : vector<16x1xf32> to vector<16x120xf32>
    %436 = arith.mulf %433, %435 : vector<16x120xf32>
    %c2_240 = arith.constant 2 : index
    %c0_241 = arith.constant 0 : index
    %437 = vector.load %arg23[%c2_240, %c0_241] : memref<9x120xf32, #tpu.memory_space<vmem>>, vector<1x120xf32>
    %438 = vector.broadcast %437 : vector<1x120xf32> to vector<16x120xf32>
    %439 = arith.mulf %436, %438 : vector<16x120xf32>
    %440 = arith.addf %432, %439 : vector<16x120xf32>
    %c1_i32_242 = arith.constant 1 : i32
    %441 = tpu.dynamic_rotate %413 by %c1_i32_242 dim 0 : vector<16x120xf32>, i32 -> vector<16x120xf32>
    %c0_243 = arith.constant 0 : index
    %c3_244 = arith.constant 3 : index
    %442 = vector.load %arg4[%c0_243, %c3_244] : memref<16x9xf32, #tpu.memory_space<vmem>>, vector<16x1xf32>
    %443 = vector.broadcast %442 : vector<16x1xf32> to vector<16x120xf32>
    %444 = arith.mulf %441, %443 : vector<16x120xf32>
    %c3_245 = arith.constant 3 : index
    %c0_246 = arith.constant 0 : index
    %445 = vector.load %arg23[%c3_245, %c0_246] : memref<9x120xf32, #tpu.memory_space<vmem>>, vector<1x120xf32>
    %446 = vector.broadcast %445 : vector<1x120xf32> to vector<16x120xf32>
    %447 = arith.mulf %444, %446 : vector<16x120xf32>
    %448 = arith.addf %440, %447 : vector<16x120xf32>
    %c15_i32_247 = arith.constant 15 : i32
    %449 = tpu.dynamic_rotate %413 by %c15_i32_247 dim 0 : vector<16x120xf32>, i32 -> vector<16x120xf32>
    %c0_248 = arith.constant 0 : index
    %c5_249 = arith.constant 5 : index
    %450 = vector.load %arg4[%c0_248, %c5_249] : memref<16x9xf32, #tpu.memory_space<vmem>>, vector<16x1xf32>
    %451 = vector.broadcast %450 : vector<16x1xf32> to vector<16x120xf32>
    %452 = arith.mulf %449, %451 : vector<16x120xf32>
    %c5_250 = arith.constant 5 : index
    %c0_251 = arith.constant 0 : index
    %453 = vector.load %arg23[%c5_250, %c0_251] : memref<9x120xf32, #tpu.memory_space<vmem>>, vector<1x120xf32>
    %454 = vector.broadcast %453 : vector<1x120xf32> to vector<16x120xf32>
    %455 = arith.mulf %452, %454 : vector<16x120xf32>
    %456 = arith.addf %448, %455 : vector<16x120xf32>
    %c13_i32 = arith.constant 13 : i32
    %457 = tpu.dynamic_rotate %413 by %c13_i32 dim 0 : vector<16x120xf32>, i32 -> vector<16x120xf32>
    %c0_252 = arith.constant 0 : index
    %c6_253 = arith.constant 6 : index
    %458 = vector.load %arg4[%c0_252, %c6_253] : memref<16x9xf32, #tpu.memory_space<vmem>>, vector<16x1xf32>
    %459 = vector.broadcast %458 : vector<16x1xf32> to vector<16x120xf32>
    %460 = arith.mulf %457, %459 : vector<16x120xf32>
    %c6_254 = arith.constant 6 : index
    %c0_255 = arith.constant 0 : index
    %461 = vector.load %arg23[%c6_254, %c0_255] : memref<9x120xf32, #tpu.memory_space<vmem>>, vector<1x120xf32>
    %462 = vector.broadcast %461 : vector<1x120xf32> to vector<16x120xf32>
    %463 = arith.mulf %460, %462 : vector<16x120xf32>
    %464 = arith.addf %456, %463 : vector<16x120xf32>
    %c12_i32 = arith.constant 12 : i32
    %465 = tpu.dynamic_rotate %413 by %c12_i32 dim 0 : vector<16x120xf32>, i32 -> vector<16x120xf32>
    %c0_256 = arith.constant 0 : index
    %c7_257 = arith.constant 7 : index
    %466 = vector.load %arg4[%c0_256, %c7_257] : memref<16x9xf32, #tpu.memory_space<vmem>>, vector<16x1xf32>
    %467 = vector.broadcast %466 : vector<16x1xf32> to vector<16x120xf32>
    %468 = arith.mulf %465, %467 : vector<16x120xf32>
    %c7_258 = arith.constant 7 : index
    %c0_259 = arith.constant 0 : index
    %469 = vector.load %arg23[%c7_258, %c0_259] : memref<9x120xf32, #tpu.memory_space<vmem>>, vector<1x120xf32>
    %470 = vector.broadcast %469 : vector<1x120xf32> to vector<16x120xf32>
    %471 = arith.mulf %468, %470 : vector<16x120xf32>
    %472 = arith.addf %464, %471 : vector<16x120xf32>
    %c11_i32 = arith.constant 11 : i32
    %473 = tpu.dynamic_rotate %413 by %c11_i32 dim 0 : vector<16x120xf32>, i32 -> vector<16x120xf32>
    %c0_260 = arith.constant 0 : index
    %c8_261 = arith.constant 8 : index
    %474 = vector.load %arg4[%c0_260, %c8_261] : memref<16x9xf32, #tpu.memory_space<vmem>>, vector<16x1xf32>
    %475 = vector.broadcast %474 : vector<16x1xf32> to vector<16x120xf32>
    %476 = arith.mulf %473, %475 : vector<16x120xf32>
    %c8_262 = arith.constant 8 : index
    %c0_263 = arith.constant 0 : index
    %477 = vector.load %arg23[%c8_262, %c0_263] : memref<9x120xf32, #tpu.memory_space<vmem>>, vector<1x120xf32>
    %478 = vector.broadcast %477 : vector<1x120xf32> to vector<16x120xf32>
    %479 = arith.mulf %476, %478 : vector<16x120xf32>
    %480 = arith.addf %472, %479 : vector<16x120xf32>
    %c0_264 = arith.constant 0 : index
    %c1920 = arith.constant 1920 : index
    %481 = vector.load %arg7[%c0_264, %c1920] : memref<1x3456xf32, #tpu.memory_space<vmem>>, vector<1x120xf32>
    %482 = vector.broadcast %481 : vector<1x120xf32> to vector<16x120xf32>
    %483 = arith.addf %480, %482 : vector<16x120xf32>
    %cst_265 = arith.constant 3.000000e+00 : f32
    %484 = vector.broadcast %cst_265 : f32 to vector<16x120xf32>
    %485 = arith.addf %483, %484 : vector<16x120xf32>
    %cst_266 = arith.constant 0.000000e+00 : f32
    %cst_267 = arith.constant 6.000000e+00 : f32
    %486 = vector.broadcast %cst_266 : f32 to vector<16x120xf32>
    %487 = arith.maximumf %486, %485 : vector<16x120xf32>
    %488 = vector.broadcast %cst_267 : f32 to vector<16x120xf32>
    %489 = arith.minimumf %488, %487 : vector<16x120xf32>
    %490 = arith.mulf %483, %489 : vector<16x120xf32>
    %cst_268 = arith.constant 0.166666672 : f32
    %491 = vector.broadcast %cst_268 : f32 to vector<16x120xf32>
    %492 = arith.mulf %490, %491 : vector<16x120xf32>
    %c0_269 = arith.constant 0 : index
    %c2048 = arith.constant 2048 : index
    %493 = vector.load %arg7[%c0_269, %c2048] : memref<1x3456xf32, #tpu.memory_space<vmem>>, vector<1x32xf32>
    %c0_270 = arith.constant 0 : index
    %c2176 = arith.constant 2176 : index
    %494 = vector.load %arg7[%c0_270, %c2176] : memref<1x3456xf32, #tpu.memory_space<vmem>>, vector<1x120xf32>
    %cst_271 = arith.constant dense<0.000000e+00> : vector<120xf32>
    %495 = vector.multi_reduction <add>, %492, %cst_271 [0] : vector<16x120xf32> to vector<120xf32>
    %496 = vector.shape_cast %495 : vector<120xf32> to vector<1x120xf32>
    %cst_272 = arith.constant 6.250000e-02 : f32
    %497 = vector.broadcast %cst_272 : f32 to vector<1x120xf32>
    %498 = arith.mulf %496, %497 : vector<1x120xf32>
    %499 = arith.truncf %498 : vector<1x120xf32> to vector<1x120xbf16>
    %c0_273 = arith.constant 0 : index
    %c0_274 = arith.constant 0 : index
    %500 = vector.load %arg24[%c0_273, %c0_274] : memref<120x32xbf16, #tpu.memory_space<vmem>>, vector<120x32xbf16>
    %cst_275 = arith.constant dense<0.000000e+00> : vector<1x32xf32>
    %501 = tpu.matmul %499, %500, %cst_275 {dimension_numbers = #tpu.dot_dimension_numbers<[1], [0], [0], [1], [0, 0, 1, 1], [], []>} : vector<1x120xbf16>, vector<120x32xbf16>, vector<1x32xf32> -> vector<1x32xf32>
    %502 = arith.addf %501, %493 : vector<1x32xf32>
    %cst_276 = arith.constant 0.000000e+00 : f32
    %503 = vector.broadcast %cst_276 : f32 to vector<1x32xf32>
    %504 = arith.maximumf %502, %503 : vector<1x32xf32>
    %505 = arith.truncf %504 : vector<1x32xf32> to vector<1x32xbf16>
    %c0_277 = arith.constant 0 : index
    %c0_278 = arith.constant 0 : index
    %506 = vector.load %arg25[%c0_277, %c0_278] : memref<32x120xbf16, #tpu.memory_space<vmem>>, vector<32x120xbf16>
    %cst_279 = arith.constant dense<0.000000e+00> : vector<1x120xf32>
    %507 = tpu.matmul %505, %506, %cst_279 {dimension_numbers = #tpu.dot_dimension_numbers<[1], [0], [0], [1], [0, 0, 1, 1], [], []>} : vector<1x32xbf16>, vector<32x120xbf16>, vector<1x120xf32> -> vector<1x120xf32>
    %508 = arith.addf %507, %494 : vector<1x120xf32>
    %cst_280 = arith.constant 3.000000e+00 : f32
    %509 = vector.broadcast %cst_280 : f32 to vector<1x120xf32>
    %510 = arith.addf %508, %509 : vector<1x120xf32>
    %cst_281 = arith.constant 0.000000e+00 : f32
    %cst_282 = arith.constant 6.000000e+00 : f32
    %511 = vector.broadcast %cst_281 : f32 to vector<1x120xf32>
    %512 = arith.maximumf %511, %510 : vector<1x120xf32>
    %513 = vector.broadcast %cst_282 : f32 to vector<1x120xf32>
    %514 = arith.minimumf %513, %512 : vector<1x120xf32>
    %cst_283 = arith.constant 0.166666672 : f32
    %515 = vector.broadcast %cst_283 : f32 to vector<1x120xf32>
    %516 = arith.mulf %514, %515 : vector<1x120xf32>
    %517 = vector.broadcast %516 : vector<1x120xf32> to vector<16x120xf32>
    %518 = arith.mulf %492, %517 : vector<16x120xf32>
    %519 = arith.truncf %518 : vector<16x120xf32> to vector<16x120xbf16>
    %c0_284 = arith.constant 0 : index
    %c0_285 = arith.constant 0 : index
    %520 = vector.load %arg26[%c0_284, %c0_285] : memref<120x40xbf16, #tpu.memory_space<vmem>>, vector<120x40xbf16>
    %cst_286 = arith.constant dense<0.000000e+00> : vector<16x40xf32>
    %521 = tpu.matmul %519, %520, %cst_286 {dimension_numbers = #tpu.dot_dimension_numbers<[1], [0], [0], [1], [0, 0, 1, 1], [], []>} : vector<16x120xbf16>, vector<120x40xbf16>, vector<16x40xf32> -> vector<16x40xf32>
    %522 = arith.addf %398, %521 : vector<16x40xf32>
    %c0_287 = arith.constant 0 : index
    %c2304 = arith.constant 2304 : index
    %523 = vector.load %arg7[%c0_287, %c2304] : memref<1x3456xf32, #tpu.memory_space<vmem>>, vector<1x40xf32>
    %524 = vector.broadcast %523 : vector<1x40xf32> to vector<16x40xf32>
    %525 = arith.addf %522, %524 : vector<16x40xf32>
    %526 = arith.truncf %525 : vector<16x40xf32> to vector<16x40xbf16>
    %c0_288 = arith.constant 0 : index
    %c0_289 = arith.constant 0 : index
    %527 = vector.load %arg27[%c0_288, %c0_289] : memref<40x960xbf16, #tpu.memory_space<vmem>>, vector<40x960xbf16>
    %cst_290 = arith.constant dense<0.000000e+00> : vector<16x960xf32>
    %528 = tpu.matmul %526, %527, %cst_290 {dimension_numbers = #tpu.dot_dimension_numbers<[1], [0], [0], [1], [0, 0, 1, 1], [], []>} : vector<16x40xbf16>, vector<40x960xbf16>, vector<16x960xf32> -> vector<16x960xf32>
    %c0_291 = arith.constant 0 : index
    %c2432 = arith.constant 2432 : index
    %529 = vector.load %arg7[%c0_291, %c2432] : memref<1x3456xf32, #tpu.memory_space<vmem>>, vector<1x960xf32>
    %530 = vector.broadcast %529 : vector<1x960xf32> to vector<16x960xf32>
    %531 = arith.addf %528, %530 : vector<16x960xf32>
    %cst_292 = arith.constant 3.000000e+00 : f32
    %532 = vector.broadcast %cst_292 : f32 to vector<16x960xf32>
    %533 = arith.addf %531, %532 : vector<16x960xf32>
    %cst_293 = arith.constant 0.000000e+00 : f32
    %cst_294 = arith.constant 6.000000e+00 : f32
    %534 = vector.broadcast %cst_293 : f32 to vector<16x960xf32>
    %535 = arith.maximumf %534, %533 : vector<16x960xf32>
    %536 = vector.broadcast %cst_294 : f32 to vector<16x960xf32>
    %537 = arith.minimumf %536, %535 : vector<16x960xf32>
    %538 = arith.mulf %531, %537 : vector<16x960xf32>
    %cst_295 = arith.constant 0.166666672 : f32
    %539 = vector.broadcast %cst_295 : f32 to vector<16x960xf32>
    %540 = arith.mulf %538, %539 : vector<16x960xf32>
    %cst_296 = arith.constant dense<0.000000e+00> : vector<960xf32>
    %541 = vector.multi_reduction <add>, %540, %cst_296 [0] : vector<16x960xf32> to vector<960xf32>
    %542 = vector.shape_cast %541 : vector<960xf32> to vector<1x960xf32>
    %cst_297 = arith.constant 6.250000e-02 : f32
    %543 = vector.broadcast %cst_297 : f32 to vector<1x960xf32>
    %544 = arith.mulf %542, %543 : vector<1x960xf32>
    %545 = vector.shape_cast %544 : vector<1x960xf32> to vector<1x960xf32>
    %546 = vector.broadcast %545 : vector<1x960xf32> to vector<8x960xf32>
    %c0_298 = arith.constant 0 : index
    %c0_299 = arith.constant 0 : index
    %547 = vector.load %arg28[%c0_298, %c0_299] : memref<8x960xf32, #tpu.memory_space<vmem>>, vector<8x960xf32>
    tpu.vector_store %arg28[%c0_298, %c0_299], %546 {strides = array<i32>} : memref<8x960xf32, #tpu.memory_space<vmem>>, vector<8x960xf32>,
    return
  }
  func.func @transform_0(%arg0: i32) -> (i32, i32) {
    %c0_i32 = arith.constant 0 : i32
    %c0_i32_0 = arith.constant 0 : i32
    return %arg0, %c0_i32 : i32, i32
  }
  func.func @transform_1(%arg0: i32) -> (i32, i32) {
    %c0_i32 = arith.constant 0 : i32
    %c0_i32_0 = arith.constant 0 : i32
    %c0_i32_1 = arith.constant 0 : i32
    return %c0_i32, %c0_i32_0 : i32, i32
  }
  func.func @transform_2(%arg0: i32) -> (i32, i32) {
    %c0_i32 = arith.constant 0 : i32
    %c0_i32_0 = arith.constant 0 : i32
    %c0_i32_1 = arith.constant 0 : i32
    return %c0_i32, %c0_i32_0 : i32, i32
  }
  func.func @transform_3(%arg0: i32) -> (i32, i32) {
    %c0_i32 = arith.constant 0 : i32
    %c0_i32_0 = arith.constant 0 : i32
    %c0_i32_1 = arith.constant 0 : i32
    return %c0_i32, %c0_i32_0 : i32, i32
  }
  func.func @transform_4(%arg0: i32) -> (i32, i32) {
    %c0_i32 = arith.constant 0 : i32
    %c0_i32_0 = arith.constant 0 : i32
    %c0_i32_1 = arith.constant 0 : i32
    return %c0_i32, %c0_i32_0 : i32, i32
  }
  func.func @transform_5(%arg0: i32) -> (i32, i32) {
    %c0_i32 = arith.constant 0 : i32
    %c0_i32_0 = arith.constant 0 : i32
    %c0_i32_1 = arith.constant 0 : i32
    return %c0_i32, %c0_i32_0 : i32, i32
  }
  func.func @transform_6(%arg0: i32) -> (i32, i32) {
    %c0_i32 = arith.constant 0 : i32
    %c0_i32_0 = arith.constant 0 : i32
    %c0_i32_1 = arith.constant 0 : i32
    return %c0_i32, %c0_i32_0 : i32, i32
  }
  func.func @transform_7(%arg0: i32) -> (i32, i32) {
    %c0_i32 = arith.constant 0 : i32
    %c0_i32_0 = arith.constant 0 : i32
    %c0_i32_1 = arith.constant 0 : i32
    return %c0_i32, %c0_i32_0 : i32, i32
  }
  func.func @transform_8(%arg0: i32) -> (i32, i32) {
    %c0_i32 = arith.constant 0 : i32
    %c0_i32_0 = arith.constant 0 : i32
    %c0_i32_1 = arith.constant 0 : i32
    return %c0_i32, %c0_i32_0 : i32, i32
  }
  func.func @transform_9(%arg0: i32) -> (i32, i32) {
    %c0_i32 = arith.constant 0 : i32
    %c0_i32_0 = arith.constant 0 : i32
    %c0_i32_1 = arith.constant 0 : i32
    return %c0_i32, %c0_i32_0 : i32, i32
  }
  func.func @transform_10(%arg0: i32) -> (i32, i32) {
    %c0_i32 = arith.constant 0 : i32
    %c0_i32_0 = arith.constant 0 : i32
    %c0_i32_1 = arith.constant 0 : i32
    return %c0_i32, %c0_i32_0 : i32, i32
  }
  func.func @transform_11(%arg0: i32) -> (i32, i32) {
    %c0_i32 = arith.constant 0 : i32
    %c0_i32_0 = arith.constant 0 : i32
    %c0_i32_1 = arith.constant 0 : i32
    return %c0_i32, %c0_i32_0 : i32, i32
  }
  func.func @transform_12(%arg0: i32) -> (i32, i32) {
    %c0_i32 = arith.constant 0 : i32
    %c0_i32_0 = arith.constant 0 : i32
    %c0_i32_1 = arith.constant 0 : i32
    return %c0_i32, %c0_i32_0 : i32, i32
  }
  func.func @transform_13(%arg0: i32) -> (i32, i32) {
    %c0_i32 = arith.constant 0 : i32
    %c0_i32_0 = arith.constant 0 : i32
    %c0_i32_1 = arith.constant 0 : i32
    return %c0_i32, %c0_i32_0 : i32, i32
  }
  func.func @transform_14(%arg0: i32) -> (i32, i32) {
    %c0_i32 = arith.constant 0 : i32
    %c0_i32_0 = arith.constant 0 : i32
    %c0_i32_1 = arith.constant 0 : i32
    return %c0_i32, %c0_i32_0 : i32, i32
  }
  func.func @transform_15(%arg0: i32) -> (i32, i32) {
    %c0_i32 = arith.constant 0 : i32
    %c0_i32_0 = arith.constant 0 : i32
    %c0_i32_1 = arith.constant 0 : i32
    return %c0_i32, %c0_i32_0 : i32, i32
  }
  func.func @transform_16(%arg0: i32) -> (i32, i32) {
    %c0_i32 = arith.constant 0 : i32
    %c0_i32_0 = arith.constant 0 : i32
    %c0_i32_1 = arith.constant 0 : i32
    return %c0_i32, %c0_i32_0 : i32, i32
  }
  func.func @transform_17(%arg0: i32) -> (i32, i32) {
    %c0_i32 = arith.constant 0 : i32
    %c0_i32_0 = arith.constant 0 : i32
    %c0_i32_1 = arith.constant 0 : i32
    return %c0_i32, %c0_i32_0 : i32, i32
  }
  func.func @transform_18(%arg0: i32) -> (i32, i32) {
    %c0_i32 = arith.constant 0 : i32
    %c0_i32_0 = arith.constant 0 : i32
    %c0_i32_1 = arith.constant 0 : i32
    return %c0_i32, %c0_i32_0 : i32, i32
  }
  func.func @transform_19(%arg0: i32) -> (i32, i32) {
    %c0_i32 = arith.constant 0 : i32
    %c0_i32_0 = arith.constant 0 : i32
    %c0_i32_1 = arith.constant 0 : i32
    return %c0_i32, %c0_i32_0 : i32, i32
  }
  func.func @transform_20(%arg0: i32) -> (i32, i32) {
    %c0_i32 = arith.constant 0 : i32
    %c0_i32_0 = arith.constant 0 : i32
    %c0_i32_1 = arith.constant 0 : i32
    return %c0_i32, %c0_i32_0 : i32, i32
  }
  func.func @transform_21(%arg0: i32) -> (i32, i32) {
    %c0_i32 = arith.constant 0 : i32
    %c0_i32_0 = arith.constant 0 : i32
    %c0_i32_1 = arith.constant 0 : i32
    return %c0_i32, %c0_i32_0 : i32, i32
  }
  func.func @transform_22(%arg0: i32) -> (i32, i32) {
    %c0_i32 = arith.constant 0 : i32
    %c0_i32_0 = arith.constant 0 : i32
    %c0_i32_1 = arith.constant 0 : i32
    return %c0_i32, %c0_i32_0 : i32, i32
  }
  func.func @transform_23(%arg0: i32) -> (i32, i32) {
    %c0_i32 = arith.constant 0 : i32
    %c0_i32_0 = arith.constant 0 : i32
    %c0_i32_1 = arith.constant 0 : i32
    return %c0_i32, %c0_i32_0 : i32, i32
  }
  func.func @transform_24(%arg0: i32) -> (i32, i32) {
    %c0_i32 = arith.constant 0 : i32
    %c0_i32_0 = arith.constant 0 : i32
    %c0_i32_1 = arith.constant 0 : i32
    return %c0_i32, %c0_i32_0 : i32, i32
  }
  func.func @transform_25(%arg0: i32) -> (i32, i32) {
    %c0_i32 = arith.constant 0 : i32
    %c0_i32_0 = arith.constant 0 : i32
    %c0_i32_1 = arith.constant 0 : i32
    return %c0_i32, %c0_i32_0 : i32, i32
  }
  func.func @transform_26(%arg0: i32) -> (i32, i32) {
    %c0_i32 = arith.constant 0 : i32
    %c0_i32_0 = arith.constant 0 : i32
    %c0_i32_1 = arith.constant 0 : i32
    return %c0_i32, %c0_i32_0 : i32, i32
  }
  func.func @transform_27(%arg0: i32) -> (i32, i32) {
    %c0_i32 = arith.constant 0 : i32
    %c0_i32_0 = arith.constant 0 : i32
    return %arg0, %c0_i32 : i32, i32
  }
}

</mosaic_0001>

<llo_original>
// kernel: mobilenet_forward.1
$region0: #{mobilenet_forward.1}
  #allocation0 [shape = 'u32[]', space=smem, size = 0x4, offset = 0x4, fixed_abs, tag = 'smem constant byte address 0x4 - core index']
  #allocation1 [shape = 'u32[144,128]{1,0:T(1,128)}', space=vmem, size = 0x12000, scoped, tag = 'internal scratch']
  %s0 = inlined_call_operand.vmem [shape: bf16[512,27], index: 0, kind: input, shape index: {}]
  %s1 = inlined_call_operand.vmem [shape: f32[256,9], index: 1, kind: input, shape index: {}]
  %s2 = inlined_call_operand.vmem [shape: f32[64,9], index: 2, kind: input, shape index: {}]
  %s3 = inlined_call_operand.vmem [shape: f32[16,9], index: 3, kind: input, shape index: {}]
  %s4 = inlined_call_operand.vmem [shape: bf16[64,256], index: 4, kind: input, shape index: {}]
  %s5 = inlined_call_operand.vmem [shape: bf16[16,64], index: 5, kind: input, shape index: {}]
  %s6 = inlined_call_operand.vmem [shape: f32[1,3456], index: 6, kind: input, shape index: {}]
  %s7 = inlined_call_operand.vmem [shape: bf16[27,16], index: 7, kind: input, shape index: {}]
  %s8 = inlined_call_operand.vmem [shape: f32[9,16], index: 8, kind: input, shape index: {}]
  %s9 = inlined_call_operand.vmem [shape: bf16[16,16], index: 9, kind: input, shape index: {}]
  %s10 = inlined_call_operand.vmem [shape: bf16[16,64], index: 10, kind: input, shape index: {}]
  %s11 = inlined_call_operand.vmem [shape: f32[9,64], index: 11, kind: input, shape index: {}]
  %s12 = inlined_call_operand.vmem [shape: bf16[64,24], index: 12, kind: input, shape index: {}]
  %s13 = inlined_call_operand.vmem [shape: bf16[24,72], index: 13, kind: input, shape index: {}]
  %s14 = inlined_call_operand.vmem [shape: f32[9,72], index: 14, kind: input, shape index: {}]
  %s15 = inlined_call_operand.vmem [shape: bf16[72,24], index: 15, kind: input, shape index: {}]
  %s16 = inlined_call_operand.vmem [shape: bf16[24,96], index: 16, kind: input, shape index: {}]
  %s17 = inlined_call_operand.vmem [shape: f32[9,96], index: 17, kind: input, shape index: {}]
  %s18 = inlined_call_operand.vmem [shape: bf16[96,24], index: 18, kind: input, shape index: {}]
  %s19 = inlined_call_operand.vmem [shape: bf16[24,96], index: 19, kind: input, shape index: {}]
  %s20 = inlined_call_operand.vmem [shape: bf16[96,40], index: 20, kind: input, shape index: {}]
  %s21 = inlined_call_operand.vmem [shape: bf16[40,120], index: 21, kind: input, shape index: {}]
  %s22 = inlined_call_operand.vmem [shape: f32[9,120], index: 22, kind: input, shape index: {}]
  %s23 = inlined_call_operand.vmem [shape: bf16[120,32], index: 23, kind: input, shape index: {}]
  %s24 = inlined_call_operand.vmem [shape: bf16[32,120], index: 24, kind: input, shape index: {}]
  %s25 = inlined_call_operand.vmem [shape: bf16[120,40], index: 25, kind: input, shape index: {}]
  %s26 = inlined_call_operand.vmem [shape: bf16[40,960], index: 26, kind: input, shape index: {}]
  %s27 = inlined_call_operand.vmem [shape: f32[16,960], index: 27, kind: output, shape index: {}]
  %s28 = sld [smem:[#allocation0]]
  $region141: #{mobilenet_forward.1} parent=0
    _
  %s30 = ssub.s32 1, %s28
  %s31 = scalar_select 0, %s30, %s28
  loop: start=0, step=1, limit=4
  $region2: #{mobilenet_forward.1} parent=0 // loop_pre_header
    _
  $region3: #{mobilenet_forward.1} parent=0 // loop_header
    %s33 = sphi 0, %s37
    %p34 = scmp.ge.s32.totalorder %s33, 4
    %s43 = sphi 0, %s45
    %s46 = sphi 0, %s43
    %s47 = sphi 0, %s46
    %s63 = sphi 0, %s47
    %s67 = sphi 0, %s67
    %s69 = sphi 0, %s67
    %s70 = sphi 0, %s69
    %s84 = sphi 0, %s70
    %s88 = sphi 0, %s88
    %s90 = sphi 0, %s88
    %s91 = sphi 0, %s90
    %s105 = sphi 0, %s91
    %s109 = sphi 0, %s109
    %s111 = sphi 0, %s109
    %s112 = sphi 0, %s111
    %s126 = sphi 0, %s112
    %s130 = sphi 0, %s130
    %s132 = sphi 0, %s130
    %s133 = sphi 0, %s132
    %s147 = sphi 0, %s133
    %s151 = sphi 0, %s151
    %s153 = sphi 0, %s151
    %s154 = sphi 0, %s153
    %s168 = sphi 0, %s154
    %s172 = sphi 0, %s172
    %s174 = sphi 0, %s172
    %s175 = sphi 0, %s174
    %s189 = sphi 0, %s175
    %s193 = sphi 0, %s193
    %s195 = sphi 0, %s193
    %s196 = sphi 0, %s195
    %s210 = sphi 0, %s196
    %s214 = sphi 0, %s214
    %s216 = sphi 0, %s214
    %s217 = sphi 0, %s216
    %s231 = sphi 0, %s217
    %s235 = sphi 0, %s235
    %s237 = sphi 0, %s235
    %s238 = sphi 0, %s237
    %s252 = sphi 0, %s238
    %s256 = sphi 0, %s256
    %s258 = sphi 0, %s256
    %s259 = sphi 0, %s258
    %s273 = sphi 0, %s259
    %s277 = sphi 0, %s277
    %s279 = sphi 0, %s277
    %s280 = sphi 0, %s279
    %s294 = sphi 0, %s280
    %s298 = sphi 0, %s298
    %s300 = sphi 0, %s298
    %s301 = sphi 0, %s300
    %s315 = sphi 0, %s301
    %s319 = sphi 0, %s319
    %s321 = sphi 0, %s319
    %s322 = sphi 0, %s321
    %s336 = sphi 0, %s322
    %s340 = sphi 0, %s340
    %s342 = sphi 0, %s340
    %s343 = sphi 0, %s342
    %s357 = sphi 0, %s343
    %s361 = sphi 0, %s361
    %s363 = sphi 0, %s361
    %s364 = sphi 0, %s363
    %s378 = sphi 0, %s364
    %s382 = sphi 0, %s382
    %s384 = sphi 0, %s382
    %s385 = sphi 0, %s384
    %s399 = sphi 0, %s385
    %s403 = sphi 0, %s403
    %s405 = sphi 0, %s403
    %s406 = sphi 0, %s405
    %s420 = sphi 0, %s406
    %s424 = sphi 0, %s424
    %s426 = sphi 0, %s424
    %s427 = sphi 0, %s426
    %s441 = sphi 0, %s427
    %s445 = sphi 0, %s445
    %s447 = sphi 0, %s445
    %s448 = sphi 0, %s447
    %s462 = sphi 0, %s448
    %s466 = sphi 0, %s466
    %s468 = sphi 0, %s466
    %s469 = sphi 0, %s468
    %s483 = sphi 0, %s469
    %s487 = sphi 0, %s487
    %s489 = sphi 0, %s487
    %s490 = sphi 0, %s489
    %s504 = sphi 0, %s490
    %s508 = sphi 0, %s508
    %s510 = sphi 0, %s508
    %s511 = sphi 0, %s510
    %s525 = sphi 0, %s511
    %s529 = sphi 0, %s529
    %s531 = sphi 0, %s529
    %s532 = sphi 0, %s531
    %s546 = sphi 0, %s532
    %s550 = sphi 0, %s550
    %s552 = sphi 0, %s550
    %s553 = sphi 0, %s552
    %s567 = sphi 0, %s553
    %s571 = sphi 0, %s571
    %s573 = sphi 0, %s571
    %s574 = sphi 0, %s573
    %s588 = sphi 0, %s574
    %s592 = sphi 0, %s592
    %s594 = sphi 0, %s592
    %s595 = sphi 0, %s594
    %s609 = sphi 0, %s595
    %s615 = sphi 0, %s617
    %s618 = sphi 0, %s615
    %s619 = sphi 0, %s618
    %s635 = sphi 0, %s619
  $region4: #{mobilenet_forward.1} parent=0 // loop_header_branch
    %36 = sbr.rel (%p34) target = $region8
  $region5: #{mobilenet_forward.1} parent=0 // loop_body
    %s38 = ssub.s32 %s33, 1
    %s39 = ssub.s32 %s33, 2
    %s40 = sadd.s32 %s33, 1
    %s41 = ssub.s32 %s33, %s40
    %p42 = scmp.eq.s32.totalorder %s41, 0
    %s44 = sadd.s32 %s43, 1
    %s45 = scalar_select %p42, %s43, %s44
    %p48 = pneg %p42
    %p49 = scmp.eq.s32.totalorder %s33, 1
    %p50 = por %p48, %p49
    %p51 = scmp.ne.s32.totalorder %s43, %s46
    %p52 = scmp.eq.s32.totalorder %s33, 0
    %p53 = por %p51, %p52
    %p54 = scmp.ne.s32.totalorder %s43, %s46
    %p55 = scmp.eq.s32.totalorder %s38, 1
    %p56 = por %p54, %p55
    %p57 = scmp.ne.s32.totalorder %s46, %s47
    %p58 = scmp.eq.s32.totalorder %s38, 0
    %p59 = por %p57, %p58
    %p60 = scmp.ne.s32.totalorder %s46, %s47
    %p61 = scmp.eq.s32.totalorder %s39, 1
    %p62 = por %p60, %p61
    %p64 = scmp.ne.s32.totalorder %s47, %s63
    %p65 = scmp.eq.s32.totalorder %s39, 0
    %p66 = por %p64, %p65
    %s68 = sadd.s32 %s67, 1
    %p71 = scmp.eq.s32.totalorder %s33, 1
    %p72 = scmp.ne.s32.totalorder %s67, %s69
    %p73 = scmp.eq.s32.totalorder %s33, 0
    %p74 = por %p72, %p73
    %p75 = scmp.ne.s32.totalorder %s67, %s69
    %p76 = scmp.eq.s32.totalorder %s38, 1
    %p77 = por %p75, %p76
    %p78 = scmp.ne.s32.totalorder %s69, %s70
    %p79 = scmp.eq.s32.totalorder %s38, 0
    %p80 = por %p78, %p79
    %p81 = scmp.ne.s32.totalorder %s69, %s70
    %p82 = scmp.eq.s32.totalorder %s39, 1
    %p83 = por %p81, %p82
    %p85 = scmp.ne.s32.totalorder %s70, %s84
    %p86 = scmp.eq.s32.totalorder %s39, 0
    %p87 = por %p85, %p86
    %s89 = sadd.s32 %s88, 1
    %p92 = scmp.eq.s32.totalorder %s33, 1
    %p93 = scmp.ne.s32.totalorder %s88, %s90
    %p94 = scmp.eq.s32.totalorder %s33, 0
    %p95 = por %p93, %p94
    %p96 = scmp.ne.s32.totalorder %s88, %s90
    %p97 = scmp.eq.s32.totalorder %s38, 1
    %p98 = por %p96, %p97
    %p99 = scmp.ne.s32.totalorder %s90, %s91
    %p100 = scmp.eq.s32.totalorder %s38, 0
    %p101 = por %p99, %p100
    %p102 = scmp.ne.s32.totalorder %s90, %s91
    %p103 = scmp.eq.s32.totalorder %s39, 1
    %p104 = por %p102, %p103
    %p106 = scmp.ne.s32.totalorder %s91, %s105
    %p107 = scmp.eq.s32.totalorder %s39, 0
    %p108 = por %p106, %p107
    %s110 = sadd.s32 %s109, 1
    %p113 = scmp.eq.s32.totalorder %s33, 1
    %p114 = scmp.ne.s32.totalorder %s109, %s111
    %p115 = scmp.eq.s32.totalorder %s33, 0
    %p116 = por %p114, %p115
    %p117 = scmp.ne.s32.totalorder %s109, %s111
    %p118 = scmp.eq.s32.totalorder %s38, 1
    %p119 = por %p117, %p118
    %p120 = scmp.ne.s32.totalorder %s111, %s112
    %p121 = scmp.eq.s32.totalorder %s38, 0
    %p122 = por %p120, %p121
    %p123 = scmp.ne.s32.totalorder %s111, %s112
    %p124 = scmp.eq.s32.totalorder %s39, 1
    %p125 = por %p123, %p124
    %p127 = scmp.ne.s32.totalorder %s112, %s126
    %p128 = scmp.eq.s32.totalorder %s39, 0
    %p129 = por %p127, %p128
    %s131 = sadd.s32 %s130, 1
    %p134 = scmp.eq.s32.totalorder %s33, 1
    %p135 = scmp.ne.s32.totalorder %s130, %s132
    %p136 = scmp.eq.s32.totalorder %s33, 0
    %p137 = por %p135, %p136
    %p138 = scmp.ne.s32.totalorder %s130, %s132
    %p139 = scmp.eq.s32.totalorder %s38, 1
    %p140 = por %p138, %p139
    %p141 = scmp.ne.s32.totalorder %s132, %s133
    %p142 = scmp.eq.s32.totalorder %s38, 0
    %p143 = por %p141, %p142
    %p144 = scmp.ne.s32.totalorder %s132, %s133
    %p145 = scmp.eq.s32.totalorder %s39, 1
    %p146 = por %p144, %p145
    %p148 = scmp.ne.s32.totalorder %s133, %s147
    %p149 = scmp.eq.s32.totalorder %s39, 0
    %p150 = por %p148, %p149
    %s152 = sadd.s32 %s151, 1
    %p155 = scmp.eq.s32.totalorder %s33, 1
    %p156 = scmp.ne.s32.totalorder %s151, %s153
    %p157 = scmp.eq.s32.totalorder %s33, 0
    %p158 = por %p156, %p157
    %p159 = scmp.ne.s32.totalorder %s151, %s153
    %p160 = scmp.eq.s32.totalorder %s38, 1
    %p161 = por %p159, %p160
    %p162 = scmp.ne.s32.totalorder %s153, %s154
    %p163 = scmp.eq.s32.totalorder %s38, 0
    %p164 = por %p162, %p163
    %p165 = scmp.ne.s32.totalorder %s153, %s154
    %p166 = scmp.eq.s32.totalorder %s39, 1
    %p167 = por %p165, %p166
    %p169 = scmp.ne.s32.totalorder %s154, %s168
    %p170 = scmp.eq.s32.totalorder %s39, 0
    %p171 = por %p169, %p170
    %s173 = sadd.s32 %s172, 1
    %p176 = scmp.eq.s32.totalorder %s33, 1
    %p177 = scmp.ne.s32.totalorder %s172, %s174
    %p178 = scmp.eq.s32.totalorder %s33, 0
    %p179 = por %p177, %p178
    %p180 = scmp.ne.s32.totalorder %s172, %s174
    %p181 = scmp.eq.s32.totalorder %s38, 1
    %p182 = por %p180, %p181
    %p183 = scmp.ne.s32.totalorder %s174, %s175
    %p184 = scmp.eq.s32.totalorder %s38, 0
    %p185 = por %p183, %p184
    %p186 = scmp.ne.s32.totalorder %s174, %s175
    %p187 = scmp.eq.s32.totalorder %s39, 1
    %p188 = por %p186, %p187
    %p190 = scmp.ne.s32.totalorder %s175, %s189
    %p191 = scmp.eq.s32.totalorder %s39, 0
    %p192 = por %p190, %p191
    %s194 = sadd.s32 %s193, 1
    %p197 = scmp.eq.s32.totalorder %s33, 1
    %p198 = scmp.ne.s32.totalorder %s193, %s195
    %p199 = scmp.eq.s32.totalorder %s33, 0
    %p200 = por %p198, %p199
    %p201 = scmp.ne.s32.totalorder %s193, %s195
    %p202 = scmp.eq.s32.totalorder %s38, 1
    %p203 = por %p201, %p202
    %p204 = scmp.ne.s32.totalorder %s195, %s196
    %p205 = scmp.eq.s32.totalorder %s38, 0
    %p206 = por %p204, %p205
    %p207 = scmp.ne.s32.totalorder %s195, %s196
    %p208 = scmp.eq.s32.totalorder %s39, 1
    %p209 = por %p207, %p208
    %p211 = scmp.ne.s32.totalorder %s196, %s210
    %p212 = scmp.eq.s32.totalorder %s39, 0
    %p213 = por %p211, %p212
    %s215 = sadd.s32 %s214, 1
    %p218 = scmp.eq.s32.totalorder %s33, 1
    %p219 = scmp.ne.s32.totalorder %s214, %s216
    %p220 = scmp.eq.s32.totalorder %s33, 0
    %p221 = por %p219, %p220
    %p222 = scmp.ne.s32.totalorder %s214, %s216
    %p223 = scmp.eq.s32.totalorder %s38, 1
    %p224 = por %p222, %p223
    %p225 = scmp.ne.s32.totalorder %s216, %s217
    %p226 = scmp.eq.s32.totalorder %s38, 0
    %p227 = por %p225, %p226
    %p228 = scmp.ne.s32.totalorder %s216, %s217
    %p229 = scmp.eq.s32.totalorder %s39, 1
    %p230 = por %p228, %p229
    %p232 = scmp.ne.s32.totalorder %s217, %s231
    %p233 = scmp.eq.s32.totalorder %s39, 0
    %p234 = por %p232, %p233
    %s236 = sadd.s32 %s235, 1
    %p239 = scmp.eq.s32.totalorder %s33, 1
    %p240 = scmp.ne.s32.totalorder %s235, %s237
    %p241 = scmp.eq.s32.totalorder %s33, 0
    %p242 = por %p240, %p241
    %p243 = scmp.ne.s32.totalorder %s235, %s237
    %p244 = scmp.eq.s32.totalorder %s38, 1
    %p245 = por %p243, %p244
    %p246 = scmp.ne.s32.totalorder %s237, %s238
    %p247 = scmp.eq.s32.totalorder %s38, 0
    %p248 = por %p246, %p247
    %p249 = scmp.ne.s32.totalorder %s237, %s238
    %p250 = scmp.eq.s32.totalorder %s39, 1
    %p251 = por %p249, %p250
    %p253 = scmp.ne.s32.totalorder %s238, %s252
    %p254 = scmp.eq.s32.totalorder %s39, 0
    %p255 = por %p253, %p254
    %s257 = sadd.s32 %s256, 1
    %p260 = scmp.eq.s32.totalorder %s33, 1
    %p261 = scmp.ne.s32.totalorder %s256, %s258
    %p262 = scmp.eq.s32.totalorder %s33, 0
    %p263 = por %p261, %p262
    %p264 = scmp.ne.s32.totalorder %s256, %s258
    %p265 = scmp.eq.s32.totalorder %s38, 1
    %p266 = por %p264, %p265
    %p267 = scmp.ne.s32.totalorder %s258, %s259
    %p268 = scmp.eq.s32.totalorder %s38, 0
    %p269 = por %p267, %p268
    %p270 = scmp.ne.s32.totalorder %s258, %s259
    %p271 = scmp.eq.s32.totalorder %s39, 1
    %p272 = por %p270, %p271
    %p274 = scmp.ne.s32.totalorder %s259, %s273
    %p275 = scmp.eq.s32.totalorder %s39, 0
    %p276 = por %p274, %p275
    %s278 = sadd.s32 %s277, 1
    %p281 = scmp.eq.s32.totalorder %s33, 1
    %p282 = scmp.ne.s32.totalorder %s277, %s279
    %p283 = scmp.eq.s32.totalorder %s33, 0
    %p284 = por %p282, %p283
    %p285 = scmp.ne.s32.totalorder %s277, %s279
    %p286 = scmp.eq.s32.totalorder %s38, 1
    %p287 = por %p285, %p286
    %p288 = scmp.ne.s32.totalorder %s279, %s280
    %p289 = scmp.eq.s32.totalorder %s38, 0
    %p290 = por %p288, %p289
    %p291 = scmp.ne.s32.totalorder %s279, %s280
    %p292 = scmp.eq.s32.totalorder %s39, 1
    %p293 = por %p291, %p292
    %p295 = scmp.ne.s32.totalorder %s280, %s294
    %p296 = scmp.eq.s32.totalorder %s39, 0
    %p297 = por %p295, %p296
    %s299 = sadd.s32 %s298, 1
    %p302 = scmp.eq.s32.totalorder %s33, 1
    %p303 = scmp.ne.s32.totalorder %s298, %s300
    %p304 = scmp.eq.s32.totalorder %s33, 0
    %p305 = por %p303, %p304
    %p306 = scmp.ne.s32.totalorder %s298, %s300
    %p307 = scmp.eq.s32.totalorder %s38, 1
    %p308 = por %p306, %p307
    %p309 = scmp.ne.s32.totalorder %s300, %s301
    %p310 = scmp.eq.s32.totalorder %s38, 0
    %p311 = por %p309, %p310
    %p312 = scmp.ne.s32.totalorder %s300, %s301
    %p313 = scmp.eq.s32.totalorder %s39, 1
    %p314 = por %p312, %p313
    %p316 = scmp.ne.s32.totalorder %s301, %s315
    %p317 = scmp.eq.s32.totalorder %s39, 0
    %p318 = por %p316, %p317
    %s320 = sadd.s32 %s319, 1
    %p323 = scmp.eq.s32.totalorder %s33, 1
    %p324 = scmp.ne.s32.totalorder %s319, %s321
    %p325 = scmp.eq.s32.totalorder %s33, 0
    %p326 = por %p324, %p325
    %p327 = scmp.ne.s32.totalorder %s319, %s321
    %p328 = scmp.eq.s32.totalorder %s38, 1
    %p329 = por %p327, %p328
    %p330 = scmp.ne.s32.totalorder %s321, %s322
    %p331 = scmp.eq.s32.totalorder %s38, 0
    %p332 = por %p330, %p331
    %p333 = scmp.ne.s32.totalorder %s321, %s322
    %p334 = scmp.eq.s32.totalorder %s39, 1
    %p335 = por %p333, %p334
    %p337 = scmp.ne.s32.totalorder %s322, %s336
    %p338 = scmp.eq.s32.totalorder %s39, 0
    %p339 = por %p337, %p338
    %s341 = sadd.s32 %s340, 1
    %p344 = scmp.eq.s32.totalorder %s33, 1
    %p345 = scmp.ne.s32.totalorder %s340, %s342
    %p346 = scmp.eq.s32.totalorder %s33, 0
    %p347 = por %p345, %p346
    %p348 = scmp.ne.s32.totalorder %s340, %s342
    %p349 = scmp.eq.s32.totalorder %s38, 1
    %p350 = por %p348, %p349
    %p351 = scmp.ne.s32.totalorder %s342, %s343
    %p352 = scmp.eq.s32.totalorder %s38, 0
    %p353 = por %p351, %p352
    %p354 = scmp.ne.s32.totalorder %s342, %s343
    %p355 = scmp.eq.s32.totalorder %s39, 1
    %p356 = por %p354, %p355
    %p358 = scmp.ne.s32.totalorder %s343, %s357
    %p359 = scmp.eq.s32.totalorder %s39, 0
    %p360 = por %p358, %p359
    %s362 = sadd.s32 %s361, 1
    %p365 = scmp.eq.s32.totalorder %s33, 1
    %p366 = scmp.ne.s32.totalorder %s361, %s363
    %p367 = scmp.eq.s32.totalorder %s33, 0
    %p368 = por %p366, %p367
    %p369 = scmp.ne.s32.totalorder %s361, %s363
    %p370 = scmp.eq.s32.totalorder %s38, 1
    %p371 = por %p369, %p370
    %p372 = scmp.ne.s32.totalorder %s363, %s364
    %p373 = scmp.eq.s32.totalorder %s38, 0
    %p374 = por %p372, %p373
    %p375 = scmp.ne.s32.totalorder %s363, %s364
    %p376 = scmp.eq.s32.totalorder %s39, 1
    %p377 = por %p375, %p376
    %p379 = scmp.ne.s32.totalorder %s364, %s378
    %p380 = scmp.eq.s32.totalorder %s39, 0
    %p381 = por %p379, %p380
    %s383 = sadd.s32 %s382, 1
    %p386 = scmp.eq.s32.totalorder %s33, 1
    %p387 = scmp.ne.s32.totalorder %s382, %s384
    %p388 = scmp.eq.s32.totalorder %s33, 0
    %p389 = por %p387, %p388
    %p390 = scmp.ne.s32.totalorder %s382, %s384
    %p391 = scmp.eq.s32.totalorder %s38, 1
    %p392 = por %p390, %p391
    %p393 = scmp.ne.s32.totalorder %s384, %s385
    %p394 = scmp.eq.s32.totalorder %s38, 0
    %p395 = por %p393, %p394
    %p396 = scmp.ne.s32.totalorder %s384, %s385
    %p397 = scmp.eq.s32.totalorder %s39, 1
    %p398 = por %p396, %p397
    %p400 = scmp.ne.s32.totalorder %s385, %s399
    %p401 = scmp.eq.s32.totalorder %s39, 0
    %p402 = por %p400, %p401
    %s404 = sadd.s32 %s403, 1
    %p407 = scmp.eq.s32.totalorder %s33, 1
    %p408 = scmp.ne.s32.totalorder %s403, %s405
    %p409 = scmp.eq.s32.totalorder %s33, 0
    %p410 = por %p408, %p409
    %p411 = scmp.ne.s32.totalorder %s403, %s405
    %p412 = scmp.eq.s32.totalorder %s38, 1
    %p413 = por %p411, %p412
    %p414 = scmp.ne.s32.totalorder %s405, %s406
    %p415 = scmp.eq.s32.totalorder %s38, 0
    %p416 = por %p414, %p415
    %p417 = scmp.ne.s32.totalorder %s405, %s406
    %p418 = scmp.eq.s32.totalorder %s39, 1
    %p419 = por %p417, %p418
    %p421 = scmp.ne.s32.totalorder %s406, %s420
    %p422 = scmp.eq.s32.totalorder %s39, 0
    %p423 = por %p421, %p422
    %s425 = sadd.s32 %s424, 1
    %p428 = scmp.eq.s32.totalorder %s33, 1
    %p429 = scmp.ne.s32.totalorder %s424, %s426
    %p430 = scmp.eq.s32.totalorder %s33, 0
    %p431 = por %p429, %p430
    %p432 = scmp.ne.s32.totalorder %s424, %s426
    %p433 = scmp.eq.s32.totalorder %s38, 1
    %p434 = por %p432, %p433
    %p435 = scmp.ne.s32.totalorder %s426, %s427
    %p436 = scmp.eq.s32.totalorder %s38, 0
    %p437 = por %p435, %p436
    %p438 = scmp.ne.s32.totalorder %s426, %s427
    %p439 = scmp.eq.s32.totalorder %s39, 1
    %p440 = por %p438, %p439
    %p442 = scmp.ne.s32.totalorder %s427, %s441
    %p443 = scmp.eq.s32.totalorder %s39, 0
    %p444 = por %p442, %p443
    %s446 = sadd.s32 %s445, 1
    %p449 = scmp.eq.s32.totalorder %s33, 1
    %p450 = scmp.ne.s32.totalorder %s445, %s447
    %p451 = scmp.eq.s32.totalorder %s33, 0
    %p452 = por %p450, %p451
    %p453 = scmp.ne.s32.totalorder %s445, %s447
    %p454 = scmp.eq.s32.totalorder %s38, 1
    %p455 = por %p453, %p454
    %p456 = scmp.ne.s32.totalorder %s447, %s448
    %p457 = scmp.eq.s32.totalorder %s38, 0
    %p458 = por %p456, %p457
    %p459 = scmp.ne.s32.totalorder %s447, %s448
    %p460 = scmp.eq.s32.totalorder %s39, 1
    %p461 = por %p459, %p460
    %p463 = scmp.ne.s32.totalorder %s448, %s462
    %p464 = scmp.eq.s32.totalorder %s39, 0
    %p465 = por %p463, %p464
    %s467 = sadd.s32 %s466, 1
    %p470 = scmp.eq.s32.totalorder %s33, 1
    %p471 = scmp.ne.s32.totalorder %s466, %s468
    %p472 = scmp.eq.s32.totalorder %s33, 0
    %p473 = por %p471, %p472
    %p474 = scmp.ne.s32.totalorder %s466, %s468
    %p475 = scmp.eq.s32.totalorder %s38, 1
    %p476 = por %p474, %p475
    %p477 = scmp.ne.s32.totalorder %s468, %s469
    %p478 = scmp.eq.s32.totalorder %s38, 0
    %p479 = por %p477, %p478
    %p480 = scmp.ne.s32.totalorder %s468, %s469
    %p481 = scmp.eq.s32.totalorder %s39, 1
    %p482 = por %p480, %p481
    %p484 = scmp.ne.s32.totalorder %s469, %s483
    %p485 = scmp.eq.s32.totalorder %s39, 0
    %p486 = por %p484, %p485
    %s488 = sadd.s32 %s487, 1
    %p491 = scmp.eq.s32.totalorder %s33, 1
    %p492 = scmp.ne.s32.totalorder %s487, %s489
    %p493 = scmp.eq.s32.totalorder %s33, 0
    %p494 = por %p492, %p493
    %p495 = scmp.ne.s32.totalorder %s487, %s489
    %p496 = scmp.eq.s32.totalorder %s38, 1
    %p497 = por %p495, %p496
    %p498 = scmp.ne.s32.totalorder %s489, %s490
    %p499 = scmp.eq.s32.totalorder %s38, 0
    %p500 = por %p498, %p499
    %p501 = scmp.ne.s32.totalorder %s489, %s490
    %p502 = scmp.eq.s32.totalorder %s39, 1
    %p503 = por %p501, %p502
    %p505 = scmp.ne.s32.totalorder %s490, %s504
    %p506 = scmp.eq.s32.totalorder %s39, 0
    %p507 = por %p505, %p506
    %s509 = sadd.s32 %s508, 1
    %p512 = scmp.eq.s32.totalorder %s33, 1
    %p513 = scmp.ne.s32.totalorder %s508, %s510
    %p514 = scmp.eq.s32.totalorder %s33, 0
    %p515 = por %p513, %p514
    %p516 = scmp.ne.s32.totalorder %s508, %s510
    %p517 = scmp.eq.s32.totalorder %s38, 1
    %p518 = por %p516, %p517
    %p519 = scmp.ne.s32.totalorder %s510, %s511
    %p520 = scmp.eq.s32.totalorder %s38, 0
    %p521 = por %p519, %p520
    %p522 = scmp.ne.s32.totalorder %s510, %s511
    %p523 = scmp.eq.s32.totalorder %s39, 1
    %p524 = por %p522, %p523
    %p526 = scmp.ne.s32.totalorder %s511, %s525
    %p527 = scmp.eq.s32.totalorder %s39, 0
    %p528 = por %p526, %p527
    %s530 = sadd.s32 %s529, 1
    %p533 = scmp.eq.s32.totalorder %s33, 1
    %p534 = scmp.ne.s32.totalorder %s529, %s531
    %p535 = scmp.eq.s32.totalorder %s33, 0
    %p536 = por %p534, %p535
    %p537 = scmp.ne.s32.totalorder %s529, %s531
    %p538 = scmp.eq.s32.totalorder %s38, 1
    %p539 = por %p537, %p538
    %p540 = scmp.ne.s32.totalorder %s531, %s532
    %p541 = scmp.eq.s32.totalorder %s38, 0
    %p542 = por %p540, %p541
    %p543 = scmp.ne.s32.totalorder %s531, %s532
    %p544 = scmp.eq.s32.totalorder %s39, 1
    %p545 = por %p543, %p544
    %p547 = scmp.ne.s32.totalorder %s532, %s546
    %p548 = scmp.eq.s32.totalorder %s39, 0
    %p549 = por %p547, %p548
    %s551 = sadd.s32 %s550, 1
    %p554 = scmp.eq.s32.totalorder %s33, 1
    %p555 = scmp.ne.s32.totalorder %s550, %s552
    %p556 = scmp.eq.s32.totalorder %s33, 0
    %p557 = por %p555, %p556
    %p558 = scmp.ne.s32.totalorder %s550, %s552
    %p559 = scmp.eq.s32.totalorder %s38, 1
    %p560 = por %p558, %p559
    %p561 = scmp.ne.s32.totalorder %s552, %s553
    %p562 = scmp.eq.s32.totalorder %s38, 0
    %p563 = por %p561, %p562
    %p564 = scmp.ne.s32.totalorder %s552, %s553
    %p565 = scmp.eq.s32.totalorder %s39, 1
    %p566 = por %p564, %p565
    %p568 = scmp.ne.s32.totalorder %s553, %s567
    %p569 = scmp.eq.s32.totalorder %s39, 0
    %p570 = por %p568, %p569
    %s572 = sadd.s32 %s571, 1
    %p575 = scmp.eq.s32.totalorder %s33, 1
    %p576 = scmp.ne.s32.totalorder %s571, %s573
    %p577 = scmp.eq.s32.totalorder %s33, 0
    %p578 = por %p576, %p577
    %p579 = scmp.ne.s32.totalorder %s571, %s573
    %p580 = scmp.eq.s32.totalorder %s38, 1
    %p581 = por %p579, %p580
    %p582 = scmp.ne.s32.totalorder %s573, %s574
    %p583 = scmp.eq.s32.totalorder %s38, 0
    %p584 = por %p582, %p583
    %p585 = scmp.ne.s32.totalorder %s573, %s574
    %p586 = scmp.eq.s32.totalorder %s39, 1
    %p587 = por %p585, %p586
    %p589 = scmp.ne.s32.totalorder %s574, %s588
    %p590 = scmp.eq.s32.totalorder %s39, 0
    %p591 = por %p589, %p590
    %s593 = sadd.s32 %s592, 1
    %p596 = scmp.eq.s32.totalorder %s33, 1
    %p597 = scmp.ne.s32.totalorder %s592, %s594
    %p598 = scmp.eq.s32.totalorder %s33, 0
    %p599 = por %p597, %p598
    %p600 = scmp.ne.s32.totalorder %s592, %s594
    %p601 = scmp.eq.s32.totalorder %s38, 1
    %p602 = por %p600, %p601
    %p603 = scmp.ne.s32.totalorder %s594, %s595
    %p604 = scmp.eq.s32.totalorder %s38, 0
    %p605 = por %p603, %p604
    %p606 = scmp.ne.s32.totalorder %s594, %s595
    %p607 = scmp.eq.s32.totalorder %s39, 1
    %p608 = por %p606, %p607
    %p610 = scmp.ne.s32.totalorder %s595, %s609
    %p611 = scmp.eq.s32.totalorder %s39, 0
    %p612 = por %p610, %p611
    %s613 = ssub.s32 %s33, %s40
    %p614 = scmp.eq.s32.totalorder %s613, 0
    %s616 = sadd.s32 %s615, 1
    %s617 = scalar_select %p614, %s615, %s616
    %p620 = pneg %p614
    %p621 = scmp.eq.s32.totalorder %s33, 1
    %p622 = por %p620, %p621
    %p623 = scmp.ne.s32.totalorder %s615, %s618
    %p624 = scmp.eq.s32.totalorder %s33, 0
    %p625 = por %p623, %p624
    %p626 = scmp.ne.s32.totalorder %s615, %s618
    %p627 = scmp.eq.s32.totalorder %s38, 1
    %p628 = por %p626, %p627
    %p629 = scmp.ne.s32.totalorder %s618, %s619
    %p630 = scmp.eq.s32.totalorder %s38, 0
    %p631 = por %p629, %p630
    %p632 = scmp.ne.s32.totalorder %s618, %s619
    %p633 = scmp.eq.s32.totalorder %s39, 1
    %p634 = por %p632, %p633
    %p636 = scmp.ne.s32.totalorder %s619, %s635
    %p637 = scmp.eq.s32.totalorder %s39, 0
    %p638 = por %p636, %p637
    %p639 = scmp.le.s32.totalorder 1, %s33
    %p640 = scmp.lt.s32.totalorder %s33, 3
    %p641 = pnand %p639, %p640
    %p642 = pneg %p641
    // Predicated region
    $region9: #{mobilenet_forward.1} parent=5 // pred_check
      _
    $region10: #{mobilenet_forward.1} parent=5 // pred_check_branch
      %644 = sbr.rel (%p641) target = $region12
    $region11: #{mobilenet_forward.1} parent=5 // pred_region
      %s645 = ssub.s32 %s33, 1
      // Predicated region
      $region13: #{mobilenet_forward.1} parent=11 // pred_check
        %p646 = pneg %p80
      $region14: #{mobilenet_forward.1} parent=11 // pred_check_branch
        %648 = sbr.rel (%p646) target = $region16
      $region15: #{mobilenet_forward.1} parent=11 // pred_region
        _
      $region16: #{mobilenet_forward.1} parent=11 // pred_fallthru
        _
      // Predicated region
      $region17: #{mobilenet_forward.1} parent=11 // pred_check
        %p649 = pneg %p101
      $region18: #{mobilenet_forward.1} parent=11 // pred_check_branch
        %651 = sbr.rel (%p649) target = $region20
      $region19: #{mobilenet_forward.1} parent=11 // pred_region
        _
      $region20: #{mobilenet_forward.1} parent=11 // pred_fallthru
        _
      // Predicated region
      $region21: #{mobilenet_forward.1} parent=11 // pred_check
        %p652 = pneg %p122
      $region22: #{mobilenet_forward.1} parent=11 // pred_check_branch
        %654 = sbr.rel (%p652) target = $region24
      $region23: #{mobilenet_forward.1} parent=11 // pred_region
        _
      $region24: #{mobilenet_forward.1} parent=11 // pred_fallthru
        _
      // Predicated region
      $region25: #{mobilenet_forward.1} parent=11 // pred_check
        %p655 = pneg %p143
      $region26: #{mobilenet_forward.1} parent=11 // pred_check_branch
        %657 = sbr.rel (%p655) target = $region28
      $region27: #{mobilenet_forward.1} parent=11 // pred_region
        _
      $region28: #{mobilenet_forward.1} parent=11 // pred_fallthru
        _
      // Predicated region
      $region29: #{mobilenet_forward.1} parent=11 // pred_check
        %p658 = pneg %p164
      $region30: #{mobilenet_forward.1} parent=11 // pred_check_branch
        %660 = sbr.rel (%p658) target = $region32
      $region31: #{mobilenet_forward.1} parent=11 // pred_region
        _
      $region32: #{mobilenet_forward.1} parent=11 // pred_fallthru
        _
      // Predicated region
      $region33: #{mobilenet_forward.1} parent=11 // pred_check
        %p661 = pneg %p185
      $region34: #{mobilenet_forward.1} parent=11 // pred_check_branch
        %663 = sbr.rel (%p661) target = $region36
      $region35: #{mobilenet_forward.1} parent=11 // pred_region
        _
      $region36: #{mobilenet_forward.1} parent=11 // pred_fallthru
        _
      // Predicated region
      $region37: #{mobilenet_forward.1} parent=11 // pred_check
        %p664 = pneg %p206
      $region38: #{mobilenet_forward.1} parent=11 // pred_check_branch
        %666 = sbr.rel (%p664) target = $region40
      $region39: #{mobilenet_forward.1} parent=11 // pred_region
        _
      $region40: #{mobilenet_forward.1} parent=11 // pred_fallthru
        _
      // Predicated region
      $region41: #{mobilenet_forward.1} parent=11 // pred_check
        %p667 = pneg %p227
      $region42: #{mobilenet_forward.1} parent=11 // pred_check_branch
        %669 = sbr.rel (%p667) target = $region44
      $region43: #{mobilenet_forward.1} parent=11 // pred_region
        _
      $region44: #{mobilenet_forward.1} parent=11 // pred_fallthru
        _
      // Predicated region
      $region45: #{mobilenet_forward.1} parent=11 // pred_check
        %p670 = pneg %p248
      $region46: #{mobilenet_forward.1} parent=11 // pred_check_branch
        %672 = sbr.rel (%p670) target = $region48
      $region47: #{mobilenet_forward.1} parent=11 // pred_region
        _
      $region48: #{mobilenet_forward.1} parent=11 // pred_fallthru
        _
      // Predicated region
      $region49: #{mobilenet_forward.1} parent=11 // pred_check
        %p673 = pneg %p269
      $region50: #{mobilenet_forward.1} parent=11 // pred_check_branch
        %675 = sbr.rel (%p673) target = $region52
      $region51: #{mobilenet_forward.1} parent=11 // pred_region
        _
      $region52: #{mobilenet_forward.1} parent=11 // pred_fallthru
        _
      // Predicated region
      $region53: #{mobilenet_forward.1} parent=11 // pred_check
        %p676 = pneg %p290
      $region54: #{mobilenet_forward.1} parent=11 // pred_check_branch
        %678 = sbr.rel (%p676) target = $region56
      $region55: #{mobilenet_forward.1} parent=11 // pred_region
        _
      $region56: #{mobilenet_forward.1} parent=11 // pred_fallthru
        _
      // Predicated region
      $region57: #{mobilenet_forward.1} parent=11 // pred_check
        %p679 = pneg %p311
      $region58: #{mobilenet_forward.1} parent=11 // pred_check_branch
        %681 = sbr.rel (%p679) target = $region60
      $region59: #{mobilenet_forward.1} parent=11 // pred_region
        _
      $region60: #{mobilenet_forward.1} parent=11 // pred_fallthru
        _
      // Predicated region
      $region61: #{mobilenet_forward.1} parent=11 // pred_check
        %p682 = pneg %p332
      $region62: #{mobilenet_forward.1} parent=11 // pred_check_branch
        %684 = sbr.rel (%p682) target = $region64
      $region63: #{mobilenet_forward.1} parent=11 // pred_region
        _
      $region64: #{mobilenet_forward.1} parent=11 // pred_fallthru
        _
      // Predicated region
      $region65: #{mobilenet_forward.1} parent=11 // pred_check
        %p685 = pneg %p353
      $region66: #{mobilenet_forward.1} parent=11 // pred_check_branch
        %687 = sbr.rel (%p685) target = $region68
      $region67: #{mobilenet_forward.1} parent=11 // pred_region
        _
      $region68: #{mobilenet_forward.1} parent=11 // pred_fallthru
        _
      // Predicated region
      $region69: #{mobilenet_forward.1} parent=11 // pred_check
        %p688 = pneg %p374
      $region70: #{mobilenet_forward.1} parent=11 // pred_check_branch
        %690 = sbr.rel (%p688) target = $region72
      $region71: #{mobilenet_forward.1} parent=11 // pred_region
        _
      $region72: #{mobilenet_forward.1} parent=11 // pred_fallthru
        _
      // Predicated region
      $region73: #{mobilenet_forward.1} parent=11 // pred_check
        %p691 = pneg %p395
      $region74: #{mobilenet_forward.1} parent=11 // pred_check_branch
        %693 = sbr.rel (%p691) target = $region76
      $region75: #{mobilenet_forward.1} parent=11 // pred_region
        _
      $region76: #{mobilenet_forward.1} parent=11 // pred_fallthru
        _
      // Predicated region
      $region77: #{mobilenet_forward.1} parent=11 // pred_check
        %p694 = pneg %p416
      $region78: #{mobilenet_forward.1} parent=11 // pred_check_branch
        %696 = sbr.rel (%p694) target = $region80
      $region79: #{mobilenet_forward.1} parent=11 // pred_region
        _
      $region80: #{mobilenet_forward.1} parent=11 // pred_fallthru
        _
      // Predicated region
      $region81: #{mobilenet_forward.1} parent=11 // pred_check
        %p697 = pneg %p437
      $region82: #{mobilenet_forward.1} parent=11 // pred_check_branch
        %699 = sbr.rel (%p697) target = $region84
      $region83: #{mobilenet_forward.1} parent=11 // pred_region
        _
      $region84: #{mobilenet_forward.1} parent=11 // pred_fallthru
        _
      // Predicated region
      $region85: #{mobilenet_forward.1} parent=11 // pred_check
        %p700 = pneg %p458
      $region86: #{mobilenet_forward.1} parent=11 // pred_check_branch
        %702 = sbr.rel (%p700) target = $region88
      $region87: #{mobilenet_forward.1} parent=11 // pred_region
        _
      $region88: #{mobilenet_forward.1} parent=11 // pred_fallthru
        _
      // Predicated region
      $region89: #{mobilenet_forward.1} parent=11 // pred_check
        %p703 = pneg %p479
      $region90: #{mobilenet_forward.1} parent=11 // pred_check_branch
        %705 = sbr.rel (%p703) target = $region92
      $region91: #{mobilenet_forward.1} parent=11 // pred_region
        _
      $region92: #{mobilenet_forward.1} parent=11 // pred_fallthru
        _
      // Predicated region
      $region93: #{mobilenet_forward.1} parent=11 // pred_check
        %p706 = pneg %p500
      $region94: #{mobilenet_forward.1} parent=11 // pred_check_branch
        %708 = sbr.rel (%p706) target = $region96
      $region95: #{mobilenet_forward.1} parent=11 // pred_region
        _
      $region96: #{mobilenet_forward.1} parent=11 // pred_fallthru
        _
      // Predicated region
      $region97: #{mobilenet_forward.1} parent=11 // pred_check
        %p709 = pneg %p521
      $region98: #{mobilenet_forward.1} parent=11 // pred_check_branch
        %711 = sbr.rel (%p709) target = $region100
      $region99: #{mobilenet_forward.1} parent=11 // pred_region
        _
      $region100: #{mobilenet_forward.1} parent=11 // pred_fallthru
        _
      // Predicated region
      $region101: #{mobilenet_forward.1} parent=11 // pred_check
        %p712 = pneg %p542
      $region102: #{mobilenet_forward.1} parent=11 // pred_check_branch
        %714 = sbr.rel (%p712) target = $region104
      $region103: #{mobilenet_forward.1} parent=11 // pred_region
        _
      $region104: #{mobilenet_forward.1} parent=11 // pred_fallthru
        _
      // Predicated region
      $region105: #{mobilenet_forward.1} parent=11 // pred_check
        %p715 = pneg %p563
      $region106: #{mobilenet_forward.1} parent=11 // pred_check_branch
        %717 = sbr.rel (%p715) target = $region108
      $region107: #{mobilenet_forward.1} parent=11 // pred_region
        _
      $region108: #{mobilenet_forward.1} parent=11 // pred_fallthru
        _
      // Predicated region
      $region109: #{mobilenet_forward.1} parent=11 // pred_check
        %p718 = pneg %p584
      $region110: #{mobilenet_forward.1} parent=11 // pred_check_branch
        %720 = sbr.rel (%p718) target = $region112
      $region111: #{mobilenet_forward.1} parent=11 // pred_region
        _
      $region112: #{mobilenet_forward.1} parent=11 // pred_fallthru
        _
      // Predicated region
      $region113: #{mobilenet_forward.1} parent=11 // pred_check
        %p721 = pneg %p605
      $region114: #{mobilenet_forward.1} parent=11 // pred_check_branch
        %723 = sbr.rel (%p721) target = $region116
      $region115: #{mobilenet_forward.1} parent=11 // pred_region
        _
      $region116: #{mobilenet_forward.1} parent=11 // pred_fallthru
        _
    $region12: #{mobilenet_forward.1} parent=5 // pred_fallthru
      _
    %p724 = scmp.lt.s32.totalorder %s33, 2
    // Predicated region
    $region117: #{mobilenet_forward.1} parent=5 // pred_check
      %p725 = pneg %p724
    $region118: #{mobilenet_forward.1} parent=5 // pred_check_branch
      %727 = sbr.rel (%p725) target = $region120
    $region119: #{mobilenet_forward.1} parent=5 // pred_region
      // Predicated region
      $region121: #{mobilenet_forward.1} parent=119 // pred_check
        %p728 = pneg %p53
      $region122: #{mobilenet_forward.1} parent=119 // pred_check_branch
        %730 = sbr.rel (%p728) target = $region124
      $region123: #{mobilenet_forward.1} parent=119 // pred_region
        %s731 = smul.u32 32, %s33
        %p732 = scmp.lt.s32.totalorder %s731, 63
        %s733 = scalar_select %p732, %s731, 63
        %s734 = smul.addr %s733, 4
        %s735 = scalar_lea.vmem %s0, %s734
        %s736 = smul.u32 32, %s33
      $region124: #{mobilenet_forward.1} parent=119 // pred_fallthru
        _
    $region120: #{mobilenet_forward.1} parent=5 // pred_fallthru
      _
    %p737 = scmp.le.s32.totalorder 1, %s33
    %p738 = scmp.lt.s32.totalorder %s33, 3
    %p739 = pnand %p737, %p738
    %p740 = pneg %p739
    // Predicated region
    $region125: #{mobilenet_forward.1} parent=5 // pred_check
      _
    $region126: #{mobilenet_forward.1} parent=5 // pred_check_branch
      %742 = sbr.rel (%p739) target = $region128
    $region127: #{mobilenet_forward.1} parent=5 // pred_region
      %s743 = ssub.s32 %s33, 1
      %s744 = smul.u32 32, %s38
      %p745 = scmp.lt.s32.totalorder %s744, 63
      %s746 = scalar_select %p745, %s744, 63
      %s747 = smul.addr %s746, 4
      %s748 = scalar_lea.vmem %s0, %s747
      %p749 = pneg %p59
      %p750 = pneg %p56
      %p751 = pneg %p80
      %p752 = pneg %p77
      %p753 = pneg %p101
      %p754 = pneg %p98
      %p755 = pneg %p122
      %p756 = pneg %p119
      %p757 = pneg %p143
      %p758 = pneg %p140
      %p759 = pneg %p164
      %p760 = pneg %p161
      %p761 = pneg %p185
      %p762 = pneg %p182
      %p763 = pneg %p206
      %p764 = pneg %p203
      %p765 = pneg %p227
      %p766 = pneg %p224
      %p767 = pneg %p248
      %p768 = pneg %p245
      %p769 = pneg %p269
      %p770 = pneg %p266
      %p771 = pneg %p290
      %p772 = pneg %p287
      %p773 = pneg %p311
      %p774 = pneg %p308
      %p775 = pneg %p332
      %p776 = pneg %p329
      %p777 = pneg %p353
      %p778 = pneg %p350
      %p779 = pneg %p374
      %p780 = pneg %p371
      %p781 = pneg %p395
      %p782 = pneg %p392
      %p783 = pneg %p416
      %p784 = pneg %p413
      %p785 = pneg %p437
      %p786 = pneg %p434
      %p787 = pneg %p458
      %p788 = pneg %p455
      %p789 = pneg %p479
      %p790 = pneg %p476
      %p791 = pneg %p500
      %p792 = pneg %p497
      %p793 = pneg %p521
      %p794 = pneg %p518
      %p795 = pneg %p542
      %p796 = pneg %p539
      %p797 = pneg %p563
      %p798 = pneg %p560
      %p799 = pneg %p584
      %p800 = pneg %p581
      %p801 = pneg %p605
      %p802 = pneg %p602
      %p803 = pneg %p631
      %p804 = pneg %p628
      %p805 = scmp.lt.s32.totalorder %s38, 1
      %s806 = scalar_select %p805, %s38, 1
      %s807 = smul.addr %s806, 8
      %s808 = smul.addr %s807, 8
      %s809 = scalar_lea.vmem %s27, %s808
      %s810 = smul.u32 32, %s38
      %p811 = scmp.lt.s32.totalorder %s810, 63
      %s812 = scalar_select %p811, %s810, 63
      %s813 = smul.addr %s812, 4
      %s814 = scalar_lea.vmem %s0, %s813
      %s815 = smul.u32 32, %s38
      %p816 = scmp.lt.s32.totalorder %s38, 1
      %s817 = scalar_select %p816, %s38, 1
      %s818 = smul.addr %s817, 8
      %s819 = smul.addr %s818, 8
      %s820 = scalar_lea.vmem %s27, %s819
      %v822 = vld [vmem:[%s814] sm:$0xf]
      %v823 = vld [vmem:[%s814 + $0x4] sm:$0xf]
      %v824 = vld [vmem:[%s814 + $0x8] sm:$0xf]
      %v825 = vld [vmem:[%s814 + $0xc] sm:$0xf]
      %v826 = vld [vmem:[%s814 + $0x10] sm:$0xf]
      %v827 = vld [vmem:[%s814 + $0x14] sm:$0xf]
      %v828 = vld [vmem:[%s814 + $0x18] sm:$0xf]
      %v829 = vld [vmem:[%s814 + $0x1c] sm:$0xf]
      %v830 = vld [vmem:[%s814 + $0x20] sm:$0xf]
      %v831 = vld [vmem:[%s814 + $0x24] sm:$0xf]
      %v832 = vld [vmem:[%s814 + $0x28] sm:$0xf]
      %v833 = vld [vmem:[%s814 + $0x2c] sm:$0xf]
      %v834 = vld [vmem:[%s814 + $0x30] sm:$0xf]
      %v835 = vld [vmem:[%s814 + $0x34] sm:$0xf]
      %v836 = vld [vmem:[%s814 + $0x38] sm:$0xf]
      %v837 = vld [vmem:[%s814 + $0x3c] sm:$0xf]
      %v838 = vld [vmem:[%s814 + $0x40] sm:$0xf]
      %v839 = vld [vmem:[%s814 + $0x44] sm:$0xf]
      %v840 = vld [vmem:[%s814 + $0x48] sm:$0xf]
      %v841 = vld [vmem:[%s814 + $0x4c] sm:$0xf]
      %v842 = vld [vmem:[%s814 + $0x50] sm:$0xf]
      %v843 = vld [vmem:[%s814 + $0x54] sm:$0xf]
      %v844 = vld [vmem:[%s814 + $0x58] sm:$0xf]
      %v845 = vld [vmem:[%s814 + $0x5c] sm:$0xf]
      %v846 = vld [vmem:[%s814 + $0x60] sm:$0xf]
      %v847 = vld [vmem:[%s814 + $0x64] sm:$0xf]
      %v848 = vld [vmem:[%s814 + $0x68] sm:$0xf]
      %v849 = vld [vmem:[%s814 + $0x6c] sm:$0xf]
      %v850 = vld [vmem:[%s814 + $0x70] sm:$0xf]
      %v851 = vld [vmem:[%s814 + $0x74] sm:$0xf]
      %v852 = vld [vmem:[%s814 + $0x78] sm:$0xf]
      %v853 = vld [vmem:[%s814 + $0x7c] sm:$0xf]
      %v854 = vld [vmem:[%s7] sm:$0xf]
      %v855 = vld [vmem:[%s7 + $0x4] sm:$0xf]
      %v856 = vld [vmem:[%s7 + $0x8] sm:$0xf]
      %v857 = vld [vmem:[%s7 + $0xc] sm:$0x3]
      %v858 = vld [vmem:[%s6] sm:$0x1]
      %v860 = vlaneseq
      %v861 = vshrl.u32 %v860, 7
      %v862 = vsub.s32 0, %v861
      %v863 = vrot.slane %v858, %v862
      %v897 = vunpack.c.l.b16 %v822
      %v898 = vunpack.c.l.b16 %v823
      %v899 = vunpack.c.l.b16 %v824
      %v900 = vunpack.c.l.b16 %v825
      %v901 = vunpack.c.l.b16 %v826
      %v902 = vunpack.c.l.b16 %v827
      %v903 = vunpack.c.l.b16 %v828
      %v904 = vunpack.c.l.b16 %v829
      %v905 = vunpack.c.l.b16 %v830
      %v906 = vunpack.c.l.b16 %v831
      %v907 = vunpack.c.l.b16 %v832
      %v908 = vunpack.c.l.b16 %v833
      %v909 = vunpack.c.l.b16 %v834
      %v910 = vunpack.c.l.b16 %v835
      %v911 = vunpack.c.l.b16 %v836
      %v912 = vunpack.c.l.b16 %v837
      %v913 = vunpack.c.l.b16 %v838
      %v914 = vunpack.c.l.b16 %v839
      %v915 = vunpack.c.l.b16 %v840
      %v916 = vunpack.c.l.b16 %v841
      %v917 = vunpack.c.l.b16 %v842
      %v918 = vunpack.c.l.b16 %v843
      %v919 = vunpack.c.l.b16 %v844
      %v920 = vunpack.c.l.b16 %v845
      %v921 = vunpack.c.l.b16 %v846
      %v922 = vunpack.c.l.b16 %v847
      %v923 = vunpack.c.l.b16 %v848
      %v924 = vunpack.c.l.b16 %v849
      %v925 = vunpack.c.l.b16 %v850
      %v926 = vunpack.c.l.b16 %v851
      %v927 = vunpack.c.l.b16 %v852
      %v928 = vunpack.c.l.b16 %v853
      %v929 = vpack.c.b16 %v898, %v897
      %v930 = vpack.c.b16 %v900, %v899
      %v931 = vpack.c.b16 %v902, %v901
      %v932 = vpack.c.b16 %v904, %v903
      %v933 = vpack.c.b16 %v906, %v905
      %v934 = vpack.c.b16 %v908, %v907
      %v935 = vpack.c.b16 %v910, %v909
      %v936 = vpack.c.b16 %v912, %v911
      %v937 = vpack.c.b16 %v914, %v913
      %v938 = vpack.c.b16 %v916, %v915
      %v939 = vpack.c.b16 %v918, %v917
      %v940 = vpack.c.b16 %v920, %v919
      %v941 = vpack.c.b16 %v922, %v921
      %v942 = vpack.c.b16 %v924, %v923
      %v943 = vpack.c.b16 %v926, %v925
      %v944 = vpack.c.b16 %v928, %v927
      %v949 = vunpack.c.l.b16 %v854
      %v950 = vunpack.c.l.b16 %v855
      %v951 = vunpack.c.l.b16 %v856
      %v952 = vunpack.c.l.b16 %v857
      %v953 = vpack.c.b16 %v950, %v949
      %v954 = vpack.c.b16 %v952, %v951
      %vm956 = vcmask 220160
      %v958 = vsel %vm956, %v929, 0
      %v961 = vsel %vm956, %v930, 0
      %v964 = vsel %vm956, %v931, 0
      %v967 = vsel %vm956, %v932, 0
      %v970 = vsel %vm956, %v933, 0
      %v973 = vsel %vm956, %v934, 0
      %v976 = vsel %vm956, %v935, 0
      %v979 = vsel %vm956, %v936, 0
      %v982 = vsel %vm956, %v937, 0
      %v985 = vsel %vm956, %v938, 0
      %v988 = vsel %vm956, %v939, 0
      %v991 = vsel %vm956, %v940, 0
      %v994 = vsel %vm956, %v941, 0
      %v997 = vsel %vm956, %v942, 0
      %v1000 = vsel %vm956, %v943, 0
      %v1003 = vsel %vm956, %v944, 0
      %vm1005 = vcmask 1044480
      %vm1006 = vcmask 1045504
      %v1007 = vsel %vm1005, 4294967295, 65535
      %v1008 = vsel %vm1006, %v1007, 0
      %v1010 = vand.u32 %v954, %v1008
      %1012 = vmatprep.subr.bf16.mxu0 0
      %1013 = vmatpush1.bf16.msra.mxu0 0
      %1014 = vmatprep.subr.bf16.mxu0 0
      %1015 = vmatpush1.bf16.msra.mxu0 0
      %1016 = vmatprep.subr.bf16.mxu0 0
      %1017 = vmatpush1.bf16.msra.mxu0 0
      %1018 = vmatprep.subr.bf16.mxu0 0
      %1019 = vmatpush1.bf16.msra.mxu0 0
      %1020 = vmatprep.subr.bf16.mxu0 0
      %1021 = vmatpush1.bf16.msra.mxu0 0
      %1022 = vmatprep.subr.bf16.mxu0 0
      %1023 = vmatpush1.bf16.msra.mxu0 0
      %1024 = vmatprep.subr.bf16.mxu0 0
      %1025 = vmatpush1.bf16.msra.mxu0 %v1010
      %1026 = vmatprep.subr.bf16.mxu0 0
      %1027 = vmatpush1.bf16.msra.mxu0 %v953
      %1028 = vmatprep.subr.bf16.mxu0 0
      %1029 = vmatpush2.bf16.msra.mxu0 0
      %1030 = vmatprep.subr.bf16.mxu0 0
      %1031 = vmatpush2.bf16.msra.mxu0 0
      %1032 = vmatprep.subr.bf16.mxu0 0
      %1033 = vmatpush2.bf16.msra.mxu0 0
      %1034 = vmatprep.subr.bf16.mxu0 0
      %1035 = vmatpush2.bf16.msra.mxu0 0
      %1036 = vmatprep.subr.bf16.mxu0 0
      %1037 = vmatpush2.bf16.msra.mxu0 0
      %1038 = vmatprep.subr.bf16.mxu0 0
      %1039 = vmatpush2.bf16.msra.mxu0 0
      %1040 = vmatprep.subr.bf16.mxu0 0
      %1041 = vmatpush2.bf16.msra.mxu0 0
      %1042 = vmatprep.subr.bf16.mxu0 0
      %1043 = vmatpush2.bf16.msra.mxu0 0
      %1044 = vmatprep.mubr.bf16.mxu0 0
      %1045 = vmatmul.mubr.bf16.gmra.mxu0 %v958
      %v1046 = vpop.f32.mrf.mxu0
      %v1047 = vadd.f32 %v863, %v1046
      %v1048 = vpop.f32.mrf.mxu0
      %v1049 = vpop.f32.mrf.mxu0
      %v1050 = vadd.f32 %v863, %v1049
      %v1051 = vpop.f32.mrf.mxu0
      %1052 = vmatprep.mubr.bf16.mxu0 0
      %1053 = vmatmul.mubr.bf16.gmra.mxu0 %v961
      %v1054 = vpop.f32.mrf.mxu0
      %v1055 = vadd.f32 %v863, %v1054
      %v1056 = vpop.f32.mrf.mxu0
      %v1057 = vpop.f32.mrf.mxu0
      %v1058 = vadd.f32 %v863, %v1057
      %v1059 = vpop.f32.mrf.mxu0
      %1060 = vmatprep.mubr.bf16.mxu0 0
      %1061 = vmatmul.mubr.bf16.gmra.mxu0 %v964
      %v1062 = vpop.f32.mrf.mxu0
      %v1063 = vadd.f32 %v863, %v1062
      %v1064 = vpop.f32.mrf.mxu0
      %v1065 = vpop.f32.mrf.mxu0
      %v1066 = vadd.f32 %v863, %v1065
      %v1067 = vpop.f32.mrf.mxu0
      %1068 = vmatprep.mubr.bf16.mxu0 0
      %1069 = vmatmul.mubr.bf16.gmra.mxu0 %v967
      %v1070 = vpop.f32.mrf.mxu0
      %v1071 = vadd.f32 %v863, %v1070
      %v1072 = vpop.f32.mrf.mxu0
      %v1073 = vpop.f32.mrf.mxu0
      %v1074 = vadd.f32 %v863, %v1073
      %v1075 = vpop.f32.mrf.mxu0
      %1076 = vmatprep.mubr.bf16.mxu0 0
      %1077 = vmatmul.mubr.bf16.gmra.mxu0 %v970
      %v1078 = vpop.f32.mrf.mxu0
      %v1079 = vadd.f32 %v863, %v1078
      %v1080 = vpop.f32.mrf.mxu0
      %v1081 = vpop.f32.mrf.mxu0
      %v1082 = vadd.f32 %v863, %v1081
      %v1083 = vpop.f32.mrf.mxu0
      %1084 = vmatprep.mubr.bf16.mxu0 0
      %1085 = vmatmul.mubr.bf16.gmra.mxu0 %v973
      %v1086 = vpop.f32.mrf.mxu0
      %v1087 = vadd.f32 %v863, %v1086
      %v1088 = vpop.f32.mrf.mxu0
      %v1089 = vpop.f32.mrf.mxu0
      %v1090 = vadd.f32 %v863, %v1089
      %v1091 = vpop.f32.mrf.mxu0
      %1092 = vmatprep.mubr.bf16.mxu0 0
      %1093 = vmatmul.mubr.bf16.gmra.mxu0 %v976
      %v1094 = vpop.f32.mrf.mxu0
      %v1095 = vadd.f32 %v863, %v1094
      %v1096 = vpop.f32.mrf.mxu0
      %v1097 = vpop.f32.mrf.mxu0
      %v1098 = vadd.f32 %v863, %v1097
      %v1099 = vpop.f32.mrf.mxu0
      %1100 = vmatprep.mubr.bf16.mxu0 0
      %1101 = vmatmul.mubr.bf16.gmra.mxu0 %v979
      %v1102 = vpop.f32.mrf.mxu0
      %v1103 = vadd.f32 %v863, %v1102
      %v1104 = vpop.f32.mrf.mxu0
      %v1105 = vpop.f32.mrf.mxu0
      %v1106 = vadd.f32 %v863, %v1105
      %v1107 = vpop.f32.mrf.mxu0
      %1108 = vmatprep.mubr.bf16.mxu0 0
      %1109 = vmatmul.mubr.bf16.gmra.mxu0 %v982
      %v1110 = vpop.f32.mrf.mxu0
      %v1111 = vadd.f32 %v863, %v1110
      %v1112 = vpop.f32.mrf.mxu0
      %v1113 = vpop.f32.mrf.mxu0
      %v1114 = vadd.f32 %v863, %v1113
      %v1115 = vpop.f32.mrf.mxu0
      %1116 = vmatprep.mubr.bf16.mxu0 0
      %1117 = vmatmul.mubr.bf16.gmra.mxu0 %v985
      %v1118 = vpop.f32.mrf.mxu0
      %v1119 = vadd.f32 %v863, %v1118
      %v1120 = vpop.f32.mrf.mxu0
      %v1121 = vpop.f32.mrf.mxu0
      %v1122 = vadd.f32 %v863, %v1121
      %v1123 = vpop.f32.mrf.mxu0
      %1124 = vmatprep.mubr.bf16.mxu0 0
      %1125 = vmatmul.mubr.bf16.gmra.mxu0 %v988
      %v1126 = vpop.f32.mrf.mxu0
      %v1127 = vadd.f32 %v863, %v1126
      %v1128 = vpop.f32.mrf.mxu0
      %v1129 = vpop.f32.mrf.mxu0
      %v1130 = vadd.f32 %v863, %v1129
      %v1131 = vpop.f32.mrf.mxu0
      %1132 = vmatprep.mubr.bf16.mxu0 0
      %1133 = vmatmul.mubr.bf16.gmra.mxu0 %v991
      %v1134 = vpop.f32.mrf.mxu0
      %v1135 = vadd.f32 %v863, %v1134
      %v1136 = vpop.f32.mrf.mxu0
      %v1137 = vpop.f32.mrf.mxu0
      %v1138 = vadd.f32 %v863, %v1137
      %v1139 = vpop.f32.mrf.mxu0
      %1140 = vmatprep.mubr.bf16.mxu0 0
      %1141 = vmatmul.mubr.bf16.gmra.mxu0 %v994
      %v1142 = vpop.f32.mrf.mxu0
      %v1143 = vadd.f32 %v863, %v1142
      %v1144 = vpop.f32.mrf.mxu0
      %v1145 = vpop.f32.mrf.mxu0
      %v1146 = vadd.f32 %v863, %v1145
      %v1147 = vpop.f32.mrf.mxu0
      %1148 = vmatprep.mubr.bf16.mxu0 0
      %1149 = vmatmul.mubr.bf16.gmra.mxu0 %v997
      %v1150 = vpop.f32.mrf.mxu0
      %v1151 = vadd.f32 %v863, %v1150
      %v1152 = vpop.f32.mrf.mxu0
      %v1153 = vpop.f32.mrf.mxu0
      %v1154 = vadd.f32 %v863, %v1153
      %v1155 = vpop.f32.mrf.mxu0
      %1156 = vmatprep.mubr.bf16.mxu0 0
      %1157 = vmatmul.mubr.bf16.gmra.mxu0 %v1000
      %v1158 = vpop.f32.mrf.mxu0
      %v1159 = vadd.f32 %v863, %v1158
      %v1160 = vpop.f32.mrf.mxu0
      %v1161 = vpop.f32.mrf.mxu0
      %v1162 = vadd.f32 %v863, %v1161
      %v1163 = vpop.f32.mrf.mxu0
      %1164 = vmatprep.mubr.bf16.mxu0 0
      %1165 = vmatmul.mubr.bf16.gmra.mxu0 %v1003
      %v1166 = vpop.f32.mrf.mxu0
      %v1167 = vadd.f32 %v863, %v1166
      %v1168 = vpop.f32.mrf.mxu0
      %v1169 = vpop.f32.mrf.mxu0
      %v1170 = vadd.f32 %v863, %v1169
      %v1171 = vpop.f32.mrf.mxu0
      %1172 = vdwg.mxu0
      %v1173 = vadd.f32 %v1047, 3.0
      %v1174 = vadd.f32 %v1050, 3.0
      %v1175 = vadd.f32 %v1055, 3.0
      %v1176 = vadd.f32 %v1058, 3.0
      %v1177 = vadd.f32 %v1063, 3.0
      %v1178 = vadd.f32 %v1066, 3.0
      %v1179 = vadd.f32 %v1071, 3.0
      %v1180 = vadd.f32 %v1074, 3.0
      %v1181 = vadd.f32 %v1079, 3.0
      %v1182 = vadd.f32 %v1082, 3.0
      %v1183 = vadd.f32 %v1087, 3.0
      %v1184 = vadd.f32 %v1090, 3.0
      %v1185 = vadd.f32 %v1095, 3.0
      %v1186 = vadd.f32 %v1098, 3.0
      %v1187 = vadd.f32 %v1103, 3.0
      %v1188 = vadd.f32 %v1106, 3.0
      %v1189 = vadd.f32 %v1111, 3.0
      %v1190 = vadd.f32 %v1114, 3.0
      %v1191 = vadd.f32 %v1119, 3.0
      %v1192 = vadd.f32 %v1122, 3.0
      %v1193 = vadd.f32 %v1127, 3.0
      %v1194 = vadd.f32 %v1130, 3.0
      %v1195 = vadd.f32 %v1135, 3.0
      %v1196 = vadd.f32 %v1138, 3.0
      %v1197 = vadd.f32 %v1143, 3.0
      %v1198 = vadd.f32 %v1146, 3.0
      %v1199 = vadd.f32 %v1151, 3.0
      %v1200 = vadd.f32 %v1154, 3.0
      %v1201 = vadd.f32 %v1159, 3.0
      %v1202 = vadd.f32 %v1162, 3.0
      %v1203 = vadd.f32 %v1167, 3.0
      %v1204 = vadd.f32 %v1170, 3.0
      %v1205 = vmax.f32 %v1173, 0.0
      %v1206 = vmax.f32 %v1174, 0.0
      %v1207 = vmax.f32 %v1175, 0.0
      %v1208 = vmax.f32 %v1176, 0.0
      %v1209 = vmax.f32 %v1177, 0.0
      %v1210 = vmax.f32 %v1178, 0.0
      %v1211 = vmax.f32 %v1179, 0.0
      %v1212 = vmax.f32 %v1180, 0.0
      %v1213 = vmax.f32 %v1181, 0.0
      %v1214 = vmax.f32 %v1182, 0.0
      %v1215 = vmax.f32 %v1183, 0.0
      %v1216 = vmax.f32 %v1184, 0.0
      %v1217 = vmax.f32 %v1185, 0.0
      %v1218 = vmax.f32 %v1186, 0.0
      %v1219 = vmax.f32 %v1187, 0.0
      %v1220 = vmax.f32 %v1188, 0.0
      %v1221 = vmax.f32 %v1189, 0.0
      %v1222 = vmax.f32 %v1190, 0.0
      %v1223 = vmax.f32 %v1191, 0.0
      %v1224 = vmax.f32 %v1192, 0.0
      %v1225 = vmax.f32 %v1193, 0.0
      %v1226 = vmax.f32 %v1194, 0.0
      %v1227 = vmax.f32 %v1195, 0.0
      %v1228 = vmax.f32 %v1196, 0.0
      %v1229 = vmax.f32 %v1197, 0.0
      %v1230 = vmax.f32 %v1198, 0.0
      %v1231 = vmax.f32 %v1199, 0.0
      %v1232 = vmax.f32 %v1200, 0.0
      %v1233 = vmax.f32 %v1201, 0.0
      %v1234 = vmax.f32 %v1202, 0.0
      %v1235 = vmax.f32 %v1203, 0.0
      %v1236 = vmax.f32 %v1204, 0.0
      %v1237 = vmin.f32 %v1205, 6.0
      %v1238 = vmin.f32 %v1206, 6.0
      %v1239 = vmin.f32 %v1207, 6.0
      %v1240 = vmin.f32 %v1208, 6.0
      %v1241 = vmin.f32 %v1209, 6.0
      %v1242 = vmin.f32 %v1210, 6.0
      %v1243 = vmin.f32 %v1211, 6.0
      %v1244 = vmin.f32 %v1212, 6.0
      %v1245 = vmin.f32 %v1213, 6.0
      %v1246 = vmin.f32 %v1214, 6.0
      %v1247 = vmin.f32 %v1215, 6.0
      %v1248 = vmin.f32 %v1216, 6.0
      %v1249 = vmin.f32 %v1217, 6.0
      %v1250 = vmin.f32 %v1218, 6.0
      %v1251 = vmin.f32 %v1219, 6.0
      %v1252 = vmin.f32 %v1220, 6.0
      %v1253 = vmin.f32 %v1221, 6.0
      %v1254 = vmin.f32 %v1222, 6.0
      %v1255 = vmin.f32 %v1223, 6.0
      %v1256 = vmin.f32 %v1224, 6.0
      %v1257 = vmin.f32 %v1225, 6.0
      %v1258 = vmin.f32 %v1226, 6.0
      %v1259 = vmin.f32 %v1227, 6.0
      %v1260 = vmin.f32 %v1228, 6.0
      %v1261 = vmin.f32 %v1229, 6.0
      %v1262 = vmin.f32 %v1230, 6.0
      %v1263 = vmin.f32 %v1231, 6.0
      %v1264 = vmin.f32 %v1232, 6.0
      %v1265 = vmin.f32 %v1233, 6.0
      %v1266 = vmin.f32 %v1234, 6.0
      %v1267 = vmin.f32 %v1235, 6.0
      %v1268 = vmin.f32 %v1236, 6.0
      %v1269 = vmul.f32 %v1047, %v1237
      %v1270 = vmul.f32 %v1050, %v1238
      %v1271 = vmul.f32 %v1055, %v1239
      %v1272 = vmul.f32 %v1058, %v1240
      %v1273 = vmul.f32 %v1063, %v1241
      %v1274 = vmul.f32 %v1066, %v1242
      %v1275 = vmul.f32 %v1071, %v1243
      %v1276 = vmul.f32 %v1074, %v1244
      %v1277 = vmul.f32 %v1079, %v1245
      %v1278 = vmul.f32 %v1082, %v1246
      %v1279 = vmul.f32 %v1087, %v1247
      %v1280 = vmul.f32 %v1090, %v1248
      %v1281 = vmul.f32 %v1095, %v1249
      %v1282 = vmul.f32 %v1098, %v1250
      %v1283 = vmul.f32 %v1103, %v1251
      %v1284 = vmul.f32 %v1106, %v1252
      %v1285 = vmul.f32 %v1111, %v1253
      %v1286 = vmul.f32 %v1114, %v1254
      %v1287 = vmul.f32 %v1119, %v1255
      %v1288 = vmul.f32 %v1122, %v1256
      %v1289 = vmul.f32 %v1127, %v1257
      %v1290 = vmul.f32 %v1130, %v1258
      %v1291 = vmul.f32 %v1135, %v1259
      %v1292 = vmul.f32 %v1138, %v1260
      %v1293 = vmul.f32 %v1143, %v1261
      %v1294 = vmul.f32 %v1146, %v1262
      %v1295 = vmul.f32 %v1151, %v1263
      %v1296 = vmul.f32 %v1154, %v1264
      %v1297 = vmul.f32 %v1159, %v1265
      %v1298 = vmul.f32 %v1162, %v1266
      %v1299 = vmul.f32 %v1167, %v1267
      %v1300 = vmul.f32 %v1170, %v1268
      %v1301 = vmul.f32 %v1269, 0.16666667
      %v1302 = vmul.f32 %v1270, 0.16666667
      %v1303 = vmul.f32 %v1271, 0.16666667
      %v1304 = vmul.f32 %v1272, 0.16666667
      %v1305 = vmul.f32 %v1273, 0.16666667
      %v1306 = vmul.f32 %v1274, 0.16666667
      %v1307 = vmul.f32 %v1275, 0.16666667
      %v1308 = vmul.f32 %v1276, 0.16666667
      %v1309 = vmul.f32 %v1277, 0.16666667
      %v1310 = vmul.f32 %v1278, 0.16666667
      %v1311 = vmul.f32 %v1279, 0.16666667
      %v1312 = vmul.f32 %v1280, 0.16666667
      %v1313 = vmul.f32 %v1281, 0.16666667
      %v1314 = vmul.f32 %v1282, 0.16666667
      %v1315 = vmul.f32 %v1283, 0.16666667
      %v1316 = vmul.f32 %v1284, 0.16666667
      %v1317 = vmul.f32 %v1285, 0.16666667
      %v1318 = vmul.f32 %v1286, 0.16666667
      %v1319 = vmul.f32 %v1287, 0.16666667
      %v1320 = vmul.f32 %v1288, 0.16666667
      %v1321 = vmul.f32 %v1289, 0.16666667
      %v1322 = vmul.f32 %v1290, 0.16666667
      %v1323 = vmul.f32 %v1291, 0.16666667
      %v1324 = vmul.f32 %v1292, 0.16666667
      %v1325 = vmul.f32 %v1293, 0.16666667
      %v1326 = vmul.f32 %v1294, 0.16666667
      %v1327 = vmul.f32 %v1295, 0.16666667
      %v1328 = vmul.f32 %v1296, 0.16666667
      %v1329 = vmul.f32 %v1297, 0.16666667
      %v1330 = vmul.f32 %v1298, 0.16666667
      %v1331 = vmul.f32 %v1299, 0.16666667
      %v1332 = vmul.f32 %v1300, 0.16666667
      %v1333 = vld [vmem:[%s8 + $0x4] sm:$0x1]
      %v1334 = vlaneseq
      %v1335 = vshrl.u32 %v1334, 7
      %v1336 = vsub.s32 0, %v1335
      %v1337 = vrot.slane %v1333, %v1336
      %v1338 = vmul.f32 %v1301, %v1337
      %v1339 = vmul.f32 %v1302, %v1337
      %v1340 = vmul.f32 %v1303, %v1337
      %v1341 = vmul.f32 %v1304, %v1337
      %v1342 = vmul.f32 %v1305, %v1337
      %v1343 = vmul.f32 %v1306, %v1337
      %v1344 = vmul.f32 %v1307, %v1337
      %v1345 = vmul.f32 %v1308, %v1337
      %v1346 = vmul.f32 %v1309, %v1337
      %v1347 = vmul.f32 %v1310, %v1337
      %v1348 = vmul.f32 %v1311, %v1337
      %v1349 = vmul.f32 %v1312, %v1337
      %v1350 = vmul.f32 %v1313, %v1337
      %v1351 = vmul.f32 %v1314, %v1337
      %v1352 = vmul.f32 %v1315, %v1337
      %v1353 = vmul.f32 %v1316, %v1337
      %v1354 = vmul.f32 %v1317, %v1337
      %v1355 = vmul.f32 %v1318, %v1337
      %v1356 = vmul.f32 %v1319, %v1337
      %v1357 = vmul.f32 %v1320, %v1337
      %v1358 = vmul.f32 %v1321, %v1337
      %v1359 = vmul.f32 %v1322, %v1337
      %v1360 = vmul.f32 %v1323, %v1337
      %v1361 = vmul.f32 %v1324, %v1337
      %v1362 = vmul.f32 %v1325, %v1337
      %v1363 = vmul.f32 %v1326, %v1337
      %v1364 = vmul.f32 %v1327, %v1337
      %v1365 = vmul.f32 %v1328, %v1337
      %v1366 = vmul.f32 %v1329, %v1337
      %v1367 = vmul.f32 %v1330, %v1337
      %v1368 = vmul.f32 %v1331, %v1337
      %v1369 = vmul.f32 %v1332, %v1337
      %v1370 = vrot.slane %v1301, 7
      %v1371 = vrot.slane %v1302, 7
      %v1372 = vrot.slane %v1303, 7
      %v1373 = vrot.slane %v1304, 7
      %v1374 = vrot.slane %v1305, 7
      %v1375 = vrot.slane %v1306, 7
      %v1376 = vrot.slane %v1307, 7
      %v1377 = vrot.slane %v1308, 7
      %v1378 = vrot.slane %v1309, 7
      %v1379 = vrot.slane %v1310, 7
      %v1380 = vrot.slane %v1311, 7
      %v1381 = vrot.slane %v1312, 7
      %v1382 = vrot.slane %v1313, 7
      %v1383 = vrot.slane %v1314, 7
      %v1384 = vrot.slane %v1315, 7
      %v1385 = vrot.slane %v1316, 7
      %v1386 = vrot.slane %v1317, 7
      %v1387 = vrot.slane %v1318, 7
      %v1388 = vrot.slane %v1319, 7
      %v1389 = vrot.slane %v1320, 7
      %v1390 = vrot.slane %v1321, 7
      %v1391 = vrot.slane %v1322, 7
      %v1392 = vrot.slane %v1323, 7
      %v1393 = vrot.slane %v1324, 7
      %v1394 = vrot.slane %v1325, 7
      %v1395 = vrot.slane %v1326, 7
      %v1396 = vrot.slane %v1327, 7
      %v1397 = vrot.slane %v1328, 7
      %v1398 = vrot.slane %v1329, 7
      %v1399 = vrot.slane %v1330, 7
      %v1400 = vrot.slane %v1331, 7
      %v1401 = vrot.slane %v1332, 7
      %v1402 = vlaneseq
      %v1403 = vshrl.u32 %v1402, 7
      %vm1404 = vcmp.lt.s32.totalorder %v1403, 1
      %v1405 = vsel %vm1404, %v1400, %v1401
      %v1406 = vsel %vm1404, %v1399, %v1400
      %v1407 = vsel %vm1404, %v1398, %v1399
      %v1408 = vsel %vm1404, %v1397, %v1398
      %v1409 = vsel %vm1404, %v1396, %v1397
      %v1410 = vsel %vm1404, %v1395, %v1396
      %v1411 = vsel %vm1404, %v1394, %v1395
      %v1412 = vsel %vm1404, %v1393, %v1394
      %v1413 = vsel %vm1404, %v1392, %v1393
      %v1414 = vsel %vm1404, %v1391, %v1392
      %v1415 = vsel %vm1404, %v1390, %v1391
      %v1416 = vsel %vm1404, %v1389, %v1390
      %v1417 = vsel %vm1404, %v1388, %v1389
      %v1418 = vsel %vm1404, %v1387, %v1388
      %v1419 = vsel %vm1404, %v1386, %v1387
      %v1420 = vsel %vm1404, %v1385, %v1386
      %v1421 = vsel %vm1404, %v1384, %v1385
      %v1422 = vsel %vm1404, %v1383, %v1384
      %v1423 = vsel %vm1404, %v1382, %v1383
      %v1424 = vsel %vm1404, %v1381, %v1382
      %v1425 = vsel %vm1404, %v1380, %v1381
      %v1426 = vsel %vm1404, %v1379, %v1380
      %v1427 = vsel %vm1404, %v1378, %v1379
      %v1428 = vsel %vm1404, %v1377, %v1378
      %v1429 = vsel %vm1404, %v1376, %v1377
      %v1430 = vsel %vm1404, %v1375, %v1376
      %v1431 = vsel %vm1404, %v1374, %v1375
      %v1432 = vsel %vm1404, %v1373, %v1374
      %v1433 = vsel %vm1404, %v1372, %v1373
      %v1434 = vsel %vm1404, %v1371, %v1372
      %v1435 = vsel %vm1404, %v1370, %v1371
      %v1436 = vsel %vm1404, %v1401, %v1370
      %v1437 = vld [vmem:[%s1] sm:$0xff]
      %v1438 = vld [vmem:[%s1 + $0x8] sm:$0xff]
      %v1439 = vld [vmem:[%s1 + $0x10] sm:$0xff]
      %v1440 = vld [vmem:[%s1 + $0x18] sm:$0xff]
      %v1441 = vld [vmem:[%s1 + $0x20] sm:$0xff]
      %v1442 = vld [vmem:[%s1 + $0x28] sm:$0xff]
      %v1443 = vld [vmem:[%s1 + $0x30] sm:$0xff]
      %v1444 = vld [vmem:[%s1 + $0x38] sm:$0xff]
      %v1445 = vld [vmem:[%s1 + $0x40] sm:$0xff]
      %v1446 = vld [vmem:[%s1 + $0x48] sm:$0xff]
      %v1447 = vld [vmem:[%s1 + $0x50] sm:$0xff]
      %v1448 = vld [vmem:[%s1 + $0x58] sm:$0xff]
      %v1449 = vld [vmem:[%s1 + $0x60] sm:$0xff]
      %v1450 = vld [vmem:[%s1 + $0x68] sm:$0xff]
      %v1451 = vld [vmem:[%s1 + $0x70] sm:$0xff]
      %v1452 = vld [vmem:[%s1 + $0x78] sm:$0xff]
      %v1453 = vld [vmem:[%s1 + $0x80] sm:$0xff]
      %v1454 = vld [vmem:[%s1 + $0x88] sm:$0xff]
      %v1455 = vld [vmem:[%s1 + $0x90] sm:$0xff]
      %v1456 = vld [vmem:[%s1 + $0x98] sm:$0xff]
      %v1457 = vld [vmem:[%s1 + $0xa0] sm:$0xff]
      %v1458 = vld [vmem:[%s1 + $0xa8] sm:$0xff]
      %v1459 = vld [vmem:[%s1 + $0xb0] sm:$0xff]
      %v1460 = vld [vmem:[%s1 + $0xb8] sm:$0xff]
      %v1461 = vld [vmem:[%s1 + $0xc0] sm:$0xff]
      %v1462 = vld [vmem:[%s1 + $0xc8] sm:$0xff]
      %v1463 = vld [vmem:[%s1 + $0xd0] sm:$0xff]
      %v1464 = vld [vmem:[%s1 + $0xd8] sm:$0xff]
      %v1465 = vld [vmem:[%s1 + $0xe0] sm:$0xff]
      %v1466 = vld [vmem:[%s1 + $0xe8] sm:$0xff]
      %v1467 = vld [vmem:[%s1 + $0xf0] sm:$0xff]
      %v1468 = vld [vmem:[%s1 + $0xf8] sm:$0xff]
      %1470 = vset.pattern.permute.xlu0 0
      %1471 = vperm.xlu0 %1470, %v1437
      %v1472 = vpop.permute.xlu0 %1471
      %1475 = vset.pattern.permute.xlu0 0
      %1476 = vperm.xlu0 %1475, %v1438
      %v1477 = vpop.permute.xlu0 %1476
      %1480 = vset.pattern.permute.xlu0 0
      %1481 = vperm.xlu0 %1480, %v1439
      %v1482 = vpop.permute.xlu0 %1481
      %1485 = vset.pattern.permute.xlu0 0
      %1486 = vperm.xlu0 %1485, %v1440
      %v1487 = vpop.permute.xlu0 %1486
      %1490 = vset.pattern.permute.xlu0 0
      %1491 = vperm.xlu0 %1490, %v1441
      %v1492 = vpop.permute.xlu0 %1491
      %1495 = vset.pattern.permute.xlu0 0
      %1496 = vperm.xlu0 %1495, %v1442
      %v1497 = vpop.permute.xlu0 %1496
      %1500 = vset.pattern.permute.xlu0 0
      %1501 = vperm.xlu0 %1500, %v1443
      %v1502 = vpop.permute.xlu0 %1501
      %1505 = vset.pattern.permute.xlu0 0
      %1506 = vperm.xlu0 %1505, %v1444
      %v1507 = vpop.permute.xlu0 %1506
      %1510 = vset.pattern.permute.xlu0 0
      %1511 = vperm.xlu0 %1510, %v1445
      %v1512 = vpop.permute.xlu0 %1511
      %1515 = vset.pattern.permute.xlu0 0
      %1516 = vperm.xlu0 %1515, %v1446
      %v1517 = vpop.permute.xlu0 %1516
      %1520 = vset.pattern.permute.xlu0 0
      %1521 = vperm.xlu0 %1520, %v1447
      %v1522 = vpop.permute.xlu0 %1521
      %1525 = vset.pattern.permute.xlu0 0
      %1526 = vperm.xlu0 %1525, %v1448
      %v1527 = vpop.permute.xlu0 %1526
      %1530 = vset.pattern.permute.xlu0 0
      %1531 = vperm.xlu0 %1530, %v1449
      %v1532 = vpop.permute.xlu0 %1531
      %1535 = vset.pattern.permute.xlu0 0
      %1536 = vperm.xlu0 %1535, %v1450
      %v1537 = vpop.permute.xlu0 %1536
      %1540 = vset.pattern.permute.xlu0 0
      %1541 = vperm.xlu0 %1540, %v1451
      %v1542 = vpop.permute.xlu0 %1541
      %1545 = vset.pattern.permute.xlu0 0
      %1546 = vperm.xlu0 %1545, %v1452
      %v1547 = vpop.permute.xlu0 %1546
      %1550 = vset.pattern.permute.xlu0 0
      %1551 = vperm.xlu0 %1550, %v1453
      %v1552 = vpop.permute.xlu0 %1551
      %1555 = vset.pattern.permute.xlu0 0
      %1556 = vperm.xlu0 %1555, %v1454
      %v1557 = vpop.permute.xlu0 %1556
      %1560 = vset.pattern.permute.xlu0 0
      %1561 = vperm.xlu0 %1560, %v1455
      %v1562 = vpop.permute.xlu0 %1561
      %1565 = vset.pattern.permute.xlu0 0
      %1566 = vperm.xlu0 %1565, %v1456
      %v1567 = vpop.permute.xlu0 %1566
      %1570 = vset.pattern.permute.xlu0 0
      %1571 = vperm.xlu0 %1570, %v1457
      %v1572 = vpop.permute.xlu0 %1571
      %1575 = vset.pattern.permute.xlu0 0
      %1576 = vperm.xlu0 %1575, %v1458
      %v1577 = vpop.permute.xlu0 %1576
      %1580 = vset.pattern.permute.xlu0 0
      %1581 = vperm.xlu0 %1580, %v1459
      %v1582 = vpop.permute.xlu0 %1581
      %1585 = vset.pattern.permute.xlu0 0
      %1586 = vperm.xlu0 %1585, %v1460
      %v1587 = vpop.permute.xlu0 %1586
      %1590 = vset.pattern.permute.xlu0 0
      %1591 = vperm.xlu0 %1590, %v1461
      %v1592 = vpop.permute.xlu0 %1591
      %1595 = vset.pattern.permute.xlu0 0
      %1596 = vperm.xlu0 %1595, %v1462
      %v1597 = vpop.permute.xlu0 %1596
      %1600 = vset.pattern.permute.xlu0 0
      %1601 = vperm.xlu0 %1600, %v1463
      %v1602 = vpop.permute.xlu0 %1601
      %1605 = vset.pattern.permute.xlu0 0
      %1606 = vperm.xlu0 %1605, %v1464
      %v1607 = vpop.permute.xlu0 %1606
      %1610 = vset.pattern.permute.xlu0 0
      %1611 = vperm.xlu0 %1610, %v1465
      %v1612 = vpop.permute.xlu0 %1611
      %1615 = vset.pattern.permute.xlu0 0
      %1616 = vperm.xlu0 %1615, %v1466
      %v1617 = vpop.permute.xlu0 %1616
      %1620 = vset.pattern.permute.xlu0 0
      %1621 = vperm.xlu0 %1620, %v1467
      %v1622 = vpop.permute.xlu0 %1621
      %1625 = vset.pattern.permute.xlu0 0
      %1626 = vperm.xlu0 %1625, %v1468
      %v1627 = vpop.permute.xlu0 %1626
      %v1629 = vmul.f32 %v1406, %v1472
      %v1630 = vmul.f32 %v1405, %v1477
      %v1631 = vmul.f32 %v1436, %v1482
      %v1632 = vmul.f32 %v1435, %v1487
      %v1633 = vmul.f32 %v1434, %v1492
      %v1634 = vmul.f32 %v1433, %v1497
      %v1635 = vmul.f32 %v1432, %v1502
      %v1636 = vmul.f32 %v1431, %v1507
      %v1637 = vmul.f32 %v1430, %v1512
      %v1638 = vmul.f32 %v1429, %v1517
      %v1639 = vmul.f32 %v1428, %v1522
      %v1640 = vmul.f32 %v1427, %v1527
      %v1641 = vmul.f32 %v1426, %v1532
      %v1642 = vmul.f32 %v1425, %v1537
      %v1643 = vmul.f32 %v1424, %v1542
      %v1644 = vmul.f32 %v1423, %v1547
      %v1645 = vmul.f32 %v1422, %v1552
      %v1646 = vmul.f32 %v1421, %v1557
      %v1647 = vmul.f32 %v1420, %v1562
      %v1648 = vmul.f32 %v1419, %v1567
      %v1649 = vmul.f32 %v1418, %v1572
      %v1650 = vmul.f32 %v1417, %v1577
      %v1651 = vmul.f32 %v1416, %v1582
      %v1652 = vmul.f32 %v1415, %v1587
      %v1653 = vmul.f32 %v1414, %v1592
      %v1654 = vmul.f32 %v1413, %v1597
      %v1655 = vmul.f32 %v1412, %v1602
      %v1656 = vmul.f32 %v1411, %v1607
      %v1657 = vmul.f32 %v1410, %v1612
      %v1658 = vmul.f32 %v1409, %v1617
      %v1659 = vmul.f32 %v1408, %v1622
      %v1660 = vmul.f32 %v1407, %v1627
      %v1661 = vld [vmem:[%s8] sm:$0x1]
      %v1662 = vlaneseq
      %v1663 = vshrl.u32 %v1662, 7
      %v1664 = vsub.s32 0, %v1663
      %v1665 = vrot.slane %v1661, %v1664
      %v1666 = vmul.f32 %v1629, %v1665
      %v1667 = vmul.f32 %v1630, %v1665
      %v1668 = vmul.f32 %v1631, %v1665
      %v1669 = vmul.f32 %v1632, %v1665
      %v1670 = vmul.f32 %v1633, %v1665
      %v1671 = vmul.f32 %v1634, %v1665
      %v1672 = vmul.f32 %v1635, %v1665
      %v1673 = vmul.f32 %v1636, %v1665
      %v1674 = vmul.f32 %v1637, %v1665
      %v1675 = vmul.f32 %v1638, %v1665
      %v1676 = vmul.f32 %v1639, %v1665
      %v1677 = vmul.f32 %v1640, %v1665
      %v1678 = vmul.f32 %v1641, %v1665
      %v1679 = vmul.f32 %v1642, %v1665
      %v1680 = vmul.f32 %v1643, %v1665
      %v1681 = vmul.f32 %v1644, %v1665
      %v1682 = vmul.f32 %v1645, %v1665
      %v1683 = vmul.f32 %v1646, %v1665
      %v1684 = vmul.f32 %v1647, %v1665
      %v1685 = vmul.f32 %v1648, %v1665
      %v1686 = vmul.f32 %v1649, %v1665
      %v1687 = vmul.f32 %v1650, %v1665
      %v1688 = vmul.f32 %v1651, %v1665
      %v1689 = vmul.f32 %v1652, %v1665
      %v1690 = vmul.f32 %v1653, %v1665
      %v1691 = vmul.f32 %v1654, %v1665
      %v1692 = vmul.f32 %v1655, %v1665
      %v1693 = vmul.f32 %v1656, %v1665
      %v1694 = vmul.f32 %v1657, %v1665
      %v1695 = vmul.f32 %v1658, %v1665
      %v1696 = vmul.f32 %v1659, %v1665
      %v1697 = vmul.f32 %v1660, %v1665
      %v1698 = vadd.f32 %v1338, %v1666
      %v1699 = vadd.f32 %v1339, %v1667
      %v1700 = vadd.f32 %v1340, %v1668
      %v1701 = vadd.f32 %v1341, %v1669
      %v1702 = vadd.f32 %v1342, %v1670
      %v1703 = vadd.f32 %v1343, %v1671
      %v1704 = vadd.f32 %v1344, %v1672
      %v1705 = vadd.f32 %v1345, %v1673
      %v1706 = vadd.f32 %v1346, %v1674
      %v1707 = vadd.f32 %v1347, %v1675
      %v1708 = vadd.f32 %v1348, %v1676
      %v1709 = vadd.f32 %v1349, %v1677
      %v1710 = vadd.f32 %v1350, %v1678
      %v1711 = vadd.f32 %v1351, %v1679
      %v1712 = vadd.f32 %v1352, %v1680
      %v1713 = vadd.f32 %v1353, %v1681
      %v1714 = vadd.f32 %v1354, %v1682
      %v1715 = vadd.f32 %v1355, %v1683
      %v1716 = vadd.f32 %v1356, %v1684
      %v1717 = vadd.f32 %v1357, %v1685
      %v1718 = vadd.f32 %v1358, %v1686
      %v1719 = vadd.f32 %v1359, %v1687
      %v1720 = vadd.f32 %v1360, %v1688
      %v1721 = vadd.f32 %v1361, %v1689
      %v1722 = vadd.f32 %v1362, %v1690
      %v1723 = vadd.f32 %v1363, %v1691
      %v1724 = vadd.f32 %v1364, %v1692
      %v1725 = vadd.f32 %v1365, %v1693
      %v1726 = vadd.f32 %v1366, %v1694
      %v1727 = vadd.f32 %v1367, %v1695
      %v1728 = vadd.f32 %v1368, %v1696
      %v1729 = vadd.f32 %v1369, %v1697
      %1730 = vset.pattern.permute.xlu0 1
      %1731 = vperm.xlu0 %1730, %v1437
      %v1732 = vpop.permute.xlu0 %1731
      %1734 = vset.pattern.permute.xlu0 1
      %1735 = vperm.xlu0 %1734, %v1438
      %v1736 = vpop.permute.xlu0 %1735
      %1738 = vset.pattern.permute.xlu0 1
      %1739 = vperm.xlu0 %1738, %v1439
      %v1740 = vpop.permute.xlu0 %1739
      %1742 = vset.pattern.permute.xlu0 1
      %1743 = vperm.xlu0 %1742, %v1440
      %v1744 = vpop.permute.xlu0 %1743
      %1746 = vset.pattern.permute.xlu0 1
      %1747 = vperm.xlu0 %1746, %v1441
      %v1748 = vpop.permute.xlu0 %1747
      %1750 = vset.pattern.permute.xlu0 1
      %1751 = vperm.xlu0 %1750, %v1442
      %v1752 = vpop.permute.xlu0 %1751
      %1754 = vset.pattern.permute.xlu0 1
      %1755 = vperm.xlu0 %1754, %v1443
      %v1756 = vpop.permute.xlu0 %1755
      %1758 = vset.pattern.permute.xlu0 1
      %1759 = vperm.xlu0 %1758, %v1444
      %v1760 = vpop.permute.xlu0 %1759
      %1762 = vset.pattern.permute.xlu0 1
      %1763 = vperm.xlu0 %1762, %v1445
      %v1764 = vpop.permute.xlu0 %1763
      %1766 = vset.pattern.permute.xlu0 1
      %1767 = vperm.xlu0 %1766, %v1446
      %v1768 = vpop.permute.xlu0 %1767
      %1770 = vset.pattern.permute.xlu0 1
      %1771 = vperm.xlu0 %1770, %v1447
      %v1772 = vpop.permute.xlu0 %1771
      %1774 = vset.pattern.permute.xlu0 1
      %1775 = vperm.xlu0 %1774, %v1448
      %v1776 = vpop.permute.xlu0 %1775
      %1778 = vset.pattern.permute.xlu0 1
      %1779 = vperm.xlu0 %1778, %v1449
      %v1780 = vpop.permute.xlu0 %1779
      %1782 = vset.pattern.permute.xlu0 1
      %1783 = vperm.xlu0 %1782, %v1450
      %v1784 = vpop.permute.xlu0 %1783
      %1786 = vset.pattern.permute.xlu0 1
      %1787 = vperm.xlu0 %1786, %v1451
      %v1788 = vpop.permute.xlu0 %1787
      %1790 = vset.pattern.permute.xlu0 1
      %1791 = vperm.xlu0 %1790, %v1452
      %v1792 = vpop.permute.xlu0 %1791
      %1794 = vset.pattern.permute.xlu0 1
      %1795 = vperm.xlu0 %1794, %v1453
      %v1796 = vpop.permute.xlu0 %1795
      %1798 = vset.pattern.permute.xlu0 1
      %1799 = vperm.xlu0 %1798, %v1454
      %v1800 = vpop.permute.xlu0 %1799
      %1802 = vset.pattern.permute.xlu0 1
      %1803 = vperm.xlu0 %1802, %v1455
      %v1804 = vpop.permute.xlu0 %1803
      %1806 = vset.pattern.permute.xlu0 1
      %1807 = vperm.xlu0 %1806, %v1456
      %v1808 = vpop.permute.xlu0 %1807
      %1810 = vset.pattern.permute.xlu0 1
      %1811 = vperm.xlu0 %1810, %v1457
      %v1812 = vpop.permute.xlu0 %1811
      %1814 = vset.pattern.permute.xlu0 1
      %1815 = vperm.xlu0 %1814, %v1458
      %v1816 = vpop.permute.xlu0 %1815
      %1818 = vset.pattern.permute.xlu0 1
      %1819 = vperm.xlu0 %1818, %v1459
      %v1820 = vpop.permute.xlu0 %1819
      %1822 = vset.pattern.permute.xlu0 1
      %1823 = vperm.xlu0 %1822, %v1460
      %v1824 = vpop.permute.xlu0 %1823
      %1826 = vset.pattern.permute.xlu0 1
      %1827 = vperm.xlu0 %1826, %v1461
      %v1828 = vpop.permute.xlu0 %1827
      %1830 = vset.pattern.permute.xlu0 1
      %1831 = vperm.xlu0 %1830, %v1462
      %v1832 = vpop.permute.xlu0 %1831
      %1834 = vset.pattern.permute.xlu0 1
      %1835 = vperm.xlu0 %1834, %v1463
      %v1836 = vpop.permute.xlu0 %1835
      %1838 = vset.pattern.permute.xlu0 1
      %1839 = vperm.xlu0 %1838, %v1464
      %v1840 = vpop.permute.xlu0 %1839
      %1842 = vset.pattern.permute.xlu0 1
      %1843 = vperm.xlu0 %1842, %v1465
      %v1844 = vpop.permute.xlu0 %1843
      %1846 = vset.pattern.permute.xlu0 1
      %1847 = vperm.xlu0 %1846, %v1466
      %v1848 = vpop.permute.xlu0 %1847
      %1850 = vset.pattern.permute.xlu0 1
      %1851 = vperm.xlu0 %1850, %v1467
      %v1852 = vpop.permute.xlu0 %1851
      %1854 = vset.pattern.permute.xlu0 1
      %1855 = vperm.xlu0 %1854, %v1468
      %v1856 = vpop.permute.xlu0 %1855
      %v1858 = vmul.f32 %v1331, %v1732
      %v1859 = vmul.f32 %v1332, %v1736
      %v1860 = vmul.f32 %v1301, %v1740
      %v1861 = vmul.f32 %v1302, %v1744
      %v1862 = vmul.f32 %v1303, %v1748
      %v1863 = vmul.f32 %v1304, %v1752
      %v1864 = vmul.f32 %v1305, %v1756
      %v1865 = vmul.f32 %v1306, %v1760
      %v1866 = vmul.f32 %v1307, %v1764
      %v1867 = vmul.f32 %v1308, %v1768
      %v1868 = vmul.f32 %v1309, %v1772
      %v1869 = vmul.f32 %v1310, %v1776
      %v1870 = vmul.f32 %v1311, %v1780
      %v1871 = vmul.f32 %v1312, %v1784
      %v1872 = vmul.f32 %v1313, %v1788
      %v1873 = vmul.f32 %v1314, %v1792
      %v1874 = vmul.f32 %v1315, %v1796
      %v1875 = vmul.f32 %v1316, %v1800
      %v1876 = vmul.f32 %v1317, %v1804
      %v1877 = vmul.f32 %v1318, %v1808
      %v1878 = vmul.f32 %v1319, %v1812
      %v1879 = vmul.f32 %v1320, %v1816
      %v1880 = vmul.f32 %v1321, %v1820
      %v1881 = vmul.f32 %v1322, %v1824
      %v1882 = vmul.f32 %v1323, %v1828
      %v1883 = vmul.f32 %v1324, %v1832
      %v1884 = vmul.f32 %v1325, %v1836
      %v1885 = vmul.f32 %v1326, %v1840
      %v1886 = vmul.f32 %v1327, %v1844
      %v1887 = vmul.f32 %v1328, %v1848
      %v1888 = vmul.f32 %v1329, %v1852
      %v1889 = vmul.f32 %v1330, %v1856
      %v1890 = vld [vmem:[%s8 + $0x1] sm:$0x1]
      %v1891 = vlaneseq
      %v1892 = vshrl.u32 %v1891, 7
      %v1893 = vsub.s32 0, %v1892
      %v1894 = vrot.slane %v1890, %v1893
      %v1895 = vmul.f32 %v1858, %v1894
      %v1896 = vmul.f32 %v1859, %v1894
      %v1897 = vmul.f32 %v1860, %v1894
      %v1898 = vmul.f32 %v1861, %v1894
      %v1899 = vmul.f32 %v1862, %v1894
      %v1900 = vmul.f32 %v1863, %v1894
      %v1901 = vmul.f32 %v1864, %v1894
      %v1902 = vmul.f32 %v1865, %v1894
      %v1903 = vmul.f32 %v1866, %v1894
      %v1904 = vmul.f32 %v1867, %v1894
      %v1905 = vmul.f32 %v1868, %v1894
      %v1906 = vmul.f32 %v1869, %v1894
      %v1907 = vmul.f32 %v1870, %v1894
      %v1908 = vmul.f32 %v1871, %v1894
      %v1909 = vmul.f32 %v1872, %v1894
      %v1910 = vmul.f32 %v1873, %v1894
      %v1911 = vmul.f32 %v1874, %v1894
      %v1912 = vmul.f32 %v1875, %v1894
      %v1913 = vmul.f32 %v1876, %v1894
      %v1914 = vmul.f32 %v1877, %v1894
      %v1915 = vmul.f32 %v1878, %v1894
      %v1916 = vmul.f32 %v1879, %v1894
      %v1917 = vmul.f32 %v1880, %v1894
      %v1918 = vmul.f32 %v1881, %v1894
      %v1919 = vmul.f32 %v1882, %v1894
      %v1920 = vmul.f32 %v1883, %v1894
      %v1921 = vmul.f32 %v1884, %v1894
      %v1922 = vmul.f32 %v1885, %v1894
      %v1923 = vmul.f32 %v1886, %v1894
      %v1924 = vmul.f32 %v1887, %v1894
      %v1925 = vmul.f32 %v1888, %v1894
      %v1926 = vmul.f32 %v1889, %v1894
      %v1927 = vadd.f32 %v1698, %v1895
      %v1928 = vadd.f32 %v1699, %v1896
      %v1929 = vadd.f32 %v1700, %v1897
      %v1930 = vadd.f32 %v1701, %v1898
      %v1931 = vadd.f32 %v1702, %v1899
      %v1932 = vadd.f32 %v1703, %v1900
      %v1933 = vadd.f32 %v1704, %v1901
      %v1934 = vadd.f32 %v1705, %v1902
      %v1935 = vadd.f32 %v1706, %v1903
      %v1936 = vadd.f32 %v1707, %v1904
      %v1937 = vadd.f32 %v1708, %v1905
      %v1938 = vadd.f32 %v1709, %v1906
      %v1939 = vadd.f32 %v1710, %v1907
      %v1940 = vadd.f32 %v1711, %v1908
      %v1941 = vadd.f32 %v1712, %v1909
      %v1942 = vadd.f32 %v1713, %v1910
      %v1943 = vadd.f32 %v1714, %v1911
      %v1944 = vadd.f32 %v1715, %v1912
      %v1945 = vadd.f32 %v1716, %v1913
      %v1946 = vadd.f32 %v1717, %v1914
      %v1947 = vadd.f32 %v1718, %v1915
      %v1948 = vadd.f32 %v1719, %v1916
      %v1949 = vadd.f32 %v1720, %v1917
      %v1950 = vadd.f32 %v1721, %v1918
      %v1951 = vadd.f32 %v1722, %v1919
      %v1952 = vadd.f32 %v1723, %v1920
      %v1953 = vadd.f32 %v1724, %v1921
      %v1954 = vadd.f32 %v1725, %v1922
      %v1955 = vadd.f32 %v1726, %v1923
      %v1956 = vadd.f32 %v1727, %v1924
      %v1957 = vadd.f32 %v1728, %v1925
      %v1958 = vadd.f32 %v1729, %v1926
      %v1959 = vrot.slane %v1301, 1
      %v1960 = vrot.slane %v1302, 1
      %v1961 = vrot.slane %v1303, 1
      %v1962 = vrot.slane %v1304, 1
      %v1963 = vrot.slane %v1305, 1
      %v1964 = vrot.slane %v1306, 1
      %v1965 = vrot.slane %v1307, 1
      %v1966 = vrot.slane %v1308, 1
      %v1967 = vrot.slane %v1309, 1
      %v1968 = vrot.slane %v1310, 1
      %v1969 = vrot.slane %v1311, 1
      %v1970 = vrot.slane %v1312, 1
      %v1971 = vrot.slane %v1313, 1
      %v1972 = vrot.slane %v1314, 1
      %v1973 = vrot.slane %v1315, 1
      %v1974 = vrot.slane %v1316, 1
      %v1975 = vrot.slane %v1317, 1
      %v1976 = vrot.slane %v1318, 1
      %v1977 = vrot.slane %v1319, 1
      %v1978 = vrot.slane %v1320, 1
      %v1979 = vrot.slane %v1321, 1
      %v1980 = vrot.slane %v1322, 1
      %v1981 = vrot.slane %v1323, 1
      %v1982 = vrot.slane %v1324, 1
      %v1983 = vrot.slane %v1325, 1
      %v1984 = vrot.slane %v1326, 1
      %v1985 = vrot.slane %v1327, 1
      %v1986 = vrot.slane %v1328, 1
      %v1987 = vrot.slane %v1329, 1
      %v1988 = vrot.slane %v1330, 1
      %v1989 = vrot.slane %v1331, 1
      %v1990 = vrot.slane %v1332, 1
      %vm1991 = vcmp.lt.s32.totalorder %v1403, 7
      %v1992 = vsel %vm1991, %v1989, %v1990
      %v1993 = vsel %vm1991, %v1988, %v1989
      %v1994 = vsel %vm1991, %v1987, %v1988
      %v1995 = vsel %vm1991, %v1986, %v1987
      %v1996 = vsel %vm1991, %v1985, %v1986
      %v1997 = vsel %vm1991, %v1984, %v1985
      %v1998 = vsel %vm1991, %v1983, %v1984
      %v1999 = vsel %vm1991, %v1982, %v1983
      %v2000 = vsel %vm1991, %v1981, %v1982
      %v2001 = vsel %vm1991, %v1980, %v1981
      %v2002 = vsel %vm1991, %v1979, %v1980
      %v2003 = vsel %vm1991, %v1978, %v1979
      %v2004 = vsel %vm1991, %v1977, %v1978
      %v2005 = vsel %vm1991, %v1976, %v1977
      %v2006 = vsel %vm1991, %v1975, %v1976
      %v2007 = vsel %vm1991, %v1974, %v1975
      %v2008 = vsel %vm1991, %v1973, %v1974
      %v2009 = vsel %vm1991, %v1972, %v1973
      %v2010 = vsel %vm1991, %v1971, %v1972
      %v2011 = vsel %vm1991, %v1970, %v1971
      %v2012 = vsel %vm1991, %v1969, %v1970
      %v2013 = vsel %vm1991, %v1968, %v1969
      %v2014 = vsel %vm1991, %v1967, %v1968
      %v2015 = vsel %vm1991, %v1966, %v1967
      %v2016 = vsel %vm1991, %v1965, %v1966
      %v2017 = vsel %vm1991, %v1964, %v1965
      %v2018 = vsel %vm1991, %v1963, %v1964
      %v2019 = vsel %vm1991, %v1962, %v1963
      %v2020 = vsel %vm1991, %v1961, %v1962
      %v2021 = vsel %vm1991, %v1960, %v1961
      %v2022 = vsel %vm1991, %v1959, %v1960
      %v2023 = vsel %vm1991, %v1990, %v1959
      %2024 = vset.pattern.permute.xlu0 2
      %2025 = vperm.xlu0 %2024, %v1437
      %v2026 = vpop.permute.xlu0 %2025
      %2028 = vset.pattern.permute.xlu0 2
      %2029 = vperm.xlu0 %2028, %v1438
      %v2030 = vpop.permute.xlu0 %2029
      %2032 = vset.pattern.permute.xlu0 2
      %2033 = vperm.xlu0 %2032, %v1439
      %v2034 = vpop.permute.xlu0 %2033
      %2036 = vset.pattern.permute.xlu0 2
      %2037 = vperm.xlu0 %2036, %v1440
      %v2038 = vpop.permute.xlu0 %2037
      %2040 = vset.pattern.permute.xlu0 2
      %2041 = vperm.xlu0 %2040, %v1441
      %v2042 = vpop.permute.xlu0 %2041
      %2044 = vset.pattern.permute.xlu0 2
      %2045 = vperm.xlu0 %2044, %v1442
      %v2046 = vpop.permute.xlu0 %2045
      %2048 = vset.pattern.permute.xlu0 2
      %2049 = vperm.xlu0 %2048, %v1443
      %v2050 = vpop.permute.xlu0 %2049
      %2052 = vset.pattern.permute.xlu0 2
      %2053 = vperm.xlu0 %2052, %v1444
      %v2054 = vpop.permute.xlu0 %2053
      %2056 = vset.pattern.permute.xlu0 2
      %2057 = vperm.xlu0 %2056, %v1445
      %v2058 = vpop.permute.xlu0 %2057
      %2060 = vset.pattern.permute.xlu0 2
      %2061 = vperm.xlu0 %2060, %v1446
      %v2062 = vpop.permute.xlu0 %2061
      %2064 = vset.pattern.permute.xlu0 2
      %2065 = vperm.xlu0 %2064, %v1447
      %v2066 = vpop.permute.xlu0 %2065
      %2068 = vset.pattern.permute.xlu0 2
      %2069 = vperm.xlu0 %2068, %v1448
      %v2070 = vpop.permute.xlu0 %2069
      %2072 = vset.pattern.permute.xlu0 2
      %2073 = vperm.xlu0 %2072, %v1449
      %v2074 = vpop.permute.xlu0 %2073
      %2076 = vset.pattern.permute.xlu0 2
      %2077 = vperm.xlu0 %2076, %v1450
      %v2078 = vpop.permute.xlu0 %2077
      %2080 = vset.pattern.permute.xlu0 2
      %2081 = vperm.xlu0 %2080, %v1451
      %v2082 = vpop.permute.xlu0 %2081
      %2084 = vset.pattern.permute.xlu0 2
      %2085 = vperm.xlu0 %2084, %v1452
      %v2086 = vpop.permute.xlu0 %2085
      %2088 = vset.pattern.permute.xlu0 2
      %2089 = vperm.xlu0 %2088, %v1453
      %v2090 = vpop.permute.xlu0 %2089
      %2092 = vset.pattern.permute.xlu0 2
      %2093 = vperm.xlu0 %2092, %v1454
      %v2094 = vpop.permute.xlu0 %2093
      %2096 = vset.pattern.permute.xlu0 2
      %2097 = vperm.xlu0 %2096, %v1455
      %v2098 = vpop.permute.xlu0 %2097
      %2100 = vset.pattern.permute.xlu0 2
      %2101 = vperm.xlu0 %2100, %v1456
      %v2102 = vpop.permute.xlu0 %2101
      %2104 = vset.pattern.permute.xlu0 2
      %2105 = vperm.xlu0 %2104, %v1457
      %v2106 = vpop.permute.xlu0 %2105
      %2108 = vset.pattern.permute.xlu0 2
      %2109 = vperm.xlu0 %2108, %v1458
      %v2110 = vpop.permute.xlu0 %2109
      %2112 = vset.pattern.permute.xlu0 2
      %2113 = vperm.xlu0 %2112, %v1459
      %v2114 = vpop.permute.xlu0 %2113
      %2116 = vset.pattern.permute.xlu0 2
      %2117 = vperm.xlu0 %2116, %v1460
      %v2118 = vpop.permute.xlu0 %2117
      %2120 = vset.pattern.permute.xlu0 2
      %2121 = vperm.xlu0 %2120, %v1461
      %v2122 = vpop.permute.xlu0 %2121
      %2124 = vset.pattern.permute.xlu0 2
      %2125 = vperm.xlu0 %2124, %v1462
      %v2126 = vpop.permute.xlu0 %2125
      %2128 = vset.pattern.permute.xlu0 2
      %2129 = vperm.xlu0 %2128, %v1463
      %v2130 = vpop.permute.xlu0 %2129
      %2132 = vset.pattern.permute.xlu0 2
      %2133 = vperm.xlu0 %2132, %v1464
      %v2134 = vpop.permute.xlu0 %2133
      %2136 = vset.pattern.permute.xlu0 2
      %2137 = vperm.xlu0 %2136, %v1465
      %v2138 = vpop.permute.xlu0 %2137
      %2140 = vset.pattern.permute.xlu0 2
      %2141 = vperm.xlu0 %2140, %v1466
      %v2142 = vpop.permute.xlu0 %2141
      %2144 = vset.pattern.permute.xlu0 2
      %2145 = vperm.xlu0 %2144, %v1467
      %v2146 = vpop.permute.xlu0 %2145
      %2148 = vset.pattern.permute.xlu0 2
      %2149 = vperm.xlu0 %2148, %v1468
      %v2150 = vpop.permute.xlu0 %2149
      %v2152 = vmul.f32 %v1992, %v2026
      %v2153 = vmul.f32 %v2023, %v2030
      %v2154 = vmul.f32 %v2022, %v2034
      %v2155 = vmul.f32 %v2021, %v2038
      %v2156 = vmul.f32 %v2020, %v2042
      %v2157 = vmul.f32 %v2019, %v2046
      %v2158 = vmul.f32 %v2018, %v2050
      %v2159 = vmul.f32 %v2017, %v2054
      %v2160 = vmul.f32 %v2016, %v2058
      %v2161 = vmul.f32 %v2015, %v2062
      %v2162 = vmul.f32 %v2014, %v2066
      %v2163 = vmul.f32 %v2013, %v2070
      %v2164 = vmul.f32 %v2012, %v2074
      %v2165 = vmul.f32 %v2011, %v2078
      %v2166 = vmul.f32 %v2010, %v2082
      %v2167 = vmul.f32 %v2009, %v2086
      %v2168 = vmul.f32 %v2008, %v2090
      %v2169 = vmul.f32 %v2007, %v2094
      %v2170 = vmul.f32 %v2006, %v2098
      %v2171 = vmul.f32 %v2005, %v2102
      %v2172 = vmul.f32 %v2004, %v2106
      %v2173 = vmul.f32 %v2003, %v2110
      %v2174 = vmul.f32 %v2002, %v2114
      %v2175 = vmul.f32 %v2001, %v2118
      %v2176 = vmul.f32 %v2000, %v2122
      %v2177 = vmul.f32 %v1999, %v2126
      %v2178 = vmul.f32 %v1998, %v2130
      %v2179 = vmul.f32 %v1997, %v2134
      %v2180 = vmul.f32 %v1996, %v2138
      %v2181 = vmul.f32 %v1995, %v2142
      %v2182 = vmul.f32 %v1994, %v2146
      %v2183 = vmul.f32 %v1993, %v2150
      %v2184 = vld [vmem:[%s8 + $0x2] sm:$0x1]
      %v2185 = vlaneseq
      %v2186 = vshrl.u32 %v2185, 7
      %v2187 = vsub.s32 0, %v2186
      %v2188 = vrot.slane %v2184, %v2187
      %v2189 = vmul.f32 %v2152, %v2188
      %v2190 = vmul.f32 %v2153, %v2188
      %v2191 = vmul.f32 %v2154, %v2188
      %v2192 = vmul.f32 %v2155, %v2188
      %v2193 = vmul.f32 %v2156, %v2188
      %v2194 = vmul.f32 %v2157, %v2188
      %v2195 = vmul.f32 %v2158, %v2188
      %v2196 = vmul.f32 %v2159, %v2188
      %v2197 = vmul.f32 %v2160, %v2188
      %v2198 = vmul.f32 %v2161, %v2188
      %v2199 = vmul.f32 %v2162, %v2188
      %v2200 = vmul.f32 %v2163, %v2188
      %v2201 = vmul.f32 %v2164, %v2188
      %v2202 = vmul.f32 %v2165, %v2188
      %v2203 = vmul.f32 %v2166, %v2188
      %v2204 = vmul.f32 %v2167, %v2188
      %v2205 = vmul.f32 %v2168, %v2188
      %v2206 = vmul.f32 %v2169, %v2188
      %v2207 = vmul.f32 %v2170, %v2188
      %v2208 = vmul.f32 %v2171, %v2188
      %v2209 = vmul.f32 %v2172, %v2188
      %v2210 = vmul.f32 %v2173, %v2188
      %v2211 = vmul.f32 %v2174, %v2188
      %v2212 = vmul.f32 %v2175, %v2188
      %v2213 = vmul.f32 %v2176, %v2188
      %v2214 = vmul.f32 %v2177, %v2188
      %v2215 = vmul.f32 %v2178, %v2188
      %v2216 = vmul.f32 %v2179, %v2188
      %v2217 = vmul.f32 %v2180, %v2188
      %v2218 = vmul.f32 %v2181, %v2188
      %v2219 = vmul.f32 %v2182, %v2188
      %v2220 = vmul.f32 %v2183, %v2188
      %v2221 = vadd.f32 %v1927, %v2189
      %v2222 = vadd.f32 %v1928, %v2190
      %v2223 = vadd.f32 %v1929, %v2191
      %v2224 = vadd.f32 %v1930, %v2192
      %v2225 = vadd.f32 %v1931, %v2193
      %v2226 = vadd.f32 %v1932, %v2194
      %v2227 = vadd.f32 %v1933, %v2195
      %v2228 = vadd.f32 %v1934, %v2196
      %v2229 = vadd.f32 %v1935, %v2197
      %v2230 = vadd.f32 %v1936, %v2198
      %v2231 = vadd.f32 %v1937, %v2199
      %v2232 = vadd.f32 %v1938, %v2200
      %v2233 = vadd.f32 %v1939, %v2201
      %v2234 = vadd.f32 %v1940, %v2202
      %v2235 = vadd.f32 %v1941, %v2203
      %v2236 = vadd.f32 %v1942, %v2204
      %v2237 = vadd.f32 %v1943, %v2205
      %v2238 = vadd.f32 %v1944, %v2206
      %v2239 = vadd.f32 %v1945, %v2207
      %v2240 = vadd.f32 %v1946, %v2208
      %v2241 = vadd.f32 %v1947, %v2209
      %v2242 = vadd.f32 %v1948, %v2210
      %v2243 = vadd.f32 %v1949, %v2211
      %v2244 = vadd.f32 %v1950, %v2212
      %v2245 = vadd.f32 %v1951, %v2213
      %v2246 = vadd.f32 %v1952, %v2214
      %v2247 = vadd.f32 %v1953, %v2215
      %v2248 = vadd.f32 %v1954, %v2216
      %v2249 = vadd.f32 %v1955, %v2217
      %v2250 = vadd.f32 %v1956, %v2218
      %v2251 = vadd.f32 %v1957, %v2219
      %v2252 = vadd.f32 %v1958, %v2220
      %2253 = vset.pattern.permute.xlu0 3
      %2254 = vperm.xlu0 %2253, %v1437
      %v2255 = vpop.permute.xlu0 %2254
      %2257 = vset.pattern.permute.xlu0 3
      %2258 = vperm.xlu0 %2257, %v1438
      %v2259 = vpop.permute.xlu0 %2258
      %2261 = vset.pattern.permute.xlu0 3
      %2262 = vperm.xlu0 %2261, %v1439
      %v2263 = vpop.permute.xlu0 %2262
      %2265 = vset.pattern.permute.xlu0 3
      %2266 = vperm.xlu0 %2265, %v1440
      %v2267 = vpop.permute.xlu0 %2266
      %2269 = vset.pattern.permute.xlu0 3
      %2270 = vperm.xlu0 %2269, %v1441
      %v2271 = vpop.permute.xlu0 %2270
      %2273 = vset.pattern.permute.xlu0 3
      %2274 = vperm.xlu0 %2273, %v1442
      %v2275 = vpop.permute.xlu0 %2274
      %2277 = vset.pattern.permute.xlu0 3
      %2278 = vperm.xlu0 %2277, %v1443
      %v2279 = vpop.permute.xlu0 %2278
      %2281 = vset.pattern.permute.xlu0 3
      %2282 = vperm.xlu0 %2281, %v1444
      %v2283 = vpop.permute.xlu0 %2282
      %2285 = vset.pattern.permute.xlu0 3
      %2286 = vperm.xlu0 %2285, %v1445
      %v2287 = vpop.permute.xlu0 %2286
      %2289 = vset.pattern.permute.xlu0 3
      %2290 = vperm.xlu0 %2289, %v1446
      %v2291 = vpop.permute.xlu0 %2290
      %2293 = vset.pattern.permute.xlu0 3
      %2294 = vperm.xlu0 %2293, %v1447
      %v2295 = vpop.permute.xlu0 %2294
      %2297 = vset.pattern.permute.xlu0 3
      %2298 = vperm.xlu0 %2297, %v1448
      %v2299 = vpop.permute.xlu0 %2298
      %2301 = vset.pattern.permute.xlu0 3
      %2302 = vperm.xlu0 %2301, %v1449
      %v2303 = vpop.permute.xlu0 %2302
      %2305 = vset.pattern.permute.xlu0 3
      %2306 = vperm.xlu0 %2305, %v1450
      %v2307 = vpop.permute.xlu0 %2306
      %2309 = vset.pattern.permute.xlu0 3
      %2310 = vperm.xlu0 %2309, %v1451
      %v2311 = vpop.permute.xlu0 %2310
      %2313 = vset.pattern.permute.xlu0 3
      %2314 = vperm.xlu0 %2313, %v1452
      %v2315 = vpop.permute.xlu0 %2314
      %2317 = vset.pattern.permute.xlu0 3
      %2318 = vperm.xlu0 %2317, %v1453
      %v2319 = vpop.permute.xlu0 %2318
      %2321 = vset.pattern.permute.xlu0 3
      %2322 = vperm.xlu0 %2321, %v1454
      %v2323 = vpop.permute.xlu0 %2322
      %2325 = vset.pattern.permute.xlu0 3
      %2326 = vperm.xlu0 %2325, %v1455
      %v2327 = vpop.permute.xlu0 %2326
      %2329 = vset.pattern.permute.xlu0 3
      %2330 = vperm.xlu0 %2329, %v1456
      %v2331 = vpop.permute.xlu0 %2330
      %2333 = vset.pattern.permute.xlu0 3
      %2334 = vperm.xlu0 %2333, %v1457
      %v2335 = vpop.permute.xlu0 %2334
      %2337 = vset.pattern.permute.xlu0 3
      %2338 = vperm.xlu0 %2337, %v1458
      %v2339 = vpop.permute.xlu0 %2338
      %2341 = vset.pattern.permute.xlu0 3
      %2342 = vperm.xlu0 %2341, %v1459
      %v2343 = vpop.permute.xlu0 %2342
      %2345 = vset.pattern.permute.xlu0 3
      %2346 = vperm.xlu0 %2345, %v1460
      %v2347 = vpop.permute.xlu0 %2346
      %2349 = vset.pattern.permute.xlu0 3
      %2350 = vperm.xlu0 %2349, %v1461
      %v2351 = vpop.permute.xlu0 %2350
      %2353 = vset.pattern.permute.xlu0 3
      %2354 = vperm.xlu0 %2353, %v1462
      %v2355 = vpop.permute.xlu0 %2354
      %2357 = vset.pattern.permute.xlu0 3
      %2358 = vperm.xlu0 %2357, %v1463
      %v2359 = vpop.permute.xlu0 %2358
      %2361 = vset.pattern.permute.xlu0 3
      %2362 = vperm.xlu0 %2361, %v1464
      %v2363 = vpop.permute.xlu0 %2362
      %2365 = vset.pattern.permute.xlu0 3
      %2366 = vperm.xlu0 %2365, %v1465
      %v2367 = vpop.permute.xlu0 %2366
      %2369 = vset.pattern.permute.xlu0 3
      %2370 = vperm.xlu0 %2369, %v1466
      %v2371 = vpop.permute.xlu0 %2370
      %2373 = vset.pattern.permute.xlu0 3
      %2374 = vperm.xlu0 %2373, %v1467
      %v2375 = vpop.permute.xlu0 %2374
      %2377 = vset.pattern.permute.xlu0 3
      %2378 = vperm.xlu0 %2377, %v1468
      %v2379 = vpop.permute.xlu0 %2378
      %v2381 = vmul.f32 %v1436, %v2255
      %v2382 = vmul.f32 %v1435, %v2259
      %v2383 = vmul.f32 %v1434, %v2263
      %v2384 = vmul.f32 %v1433, %v2267
      %v2385 = vmul.f32 %v1432, %v2271
      %v2386 = vmul.f32 %v1431, %v2275
      %v2387 = vmul.f32 %v1430, %v2279
      %v2388 = vmul.f32 %v1429, %v2283
      %v2389 = vmul.f32 %v1428, %v2287
      %v2390 = vmul.f32 %v1427, %v2291
      %v2391 = vmul.f32 %v1426, %v2295
      %v2392 = vmul.f32 %v1425, %v2299
      %v2393 = vmul.f32 %v1424, %v2303
      %v2394 = vmul.f32 %v1423, %v2307
      %v2395 = vmul.f32 %v1422, %v2311
      %v2396 = vmul.f32 %v1421, %v2315
      %v2397 = vmul.f32 %v1420, %v2319
      %v2398 = vmul.f32 %v1419, %v2323
      %v2399 = vmul.f32 %v1418, %v2327
      %v2400 = vmul.f32 %v1417, %v2331
      %v2401 = vmul.f32 %v1416, %v2335
      %v2402 = vmul.f32 %v1415, %v2339
      %v2403 = vmul.f32 %v1414, %v2343
      %v2404 = vmul.f32 %v1413, %v2347
      %v2405 = vmul.f32 %v1412, %v2351
      %v2406 = vmul.f32 %v1411, %v2355
      %v2407 = vmul.f32 %v1410, %v2359
      %v2408 = vmul.f32 %v1409, %v2363
      %v2409 = vmul.f32 %v1408, %v2367
      %v2410 = vmul.f32 %v1407, %v2371
      %v2411 = vmul.f32 %v1406, %v2375
      %v2412 = vmul.f32 %v1405, %v2379
      %v2413 = vld [vmem:[%s8 + $0x3] sm:$0x1]
      %v2414 = vlaneseq
      %v2415 = vshrl.u32 %v2414, 7
      %v2416 = vsub.s32 0, %v2415
      %v2417 = vrot.slane %v2413, %v2416
      %v2418 = vmul.f32 %v2381, %v2417
      %v2419 = vmul.f32 %v2382, %v2417
      %v2420 = vmul.f32 %v2383, %v2417
      %v2421 = vmul.f32 %v2384, %v2417
      %v2422 = vmul.f32 %v2385, %v2417
      %v2423 = vmul.f32 %v2386, %v2417
      %v2424 = vmul.f32 %v2387, %v2417
      %v2425 = vmul.f32 %v2388, %v2417
      %v2426 = vmul.f32 %v2389, %v2417
      %v2427 = vmul.f32 %v2390, %v2417
      %v2428 = vmul.f32 %v2391, %v2417
      %v2429 = vmul.f32 %v2392, %v2417
      %v2430 = vmul.f32 %v2393, %v2417
      %v2431 = vmul.f32 %v2394, %v2417
      %v2432 = vmul.f32 %v2395, %v2417
      %v2433 = vmul.f32 %v2396, %v2417
      %v2434 = vmul.f32 %v2397, %v2417
      %v2435 = vmul.f32 %v2398, %v2417
      %v2436 = vmul.f32 %v2399, %v2417
      %v2437 = vmul.f32 %v2400, %v2417
      %v2438 = vmul.f32 %v2401, %v2417
      %v2439 = vmul.f32 %v2402, %v2417
      %v2440 = vmul.f32 %v2403, %v2417
      %v2441 = vmul.f32 %v2404, %v2417
      %v2442 = vmul.f32 %v2405, %v2417
      %v2443 = vmul.f32 %v2406, %v2417
      %v2444 = vmul.f32 %v2407, %v2417
      %v2445 = vmul.f32 %v2408, %v2417
      %v2446 = vmul.f32 %v2409, %v2417
      %v2447 = vmul.f32 %v2410, %v2417
      %v2448 = vmul.f32 %v2411, %v2417
      %v2449 = vmul.f32 %v2412, %v2417
      %v2450 = vadd.f32 %v2221, %v2418
      %v2451 = vadd.f32 %v2222, %v2419
      %v2452 = vadd.f32 %v2223, %v2420
      %v2453 = vadd.f32 %v2224, %v2421
      %v2454 = vadd.f32 %v2225, %v2422
      %v2455 = vadd.f32 %v2226, %v2423
      %v2456 = vadd.f32 %v2227, %v2424
      %v2457 = vadd.f32 %v2228, %v2425
      %v2458 = vadd.f32 %v2229, %v2426
      %v2459 = vadd.f32 %v2230, %v2427
      %v2460 = vadd.f32 %v2231, %v2428
      %v2461 = vadd.f32 %v2232, %v2429
      %v2462 = vadd.f32 %v2233, %v2430
      %v2463 = vadd.f32 %v2234, %v2431
      %v2464 = vadd.f32 %v2235, %v2432
      %v2465 = vadd.f32 %v2236, %v2433
      %v2466 = vadd.f32 %v2237, %v2434
      %v2467 = vadd.f32 %v2238, %v2435
      %v2468 = vadd.f32 %v2239, %v2436
      %v2469 = vadd.f32 %v2240, %v2437
      %v2470 = vadd.f32 %v2241, %v2438
      %v2471 = vadd.f32 %v2242, %v2439
      %v2472 = vadd.f32 %v2243, %v2440
      %v2473 = vadd.f32 %v2244, %v2441
      %v2474 = vadd.f32 %v2245, %v2442
      %v2475 = vadd.f32 %v2246, %v2443
      %v2476 = vadd.f32 %v2247, %v2444
      %v2477 = vadd.f32 %v2248, %v2445
      %v2478 = vadd.f32 %v2249, %v2446
      %v2479 = vadd.f32 %v2250, %v2447
      %v2480 = vadd.f32 %v2251, %v2448
      %v2481 = vadd.f32 %v2252, %v2449
      %2482 = vset.pattern.permute.xlu0 5
      %2483 = vperm.xlu0 %2482, %v1437
      %v2484 = vpop.permute.xlu0 %2483
      %2486 = vset.pattern.permute.xlu0 5
      %2487 = vperm.xlu0 %2486, %v1438
      %v2488 = vpop.permute.xlu0 %2487
      %2490 = vset.pattern.permute.xlu0 5
      %2491 = vperm.xlu0 %2490, %v1439
      %v2492 = vpop.permute.xlu0 %2491
      %2494 = vset.pattern.permute.xlu0 5
      %2495 = vperm.xlu0 %2494, %v1440
      %v2496 = vpop.permute.xlu0 %2495
      %2498 = vset.pattern.permute.xlu0 5
      %2499 = vperm.xlu0 %2498, %v1441
      %v2500 = vpop.permute.xlu0 %2499
      %2502 = vset.pattern.permute.xlu0 5
      %2503 = vperm.xlu0 %2502, %v1442
      %v2504 = vpop.permute.xlu0 %2503
      %2506 = vset.pattern.permute.xlu0 5
      %2507 = vperm.xlu0 %2506, %v1443
      %v2508 = vpop.permute.xlu0 %2507
      %2510 = vset.pattern.permute.xlu0 5
      %2511 = vperm.xlu0 %2510, %v1444
      %v2512 = vpop.permute.xlu0 %2511
      %2514 = vset.pattern.permute.xlu0 5
      %2515 = vperm.xlu0 %2514, %v1445
      %v2516 = vpop.permute.xlu0 %2515
      %2518 = vset.pattern.permute.xlu0 5
      %2519 = vperm.xlu0 %2518, %v1446
      %v2520 = vpop.permute.xlu0 %2519
      %2522 = vset.pattern.permute.xlu0 5
      %2523 = vperm.xlu0 %2522, %v1447
      %v2524 = vpop.permute.xlu0 %2523
      %2526 = vset.pattern.permute.xlu0 5
      %2527 = vperm.xlu0 %2526, %v1448
      %v2528 = vpop.permute.xlu0 %2527
      %2530 = vset.pattern.permute.xlu0 5
      %2531 = vperm.xlu0 %2530, %v1449
      %v2532 = vpop.permute.xlu0 %2531
      %2534 = vset.pattern.permute.xlu0 5
      %2535 = vperm.xlu0 %2534, %v1450
      %v2536 = vpop.permute.xlu0 %2535
      %2538 = vset.pattern.permute.xlu0 5
      %2539 = vperm.xlu0 %2538, %v1451
      %v2540 = vpop.permute.xlu0 %2539
      %2542 = vset.pattern.permute.xlu0 5
      %2543 = vperm.xlu0 %2542, %v1452
      %v2544 = vpop.permute.xlu0 %2543
      %2546 = vset.pattern.permute.xlu0 5
      %2547 = vperm.xlu0 %2546, %v1453
      %v2548 = vpop.permute.xlu0 %2547
      %2550 = vset.pattern.permute.xlu0 5
      %2551 = vperm.xlu0 %2550, %v1454
      %v2552 = vpop.permute.xlu0 %2551
      %2554 = vset.pattern.permute.xlu0 5
      %2555 = vperm.xlu0 %2554, %v1455
      %v2556 = vpop.permute.xlu0 %2555
      %2558 = vset.pattern.permute.xlu0 5
      %2559 = vperm.xlu0 %2558, %v1456
      %v2560 = vpop.permute.xlu0 %2559
      %2562 = vset.pattern.permute.xlu0 5
      %2563 = vperm.xlu0 %2562, %v1457
      %v2564 = vpop.permute.xlu0 %2563
      %2566 = vset.pattern.permute.xlu0 5
      %2567 = vperm.xlu0 %2566, %v1458
      %v2568 = vpop.permute.xlu0 %2567
      %2570 = vset.pattern.permute.xlu0 5
      %2571 = vperm.xlu0 %2570, %v1459
      %v2572 = vpop.permute.xlu0 %2571
      %2574 = vset.pattern.permute.xlu0 5
      %2575 = vperm.xlu0 %2574, %v1460
      %v2576 = vpop.permute.xlu0 %2575
      %2578 = vset.pattern.permute.xlu0 5
      %2579 = vperm.xlu0 %2578, %v1461
      %v2580 = vpop.permute.xlu0 %2579
      %2582 = vset.pattern.permute.xlu0 5
      %2583 = vperm.xlu0 %2582, %v1462
      %v2584 = vpop.permute.xlu0 %2583
      %2586 = vset.pattern.permute.xlu0 5
      %2587 = vperm.xlu0 %2586, %v1463
      %v2588 = vpop.permute.xlu0 %2587
      %2590 = vset.pattern.permute.xlu0 5
      %2591 = vperm.xlu0 %2590, %v1464
      %v2592 = vpop.permute.xlu0 %2591
      %2594 = vset.pattern.permute.xlu0 5
      %2595 = vperm.xlu0 %2594, %v1465
      %v2596 = vpop.permute.xlu0 %2595
      %2598 = vset.pattern.permute.xlu0 5
      %2599 = vperm.xlu0 %2598, %v1466
      %v2600 = vpop.permute.xlu0 %2599
      %2602 = vset.pattern.permute.xlu0 5
      %2603 = vperm.xlu0 %2602, %v1467
      %v2604 = vpop.permute.xlu0 %2603
      %2606 = vset.pattern.permute.xlu0 5
      %2607 = vperm.xlu0 %2606, %v1468
      %v2608 = vpop.permute.xlu0 %2607
      %v2610 = vmul.f32 %v2022, %v2484
      %v2611 = vmul.f32 %v2021, %v2488
      %v2612 = vmul.f32 %v2020, %v2492
      %v2613 = vmul.f32 %v2019, %v2496
      %v2614 = vmul.f32 %v2018, %v2500
      %v2615 = vmul.f32 %v2017, %v2504
      %v2616 = vmul.f32 %v2016, %v2508
      %v2617 = vmul.f32 %v2015, %v2512
      %v2618 = vmul.f32 %v2014, %v2516
      %v2619 = vmul.f32 %v2013, %v2520
      %v2620 = vmul.f32 %v2012, %v2524
      %v2621 = vmul.f32 %v2011, %v2528
      %v2622 = vmul.f32 %v2010, %v2532
      %v2623 = vmul.f32 %v2009, %v2536
      %v2624 = vmul.f32 %v2008, %v2540
      %v2625 = vmul.f32 %v2007, %v2544
      %v2626 = vmul.f32 %v2006, %v2548
      %v2627 = vmul.f32 %v2005, %v2552
      %v2628 = vmul.f32 %v2004, %v2556
      %v2629 = vmul.f32 %v2003, %v2560
      %v2630 = vmul.f32 %v2002, %v2564
      %v2631 = vmul.f32 %v2001, %v2568
      %v2632 = vmul.f32 %v2000, %v2572
      %v2633 = vmul.f32 %v1999, %v2576
      %v2634 = vmul.f32 %v1998, %v2580
      %v2635 = vmul.f32 %v1997, %v2584
      %v2636 = vmul.f32 %v1996, %v2588
      %v2637 = vmul.f32 %v1995, %v2592
      %v2638 = vmul.f32 %v1994, %v2596
      %v2639 = vmul.f32 %v1993, %v2600
      %v2640 = vmul.f32 %v1992, %v2604
      %v2641 = vmul.f32 %v2023, %v2608
      %v2642 = vld [vmem:[%s8 + $0x5] sm:$0x1]
      %v2643 = vlaneseq
      %v2644 = vshrl.u32 %v2643, 7
      %v2645 = vsub.s32 0, %v2644
      %v2646 = vrot.slane %v2642, %v2645
      %v2647 = vmul.f32 %v2610, %v2646
      %v2648 = vmul.f32 %v2611, %v2646
      %v2649 = vmul.f32 %v2612, %v2646
      %v2650 = vmul.f32 %v2613, %v2646
      %v2651 = vmul.f32 %v2614, %v2646
      %v2652 = vmul.f32 %v2615, %v2646
      %v2653 = vmul.f32 %v2616, %v2646
      %v2654 = vmul.f32 %v2617, %v2646
      %v2655 = vmul.f32 %v2618, %v2646
      %v2656 = vmul.f32 %v2619, %v2646
      %v2657 = vmul.f32 %v2620, %v2646
      %v2658 = vmul.f32 %v2621, %v2646
      %v2659 = vmul.f32 %v2622, %v2646
      %v2660 = vmul.f32 %v2623, %v2646
      %v2661 = vmul.f32 %v2624, %v2646
      %v2662 = vmul.f32 %v2625, %v2646
      %v2663 = vmul.f32 %v2626, %v2646
      %v2664 = vmul.f32 %v2627, %v2646
      %v2665 = vmul.f32 %v2628, %v2646
      %v2666 = vmul.f32 %v2629, %v2646
      %v2667 = vmul.f32 %v2630, %v2646
      %v2668 = vmul.f32 %v2631, %v2646
      %v2669 = vmul.f32 %v2632, %v2646
      %v2670 = vmul.f32 %v2633, %v2646
      %v2671 = vmul.f32 %v2634, %v2646
      %v2672 = vmul.f32 %v2635, %v2646
      %v2673 = vmul.f32 %v2636, %v2646
      %v2674 = vmul.f32 %v2637, %v2646
      %v2675 = vmul.f32 %v2638, %v2646
      %v2676 = vmul.f32 %v2639, %v2646
      %v2677 = vmul.f32 %v2640, %v2646
      %v2678 = vmul.f32 %v2641, %v2646
      %v2679 = vadd.f32 %v2450, %v2647
      %v2680 = vadd.f32 %v2451, %v2648
      %v2681 = vadd.f32 %v2452, %v2649
      %v2682 = vadd.f32 %v2453, %v2650
      %v2683 = vadd.f32 %v2454, %v2651
      %v2684 = vadd.f32 %v2455, %v2652
      %v2685 = vadd.f32 %v2456, %v2653
      %v2686 = vadd.f32 %v2457, %v2654
      %v2687 = vadd.f32 %v2458, %v2655
      %v2688 = vadd.f32 %v2459, %v2656
      %v2689 = vadd.f32 %v2460, %v2657
      %v2690 = vadd.f32 %v2461, %v2658
      %v2691 = vadd.f32 %v2462, %v2659
      %v2692 = vadd.f32 %v2463, %v2660
      %v2693 = vadd.f32 %v2464, %v2661
      %v2694 = vadd.f32 %v2465, %v2662
      %v2695 = vadd.f32 %v2466, %v2663
      %v2696 = vadd.f32 %v2467, %v2664
      %v2697 = vadd.f32 %v2468, %v2665
      %v2698 = vadd.f32 %v2469, %v2666
      %v2699 = vadd.f32 %v2470, %v2667
      %v2700 = vadd.f32 %v2471, %v2668
      %v2701 = vadd.f32 %v2472, %v2669
      %v2702 = vadd.f32 %v2473, %v2670
      %v2703 = vadd.f32 %v2474, %v2671
      %v2704 = vadd.f32 %v2475, %v2672
      %v2705 = vadd.f32 %v2476, %v2673
      %v2706 = vadd.f32 %v2477, %v2674
      %v2707 = vadd.f32 %v2478, %v2675
      %v2708 = vadd.f32 %v2479, %v2676
      %v2709 = vadd.f32 %v2480, %v2677
      %v2710 = vadd.f32 %v2481, %v2678
      %2711 = vset.pattern.permute.xlu0 6
      %2712 = vperm.xlu0 %2711, %v1437
      %v2713 = vpop.permute.xlu0 %2712
      %2715 = vset.pattern.permute.xlu0 6
      %2716 = vperm.xlu0 %2715, %v1438
      %v2717 = vpop.permute.xlu0 %2716
      %2719 = vset.pattern.permute.xlu0 6
      %2720 = vperm.xlu0 %2719, %v1439
      %v2721 = vpop.permute.xlu0 %2720
      %2723 = vset.pattern.permute.xlu0 6
      %2724 = vperm.xlu0 %2723, %v1440
      %v2725 = vpop.permute.xlu0 %2724
      %2727 = vset.pattern.permute.xlu0 6
      %2728 = vperm.xlu0 %2727, %v1441
      %v2729 = vpop.permute.xlu0 %2728
      %2731 = vset.pattern.permute.xlu0 6
      %2732 = vperm.xlu0 %2731, %v1442
      %v2733 = vpop.permute.xlu0 %2732
      %2735 = vset.pattern.permute.xlu0 6
      %2736 = vperm.xlu0 %2735, %v1443
      %v2737 = vpop.permute.xlu0 %2736
      %2739 = vset.pattern.permute.xlu0 6
      %2740 = vperm.xlu0 %2739, %v1444
      %v2741 = vpop.permute.xlu0 %2740
      %2743 = vset.pattern.permute.xlu0 6
      %2744 = vperm.xlu0 %2743, %v1445
      %v2745 = vpop.permute.xlu0 %2744
      %2747 = vset.pattern.permute.xlu0 6
      %2748 = vperm.xlu0 %2747, %v1446
      %v2749 = vpop.permute.xlu0 %2748
      %2751 = vset.pattern.permute.xlu0 6
      %2752 = vperm.xlu0 %2751, %v1447
      %v2753 = vpop.permute.xlu0 %2752
      %2755 = vset.pattern.permute.xlu0 6
      %2756 = vperm.xlu0 %2755, %v1448
      %v2757 = vpop.permute.xlu0 %2756
      %2759 = vset.pattern.permute.xlu0 6
      %2760 = vperm.xlu0 %2759, %v1449
      %v2761 = vpop.permute.xlu0 %2760
      %2763 = vset.pattern.permute.xlu0 6
      %2764 = vperm.xlu0 %2763, %v1450
      %v2765 = vpop.permute.xlu0 %2764
      %2767 = vset.pattern.permute.xlu0 6
      %2768 = vperm.xlu0 %2767, %v1451
      %v2769 = vpop.permute.xlu0 %2768
      %2771 = vset.pattern.permute.xlu0 6
      %2772 = vperm.xlu0 %2771, %v1452
      %v2773 = vpop.permute.xlu0 %2772
      %2775 = vset.pattern.permute.xlu0 6
      %2776 = vperm.xlu0 %2775, %v1453
      %v2777 = vpop.permute.xlu0 %2776
      %2779 = vset.pattern.permute.xlu0 6
      %2780 = vperm.xlu0 %2779, %v1454
      %v2781 = vpop.permute.xlu0 %2780
      %2783 = vset.pattern.permute.xlu0 6
      %2784 = vperm.xlu0 %2783, %v1455
      %v2785 = vpop.permute.xlu0 %2784
      %2787 = vset.pattern.permute.xlu0 6
      %2788 = vperm.xlu0 %2787, %v1456
      %v2789 = vpop.permute.xlu0 %2788
      %2791 = vset.pattern.permute.xlu0 6
      %2792 = vperm.xlu0 %2791, %v1457
      %v2793 = vpop.permute.xlu0 %2792
      %2795 = vset.pattern.permute.xlu0 6
      %2796 = vperm.xlu0 %2795, %v1458
      %v2797 = vpop.permute.xlu0 %2796
      %2799 = vset.pattern.permute.xlu0 6
      %2800 = vperm.xlu0 %2799, %v1459
      %v2801 = vpop.permute.xlu0 %2800
      %2803 = vset.pattern.permute.xlu0 6
      %2804 = vperm.xlu0 %2803, %v1460
      %v2805 = vpop.permute.xlu0 %2804
      %2807 = vset.pattern.permute.xlu0 6
      %2808 = vperm.xlu0 %2807, %v1461
      %v2809 = vpop.permute.xlu0 %2808
      %2811 = vset.pattern.permute.xlu0 6
      %2812 = vperm.xlu0 %2811, %v1462
      %v2813 = vpop.permute.xlu0 %2812
      %2815 = vset.pattern.permute.xlu0 6
      %2816 = vperm.xlu0 %2815, %v1463
      %v2817 = vpop.permute.xlu0 %2816
      %2819 = vset.pattern.permute.xlu0 6
      %2820 = vperm.xlu0 %2819, %v1464
      %v2821 = vpop.permute.xlu0 %2820
      %2823 = vset.pattern.permute.xlu0 6
      %2824 = vperm.xlu0 %2823, %v1465
      %v2825 = vpop.permute.xlu0 %2824
      %2827 = vset.pattern.permute.xlu0 6
      %2828 = vperm.xlu0 %2827, %v1466
      %v2829 = vpop.permute.xlu0 %2828
      %2831 = vset.pattern.permute.xlu0 6
      %2832 = vperm.xlu0 %2831, %v1467
      %v2833 = vpop.permute.xlu0 %2832
      %2835 = vset.pattern.permute.xlu0 6
      %2836 = vperm.xlu0 %2835, %v1468
      %v2837 = vpop.permute.xlu0 %2836
      %v2839 = vmul.f32 %v1434, %v2713
      %v2840 = vmul.f32 %v1433, %v2717
      %v2841 = vmul.f32 %v1432, %v2721
      %v2842 = vmul.f32 %v1431, %v2725
      %v2843 = vmul.f32 %v1430, %v2729
      %v2844 = vmul.f32 %v1429, %v2733
      %v2845 = vmul.f32 %v1428, %v2737
      %v2846 = vmul.f32 %v1427, %v2741
      %v2847 = vmul.f32 %v1426, %v2745
      %v2848 = vmul.f32 %v1425, %v2749
      %v2849 = vmul.f32 %v1424, %v2753
      %v2850 = vmul.f32 %v1423, %v2757
      %v2851 = vmul.f32 %v1422, %v2761
      %v2852 = vmul.f32 %v1421, %v2765
      %v2853 = vmul.f32 %v1420, %v2769
      %v2854 = vmul.f32 %v1419, %v2773
      %v2855 = vmul.f32 %v1418, %v2777
      %v2856 = vmul.f32 %v1417, %v2781
      %v2857 = vmul.f32 %v1416, %v2785
      %v2858 = vmul.f32 %v1415, %v2789
      %v2859 = vmul.f32 %v1414, %v2793
      %v2860 = vmul.f32 %v1413, %v2797
      %v2861 = vmul.f32 %v1412, %v2801
      %v2862 = vmul.f32 %v1411, %v2805
      %v2863 = vmul.f32 %v1410, %v2809
      %v2864 = vmul.f32 %v1409, %v2813
      %v2865 = vmul.f32 %v1408, %v2817
      %v2866 = vmul.f32 %v1407, %v2821
      %v2867 = vmul.f32 %v1406, %v2825
      %v2868 = vmul.f32 %v1405, %v2829
      %v2869 = vmul.f32 %v1436, %v2833
      %v2870 = vmul.f32 %v1435, %v2837
      %v2871 = vld [vmem:[%s8 + $0x6] sm:$0x1]
      %v2872 = vlaneseq
      %v2873 = vshrl.u32 %v2872, 7
      %v2874 = vsub.s32 0, %v2873
      %v2875 = vrot.slane %v2871, %v2874
      %v2876 = vmul.f32 %v2839, %v2875
      %v2877 = vmul.f32 %v2840, %v2875
      %v2878 = vmul.f32 %v2841, %v2875
      %v2879 = vmul.f32 %v2842, %v2875
      %v2880 = vmul.f32 %v2843, %v2875
      %v2881 = vmul.f32 %v2844, %v2875
      %v2882 = vmul.f32 %v2845, %v2875
      %v2883 = vmul.f32 %v2846, %v2875
      %v2884 = vmul.f32 %v2847, %v2875
      %v2885 = vmul.f32 %v2848, %v2875
      %v2886 = vmul.f32 %v2849, %v2875
      %v2887 = vmul.f32 %v2850, %v2875
      %v2888 = vmul.f32 %v2851, %v2875
      %v2889 = vmul.f32 %v2852, %v2875
      %v2890 = vmul.f32 %v2853, %v2875
      %v2891 = vmul.f32 %v2854, %v2875
      %v2892 = vmul.f32 %v2855, %v2875
      %v2893 = vmul.f32 %v2856, %v2875
      %v2894 = vmul.f32 %v2857, %v2875
      %v2895 = vmul.f32 %v2858, %v2875
      %v2896 = vmul.f32 %v2859, %v2875
      %v2897 = vmul.f32 %v2860, %v2875
      %v2898 = vmul.f32 %v2861, %v2875
      %v2899 = vmul.f32 %v2862, %v2875
      %v2900 = vmul.f32 %v2863, %v2875
      %v2901 = vmul.f32 %v2864, %v2875
      %v2902 = vmul.f32 %v2865, %v2875
      %v2903 = vmul.f32 %v2866, %v2875
      %v2904 = vmul.f32 %v2867, %v2875
      %v2905 = vmul.f32 %v2868, %v2875
      %v2906 = vmul.f32 %v2869, %v2875
      %v2907 = vmul.f32 %v2870, %v2875
      %v2908 = vadd.f32 %v2679, %v2876
      %v2909 = vadd.f32 %v2680, %v2877
      %v2910 = vadd.f32 %v2681, %v2878
      %v2911 = vadd.f32 %v2682, %v2879
      %v2912 = vadd.f32 %v2683, %v2880
      %v2913 = vadd.f32 %v2684, %v2881
      %v2914 = vadd.f32 %v2685, %v2882
      %v2915 = vadd.f32 %v2686, %v2883
      %v2916 = vadd.f32 %v2687, %v2884
      %v2917 = vadd.f32 %v2688, %v2885
      %v2918 = vadd.f32 %v2689, %v2886
      %v2919 = vadd.f32 %v2690, %v2887
      %v2920 = vadd.f32 %v2691, %v2888
      %v2921 = vadd.f32 %v2692, %v2889
      %v2922 = vadd.f32 %v2693, %v2890
      %v2923 = vadd.f32 %v2694, %v2891
      %v2924 = vadd.f32 %v2695, %v2892
      %v2925 = vadd.f32 %v2696, %v2893
      %v2926 = vadd.f32 %v2697, %v2894
      %v2927 = vadd.f32 %v2698, %v2895
      %v2928 = vadd.f32 %v2699, %v2896
      %v2929 = vadd.f32 %v2700, %v2897
      %v2930 = vadd.f32 %v2701, %v2898
      %v2931 = vadd.f32 %v2702, %v2899
      %v2932 = vadd.f32 %v2703, %v2900
      %v2933 = vadd.f32 %v2704, %v2901
      %v2934 = vadd.f32 %v2705, %v2902
      %v2935 = vadd.f32 %v2706, %v2903
      %v2936 = vadd.f32 %v2707, %v2904
      %v2937 = vadd.f32 %v2708, %v2905
      %v2938 = vadd.f32 %v2709, %v2906
      %v2939 = vadd.f32 %v2710, %v2907
      %2940 = vset.pattern.permute.xlu0 7
      %2941 = vperm.xlu0 %2940, %v1437
      %v2942 = vpop.permute.xlu0 %2941
      %2944 = vset.pattern.permute.xlu0 7
      %2945 = vperm.xlu0 %2944, %v1438
      %v2946 = vpop.permute.xlu0 %2945
      %2948 = vset.pattern.permute.xlu0 7
      %2949 = vperm.xlu0 %2948, %v1439
      %v2950 = vpop.permute.xlu0 %2949
      %2952 = vset.pattern.permute.xlu0 7
      %2953 = vperm.xlu0 %2952, %v1440
      %v2954 = vpop.permute.xlu0 %2953
      %2956 = vset.pattern.permute.xlu0 7
      %2957 = vperm.xlu0 %2956, %v1441
      %v2958 = vpop.permute.xlu0 %2957
      %2960 = vset.pattern.permute.xlu0 7
      %2961 = vperm.xlu0 %2960, %v1442
      %v2962 = vpop.permute.xlu0 %2961
      %2964 = vset.pattern.permute.xlu0 7
      %2965 = vperm.xlu0 %2964, %v1443
      %v2966 = vpop.permute.xlu0 %2965
      %2968 = vset.pattern.permute.xlu0 7
      %2969 = vperm.xlu0 %2968, %v1444
      %v2970 = vpop.permute.xlu0 %2969
      %2972 = vset.pattern.permute.xlu0 7
      %2973 = vperm.xlu0 %2972, %v1445
      %v2974 = vpop.permute.xlu0 %2973
      %2976 = vset.pattern.permute.xlu0 7
      %2977 = vperm.xlu0 %2976, %v1446
      %v2978 = vpop.permute.xlu0 %2977
      %2980 = vset.pattern.permute.xlu0 7
      %2981 = vperm.xlu0 %2980, %v1447
      %v2982 = vpop.permute.xlu0 %2981
      %2984 = vset.pattern.permute.xlu0 7
      %2985 = vperm.xlu0 %2984, %v1448
      %v2986 = vpop.permute.xlu0 %2985
      %2988 = vset.pattern.permute.xlu0 7
      %2989 = vperm.xlu0 %2988, %v1449
      %v2990 = vpop.permute.xlu0 %2989
      %2992 = vset.pattern.permute.xlu0 7
      %2993 = vperm.xlu0 %2992, %v1450
      %v2994 = vpop.permute.xlu0 %2993
      %2996 = vset.pattern.permute.xlu0 7
      %2997 = vperm.xlu0 %2996, %v1451
      %v2998 = vpop.permute.xlu0 %2997
      %3000 = vset.pattern.permute.xlu0 7
      %3001 = vperm.xlu0 %3000, %v1452
      %v3002 = vpop.permute.xlu0 %3001
      %3004 = vset.pattern.permute.xlu0 7
      %3005 = vperm.xlu0 %3004, %v1453
      %v3006 = vpop.permute.xlu0 %3005
      %3008 = vset.pattern.permute.xlu0 7
      %3009 = vperm.xlu0 %3008, %v1454
      %v3010 = vpop.permute.xlu0 %3009
      %3012 = vset.pattern.permute.xlu0 7
      %3013 = vperm.xlu0 %3012, %v1455
      %v3014 = vpop.permute.xlu0 %3013
      %3016 = vset.pattern.permute.xlu0 7
      %3017 = vperm.xlu0 %3016, %v1456
      %v3018 = vpop.permute.xlu0 %3017
      %3020 = vset.pattern.permute.xlu0 7
      %3021 = vperm.xlu0 %3020, %v1457
      %v3022 = vpop.permute.xlu0 %3021
      %3024 = vset.pattern.permute.xlu0 7
      %3025 = vperm.xlu0 %3024, %v1458
      %v3026 = vpop.permute.xlu0 %3025
      %3028 = vset.pattern.permute.xlu0 7
      %3029 = vperm.xlu0 %3028, %v1459
      %v3030 = vpop.permute.xlu0 %3029
      %3032 = vset.pattern.permute.xlu0 7
      %3033 = vperm.xlu0 %3032, %v1460
      %v3034 = vpop.permute.xlu0 %3033
      %3036 = vset.pattern.permute.xlu0 7
      %3037 = vperm.xlu0 %3036, %v1461
      %v3038 = vpop.permute.xlu0 %3037
      %3040 = vset.pattern.permute.xlu0 7
      %3041 = vperm.xlu0 %3040, %v1462
      %v3042 = vpop.permute.xlu0 %3041
      %3044 = vset.pattern.permute.xlu0 7
      %3045 = vperm.xlu0 %3044, %v1463
      %v3046 = vpop.permute.xlu0 %3045
      %3048 = vset.pattern.permute.xlu0 7
      %3049 = vperm.xlu0 %3048, %v1464
      %v3050 = vpop.permute.xlu0 %3049
      %3052 = vset.pattern.permute.xlu0 7
      %3053 = vperm.xlu0 %3052, %v1465
      %v3054 = vpop.permute.xlu0 %3053
      %3056 = vset.pattern.permute.xlu0 7
      %3057 = vperm.xlu0 %3056, %v1466
      %v3058 = vpop.permute.xlu0 %3057
      %3060 = vset.pattern.permute.xlu0 7
      %3061 = vperm.xlu0 %3060, %v1467
      %v3062 = vpop.permute.xlu0 %3061
      %3064 = vset.pattern.permute.xlu0 7
      %3065 = vperm.xlu0 %3064, %v1468
      %v3066 = vpop.permute.xlu0 %3065
      %v3068 = vmul.f32 %v1303, %v2942
      %v3069 = vmul.f32 %v1304, %v2946
      %v3070 = vmul.f32 %v1305, %v2950
      %v3071 = vmul.f32 %v1306, %v2954
      %v3072 = vmul.f32 %v1307, %v2958
      %v3073 = vmul.f32 %v1308, %v2962
      %v3074 = vmul.f32 %v1309, %v2966
      %v3075 = vmul.f32 %v1310, %v2970
      %v3076 = vmul.f32 %v1311, %v2974
      %v3077 = vmul.f32 %v1312, %v2978
      %v3078 = vmul.f32 %v1313, %v2982
      %v3079 = vmul.f32 %v1314, %v2986
      %v3080 = vmul.f32 %v1315, %v2990
      %v3081 = vmul.f32 %v1316, %v2994
      %v3082 = vmul.f32 %v1317, %v2998
      %v3083 = vmul.f32 %v1318, %v3002
      %v3084 = vmul.f32 %v1319, %v3006
      %v3085 = vmul.f32 %v1320, %v3010
      %v3086 = vmul.f32 %v1321, %v3014
      %v3087 = vmul.f32 %v1322, %v3018
      %v3088 = vmul.f32 %v1323, %v3022
      %v3089 = vmul.f32 %v1324, %v3026
      %v3090 = vmul.f32 %v1325, %v3030
      %v3091 = vmul.f32 %v1326, %v3034
      %v3092 = vmul.f32 %v1327, %v3038
      %v3093 = vmul.f32 %v1328, %v3042
      %v3094 = vmul.f32 %v1329, %v3046
      %v3095 = vmul.f32 %v1330, %v3050
      %v3096 = vmul.f32 %v1331, %v3054
      %v3097 = vmul.f32 %v1332, %v3058
      %v3098 = vmul.f32 %v1301, %v3062
      %v3099 = vmul.f32 %v1302, %v3066
      %v3100 = vld [vmem:[%s8 + $0x7] sm:$0x1]
      %v3101 = vlaneseq
      %v3102 = vshrl.u32 %v3101, 7
      %v3103 = vsub.s32 0, %v3102
      %v3104 = vrot.slane %v3100, %v3103
      %v3105 = vmul.f32 %v3068, %v3104
      %v3106 = vmul.f32 %v3069, %v3104
      %v3107 = vmul.f32 %v3070, %v3104
      %v3108 = vmul.f32 %v3071, %v3104
      %v3109 = vmul.f32 %v3072, %v3104
      %v3110 = vmul.f32 %v3073, %v3104
      %v3111 = vmul.f32 %v3074, %v3104
      %v3112 = vmul.f32 %v3075, %v3104
      %v3113 = vmul.f32 %v3076, %v3104
      %v3114 = vmul.f32 %v3077, %v3104
      %v3115 = vmul.f32 %v3078, %v3104
      %v3116 = vmul.f32 %v3079, %v3104
      %v3117 = vmul.f32 %v3080, %v3104
      %v3118 = vmul.f32 %v3081, %v3104
      %v3119 = vmul.f32 %v3082, %v3104
      %v3120 = vmul.f32 %v3083, %v3104
      %v3121 = vmul.f32 %v3084, %v3104
      %v3122 = vmul.f32 %v3085, %v3104
      %v3123 = vmul.f32 %v3086, %v3104
      %v3124 = vmul.f32 %v3087, %v3104
      %v3125 = vmul.f32 %v3088, %v3104
      %v3126 = vmul.f32 %v3089, %v3104
      %v3127 = vmul.f32 %v3090, %v3104
      %v3128 = vmul.f32 %v3091, %v3104
      %v3129 = vmul.f32 %v3092, %v3104
      %v3130 = vmul.f32 %v3093, %v3104
      %v3131 = vmul.f32 %v3094, %v3104
      %v3132 = vmul.f32 %v3095, %v3104
      %v3133 = vmul.f32 %v3096, %v3104
      %v3134 = vmul.f32 %v3097, %v3104
      %v3135 = vmul.f32 %v3098, %v3104
      %v3136 = vmul.f32 %v3099, %v3104
      %v3137 = vadd.f32 %v2908, %v3105
      %v3138 = vadd.f32 %v2909, %v3106
      %v3139 = vadd.f32 %v2910, %v3107
      %v3140 = vadd.f32 %v2911, %v3108
      %v3141 = vadd.f32 %v2912, %v3109
      %v3142 = vadd.f32 %v2913, %v3110
      %v3143 = vadd.f32 %v2914, %v3111
      %v3144 = vadd.f32 %v2915, %v3112
      %v3145 = vadd.f32 %v2916, %v3113
      %v3146 = vadd.f32 %v2917, %v3114
      %v3147 = vadd.f32 %v2918, %v3115
      %v3148 = vadd.f32 %v2919, %v3116
      %v3149 = vadd.f32 %v2920, %v3117
      %v3150 = vadd.f32 %v2921, %v3118
      %v3151 = vadd.f32 %v2922, %v3119
      %v3152 = vadd.f32 %v2923, %v3120
      %v3153 = vadd.f32 %v2924, %v3121
      %v3154 = vadd.f32 %v2925, %v3122
      %v3155 = vadd.f32 %v2926, %v3123
      %v3156 = vadd.f32 %v2927, %v3124
      %v3157 = vadd.f32 %v2928, %v3125
      %v3158 = vadd.f32 %v2929, %v3126
      %v3159 = vadd.f32 %v2930, %v3127
      %v3160 = vadd.f32 %v2931, %v3128
      %v3161 = vadd.f32 %v2932, %v3129
      %v3162 = vadd.f32 %v2933, %v3130
      %v3163 = vadd.f32 %v2934, %v3131
      %v3164 = vadd.f32 %v2935, %v3132
      %v3165 = vadd.f32 %v2936, %v3133
      %v3166 = vadd.f32 %v2937, %v3134
      %v3167 = vadd.f32 %v2938, %v3135
      %v3168 = vadd.f32 %v2939, %v3136
      %3169 = vset.pattern.permute.xlu0 8
      %3170 = vperm.xlu0 %3169, %v1437
      %v3171 = vpop.permute.xlu0 %3170
      %3173 = vset.pattern.permute.xlu0 8
      %3174 = vperm.xlu0 %3173, %v1438
      %v3175 = vpop.permute.xlu0 %3174
      %3177 = vset.pattern.permute.xlu0 8
      %3178 = vperm.xlu0 %3177, %v1439
      %v3179 = vpop.permute.xlu0 %3178
      %3181 = vset.pattern.permute.xlu0 8
      %3182 = vperm.xlu0 %3181, %v1440
      %v3183 = vpop.permute.xlu0 %3182
      %3185 = vset.pattern.permute.xlu0 8
      %3186 = vperm.xlu0 %3185, %v1441
      %v3187 = vpop.permute.xlu0 %3186
      %3189 = vset.pattern.permute.xlu0 8
      %3190 = vperm.xlu0 %3189, %v1442
      %v3191 = vpop.permute.xlu0 %3190
      %3193 = vset.pattern.permute.xlu0 8
      %3194 = vperm.xlu0 %3193, %v1443
      %v3195 = vpop.permute.xlu0 %3194
      %3197 = vset.pattern.permute.xlu0 8
      %3198 = vperm.xlu0 %3197, %v1444
      %v3199 = vpop.permute.xlu0 %3198
      %3201 = vset.pattern.permute.xlu0 8
      %3202 = vperm.xlu0 %3201, %v1445
      %v3203 = vpop.permute.xlu0 %3202
      %3205 = vset.pattern.permute.xlu0 8
      %3206 = vperm.xlu0 %3205, %v1446
      %v3207 = vpop.permute.xlu0 %3206
      %3209 = vset.pattern.permute.xlu0 8
      %3210 = vperm.xlu0 %3209, %v1447
      %v3211 = vpop.permute.xlu0 %3210
      %3213 = vset.pattern.permute.xlu0 8
      %3214 = vperm.xlu0 %3213, %v1448
      %v3215 = vpop.permute.xlu0 %3214
      %3217 = vset.pattern.permute.xlu0 8
      %3218 = vperm.xlu0 %3217, %v1449
      %v3219 = vpop.permute.xlu0 %3218
      %3221 = vset.pattern.permute.xlu0 8
      %3222 = vperm.xlu0 %3221, %v1450
      %v3223 = vpop.permute.xlu0 %3222
      %3225 = vset.pattern.permute.xlu0 8
      %3226 = vperm.xlu0 %3225, %v1451
      %v3227 = vpop.permute.xlu0 %3226
      %3229 = vset.pattern.permute.xlu0 8
      %3230 = vperm.xlu0 %3229, %v1452
      %v3231 = vpop.permute.xlu0 %3230
      %3233 = vset.pattern.permute.xlu0 8
      %3234 = vperm.xlu0 %3233, %v1453
      %v3235 = vpop.permute.xlu0 %3234
      %3237 = vset.pattern.permute.xlu0 8
      %3238 = vperm.xlu0 %3237, %v1454
      %v3239 = vpop.permute.xlu0 %3238
      %3241 = vset.pattern.permute.xlu0 8
      %3242 = vperm.xlu0 %3241, %v1455
      %v3243 = vpop.permute.xlu0 %3242
      %3245 = vset.pattern.permute.xlu0 8
      %3246 = vperm.xlu0 %3245, %v1456
      %v3247 = vpop.permute.xlu0 %3246
      %3249 = vset.pattern.permute.xlu0 8
      %3250 = vperm.xlu0 %3249, %v1457
      %v3251 = vpop.permute.xlu0 %3250
      %3253 = vset.pattern.permute.xlu0 8
      %3254 = vperm.xlu0 %3253, %v1458
      %v3255 = vpop.permute.xlu0 %3254
      %3257 = vset.pattern.permute.xlu0 8
      %3258 = vperm.xlu0 %3257, %v1459
      %v3259 = vpop.permute.xlu0 %3258
      %3261 = vset.pattern.permute.xlu0 8
      %3262 = vperm.xlu0 %3261, %v1460
      %v3263 = vpop.permute.xlu0 %3262
      %3265 = vset.pattern.permute.xlu0 8
      %3266 = vperm.xlu0 %3265, %v1461
      %v3267 = vpop.permute.xlu0 %3266
      %3269 = vset.pattern.permute.xlu0 8
      %3270 = vperm.xlu0 %3269, %v1462
      %v3271 = vpop.permute.xlu0 %3270
      %3273 = vset.pattern.permute.xlu0 8
      %3274 = vperm.xlu0 %3273, %v1463
      %v3275 = vpop.permute.xlu0 %3274
      %3277 = vset.pattern.permute.xlu0 8
      %3278 = vperm.xlu0 %3277, %v1464
      %v3279 = vpop.permute.xlu0 %3278
      %3281 = vset.pattern.permute.xlu0 8
      %3282 = vperm.xlu0 %3281, %v1465
      %v3283 = vpop.permute.xlu0 %3282
      %3285 = vset.pattern.permute.xlu0 8
      %3286 = vperm.xlu0 %3285, %v1466
      %v3287 = vpop.permute.xlu0 %3286
      %3289 = vset.pattern.permute.xlu0 8
      %3290 = vperm.xlu0 %3289, %v1467
      %v3291 = vpop.permute.xlu0 %3290
      %3293 = vset.pattern.permute.xlu0 8
      %3294 = vperm.xlu0 %3293, %v1468
      %v3295 = vpop.permute.xlu0 %3294
      %v3297 = vmul.f32 %v2020, %v3171
      %v3298 = vmul.f32 %v2019, %v3175
      %v3299 = vmul.f32 %v2018, %v3179
      %v3300 = vmul.f32 %v2017, %v3183
      %v3301 = vmul.f32 %v2016, %v3187
      %v3302 = vmul.f32 %v2015, %v3191
      %v3303 = vmul.f32 %v2014, %v3195
      %v3304 = vmul.f32 %v2013, %v3199
      %v3305 = vmul.f32 %v2012, %v3203
      %v3306 = vmul.f32 %v2011, %v3207
      %v3307 = vmul.f32 %v2010, %v3211
      %v3308 = vmul.f32 %v2009, %v3215
      %v3309 = vmul.f32 %v2008, %v3219
      %v3310 = vmul.f32 %v2007, %v3223
      %v3311 = vmul.f32 %v2006, %v3227
      %v3312 = vmul.f32 %v2005, %v3231
      %v3313 = vmul.f32 %v2004, %v3235
      %v3314 = vmul.f32 %v2003, %v3239
      %v3315 = vmul.f32 %v2002, %v3243
      %v3316 = vmul.f32 %v2001, %v3247
      %v3317 = vmul.f32 %v2000, %v3251
      %v3318 = vmul.f32 %v1999, %v3255
      %v3319 = vmul.f32 %v1998, %v3259
      %v3320 = vmul.f32 %v1997, %v3263
      %v3321 = vmul.f32 %v1996, %v3267
      %v3322 = vmul.f32 %v1995, %v3271
      %v3323 = vmul.f32 %v1994, %v3275
      %v3324 = vmul.f32 %v1993, %v3279
      %v3325 = vmul.f32 %v1992, %v3283
      %v3326 = vmul.f32 %v2023, %v3287
      %v3327 = vmul.f32 %v2022, %v3291
      %v3328 = vmul.f32 %v2021, %v3295
      %v3329 = vld [vmem:[%s8 + $0x8] sm:$0x1]
      %v3330 = vlaneseq
      %v3331 = vshrl.u32 %v3330, 7
      %v3332 = vsub.s32 0, %v3331
      %v3333 = vrot.slane %v3329, %v3332
      %v3334 = vmul.f32 %v3297, %v3333
      %v3335 = vmul.f32 %v3298, %v3333
      %v3336 = vmul.f32 %v3299, %v3333
      %v3337 = vmul.f32 %v3300, %v3333
      %v3338 = vmul.f32 %v3301, %v3333
      %v3339 = vmul.f32 %v3302, %v3333
      %v3340 = vmul.f32 %v3303, %v3333
      %v3341 = vmul.f32 %v3304, %v3333
      %v3342 = vmul.f32 %v3305, %v3333
      %v3343 = vmul.f32 %v3306, %v3333
      %v3344 = vmul.f32 %v3307, %v3333
      %v3345 = vmul.f32 %v3308, %v3333
      %v3346 = vmul.f32 %v3309, %v3333
      %v3347 = vmul.f32 %v3310, %v3333
      %v3348 = vmul.f32 %v3311, %v3333
      %v3349 = vmul.f32 %v3312, %v3333
      %v3350 = vmul.f32 %v3313, %v3333
      %v3351 = vmul.f32 %v3314, %v3333
      %v3352 = vmul.f32 %v3315, %v3333
      %v3353 = vmul.f32 %v3316, %v3333
      %v3354 = vmul.f32 %v3317, %v3333
      %v3355 = vmul.f32 %v3318, %v3333
      %v3356 = vmul.f32 %v3319, %v3333
      %v3357 = vmul.f32 %v3320, %v3333
      %v3358 = vmul.f32 %v3321, %v3333
      %v3359 = vmul.f32 %v3322, %v3333
      %v3360 = vmul.f32 %v3323, %v3333
      %v3361 = vmul.f32 %v3324, %v3333
      %v3362 = vmul.f32 %v3325, %v3333
      %v3363 = vmul.f32 %v3326, %v3333
      %v3364 = vmul.f32 %v3327, %v3333
      %v3365 = vmul.f32 %v3328, %v3333
      %v3366 = vadd.f32 %v3137, %v3334
      %v3367 = vadd.f32 %v3138, %v3335
      %v3368 = vadd.f32 %v3139, %v3336
      %v3369 = vadd.f32 %v3140, %v3337
      %v3370 = vadd.f32 %v3141, %v3338
      %v3371 = vadd.f32 %v3142, %v3339
      %v3372 = vadd.f32 %v3143, %v3340
      %v3373 = vadd.f32 %v3144, %v3341
      %v3374 = vadd.f32 %v3145, %v3342
      %v3375 = vadd.f32 %v3146, %v3343
      %v3376 = vadd.f32 %v3147, %v3344
      %v3377 = vadd.f32 %v3148, %v3345
      %v3378 = vadd.f32 %v3149, %v3346
      %v3379 = vadd.f32 %v3150, %v3347
      %v3380 = vadd.f32 %v3151, %v3348
      %v3381 = vadd.f32 %v3152, %v3349
      %v3382 = vadd.f32 %v3153, %v3350
      %v3383 = vadd.f32 %v3154, %v3351
      %v3384 = vadd.f32 %v3155, %v3352
      %v3385 = vadd.f32 %v3156, %v3353
      %v3386 = vadd.f32 %v3157, %v3354
      %v3387 = vadd.f32 %v3158, %v3355
      %v3388 = vadd.f32 %v3159, %v3356
      %v3389 = vadd.f32 %v3160, %v3357
      %v3390 = vadd.f32 %v3161, %v3358
      %v3391 = vadd.f32 %v3162, %v3359
      %v3392 = vadd.f32 %v3163, %v3360
      %v3393 = vadd.f32 %v3164, %v3361
      %v3394 = vadd.f32 %v3165, %v3362
      %v3395 = vadd.f32 %v3166, %v3363
      %v3396 = vadd.f32 %v3167, %v3364
      %v3397 = vadd.f32 %v3168, %v3365
      %v3398 = vld [vmem:[%s6 + $0x1] sm:$0x1]
      %v3400 = vlaneseq
      %v3401 = vshrl.u32 %v3400, 7
      %v3402 = vsub.s32 0, %v3401
      %v3403 = vrot.slane %v3398, %v3402
      %v3405 = vadd.f32 %v3366, %v3403
      %v3406 = vadd.f32 %v3367, %v3403
      %v3407 = vadd.f32 %v3368, %v3403
      %v3408 = vadd.f32 %v3369, %v3403
      %v3409 = vadd.f32 %v3370, %v3403
      %v3410 = vadd.f32 %v3371, %v3403
      %v3411 = vadd.f32 %v3372, %v3403
      %v3412 = vadd.f32 %v3373, %v3403
      %v3413 = vadd.f32 %v3374, %v3403
      %v3414 = vadd.f32 %v3375, %v3403
      %v3415 = vadd.f32 %v3376, %v3403
      %v3416 = vadd.f32 %v3377, %v3403
      %v3417 = vadd.f32 %v3378, %v3403
      %v3418 = vadd.f32 %v3379, %v3403
      %v3419 = vadd.f32 %v3380, %v3403
      %v3420 = vadd.f32 %v3381, %v3403
      %v3421 = vadd.f32 %v3382, %v3403
      %v3422 = vadd.f32 %v3383, %v3403
      %v3423 = vadd.f32 %v3384, %v3403
      %v3424 = vadd.f32 %v3385, %v3403
      %v3425 = vadd.f32 %v3386, %v3403
      %v3426 = vadd.f32 %v3387, %v3403
      %v3427 = vadd.f32 %v3388, %v3403
      %v3428 = vadd.f32 %v3389, %v3403
      %v3429 = vadd.f32 %v3390, %v3403
      %v3430 = vadd.f32 %v3391, %v3403
      %v3431 = vadd.f32 %v3392, %v3403
      %v3432 = vadd.f32 %v3393, %v3403
      %v3433 = vadd.f32 %v3394, %v3403
      %v3434 = vadd.f32 %v3395, %v3403
      %v3435 = vadd.f32 %v3396, %v3403
      %v3436 = vadd.f32 %v3397, %v3403
      %v3437 = vmax.f32 %v3405, 0.0
      %v3438 = vmax.f32 %v3406, 0.0
      %v3439 = vmax.f32 %v3407, 0.0
      %v3440 = vmax.f32 %v3408, 0.0
      %v3441 = vmax.f32 %v3409, 0.0
      %v3442 = vmax.f32 %v3410, 0.0
      %v3443 = vmax.f32 %v3411, 0.0
      %v3444 = vmax.f32 %v3412, 0.0
      %v3445 = vmax.f32 %v3413, 0.0
      %v3446 = vmax.f32 %v3414, 0.0
      %v3447 = vmax.f32 %v3415, 0.0
      %v3448 = vmax.f32 %v3416, 0.0
      %v3449 = vmax.f32 %v3417, 0.0
      %v3450 = vmax.f32 %v3418, 0.0
      %v3451 = vmax.f32 %v3419, 0.0
      %v3452 = vmax.f32 %v3420, 0.0
      %v3453 = vmax.f32 %v3421, 0.0
      %v3454 = vmax.f32 %v3422, 0.0
      %v3455 = vmax.f32 %v3423, 0.0
      %v3456 = vmax.f32 %v3424, 0.0
      %v3457 = vmax.f32 %v3425, 0.0
      %v3458 = vmax.f32 %v3426, 0.0
      %v3459 = vmax.f32 %v3427, 0.0
      %v3460 = vmax.f32 %v3428, 0.0
      %v3461 = vmax.f32 %v3429, 0.0
      %v3462 = vmax.f32 %v3430, 0.0
      %v3463 = vmax.f32 %v3431, 0.0
      %v3464 = vmax.f32 %v3432, 0.0
      %v3465 = vmax.f32 %v3433, 0.0
      %v3466 = vmax.f32 %v3434, 0.0
      %v3467 = vmax.f32 %v3435, 0.0
      %v3468 = vmax.f32 %v3436, 0.0
      %v3469 = vpack.c.bf16 %v3438, %v3437
      %v3470 = vpack.c.bf16 %v3440, %v3439
      %v3471 = vpack.c.bf16 %v3442, %v3441
      %v3472 = vpack.c.bf16 %v3444, %v3443
      %v3473 = vpack.c.bf16 %v3446, %v3445
      %v3474 = vpack.c.bf16 %v3448, %v3447
      %v3475 = vpack.c.bf16 %v3450, %v3449
      %v3476 = vpack.c.bf16 %v3452, %v3451
      %v3477 = vpack.c.bf16 %v3454, %v3453
      %v3478 = vpack.c.bf16 %v3456, %v3455
      %v3479 = vpack.c.bf16 %v3458, %v3457
      %v3480 = vpack.c.bf16 %v3460, %v3459
      %v3481 = vpack.c.bf16 %v3462, %v3461
      %v3482 = vpack.c.bf16 %v3464, %v3463
      %v3483 = vpack.c.bf16 %v3466, %v3465
      %v3484 = vpack.c.bf16 %v3468, %v3467
      %v3485 = vld [vmem:[%s9] sm:$0xf]
      %v3486 = vld [vmem:[%s9 + $0x4] sm:$0xf]
      %v3487 = vld [vmem:[%s6 + $0x2] sm:$0x1]
      %v3489 = vlaneseq
      %v3490 = vshrl.u32 %v3489, 7
      %v3491 = vsub.s32 0, %v3490
      %v3492 = vrot.slane %v3487, %v3491
      %v3496 = vunpack.c.l.b16 %v3485
      %v3497 = vunpack.c.l.b16 %v3486
      %v3498 = vpack.c.b16 %v3497, %v3496
      %vm3500 = vcmask 130048
      %v3502 = vsel %vm3500, %v3469, 0
      %v3505 = vsel %vm3500, %v3470, 0
      %v3508 = vsel %vm3500, %v3471, 0
      %v3511 = vsel %vm3500, %v3472, 0
      %v3514 = vsel %vm3500, %v3473, 0
      %v3517 = vsel %vm3500, %v3474, 0
      %v3520 = vsel %vm3500, %v3475, 0
      %v3523 = vsel %vm3500, %v3476, 0
      %v3526 = vsel %vm3500, %v3477, 0
      %v3529 = vsel %vm3500, %v3478, 0
      %v3532 = vsel %vm3500, %v3479, 0
      %v3535 = vsel %vm3500, %v3480, 0
      %v3538 = vsel %vm3500, %v3481, 0
      %v3541 = vsel %vm3500, %v3482, 0
      %v3544 = vsel %vm3500, %v3483, 0
      %v3547 = vsel %vm3500, %v3484, 0
      %3549 = vmatprep.subr.bf16.mxu0 0
      %3550 = vmatpush1.bf16.msra.mxu0 0
      %3551 = vmatprep.subr.bf16.mxu0 0
      %3552 = vmatpush1.bf16.msra.mxu0 0
      %3553 = vmatprep.subr.bf16.mxu0 0
      %3554 = vmatpush1.bf16.msra.mxu0 0
      %3555 = vmatprep.subr.bf16.mxu0 0
      %3556 = vmatpush1.bf16.msra.mxu0 0
      %3557 = vmatprep.subr.bf16.mxu0 0
      %3558 = vmatpush1.bf16.msra.mxu0 0
      %3559 = vmatprep.subr.bf16.mxu0 0
      %3560 = vmatpush1.bf16.msra.mxu0 0
      %3561 = vmatprep.subr.bf16.mxu0 0
      %3562 = vmatpush1.bf16.msra.mxu0 0
      %3563 = vmatprep.subr.bf16.mxu0 0
      %3564 = vmatpush1.bf16.msra.mxu0 %v3498
      %3565 = vmatprep.subr.bf16.mxu0 0
      %3566 = vmatpush2.bf16.msra.mxu0 0
      %3567 = vmatprep.subr.bf16.mxu0 0
      %3568 = vmatpush2.bf16.msra.mxu0 0
      %3569 = vmatprep.subr.bf16.mxu0 0
      %3570 = vmatpush2.bf16.msra.mxu0 0
      %3571 = vmatprep.subr.bf16.mxu0 0
      %3572 = vmatpush2.bf16.msra.mxu0 0
      %3573 = vmatprep.subr.bf16.mxu0 0
      %3574 = vmatpush2.bf16.msra.mxu0 0
      %3575 = vmatprep.subr.bf16.mxu0 0
      %3576 = vmatpush2.bf16.msra.mxu0 0
      %3577 = vmatprep.subr.bf16.mxu0 0
      %3578 = vmatpush2.bf16.msra.mxu0 0
      %3579 = vmatprep.subr.bf16.mxu0 0
      %3580 = vmatpush2.bf16.msra.mxu0 0
      %3581 = vmatprep.mubr.bf16.mxu0 0
      %3582 = vmatmul.mubr.bf16.gmra.mxu0 %v3502
      %v3583 = vpop.f32.mrf.mxu0
      %v3584 = vadd.f32 %v3492, %v3583
      %v3585 = vpop.f32.mrf.mxu0
      %v3586 = vpop.f32.mrf.mxu0
      %v3587 = vadd.f32 %v3492, %v3586
      %v3588 = vpop.f32.mrf.mxu0
      %3589 = vmatprep.mubr.bf16.mxu0 0
      %3590 = vmatmul.mubr.bf16.gmra.mxu0 %v3505
      %v3591 = vpop.f32.mrf.mxu0
      %v3592 = vadd.f32 %v3492, %v3591
      %v3593 = vpop.f32.mrf.mxu0
      %v3594 = vpop.f32.mrf.mxu0
      %v3595 = vadd.f32 %v3492, %v3594
      %v3596 = vpop.f32.mrf.mxu0
      %3597 = vmatprep.mubr.bf16.mxu0 0
      %3598 = vmatmul.mubr.bf16.gmra.mxu0 %v3508
      %v3599 = vpop.f32.mrf.mxu0
      %v3600 = vadd.f32 %v3492, %v3599
      %v3601 = vpop.f32.mrf.mxu0
      %v3602 = vpop.f32.mrf.mxu0
      %v3603 = vadd.f32 %v3492, %v3602
      %v3604 = vpop.f32.mrf.mxu0
      %3605 = vmatprep.mubr.bf16.mxu0 0
      %3606 = vmatmul.mubr.bf16.gmra.mxu0 %v3511
      %v3607 = vpop.f32.mrf.mxu0
      %v3608 = vadd.f32 %v3492, %v3607
      %v3609 = vpop.f32.mrf.mxu0
      %v3610 = vpop.f32.mrf.mxu0
      %v3611 = vadd.f32 %v3492, %v3610
      %v3612 = vpop.f32.mrf.mxu0
      %3613 = vmatprep.mubr.bf16.mxu0 0
      %3614 = vmatmul.mubr.bf16.gmra.mxu0 %v3514
      %v3615 = vpop.f32.mrf.mxu0
      %v3616 = vadd.f32 %v3492, %v3615
      %v3617 = vpop.f32.mrf.mxu0
      %v3618 = vpop.f32.mrf.mxu0
      %v3619 = vadd.f32 %v3492, %v3618
      %v3620 = vpop.f32.mrf.mxu0
      %3621 = vmatprep.mubr.bf16.mxu0 0
      %3622 = vmatmul.mubr.bf16.gmra.mxu0 %v3517
      %v3623 = vpop.f32.mrf.mxu0
      %v3624 = vadd.f32 %v3492, %v3623
      %v3625 = vpop.f32.mrf.mxu0
      %v3626 = vpop.f32.mrf.mxu0
      %v3627 = vadd.f32 %v3492, %v3626
      %v3628 = vpop.f32.mrf.mxu0
      %3629 = vmatprep.mubr.bf16.mxu0 0
      %3630 = vmatmul.mubr.bf16.gmra.mxu0 %v3520
      %v3631 = vpop.f32.mrf.mxu0
      %v3632 = vadd.f32 %v3492, %v3631
      %v3633 = vpop.f32.mrf.mxu0
      %v3634 = vpop.f32.mrf.mxu0
      %v3635 = vadd.f32 %v3492, %v3634
      %v3636 = vpop.f32.mrf.mxu0
      %3637 = vmatprep.mubr.bf16.mxu0 0
      %3638 = vmatmul.mubr.bf16.gmra.mxu0 %v3523
      %v3639 = vpop.f32.mrf.mxu0
      %v3640 = vadd.f32 %v3492, %v3639
      %v3641 = vpop.f32.mrf.mxu0
      %v3642 = vpop.f32.mrf.mxu0
      %v3643 = vadd.f32 %v3492, %v3642
      %v3644 = vpop.f32.mrf.mxu0
      %3645 = vmatprep.mubr.bf16.mxu0 0
      %3646 = vmatmul.mubr.bf16.gmra.mxu0 %v3526
      %v3647 = vpop.f32.mrf.mxu0
      %v3648 = vadd.f32 %v3492, %v3647
      %v3649 = vpop.f32.mrf.mxu0
      %v3650 = vpop.f32.mrf.mxu0
      %v3651 = vadd.f32 %v3492, %v3650
      %v3652 = vpop.f32.mrf.mxu0
      %3653 = vmatprep.mubr.bf16.mxu0 0
      %3654 = vmatmul.mubr.bf16.gmra.mxu0 %v3529
      %v3655 = vpop.f32.mrf.mxu0
      %v3656 = vadd.f32 %v3492, %v3655
      %v3657 = vpop.f32.mrf.mxu0
      %v3658 = vpop.f32.mrf.mxu0
      %v3659 = vadd.f32 %v3492, %v3658
      %v3660 = vpop.f32.mrf.mxu0
      %3661 = vmatprep.mubr.bf16.mxu0 0
      %3662 = vmatmul.mubr.bf16.gmra.mxu0 %v3532
      %v3663 = vpop.f32.mrf.mxu0
      %v3664 = vadd.f32 %v3492, %v3663
      %v3665 = vpop.f32.mrf.mxu0
      %v3666 = vpop.f32.mrf.mxu0
      %v3667 = vadd.f32 %v3492, %v3666
      %v3668 = vpop.f32.mrf.mxu0
      %3669 = vmatprep.mubr.bf16.mxu0 0
      %3670 = vmatmul.mubr.bf16.gmra.mxu0 %v3535
      %v3671 = vpop.f32.mrf.mxu0
      %v3672 = vadd.f32 %v3492, %v3671
      %v3673 = vpop.f32.mrf.mxu0
      %v3674 = vpop.f32.mrf.mxu0
      %v3675 = vadd.f32 %v3492, %v3674
      %v3676 = vpop.f32.mrf.mxu0
      %3677 = vmatprep.mubr.bf16.mxu0 0
      %3678 = vmatmul.mubr.bf16.gmra.mxu0 %v3538
      %v3679 = vpop.f32.mrf.mxu0
      %v3680 = vadd.f32 %v3492, %v3679
      %v3681 = vpop.f32.mrf.mxu0
      %v3682 = vpop.f32.mrf.mxu0
      %v3683 = vadd.f32 %v3492, %v3682
      %v3684 = vpop.f32.mrf.mxu0
      %3685 = vmatprep.mubr.bf16.mxu0 0
      %3686 = vmatmul.mubr.bf16.gmra.mxu0 %v3541
      %v3687 = vpop.f32.mrf.mxu0
      %v3688 = vadd.f32 %v3492, %v3687
      %v3689 = vpop.f32.mrf.mxu0
      %v3690 = vpop.f32.mrf.mxu0
      %v3691 = vadd.f32 %v3492, %v3690
      %v3692 = vpop.f32.mrf.mxu0
      %3693 = vmatprep.mubr.bf16.mxu0 0
      %3694 = vmatmul.mubr.bf16.gmra.mxu0 %v3544
      %v3695 = vpop.f32.mrf.mxu0
      %v3696 = vadd.f32 %v3492, %v3695
      %v3697 = vpop.f32.mrf.mxu0
      %v3698 = vpop.f32.mrf.mxu0
      %v3699 = vadd.f32 %v3492, %v3698
      %v3700 = vpop.f32.mrf.mxu0
      %3701 = vmatprep.mubr.bf16.mxu0 0
      %3702 = vmatmul.mubr.bf16.gmra.mxu0 %v3547
      %v3703 = vpop.f32.mrf.mxu0
      %v3704 = vadd.f32 %v3492, %v3703
      %v3705 = vpop.f32.mrf.mxu0
      %v3706 = vpop.f32.mrf.mxu0
      %v3707 = vadd.f32 %v3492, %v3706
      %v3708 = vpop.f32.mrf.mxu0
      %3709 = vdwg.mxu0
      %v3710 = vadd.f32 %v1301, %v3584
      %v3711 = vadd.f32 %v1302, %v3587
      %v3712 = vadd.f32 %v1303, %v3592
      %v3713 = vadd.f32 %v1304, %v3595
      %v3714 = vadd.f32 %v1305, %v3600
      %v3715 = vadd.f32 %v1306, %v3603
      %v3716 = vadd.f32 %v1307, %v3608
      %v3717 = vadd.f32 %v1308, %v3611
      %v3718 = vadd.f32 %v1309, %v3616
      %v3719 = vadd.f32 %v1310, %v3619
      %v3720 = vadd.f32 %v1311, %v3624
      %v3721 = vadd.f32 %v1312, %v3627
      %v3722 = vadd.f32 %v1313, %v3632
      %v3723 = vadd.f32 %v1314, %v3635
      %v3724 = vadd.f32 %v1315, %v3640
      %v3725 = vadd.f32 %v1316, %v3643
      %v3726 = vadd.f32 %v1317, %v3648
      %v3727 = vadd.f32 %v1318, %v3651
      %v3728 = vadd.f32 %v1319, %v3656
      %v3729 = vadd.f32 %v1320, %v3659
      %v3730 = vadd.f32 %v1321, %v3664
      %v3731 = vadd.f32 %v1322, %v3667
      %v3732 = vadd.f32 %v1323, %v3672
      %v3733 = vadd.f32 %v1324, %v3675
      %v3734 = vadd.f32 %v1325, %v3680
      %v3735 = vadd.f32 %v1326, %v3683
      %v3736 = vadd.f32 %v1327, %v3688
      %v3737 = vadd.f32 %v1328, %v3691
      %v3738 = vadd.f32 %v1329, %v3696
      %v3739 = vadd.f32 %v1330, %v3699
      %v3740 = vadd.f32 %v1331, %v3704
      %v3741 = vadd.f32 %v1332, %v3707
      %v3742 = vpack.c.bf16 %v3711, %v3710
      %v3743 = vpack.c.bf16 %v3713, %v3712
      %v3744 = vpack.c.bf16 %v3715, %v3714
      %v3745 = vpack.c.bf16 %v3717, %v3716
      %v3746 = vpack.c.bf16 %v3719, %v3718
      %v3747 = vpack.c.bf16 %v3721, %v3720
      %v3748 = vpack.c.bf16 %v3723, %v3722
      %v3749 = vpack.c.bf16 %v3725, %v3724
      %v3750 = vpack.c.bf16 %v3727, %v3726
      %v3751 = vpack.c.bf16 %v3729, %v3728
      %v3752 = vpack.c.bf16 %v3731, %v3730
      %v3753 = vpack.c.bf16 %v3733, %v3732
      %v3754 = vpack.c.bf16 %v3735, %v3734
      %v3755 = vpack.c.bf16 %v3737, %v3736
      %v3756 = vpack.c.bf16 %v3739, %v3738
      %v3757 = vpack.c.bf16 %v3741, %v3740
      %v3758 = vld [vmem:[%s10] sm:$0xf]
      %v3759 = vld [vmem:[%s10 + $0x4] sm:$0xf]
      %v3760 = vld [vmem:[%s6 + $0x3] sm:$0x1]
      %v3762 = vlaneseq
      %v3763 = vshrl.u32 %v3762, 7
      %v3764 = vsub.s32 0, %v3763
      %v3765 = vrot.slane %v3760, %v3764
      %v3769 = vunpack.c.l.b16 %v3758
      %v3770 = vunpack.c.l.b16 %v3759
      %v3771 = vpack.c.b16 %v3770, %v3769
      %v3774 = vsel %vm3500, %v3742, 0
      %v3777 = vsel %vm3500, %v3743, 0
      %v3780 = vsel %vm3500, %v3744, 0
      %v3783 = vsel %vm3500, %v3745, 0
      %v3786 = vsel %vm3500, %v3746, 0
      %v3789 = vsel %vm3500, %v3747, 0
      %v3792 = vsel %vm3500, %v3748, 0
      %v3795 = vsel %vm3500, %v3749, 0
      %v3798 = vsel %vm3500, %v3750, 0
      %v3801 = vsel %vm3500, %v3751, 0
      %v3804 = vsel %vm3500, %v3752, 0
      %v3807 = vsel %vm3500, %v3753, 0
      %v3810 = vsel %vm3500, %v3754, 0
      %v3813 = vsel %vm3500, %v3755, 0
      %v3816 = vsel %vm3500, %v3756, 0
      %v3819 = vsel %vm3500, %v3757, 0
      %3821 = vmatprep.subr.bf16.mxu0 0
      %3822 = vmatpush1.bf16.msra.mxu0 0
      %3823 = vmatprep.subr.bf16.mxu0 0
      %3824 = vmatpush1.bf16.msra.mxu0 0
      %3825 = vmatprep.subr.bf16.mxu0 0
      %3826 = vmatpush1.bf16.msra.mxu0 0
      %3827 = vmatprep.subr.bf16.mxu0 0
      %3828 = vmatpush1.bf16.msra.mxu0 0
      %3829 = vmatprep.subr.bf16.mxu0 0
      %3830 = vmatpush1.bf16.msra.mxu0 0
      %3831 = vmatprep.subr.bf16.mxu0 0
      %3832 = vmatpush1.bf16.msra.mxu0 0
      %3833 = vmatprep.subr.bf16.mxu0 0
      %3834 = vmatpush1.bf16.msra.mxu0 0
      %3835 = vmatprep.subr.bf16.mxu0 0
      %3836 = vmatpush1.bf16.msra.mxu0 %v3771
      %3837 = vmatprep.subr.bf16.mxu0 0
      %3838 = vmatpush2.bf16.msra.mxu0 0
      %3839 = vmatprep.subr.bf16.mxu0 0
      %3840 = vmatpush2.bf16.msra.mxu0 0
      %3841 = vmatprep.subr.bf16.mxu0 0
      %3842 = vmatpush2.bf16.msra.mxu0 0
      %3843 = vmatprep.subr.bf16.mxu0 0
      %3844 = vmatpush2.bf16.msra.mxu0 0
      %3845 = vmatprep.subr.bf16.mxu0 0
      %3846 = vmatpush2.bf16.msra.mxu0 0
      %3847 = vmatprep.subr.bf16.mxu0 0
      %3848 = vmatpush2.bf16.msra.mxu0 0
      %3849 = vmatprep.subr.bf16.mxu0 0
      %3850 = vmatpush2.bf16.msra.mxu0 0
      %3851 = vmatprep.subr.bf16.mxu0 0
      %3852 = vmatpush2.bf16.msra.mxu0 0
      %3853 = vmatprep.mubr.bf16.mxu0 0
      %3854 = vmatmul.mubr.bf16.gmra.mxu0 %v3774
      %v3855 = vpop.f32.mrf.mxu0
      %v3856 = vadd.f32 %v3765, %v3855
      %v3857 = vpop.f32.mrf.mxu0
      %v3858 = vpop.f32.mrf.mxu0
      %v3859 = vadd.f32 %v3765, %v3858
      %v3860 = vpop.f32.mrf.mxu0
      %3861 = vmatprep.mubr.bf16.mxu0 0
      %3862 = vmatmul.mubr.bf16.gmra.mxu0 %v3777
      %v3863 = vpop.f32.mrf.mxu0
      %v3864 = vadd.f32 %v3765, %v3863
      %v3865 = vpop.f32.mrf.mxu0
      %v3866 = vpop.f32.mrf.mxu0
      %v3867 = vadd.f32 %v3765, %v3866
      %v3868 = vpop.f32.mrf.mxu0
      %3869 = vmatprep.mubr.bf16.mxu0 0
      %3870 = vmatmul.mubr.bf16.gmra.mxu0 %v3780
      %v3871 = vpop.f32.mrf.mxu0
      %v3872 = vadd.f32 %v3765, %v3871
      %v3873 = vpop.f32.mrf.mxu0
      %v3874 = vpop.f32.mrf.mxu0
      %v3875 = vadd.f32 %v3765, %v3874
      %v3876 = vpop.f32.mrf.mxu0
      %3877 = vmatprep.mubr.bf16.mxu0 0
      %3878 = vmatmul.mubr.bf16.gmra.mxu0 %v3783
      %v3879 = vpop.f32.mrf.mxu0
      %v3880 = vadd.f32 %v3765, %v3879
      %v3881 = vpop.f32.mrf.mxu0
      %v3882 = vpop.f32.mrf.mxu0
      %v3883 = vadd.f32 %v3765, %v3882
      %v3884 = vpop.f32.mrf.mxu0
      %3885 = vmatprep.mubr.bf16.mxu0 0
      %3886 = vmatmul.mubr.bf16.gmra.mxu0 %v3786
      %v3887 = vpop.f32.mrf.mxu0
      %v3888 = vadd.f32 %v3765, %v3887
      %v3889 = vpop.f32.mrf.mxu0
      %v3890 = vpop.f32.mrf.mxu0
      %v3891 = vadd.f32 %v3765, %v3890
      %v3892 = vpop.f32.mrf.mxu0
      %3893 = vmatprep.mubr.bf16.mxu0 0
      %3894 = vmatmul.mubr.bf16.gmra.mxu0 %v3789
      %v3895 = vpop.f32.mrf.mxu0
      %v3896 = vadd.f32 %v3765, %v3895
      %v3897 = vpop.f32.mrf.mxu0
      %v3898 = vpop.f32.mrf.mxu0
      %v3899 = vadd.f32 %v3765, %v3898
      %v3900 = vpop.f32.mrf.mxu0
      %3901 = vmatprep.mubr.bf16.mxu0 0
      %3902 = vmatmul.mubr.bf16.gmra.mxu0 %v3792
      %v3903 = vpop.f32.mrf.mxu0
      %v3904 = vadd.f32 %v3765, %v3903
      %v3905 = vpop.f32.mrf.mxu0
      %v3906 = vpop.f32.mrf.mxu0
      %v3907 = vadd.f32 %v3765, %v3906
      %v3908 = vpop.f32.mrf.mxu0
      %3909 = vmatprep.mubr.bf16.mxu0 0
      %3910 = vmatmul.mubr.bf16.gmra.mxu0 %v3795
      %v3911 = vpop.f32.mrf.mxu0
      %v3912 = vadd.f32 %v3765, %v3911
      %v3913 = vpop.f32.mrf.mxu0
      %v3914 = vpop.f32.mrf.mxu0
      %v3915 = vadd.f32 %v3765, %v3914
      %v3916 = vpop.f32.mrf.mxu0
      %3917 = vmatprep.mubr.bf16.mxu0 0
      %3918 = vmatmul.mubr.bf16.gmra.mxu0 %v3798
      %v3919 = vpop.f32.mrf.mxu0
      %v3920 = vadd.f32 %v3765, %v3919
      %v3921 = vpop.f32.mrf.mxu0
      %v3922 = vpop.f32.mrf.mxu0
      %v3923 = vadd.f32 %v3765, %v3922
      %v3924 = vpop.f32.mrf.mxu0
      %3925 = vmatprep.mubr.bf16.mxu0 0
      %3926 = vmatmul.mubr.bf16.gmra.mxu0 %v3801
      %v3927 = vpop.f32.mrf.mxu0
      %v3928 = vadd.f32 %v3765, %v3927
      %v3929 = vpop.f32.mrf.mxu0
      %v3930 = vpop.f32.mrf.mxu0
      %v3931 = vadd.f32 %v3765, %v3930
      %v3932 = vpop.f32.mrf.mxu0
      %3933 = vmatprep.mubr.bf16.mxu0 0
      %3934 = vmatmul.mubr.bf16.gmra.mxu0 %v3804
      %v3935 = vpop.f32.mrf.mxu0
      %v3936 = vadd.f32 %v3765, %v3935
      %v3937 = vpop.f32.mrf.mxu0
      %v3938 = vpop.f32.mrf.mxu0
      %v3939 = vadd.f32 %v3765, %v3938
      %v3940 = vpop.f32.mrf.mxu0
      %3941 = vmatprep.mubr.bf16.mxu0 0
      %3942 = vmatmul.mubr.bf16.gmra.mxu0 %v3807
      %v3943 = vpop.f32.mrf.mxu0
      %v3944 = vadd.f32 %v3765, %v3943
      %v3945 = vpop.f32.mrf.mxu0
      %v3946 = vpop.f32.mrf.mxu0
      %v3947 = vadd.f32 %v3765, %v3946
      %v3948 = vpop.f32.mrf.mxu0
      %3949 = vmatprep.mubr.bf16.mxu0 0
      %3950 = vmatmul.mubr.bf16.gmra.mxu0 %v3810
      %v3951 = vpop.f32.mrf.mxu0
      %v3952 = vadd.f32 %v3765, %v3951
      %v3953 = vpop.f32.mrf.mxu0
      %v3954 = vpop.f32.mrf.mxu0
      %v3955 = vadd.f32 %v3765, %v3954
      %v3956 = vpop.f32.mrf.mxu0
      %3957 = vmatprep.mubr.bf16.mxu0 0
      %3958 = vmatmul.mubr.bf16.gmra.mxu0 %v3813
      %v3959 = vpop.f32.mrf.mxu0
      %v3960 = vadd.f32 %v3765, %v3959
      %v3961 = vpop.f32.mrf.mxu0
      %v3962 = vpop.f32.mrf.mxu0
      %v3963 = vadd.f32 %v3765, %v3962
      %v3964 = vpop.f32.mrf.mxu0
      %3965 = vmatprep.mubr.bf16.mxu0 0
      %3966 = vmatmul.mubr.bf16.gmra.mxu0 %v3816
      %v3967 = vpop.f32.mrf.mxu0
      %v3968 = vadd.f32 %v3765, %v3967
      %v3969 = vpop.f32.mrf.mxu0
      %v3970 = vpop.f32.mrf.mxu0
      %v3971 = vadd.f32 %v3765, %v3970
      %v3972 = vpop.f32.mrf.mxu0
      %3973 = vmatprep.mubr.bf16.mxu0 0
      %3974 = vmatmul.mubr.bf16.gmra.mxu0 %v3819
      %v3975 = vpop.f32.mrf.mxu0
      %v3976 = vadd.f32 %v3765, %v3975
      %v3977 = vpop.f32.mrf.mxu0
      %v3978 = vpop.f32.mrf.mxu0
      %v3979 = vadd.f32 %v3765, %v3978
      %v3980 = vpop.f32.mrf.mxu0
      %3981 = vdwg.mxu0
      %v3982 = vmax.f32 %v3856, 0.0
      %v3983 = vmax.f32 %v3859, 0.0
      %v3984 = vmax.f32 %v3864, 0.0
      %v3985 = vmax.f32 %v3867, 0.0
      %v3986 = vmax.f32 %v3872, 0.0
      %v3987 = vmax.f32 %v3875, 0.0
      %v3988 = vmax.f32 %v3880, 0.0
      %v3989 = vmax.f32 %v3883, 0.0
      %v3990 = vmax.f32 %v3888, 0.0
      %v3991 = vmax.f32 %v3891, 0.0
      %v3992 = vmax.f32 %v3896, 0.0
      %v3993 = vmax.f32 %v3899, 0.0
      %v3994 = vmax.f32 %v3904, 0.0
      %v3995 = vmax.f32 %v3907, 0.0
      %v3996 = vmax.f32 %v3912, 0.0
      %v3997 = vmax.f32 %v3915, 0.0
      %v3998 = vmax.f32 %v3920, 0.0
      %v3999 = vmax.f32 %v3923, 0.0
      %v4000 = vmax.f32 %v3928, 0.0
      %v4001 = vmax.f32 %v3931, 0.0
      %v4002 = vmax.f32 %v3936, 0.0
      %v4003 = vmax.f32 %v3939, 0.0
      %v4004 = vmax.f32 %v3944, 0.0
      %v4005 = vmax.f32 %v3947, 0.0
      %v4006 = vmax.f32 %v3952, 0.0
      %v4007 = vmax.f32 %v3955, 0.0
      %v4008 = vmax.f32 %v3960, 0.0
      %v4009 = vmax.f32 %v3963, 0.0
      %v4010 = vmax.f32 %v3968, 0.0
      %v4011 = vmax.f32 %v3971, 0.0
      %v4012 = vmax.f32 %v3976, 0.0
      %v4013 = vmax.f32 %v3979, 0.0
      %v4014 = vld [vmem:[%s11 + $0x4] sm:$0x1]
      %v4015 = vlaneseq
      %v4016 = vshrl.u32 %v4015, 7
      %v4017 = vsub.s32 0, %v4016
      %v4018 = vrot.slane %v4014, %v4017
      %v4019 = vmul.f32 %v3982, %v4018
      %v4020 = vmul.f32 %v3983, %v4018
      %v4021 = vmul.f32 %v3984, %v4018
      %v4022 = vmul.f32 %v3985, %v4018
      %v4023 = vmul.f32 %v3986, %v4018
      %v4024 = vmul.f32 %v3987, %v4018
      %v4025 = vmul.f32 %v3988, %v4018
      %v4026 = vmul.f32 %v3989, %v4018
      %v4027 = vmul.f32 %v3990, %v4018
      %v4028 = vmul.f32 %v3991, %v4018
      %v4029 = vmul.f32 %v3992, %v4018
      %v4030 = vmul.f32 %v3993, %v4018
      %v4031 = vmul.f32 %v3994, %v4018
      %v4032 = vmul.f32 %v3995, %v4018
      %v4033 = vmul.f32 %v3996, %v4018
      %v4034 = vmul.f32 %v3997, %v4018
      %v4035 = vmul.f32 %v3998, %v4018
      %v4036 = vmul.f32 %v3999, %v4018
      %v4037 = vmul.f32 %v4000, %v4018
      %v4038 = vmul.f32 %v4001, %v4018
      %v4039 = vmul.f32 %v4002, %v4018
      %v4040 = vmul.f32 %v4003, %v4018
      %v4041 = vmul.f32 %v4004, %v4018
      %v4042 = vmul.f32 %v4005, %v4018
      %v4043 = vmul.f32 %v4006, %v4018
      %v4044 = vmul.f32 %v4007, %v4018
      %v4045 = vmul.f32 %v4008, %v4018
      %v4046 = vmul.f32 %v4009, %v4018
      %v4047 = vmul.f32 %v4010, %v4018
      %v4048 = vmul.f32 %v4011, %v4018
      %v4049 = vmul.f32 %v4012, %v4018
      %v4050 = vmul.f32 %v4013, %v4018
      %v4051 = vrot.slane %v3982, 7
      %v4052 = vrot.slane %v3983, 7
      %v4053 = vrot.slane %v3984, 7
      %v4054 = vrot.slane %v3985, 7
      %v4055 = vrot.slane %v3986, 7
      %v4056 = vrot.slane %v3987, 7
      %v4057 = vrot.slane %v3988, 7
      %v4058 = vrot.slane %v3989, 7
      %v4059 = vrot.slane %v3990, 7
      %v4060 = vrot.slane %v3991, 7
      %v4061 = vrot.slane %v3992, 7
      %v4062 = vrot.slane %v3993, 7
      %v4063 = vrot.slane %v3994, 7
      %v4064 = vrot.slane %v3995, 7
      %v4065 = vrot.slane %v3996, 7
      %v4066 = vrot.slane %v3997, 7
      %v4067 = vrot.slane %v3998, 7
      %v4068 = vrot.slane %v3999, 7
      %v4069 = vrot.slane %v4000, 7
      %v4070 = vrot.slane %v4001, 7
      %v4071 = vrot.slane %v4002, 7
      %v4072 = vrot.slane %v4003, 7
      %v4073 = vrot.slane %v4004, 7
      %v4074 = vrot.slane %v4005, 7
      %v4075 = vrot.slane %v4006, 7
      %v4076 = vrot.slane %v4007, 7
      %v4077 = vrot.slane %v4008, 7
      %v4078 = vrot.slane %v4009, 7
      %v4079 = vrot.slane %v4010, 7
      %v4080 = vrot.slane %v4011, 7
      %v4081 = vrot.slane %v4012, 7
      %v4082 = vrot.slane %v4013, 7
      %v4083 = vsel %vm1404, %v4081, %v4082
      %v4084 = vsel %vm1404, %v4080, %v4081
      %v4085 = vsel %vm1404, %v4079, %v4080
      %v4086 = vsel %vm1404, %v4078, %v4079
      %v4087 = vsel %vm1404, %v4077, %v4078
      %v4088 = vsel %vm1404, %v4076, %v4077
      %v4089 = vsel %vm1404, %v4075, %v4076
      %v4090 = vsel %vm1404, %v4074, %v4075
      %v4091 = vsel %vm1404, %v4073, %v4074
      %v4092 = vsel %vm1404, %v4072, %v4073
      %v4093 = vsel %vm1404, %v4071, %v4072
      %v4094 = vsel %vm1404, %v4070, %v4071
      %v4095 = vsel %vm1404, %v4069, %v4070
      %v4096 = vsel %vm1404, %v4068, %v4069
      %v4097 = vsel %vm1404, %v4067, %v4068
      %v4098 = vsel %vm1404, %v4066, %v4067
      %v4099 = vsel %vm1404, %v4065, %v4066
      %v4100 = vsel %vm1404, %v4064, %v4065
      %v4101 = vsel %vm1404, %v4063, %v4064
      %v4102 = vsel %vm1404, %v4062, %v4063
      %v4103 = vsel %vm1404, %v4061, %v4062
      %v4104 = vsel %vm1404, %v4060, %v4061
      %v4105 = vsel %vm1404, %v4059, %v4060
      %v4106 = vsel %vm1404, %v4058, %v4059
      %v4107 = vsel %vm1404, %v4057, %v4058
      %v4108 = vsel %vm1404, %v4056, %v4057
      %v4109 = vsel %vm1404, %v4055, %v4056
      %v4110 = vsel %vm1404, %v4054, %v4055
      %v4111 = vsel %vm1404, %v4053, %v4054
      %v4112 = vsel %vm1404, %v4052, %v4053
      %v4113 = vsel %vm1404, %v4051, %v4052
      %v4114 = vsel %vm1404, %v4082, %v4051
      %v4115 = vmul.f32 %v4084, %v1472
      %v4116 = vmul.f32 %v4083, %v1477
      %v4117 = vmul.f32 %v4114, %v1482
      %v4118 = vmul.f32 %v4113, %v1487
      %v4119 = vmul.f32 %v4112, %v1492
      %v4120 = vmul.f32 %v4111, %v1497
      %v4121 = vmul.f32 %v4110, %v1502
      %v4122 = vmul.f32 %v4109, %v1507
      %v4123 = vmul.f32 %v4108, %v1512
      %v4124 = vmul.f32 %v4107, %v1517
      %v4125 = vmul.f32 %v4106, %v1522
      %v4126 = vmul.f32 %v4105, %v1527
      %v4127 = vmul.f32 %v4104, %v1532
      %v4128 = vmul.f32 %v4103, %v1537
      %v4129 = vmul.f32 %v4102, %v1542
      %v4130 = vmul.f32 %v4101, %v1547
      %v4131 = vmul.f32 %v4100, %v1552
      %v4132 = vmul.f32 %v4099, %v1557
      %v4133 = vmul.f32 %v4098, %v1562
      %v4134 = vmul.f32 %v4097, %v1567
      %v4135 = vmul.f32 %v4096, %v1572
      %v4136 = vmul.f32 %v4095, %v1577
      %v4137 = vmul.f32 %v4094, %v1582
      %v4138 = vmul.f32 %v4093, %v1587
      %v4139 = vmul.f32 %v4092, %v1592
      %v4140 = vmul.f32 %v4091, %v1597
      %v4141 = vmul.f32 %v4090, %v1602
      %v4142 = vmul.f32 %v4089, %v1607
      %v4143 = vmul.f32 %v4088, %v1612
      %v4144 = vmul.f32 %v4087, %v1617
      %v4145 = vmul.f32 %v4086, %v1622
      %v4146 = vmul.f32 %v4085, %v1627
      %v4147 = vld [vmem:[%s11] sm:$0x1]
      %v4148 = vlaneseq
      %v4149 = vshrl.u32 %v4148, 7
      %v4150 = vsub.s32 0, %v4149
      %v4151 = vrot.slane %v4147, %v4150
      %v4152 = vmul.f32 %v4115, %v4151
      %v4153 = vmul.f32 %v4116, %v4151
      %v4154 = vmul.f32 %v4117, %v4151
      %v4155 = vmul.f32 %v4118, %v4151
      %v4156 = vmul.f32 %v4119, %v4151
      %v4157 = vmul.f32 %v4120, %v4151
      %v4158 = vmul.f32 %v4121, %v4151
      %v4159 = vmul.f32 %v4122, %v4151
      %v4160 = vmul.f32 %v4123, %v4151
      %v4161 = vmul.f32 %v4124, %v4151
      %v4162 = vmul.f32 %v4125, %v4151
      %v4163 = vmul.f32 %v4126, %v4151
      %v4164 = vmul.f32 %v4127, %v4151
      %v4165 = vmul.f32 %v4128, %v4151
      %v4166 = vmul.f32 %v4129, %v4151
      %v4167 = vmul.f32 %v4130, %v4151
      %v4168 = vmul.f32 %v4131, %v4151
      %v4169 = vmul.f32 %v4132, %v4151
      %v4170 = vmul.f32 %v4133, %v4151
      %v4171 = vmul.f32 %v4134, %v4151
      %v4172 = vmul.f32 %v4135, %v4151
      %v4173 = vmul.f32 %v4136, %v4151
      %v4174 = vmul.f32 %v4137, %v4151
      %v4175 = vmul.f32 %v4138, %v4151
      %v4176 = vmul.f32 %v4139, %v4151
      %v4177 = vmul.f32 %v4140, %v4151
      %v4178 = vmul.f32 %v4141, %v4151
      %v4179 = vmul.f32 %v4142, %v4151
      %v4180 = vmul.f32 %v4143, %v4151
      %v4181 = vmul.f32 %v4144, %v4151
      %v4182 = vmul.f32 %v4145, %v4151
      %v4183 = vmul.f32 %v4146, %v4151
      %v4184 = vadd.f32 %v4019, %v4152
      %v4185 = vadd.f32 %v4020, %v4153
      %v4186 = vadd.f32 %v4021, %v4154
      %v4187 = vadd.f32 %v4022, %v4155
      %v4188 = vadd.f32 %v4023, %v4156
      %v4189 = vadd.f32 %v4024, %v4157
      %v4190 = vadd.f32 %v4025, %v4158
      %v4191 = vadd.f32 %v4026, %v4159
      %v4192 = vadd.f32 %v4027, %v4160
      %v4193 = vadd.f32 %v4028, %v4161
      %v4194 = vadd.f32 %v4029, %v4162
      %v4195 = vadd.f32 %v4030, %v4163
      %v4196 = vadd.f32 %v4031, %v4164
      %v4197 = vadd.f32 %v4032, %v4165
      %v4198 = vadd.f32 %v4033, %v4166
      %v4199 = vadd.f32 %v4034, %v4167
      %v4200 = vadd.f32 %v4035, %v4168
      %v4201 = vadd.f32 %v4036, %v4169
      %v4202 = vadd.f32 %v4037, %v4170
      %v4203 = vadd.f32 %v4038, %v4171
      %v4204 = vadd.f32 %v4039, %v4172
      %v4205 = vadd.f32 %v4040, %v4173
      %v4206 = vadd.f32 %v4041, %v4174
      %v4207 = vadd.f32 %v4042, %v4175
      %v4208 = vadd.f32 %v4043, %v4176
      %v4209 = vadd.f32 %v4044, %v4177
      %v4210 = vadd.f32 %v4045, %v4178
      %v4211 = vadd.f32 %v4046, %v4179
      %v4212 = vadd.f32 %v4047, %v4180
      %v4213 = vadd.f32 %v4048, %v4181
      %v4214 = vadd.f32 %v4049, %v4182
      %v4215 = vadd.f32 %v4050, %v4183
      %v4216 = vmul.f32 %v4012, %v1732
      %v4217 = vmul.f32 %v4013, %v1736
      %v4218 = vmul.f32 %v3982, %v1740
      %v4219 = vmul.f32 %v3983, %v1744
      %v4220 = vmul.f32 %v3984, %v1748
      %v4221 = vmul.f32 %v3985, %v1752
      %v4222 = vmul.f32 %v3986, %v1756
      %v4223 = vmul.f32 %v3987, %v1760
      %v4224 = vmul.f32 %v3988, %v1764
      %v4225 = vmul.f32 %v3989, %v1768
      %v4226 = vmul.f32 %v3990, %v1772
      %v4227 = vmul.f32 %v3991, %v1776
      %v4228 = vmul.f32 %v3992, %v1780
      %v4229 = vmul.f32 %v3993, %v1784
      %v4230 = vmul.f32 %v3994, %v1788
      %v4231 = vmul.f32 %v3995, %v1792
      %v4232 = vmul.f32 %v3996, %v1796
      %v4233 = vmul.f32 %v3997, %v1800
      %v4234 = vmul.f32 %v3998, %v1804
      %v4235 = vmul.f32 %v3999, %v1808
      %v4236 = vmul.f32 %v4000, %v1812
      %v4237 = vmul.f32 %v4001, %v1816
      %v4238 = vmul.f32 %v4002, %v1820
      %v4239 = vmul.f32 %v4003, %v1824
      %v4240 = vmul.f32 %v4004, %v1828
      %v4241 = vmul.f32 %v4005, %v1832
      %v4242 = vmul.f32 %v4006, %v1836
      %v4243 = vmul.f32 %v4007, %v1840
      %v4244 = vmul.f32 %v4008, %v1844
      %v4245 = vmul.f32 %v4009, %v1848
      %v4246 = vmul.f32 %v4010, %v1852
      %v4247 = vmul.f32 %v4011, %v1856
      %v4248 = vld [vmem:[%s11 + $0x1] sm:$0x1]
      %v4249 = vlaneseq
      %v4250 = vshrl.u32 %v4249, 7
      %v4251 = vsub.s32 0, %v4250
      %v4252 = vrot.slane %v4248, %v4251
      %v4253 = vmul.f32 %v4216, %v4252
      %v4254 = vmul.f32 %v4217, %v4252
      %v4255 = vmul.f32 %v4218, %v4252
      %v4256 = vmul.f32 %v4219, %v4252
      %v4257 = vmul.f32 %v4220, %v4252
      %v4258 = vmul.f32 %v4221, %v4252
      %v4259 = vmul.f32 %v4222, %v4252
      %v4260 = vmul.f32 %v4223, %v4252
      %v4261 = vmul.f32 %v4224, %v4252
      %v4262 = vmul.f32 %v4225, %v4252
      %v4263 = vmul.f32 %v4226, %v4252
      %v4264 = vmul.f32 %v4227, %v4252
      %v4265 = vmul.f32 %v4228, %v4252
      %v4266 = vmul.f32 %v4229, %v4252
      %v4267 = vmul.f32 %v4230, %v4252
      %v4268 = vmul.f32 %v4231, %v4252
      %v4269 = vmul.f32 %v4232, %v4252
      %v4270 = vmul.f32 %v4233, %v4252
      %v4271 = vmul.f32 %v4234, %v4252
      %v4272 = vmul.f32 %v4235, %v4252
      %v4273 = vmul.f32 %v4236, %v4252
      %v4274 = vmul.f32 %v4237, %v4252
      %v4275 = vmul.f32 %v4238, %v4252
      %v4276 = vmul.f32 %v4239, %v4252
      %v4277 = vmul.f32 %v4240, %v4252
      %v4278 = vmul.f32 %v4241, %v4252
      %v4279 = vmul.f32 %v4242, %v4252
      %v4280 = vmul.f32 %v4243, %v4252
      %v4281 = vmul.f32 %v4244, %v4252
      %v4282 = vmul.f32 %v4245, %v4252
      %v4283 = vmul.f32 %v4246, %v4252
      %v4284 = vmul.f32 %v4247, %v4252
      %v4285 = vadd.f32 %v4184, %v4253
      %v4286 = vadd.f32 %v4185, %v4254
      %v4287 = vadd.f32 %v4186, %v4255
      %v4288 = vadd.f32 %v4187, %v4256
      %v4289 = vadd.f32 %v4188, %v4257
      %v4290 = vadd.f32 %v4189, %v4258
      %v4291 = vadd.f32 %v4190, %v4259
      %v4292 = vadd.f32 %v4191, %v4260
      %v4293 = vadd.f32 %v4192, %v4261
      %v4294 = vadd.f32 %v4193, %v4262
      %v4295 = vadd.f32 %v4194, %v4263
      %v4296 = vadd.f32 %v4195, %v4264
      %v4297 = vadd.f32 %v4196, %v4265
      %v4298 = vadd.f32 %v4197, %v4266
      %v4299 = vadd.f32 %v4198, %v4267
      %v4300 = vadd.f32 %v4199, %v4268
      %v4301 = vadd.f32 %v4200, %v4269
      %v4302 = vadd.f32 %v4201, %v4270
      %v4303 = vadd.f32 %v4202, %v4271
      %v4304 = vadd.f32 %v4203, %v4272
      %v4305 = vadd.f32 %v4204, %v4273
      %v4306 = vadd.f32 %v4205, %v4274
      %v4307 = vadd.f32 %v4206, %v4275
      %v4308 = vadd.f32 %v4207, %v4276
      %v4309 = vadd.f32 %v4208, %v4277
      %v4310 = vadd.f32 %v4209, %v4278
      %v4311 = vadd.f32 %v4210, %v4279
      %v4312 = vadd.f32 %v4211, %v4280
      %v4313 = vadd.f32 %v4212, %v4281
      %v4314 = vadd.f32 %v4213, %v4282
      %v4315 = vadd.f32 %v4214, %v4283
      %v4316 = vadd.f32 %v4215, %v4284
      %v4317 = vrot.slane %v3982, 1
      %v4318 = vrot.slane %v3983, 1
      %v4319 = vrot.slane %v3984, 1
      %v4320 = vrot.slane %v3985, 1
      %v4321 = vrot.slane %v3986, 1
      %v4322 = vrot.slane %v3987, 1
      %v4323 = vrot.slane %v3988, 1
      %v4324 = vrot.slane %v3989, 1
      %v4325 = vrot.slane %v3990, 1
      %v4326 = vrot.slane %v3991, 1
      %v4327 = vrot.slane %v3992, 1
      %v4328 = vrot.slane %v3993, 1
      %v4329 = vrot.slane %v3994, 1
      %v4330 = vrot.slane %v3995, 1
      %v4331 = vrot.slane %v3996, 1
      %v4332 = vrot.slane %v3997, 1
      %v4333 = vrot.slane %v3998, 1
      %v4334 = vrot.slane %v3999, 1
      %v4335 = vrot.slane %v4000, 1
      %v4336 = vrot.slane %v4001, 1
      %v4337 = vrot.slane %v4002, 1
      %v4338 = vrot.slane %v4003, 1
      %v4339 = vrot.slane %v4004, 1
      %v4340 = vrot.slane %v4005, 1
      %v4341 = vrot.slane %v4006, 1
      %v4342 = vrot.slane %v4007, 1
      %v4343 = vrot.slane %v4008, 1
      %v4344 = vrot.slane %v4009, 1
      %v4345 = vrot.slane %v4010, 1
      %v4346 = vrot.slane %v4011, 1
      %v4347 = vrot.slane %v4012, 1
      %v4348 = vrot.slane %v4013, 1
      %v4349 = vsel %vm1991, %v4347, %v4348
      %v4350 = vsel %vm1991, %v4346, %v4347
      %v4351 = vsel %vm1991, %v4345, %v4346
      %v4352 = vsel %vm1991, %v4344, %v4345
      %v4353 = vsel %vm1991, %v4343, %v4344
      %v4354 = vsel %vm1991, %v4342, %v4343
      %v4355 = vsel %vm1991, %v4341, %v4342
      %v4356 = vsel %vm1991, %v4340, %v4341
      %v4357 = vsel %vm1991, %v4339, %v4340
      %v4358 = vsel %vm1991, %v4338, %v4339
      %v4359 = vsel %vm1991, %v4337, %v4338
      %v4360 = vsel %vm1991, %v4336, %v4337
      %v4361 = vsel %vm1991, %v4335, %v4336
      %v4362 = vsel %vm1991, %v4334, %v4335
      %v4363 = vsel %vm1991, %v4333, %v4334
      %v4364 = vsel %vm1991, %v4332, %v4333
      %v4365 = vsel %vm1991, %v4331, %v4332
      %v4366 = vsel %vm1991, %v4330, %v4331
      %v4367 = vsel %vm1991, %v4329, %v4330
      %v4368 = vsel %vm1991, %v4328, %v4329
      %v4369 = vsel %vm1991, %v4327, %v4328
      %v4370 = vsel %vm1991, %v4326, %v4327
      %v4371 = vsel %vm1991, %v4325, %v4326
      %v4372 = vsel %vm1991, %v4324, %v4325
      %v4373 = vsel %vm1991, %v4323, %v4324
      %v4374 = vsel %vm1991, %v4322, %v4323
      %v4375 = vsel %vm1991, %v4321, %v4322
      %v4376 = vsel %vm1991, %v4320, %v4321
      %v4377 = vsel %vm1991, %v4319, %v4320
      %v4378 = vsel %vm1991, %v4318, %v4319
      %v4379 = vsel %vm1991, %v4317, %v4318
      %v4380 = vsel %vm1991, %v4348, %v4317
      %v4381 = vmul.f32 %v4349, %v2026
      %v4382 = vmul.f32 %v4380, %v2030
      %v4383 = vmul.f32 %v4379, %v2034
      %v4384 = vmul.f32 %v4378, %v2038
      %v4385 = vmul.f32 %v4377, %v2042
      %v4386 = vmul.f32 %v4376, %v2046
      %v4387 = vmul.f32 %v4375, %v2050
      %v4388 = vmul.f32 %v4374, %v2054
      %v4389 = vmul.f32 %v4373, %v2058
      %v4390 = vmul.f32 %v4372, %v2062
      %v4391 = vmul.f32 %v4371, %v2066
      %v4392 = vmul.f32 %v4370, %v2070
      %v4393 = vmul.f32 %v4369, %v2074
      %v4394 = vmul.f32 %v4368, %v2078
      %v4395 = vmul.f32 %v4367, %v2082
      %v4396 = vmul.f32 %v4366, %v2086
      %v4397 = vmul.f32 %v4365, %v2090
      %v4398 = vmul.f32 %v4364, %v2094
      %v4399 = vmul.f32 %v4363, %v2098
      %v4400 = vmul.f32 %v4362, %v2102
      %v4401 = vmul.f32 %v4361, %v2106
      %v4402 = vmul.f32 %v4360, %v2110
      %v4403 = vmul.f32 %v4359, %v2114
      %v4404 = vmul.f32 %v4358, %v2118
      %v4405 = vmul.f32 %v4357, %v2122
      %v4406 = vmul.f32 %v4356, %v2126
      %v4407 = vmul.f32 %v4355, %v2130
      %v4408 = vmul.f32 %v4354, %v2134
      %v4409 = vmul.f32 %v4353, %v2138
      %v4410 = vmul.f32 %v4352, %v2142
      %v4411 = vmul.f32 %v4351, %v2146
      %v4412 = vmul.f32 %v4350, %v2150
      %v4413 = vld [vmem:[%s11 + $0x2] sm:$0x1]
      %v4414 = vlaneseq
      %v4415 = vshrl.u32 %v4414, 7
      %v4416 = vsub.s32 0, %v4415
      %v4417 = vrot.slane %v4413, %v4416
      %v4418 = vmul.f32 %v4381, %v4417
      %v4419 = vmul.f32 %v4382, %v4417
      %v4420 = vmul.f32 %v4383, %v4417
      %v4421 = vmul.f32 %v4384, %v4417
      %v4422 = vmul.f32 %v4385, %v4417
      %v4423 = vmul.f32 %v4386, %v4417
      %v4424 = vmul.f32 %v4387, %v4417
      %v4425 = vmul.f32 %v4388, %v4417
      %v4426 = vmul.f32 %v4389, %v4417
      %v4427 = vmul.f32 %v4390, %v4417
      %v4428 = vmul.f32 %v4391, %v4417
      %v4429 = vmul.f32 %v4392, %v4417
      %v4430 = vmul.f32 %v4393, %v4417
      %v4431 = vmul.f32 %v4394, %v4417
      %v4432 = vmul.f32 %v4395, %v4417
      %v4433 = vmul.f32 %v4396, %v4417
      %v4434 = vmul.f32 %v4397, %v4417
      %v4435 = vmul.f32 %v4398, %v4417
      %v4436 = vmul.f32 %v4399, %v4417
      %v4437 = vmul.f32 %v4400, %v4417
      %v4438 = vmul.f32 %v4401, %v4417
      %v4439 = vmul.f32 %v4402, %v4417
      %v4440 = vmul.f32 %v4403, %v4417
      %v4441 = vmul.f32 %v4404, %v4417
      %v4442 = vmul.f32 %v4405, %v4417
      %v4443 = vmul.f32 %v4406, %v4417
      %v4444 = vmul.f32 %v4407, %v4417
      %v4445 = vmul.f32 %v4408, %v4417
      %v4446 = vmul.f32 %v4409, %v4417
      %v4447 = vmul.f32 %v4410, %v4417
      %v4448 = vmul.f32 %v4411, %v4417
      %v4449 = vmul.f32 %v4412, %v4417
      %v4450 = vadd.f32 %v4285, %v4418
      %v4451 = vadd.f32 %v4286, %v4419
      %v4452 = vadd.f32 %v4287, %v4420
      %v4453 = vadd.f32 %v4288, %v4421
      %v4454 = vadd.f32 %v4289, %v4422
      %v4455 = vadd.f32 %v4290, %v4423
      %v4456 = vadd.f32 %v4291, %v4424
      %v4457 = vadd.f32 %v4292, %v4425
      %v4458 = vadd.f32 %v4293, %v4426
      %v4459 = vadd.f32 %v4294, %v4427
      %v4460 = vadd.f32 %v4295, %v4428
      %v4461 = vadd.f32 %v4296, %v4429
      %v4462 = vadd.f32 %v4297, %v4430
      %v4463 = vadd.f32 %v4298, %v4431
      %v4464 = vadd.f32 %v4299, %v4432
      %v4465 = vadd.f32 %v4300, %v4433
      %v4466 = vadd.f32 %v4301, %v4434
      %v4467 = vadd.f32 %v4302, %v4435
      %v4468 = vadd.f32 %v4303, %v4436
      %v4469 = vadd.f32 %v4304, %v4437
      %v4470 = vadd.f32 %v4305, %v4438
      %v4471 = vadd.f32 %v4306, %v4439
      %v4472 = vadd.f32 %v4307, %v4440
      %v4473 = vadd.f32 %v4308, %v4441
      %v4474 = vadd.f32 %v4309, %v4442
      %v4475 = vadd.f32 %v4310, %v4443
      %v4476 = vadd.f32 %v4311, %v4444
      %v4477 = vadd.f32 %v4312, %v4445
      %v4478 = vadd.f32 %v4313, %v4446
      %v4479 = vadd.f32 %v4314, %v4447
      %v4480 = vadd.f32 %v4315, %v4448
      %v4481 = vadd.f32 %v4316, %v4449
      %v4482 = vmul.f32 %v4114, %v2255
      %v4483 = vmul.f32 %v4113, %v2259
      %v4484 = vmul.f32 %v4112, %v2263
      %v4485 = vmul.f32 %v4111, %v2267
      %v4486 = vmul.f32 %v4110, %v2271
      %v4487 = vmul.f32 %v4109, %v2275
      %v4488 = vmul.f32 %v4108, %v2279
      %v4489 = vmul.f32 %v4107, %v2283
      %v4490 = vmul.f32 %v4106, %v2287
      %v4491 = vmul.f32 %v4105, %v2291
      %v4492 = vmul.f32 %v4104, %v2295
      %v4493 = vmul.f32 %v4103, %v2299
      %v4494 = vmul.f32 %v4102, %v2303
      %v4495 = vmul.f32 %v4101, %v2307
      %v4496 = vmul.f32 %v4100, %v2311
      %v4497 = vmul.f32 %v4099, %v2315
      %v4498 = vmul.f32 %v4098, %v2319
      %v4499 = vmul.f32 %v4097, %v2323
      %v4500 = vmul.f32 %v4096, %v2327
      %v4501 = vmul.f32 %v4095, %v2331
      %v4502 = vmul.f32 %v4094, %v2335
      %v4503 = vmul.f32 %v4093, %v2339
      %v4504 = vmul.f32 %v4092, %v2343
      %v4505 = vmul.f32 %v4091, %v2347
      %v4506 = vmul.f32 %v4090, %v2351
      %v4507 = vmul.f32 %v4089, %v2355
      %v4508 = vmul.f32 %v4088, %v2359
      %v4509 = vmul.f32 %v4087, %v2363
      %v4510 = vmul.f32 %v4086, %v2367
      %v4511 = vmul.f32 %v4085, %v2371
      %v4512 = vmul.f32 %v4084, %v2375
      %v4513 = vmul.f32 %v4083, %v2379
      %v4514 = vld [vmem:[%s11 + $0x3] sm:$0x1]
      %v4515 = vlaneseq
      %v4516 = vshrl.u32 %v4515, 7
      %v4517 = vsub.s32 0, %v4516
      %v4518 = vrot.slane %v4514, %v4517
      %v4519 = vmul.f32 %v4482, %v4518
      %v4520 = vmul.f32 %v4483, %v4518
      %v4521 = vmul.f32 %v4484, %v4518
      %v4522 = vmul.f32 %v4485, %v4518
      %v4523 = vmul.f32 %v4486, %v4518
      %v4524 = vmul.f32 %v4487, %v4518
      %v4525 = vmul.f32 %v4488, %v4518
      %v4526 = vmul.f32 %v4489, %v4518
      %v4527 = vmul.f32 %v4490, %v4518
      %v4528 = vmul.f32 %v4491, %v4518
      %v4529 = vmul.f32 %v4492, %v4518
      %v4530 = vmul.f32 %v4493, %v4518
      %v4531 = vmul.f32 %v4494, %v4518
      %v4532 = vmul.f32 %v4495, %v4518
      %v4533 = vmul.f32 %v4496, %v4518
      %v4534 = vmul.f32 %v4497, %v4518
      %v4535 = vmul.f32 %v4498, %v4518
      %v4536 = vmul.f32 %v4499, %v4518
      %v4537 = vmul.f32 %v4500, %v4518
      %v4538 = vmul.f32 %v4501, %v4518
      %v4539 = vmul.f32 %v4502, %v4518
      %v4540 = vmul.f32 %v4503, %v4518
      %v4541 = vmul.f32 %v4504, %v4518
      %v4542 = vmul.f32 %v4505, %v4518
      %v4543 = vmul.f32 %v4506, %v4518
      %v4544 = vmul.f32 %v4507, %v4518
      %v4545 = vmul.f32 %v4508, %v4518
      %v4546 = vmul.f32 %v4509, %v4518
      %v4547 = vmul.f32 %v4510, %v4518
      %v4548 = vmul.f32 %v4511, %v4518
      %v4549 = vmul.f32 %v4512, %v4518
      %v4550 = vmul.f32 %v4513, %v4518
      %v4551 = vadd.f32 %v4450, %v4519
      %v4552 = vadd.f32 %v4451, %v4520
      %v4553 = vadd.f32 %v4452, %v4521
      %v4554 = vadd.f32 %v4453, %v4522
      %v4555 = vadd.f32 %v4454, %v4523
      %v4556 = vadd.f32 %v4455, %v4524
      %v4557 = vadd.f32 %v4456, %v4525
      %v4558 = vadd.f32 %v4457, %v4526
      %v4559 = vadd.f32 %v4458, %v4527
      %v4560 = vadd.f32 %v4459, %v4528
      %v4561 = vadd.f32 %v4460, %v4529
      %v4562 = vadd.f32 %v4461, %v4530
      %v4563 = vadd.f32 %v4462, %v4531
      %v4564 = vadd.f32 %v4463, %v4532
      %v4565 = vadd.f32 %v4464, %v4533
      %v4566 = vadd.f32 %v4465, %v4534
      %v4567 = vadd.f32 %v4466, %v4535
      %v4568 = vadd.f32 %v4467, %v4536
      %v4569 = vadd.f32 %v4468, %v4537
      %v4570 = vadd.f32 %v4469, %v4538
      %v4571 = vadd.f32 %v4470, %v4539
      %v4572 = vadd.f32 %v4471, %v4540
      %v4573 = vadd.f32 %v4472, %v4541
      %v4574 = vadd.f32 %v4473, %v4542
      %v4575 = vadd.f32 %v4474, %v4543
      %v4576 = vadd.f32 %v4475, %v4544
      %v4577 = vadd.f32 %v4476, %v4545
      %v4578 = vadd.f32 %v4477, %v4546
      %v4579 = vadd.f32 %v4478, %v4547
      %v4580 = vadd.f32 %v4479, %v4548
      %v4581 = vadd.f32 %v4480, %v4549
      %v4582 = vadd.f32 %v4481, %v4550
      %v4583 = vmul.f32 %v4379, %v2484
      %v4584 = vmul.f32 %v4378, %v2488
      %v4585 = vmul.f32 %v4377, %v2492
      %v4586 = vmul.f32 %v4376, %v2496
      %v4587 = vmul.f32 %v4375, %v2500
      %v4588 = vmul.f32 %v4374, %v2504
      %v4589 = vmul.f32 %v4373, %v2508
      %v4590 = vmul.f32 %v4372, %v2512
      %v4591 = vmul.f32 %v4371, %v2516
      %v4592 = vmul.f32 %v4370, %v2520
      %v4593 = vmul.f32 %v4369, %v2524
      %v4594 = vmul.f32 %v4368, %v2528
      %v4595 = vmul.f32 %v4367, %v2532
      %v4596 = vmul.f32 %v4366, %v2536
      %v4597 = vmul.f32 %v4365, %v2540
      %v4598 = vmul.f32 %v4364, %v2544
      %v4599 = vmul.f32 %v4363, %v2548
      %v4600 = vmul.f32 %v4362, %v2552
      %v4601 = vmul.f32 %v4361, %v2556
      %v4602 = vmul.f32 %v4360, %v2560
      %v4603 = vmul.f32 %v4359, %v2564
      %v4604 = vmul.f32 %v4358, %v2568
      %v4605 = vmul.f32 %v4357, %v2572
      %v4606 = vmul.f32 %v4356, %v2576
      %v4607 = vmul.f32 %v4355, %v2580
      %v4608 = vmul.f32 %v4354, %v2584
      %v4609 = vmul.f32 %v4353, %v2588
      %v4610 = vmul.f32 %v4352, %v2592
      %v4611 = vmul.f32 %v4351, %v2596
      %v4612 = vmul.f32 %v4350, %v2600
      %v4613 = vmul.f32 %v4349, %v2604
      %v4614 = vmul.f32 %v4380, %v2608
      %v4615 = vld [vmem:[%s11 + $0x5] sm:$0x1]
      %v4616 = vlaneseq
      %v4617 = vshrl.u32 %v4616, 7
      %v4618 = vsub.s32 0, %v4617
      %v4619 = vrot.slane %v4615, %v4618
      %v4620 = vmul.f32 %v4583, %v4619
      %v4621 = vmul.f32 %v4584, %v4619
      %v4622 = vmul.f32 %v4585, %v4619
      %v4623 = vmul.f32 %v4586, %v4619
      %v4624 = vmul.f32 %v4587, %v4619
      %v4625 = vmul.f32 %v4588, %v4619
      %v4626 = vmul.f32 %v4589, %v4619
      %v4627 = vmul.f32 %v4590, %v4619
      %v4628 = vmul.f32 %v4591, %v4619
      %v4629 = vmul.f32 %v4592, %v4619
      %v4630 = vmul.f32 %v4593, %v4619
      %v4631 = vmul.f32 %v4594, %v4619
      %v4632 = vmul.f32 %v4595, %v4619
      %v4633 = vmul.f32 %v4596, %v4619
      %v4634 = vmul.f32 %v4597, %v4619
      %v4635 = vmul.f32 %v4598, %v4619
      %v4636 = vmul.f32 %v4599, %v4619
      %v4637 = vmul.f32 %v4600, %v4619
      %v4638 = vmul.f32 %v4601, %v4619
      %v4639 = vmul.f32 %v4602, %v4619
      %v4640 = vmul.f32 %v4603, %v4619
      %v4641 = vmul.f32 %v4604, %v4619
      %v4642 = vmul.f32 %v4605, %v4619
      %v4643 = vmul.f32 %v4606, %v4619
      %v4644 = vmul.f32 %v4607, %v4619
      %v4645 = vmul.f32 %v4608, %v4619
      %v4646 = vmul.f32 %v4609, %v4619
      %v4647 = vmul.f32 %v4610, %v4619
      %v4648 = vmul.f32 %v4611, %v4619
      %v4649 = vmul.f32 %v4612, %v4619
      %v4650 = vmul.f32 %v4613, %v4619
      %v4651 = vmul.f32 %v4614, %v4619
      %v4652 = vadd.f32 %v4551, %v4620
      %v4653 = vadd.f32 %v4552, %v4621
      %v4654 = vadd.f32 %v4553, %v4622
      %v4655 = vadd.f32 %v4554, %v4623
      %v4656 = vadd.f32 %v4555, %v4624
      %v4657 = vadd.f32 %v4556, %v4625
      %v4658 = vadd.f32 %v4557, %v4626
      %v4659 = vadd.f32 %v4558, %v4627
      %v4660 = vadd.f32 %v4559, %v4628
      %v4661 = vadd.f32 %v4560, %v4629
      %v4662 = vadd.f32 %v4561, %v4630
      %v4663 = vadd.f32 %v4562, %v4631
      %v4664 = vadd.f32 %v4563, %v4632
      %v4665 = vadd.f32 %v4564, %v4633
      %v4666 = vadd.f32 %v4565, %v4634
      %v4667 = vadd.f32 %v4566, %v4635
      %v4668 = vadd.f32 %v4567, %v4636
      %v4669 = vadd.f32 %v4568, %v4637
      %v4670 = vadd.f32 %v4569, %v4638
      %v4671 = vadd.f32 %v4570, %v4639
      %v4672 = vadd.f32 %v4571, %v4640
      %v4673 = vadd.f32 %v4572, %v4641
      %v4674 = vadd.f32 %v4573, %v4642
      %v4675 = vadd.f32 %v4574, %v4643
      %v4676 = vadd.f32 %v4575, %v4644
      %v4677 = vadd.f32 %v4576, %v4645
      %v4678 = vadd.f32 %v4577, %v4646
      %v4679 = vadd.f32 %v4578, %v4647
      %v4680 = vadd.f32 %v4579, %v4648
      %v4681 = vadd.f32 %v4580, %v4649
      %v4682 = vadd.f32 %v4581, %v4650
      %v4683 = vadd.f32 %v4582, %v4651
      %v4684 = vmul.f32 %v4112, %v2713
      %v4685 = vmul.f32 %v4111, %v2717
      %v4686 = vmul.f32 %v4110, %v2721
      %v4687 = vmul.f32 %v4109, %v2725
      %v4688 = vmul.f32 %v4108, %v2729
      %v4689 = vmul.f32 %v4107, %v2733
      %v4690 = vmul.f32 %v4106, %v2737
      %v4691 = vmul.f32 %v4105, %v2741
      %v4692 = vmul.f32 %v4104, %v2745
      %v4693 = vmul.f32 %v4103, %v2749
      %v4694 = vmul.f32 %v4102, %v2753
      %v4695 = vmul.f32 %v4101, %v2757
      %v4696 = vmul.f32 %v4100, %v2761
      %v4697 = vmul.f32 %v4099, %v2765
      %v4698 = vmul.f32 %v4098, %v2769
      %v4699 = vmul.f32 %v4097, %v2773
      %v4700 = vmul.f32 %v4096, %v2777
      %v4701 = vmul.f32 %v4095, %v2781
      %v4702 = vmul.f32 %v4094, %v2785
      %v4703 = vmul.f32 %v4093, %v2789
      %v4704 = vmul.f32 %v4092, %v2793
      %v4705 = vmul.f32 %v4091, %v2797
      %v4706 = vmul.f32 %v4090, %v2801
      %v4707 = vmul.f32 %v4089, %v2805
      %v4708 = vmul.f32 %v4088, %v2809
      %v4709 = vmul.f32 %v4087, %v2813
      %v4710 = vmul.f32 %v4086, %v2817
      %v4711 = vmul.f32 %v4085, %v2821
      %v4712 = vmul.f32 %v4084, %v2825
      %v4713 = vmul.f32 %v4083, %v2829
      %v4714 = vmul.f32 %v4114, %v2833
      %v4715 = vmul.f32 %v4113, %v2837
      %v4716 = vld [vmem:[%s11 + $0x6] sm:$0x1]
      %v4717 = vlaneseq
      %v4718 = vshrl.u32 %v4717, 7
      %v4719 = vsub.s32 0, %v4718
      %v4720 = vrot.slane %v4716, %v4719
      %v4721 = vmul.f32 %v4684, %v4720
      %v4722 = vmul.f32 %v4685, %v4720
      %v4723 = vmul.f32 %v4686, %v4720
      %v4724 = vmul.f32 %v4687, %v4720
      %v4725 = vmul.f32 %v4688, %v4720
      %v4726 = vmul.f32 %v4689, %v4720
      %v4727 = vmul.f32 %v4690, %v4720
      %v4728 = vmul.f32 %v4691, %v4720
      %v4729 = vmul.f32 %v4692, %v4720
      %v4730 = vmul.f32 %v4693, %v4720
      %v4731 = vmul.f32 %v4694, %v4720
      %v4732 = vmul.f32 %v4695, %v4720
      %v4733 = vmul.f32 %v4696, %v4720
      %v4734 = vmul.f32 %v4697, %v4720
      %v4735 = vmul.f32 %v4698, %v4720
      %v4736 = vmul.f32 %v4699, %v4720
      %v4737 = vmul.f32 %v4700, %v4720
      %v4738 = vmul.f32 %v4701, %v4720
      %v4739 = vmul.f32 %v4702, %v4720
      %v4740 = vmul.f32 %v4703, %v4720
      %v4741 = vmul.f32 %v4704, %v4720
      %v4742 = vmul.f32 %v4705, %v4720
      %v4743 = vmul.f32 %v4706, %v4720
      %v4744 = vmul.f32 %v4707, %v4720
      %v4745 = vmul.f32 %v4708, %v4720
      %v4746 = vmul.f32 %v4709, %v4720
      %v4747 = vmul.f32 %v4710, %v4720
      %v4748 = vmul.f32 %v4711, %v4720
      %v4749 = vmul.f32 %v4712, %v4720
      %v4750 = vmul.f32 %v4713, %v4720
      %v4751 = vmul.f32 %v4714, %v4720
      %v4752 = vmul.f32 %v4715, %v4720
      %v4753 = vadd.f32 %v4652, %v4721
      %v4754 = vadd.f32 %v4653, %v4722
      %v4755 = vadd.f32 %v4654, %v4723
      %v4756 = vadd.f32 %v4655, %v4724
      %v4757 = vadd.f32 %v4656, %v4725
      %v4758 = vadd.f32 %v4657, %v4726
      %v4759 = vadd.f32 %v4658, %v4727
      %v4760 = vadd.f32 %v4659, %v4728
      %v4761 = vadd.f32 %v4660, %v4729
      %v4762 = vadd.f32 %v4661, %v4730
      %v4763 = vadd.f32 %v4662, %v4731
      %v4764 = vadd.f32 %v4663, %v4732
      %v4765 = vadd.f32 %v4664, %v4733
      %v4766 = vadd.f32 %v4665, %v4734
      %v4767 = vadd.f32 %v4666, %v4735
      %v4768 = vadd.f32 %v4667, %v4736
      %v4769 = vadd.f32 %v4668, %v4737
      %v4770 = vadd.f32 %v4669, %v4738
      %v4771 = vadd.f32 %v4670, %v4739
      %v4772 = vadd.f32 %v4671, %v4740
      %v4773 = vadd.f32 %v4672, %v4741
      %v4774 = vadd.f32 %v4673, %v4742
      %v4775 = vadd.f32 %v4674, %v4743
      %v4776 = vadd.f32 %v4675, %v4744
      %v4777 = vadd.f32 %v4676, %v4745
      %v4778 = vadd.f32 %v4677, %v4746
      %v4779 = vadd.f32 %v4678, %v4747
      %v4780 = vadd.f32 %v4679, %v4748
      %v4781 = vadd.f32 %v4680, %v4749
      %v4782 = vadd.f32 %v4681, %v4750
      %v4783 = vadd.f32 %v4682, %v4751
      %v4784 = vadd.f32 %v4683, %v4752
      %v4785 = vmul.f32 %v3984, %v2942
      %v4786 = vmul.f32 %v3985, %v2946
      %v4787 = vmul.f32 %v3986, %v2950
      %v4788 = vmul.f32 %v3987, %v2954
      %v4789 = vmul.f32 %v3988, %v2958
      %v4790 = vmul.f32 %v3989, %v2962
      %v4791 = vmul.f32 %v3990, %v2966
      %v4792 = vmul.f32 %v3991, %v2970
      %v4793 = vmul.f32 %v3992, %v2974
      %v4794 = vmul.f32 %v3993, %v2978
      %v4795 = vmul.f32 %v3994, %v2982
      %v4796 = vmul.f32 %v3995, %v2986
      %v4797 = vmul.f32 %v3996, %v2990
      %v4798 = vmul.f32 %v3997, %v2994
      %v4799 = vmul.f32 %v3998, %v2998
      %v4800 = vmul.f32 %v3999, %v3002
      %v4801 = vmul.f32 %v4000, %v3006
      %v4802 = vmul.f32 %v4001, %v3010
      %v4803 = vmul.f32 %v4002, %v3014
      %v4804 = vmul.f32 %v4003, %v3018
      %v4805 = vmul.f32 %v4004, %v3022
      %v4806 = vmul.f32 %v4005, %v3026
      %v4807 = vmul.f32 %v4006, %v3030
      %v4808 = vmul.f32 %v4007, %v3034
      %v4809 = vmul.f32 %v4008, %v3038
      %v4810 = vmul.f32 %v4009, %v3042
      %v4811 = vmul.f32 %v4010, %v3046
      %v4812 = vmul.f32 %v4011, %v3050
      %v4813 = vmul.f32 %v4012, %v3054
      %v4814 = vmul.f32 %v4013, %v3058
      %v4815 = vmul.f32 %v3982, %v3062
      %v4816 = vmul.f32 %v3983, %v3066
      %v4817 = vld [vmem:[%s11 + $0x7] sm:$0x1]
      %v4818 = vlaneseq
      %v4819 = vshrl.u32 %v4818, 7
      %v4820 = vsub.s32 0, %v4819
      %v4821 = vrot.slane %v4817, %v4820
      %v4822 = vmul.f32 %v4785, %v4821
      %v4823 = vmul.f32 %v4786, %v4821
      %v4824 = vmul.f32 %v4787, %v4821
      %v4825 = vmul.f32 %v4788, %v4821
      %v4826 = vmul.f32 %v4789, %v4821
      %v4827 = vmul.f32 %v4790, %v4821
      %v4828 = vmul.f32 %v4791, %v4821
      %v4829 = vmul.f32 %v4792, %v4821
      %v4830 = vmul.f32 %v4793, %v4821
      %v4831 = vmul.f32 %v4794, %v4821
      %v4832 = vmul.f32 %v4795, %v4821
      %v4833 = vmul.f32 %v4796, %v4821
      %v4834 = vmul.f32 %v4797, %v4821
      %v4835 = vmul.f32 %v4798, %v4821
      %v4836 = vmul.f32 %v4799, %v4821
      %v4837 = vmul.f32 %v4800, %v4821
      %v4838 = vmul.f32 %v4801, %v4821
      %v4839 = vmul.f32 %v4802, %v4821
      %v4840 = vmul.f32 %v4803, %v4821
      %v4841 = vmul.f32 %v4804, %v4821
      %v4842 = vmul.f32 %v4805, %v4821
      %v4843 = vmul.f32 %v4806, %v4821
      %v4844 = vmul.f32 %v4807, %v4821
      %v4845 = vmul.f32 %v4808, %v4821
      %v4846 = vmul.f32 %v4809, %v4821
      %v4847 = vmul.f32 %v4810, %v4821
      %v4848 = vmul.f32 %v4811, %v4821
      %v4849 = vmul.f32 %v4812, %v4821
      %v4850 = vmul.f32 %v4813, %v4821
      %v4851 = vmul.f32 %v4814, %v4821
      %v4852 = vmul.f32 %v4815, %v4821
      %v4853 = vmul.f32 %v4816, %v4821
      %v4854 = vadd.f32 %v4753, %v4822
      %v4855 = vadd.f32 %v4754, %v4823
      %v4856 = vadd.f32 %v4755, %v4824
      %v4857 = vadd.f32 %v4756, %v4825
      %v4858 = vadd.f32 %v4757, %v4826
      %v4859 = vadd.f32 %v4758, %v4827
      %v4860 = vadd.f32 %v4759, %v4828
      %v4861 = vadd.f32 %v4760, %v4829
      %v4862 = vadd.f32 %v4761, %v4830
      %v4863 = vadd.f32 %v4762, %v4831
      %v4864 = vadd.f32 %v4763, %v4832
      %v4865 = vadd.f32 %v4764, %v4833
      %v4866 = vadd.f32 %v4765, %v4834
      %v4867 = vadd.f32 %v4766, %v4835
      %v4868 = vadd.f32 %v4767, %v4836
      %v4869 = vadd.f32 %v4768, %v4837
      %v4870 = vadd.f32 %v4769, %v4838
      %v4871 = vadd.f32 %v4770, %v4839
      %v4872 = vadd.f32 %v4771, %v4840
      %v4873 = vadd.f32 %v4772, %v4841
      %v4874 = vadd.f32 %v4773, %v4842
      %v4875 = vadd.f32 %v4774, %v4843
      %v4876 = vadd.f32 %v4775, %v4844
      %v4877 = vadd.f32 %v4776, %v4845
      %v4878 = vadd.f32 %v4777, %v4846
      %v4879 = vadd.f32 %v4778, %v4847
      %v4880 = vadd.f32 %v4779, %v4848
      %v4881 = vadd.f32 %v4780, %v4849
      %v4882 = vadd.f32 %v4781, %v4850
      %v4883 = vadd.f32 %v4782, %v4851
      %v4884 = vadd.f32 %v4783, %v4852
      %v4885 = vadd.f32 %v4784, %v4853
      %v4886 = vmul.f32 %v4377, %v3171
      %v4887 = vmul.f32 %v4376, %v3175
      %v4888 = vmul.f32 %v4375, %v3179
      %v4889 = vmul.f32 %v4374, %v3183
      %v4890 = vmul.f32 %v4373, %v3187
      %v4891 = vmul.f32 %v4372, %v3191
      %v4892 = vmul.f32 %v4371, %v3195
      %v4893 = vmul.f32 %v4370, %v3199
      %v4894 = vmul.f32 %v4369, %v3203
      %v4895 = vmul.f32 %v4368, %v3207
      %v4896 = vmul.f32 %v4367, %v3211
      %v4897 = vmul.f32 %v4366, %v3215
      %v4898 = vmul.f32 %v4365, %v3219
      %v4899 = vmul.f32 %v4364, %v3223
      %v4900 = vmul.f32 %v4363, %v3227
      %v4901 = vmul.f32 %v4362, %v3231
      %v4902 = vmul.f32 %v4361, %v3235
      %v4903 = vmul.f32 %v4360, %v3239
      %v4904 = vmul.f32 %v4359, %v3243
      %v4905 = vmul.f32 %v4358, %v3247
      %v4906 = vmul.f32 %v4357, %v3251
      %v4907 = vmul.f32 %v4356, %v3255
      %v4908 = vmul.f32 %v4355, %v3259
      %v4909 = vmul.f32 %v4354, %v3263
      %v4910 = vmul.f32 %v4353, %v3267
      %v4911 = vmul.f32 %v4352, %v3271
      %v4912 = vmul.f32 %v4351, %v3275
      %v4913 = vmul.f32 %v4350, %v3279
      %v4914 = vmul.f32 %v4349, %v3283
      %v4915 = vmul.f32 %v4380, %v3287
      %v4916 = vmul.f32 %v4379, %v3291
      %v4917 = vmul.f32 %v4378, %v3295
      %v4918 = vld [vmem:[%s11 + $0x8] sm:$0x1]
      %v4919 = vlaneseq
      %v4920 = vshrl.u32 %v4919, 7
      %v4921 = vsub.s32 0, %v4920
      %v4922 = vrot.slane %v4918, %v4921
      %v4923 = vmul.f32 %v4886, %v4922
      %v4924 = vmul.f32 %v4887, %v4922
      %v4925 = vmul.f32 %v4888, %v4922
      %v4926 = vmul.f32 %v4889, %v4922
      %v4927 = vmul.f32 %v4890, %v4922
      %v4928 = vmul.f32 %v4891, %v4922
      %v4929 = vmul.f32 %v4892, %v4922
      %v4930 = vmul.f32 %v4893, %v4922
      %v4931 = vmul.f32 %v4894, %v4922
      %v4932 = vmul.f32 %v4895, %v4922
      %v4933 = vmul.f32 %v4896, %v4922
      %v4934 = vmul.f32 %v4897, %v4922
      %v4935 = vmul.f32 %v4898, %v4922
      %v4936 = vmul.f32 %v4899, %v4922
      %v4937 = vmul.f32 %v4900, %v4922
      %v4938 = vmul.f32 %v4901, %v4922
      %v4939 = vmul.f32 %v4902, %v4922
      %v4940 = vmul.f32 %v4903, %v4922
      %v4941 = vmul.f32 %v4904, %v4922
      %v4942 = vmul.f32 %v4905, %v4922
      %v4943 = vmul.f32 %v4906, %v4922
      %v4944 = vmul.f32 %v4907, %v4922
      %v4945 = vmul.f32 %v4908, %v4922
      %v4946 = vmul.f32 %v4909, %v4922
      %v4947 = vmul.f32 %v4910, %v4922
      %v4948 = vmul.f32 %v4911, %v4922
      %v4949 = vmul.f32 %v4912, %v4922
      %v4950 = vmul.f32 %v4913, %v4922
      %v4951 = vmul.f32 %v4914, %v4922
      %v4952 = vmul.f32 %v4915, %v4922
      %v4953 = vmul.f32 %v4916, %v4922
      %v4954 = vmul.f32 %v4917, %v4922
      %v4955 = vadd.f32 %v4854, %v4923
      %v4956 = vadd.f32 %v4855, %v4924
      %v4957 = vadd.f32 %v4856, %v4925
      %v4958 = vadd.f32 %v4857, %v4926
      %v4959 = vadd.f32 %v4858, %v4927
      %v4960 = vadd.f32 %v4859, %v4928
      %v4961 = vadd.f32 %v4860, %v4929
      %v4962 = vadd.f32 %v4861, %v4930
      %v4963 = vadd.f32 %v4862, %v4931
      %v4964 = vadd.f32 %v4863, %v4932
      %v4965 = vadd.f32 %v4864, %v4933
      %v4966 = vadd.f32 %v4865, %v4934
      %v4967 = vadd.f32 %v4866, %v4935
      %v4968 = vadd.f32 %v4867, %v4936
      %v4969 = vadd.f32 %v4868, %v4937
      %v4970 = vadd.f32 %v4869, %v4938
      %v4971 = vadd.f32 %v4870, %v4939
      %v4972 = vadd.f32 %v4871, %v4940
      %v4973 = vadd.f32 %v4872, %v4941
      %v4974 = vadd.f32 %v4873, %v4942
      %v4975 = vadd.f32 %v4874, %v4943
      %v4976 = vadd.f32 %v4875, %v4944
      %v4977 = vadd.f32 %v4876, %v4945
      %v4978 = vadd.f32 %v4877, %v4946
      %v4979 = vadd.f32 %v4878, %v4947
      %v4980 = vadd.f32 %v4879, %v4948
      %v4981 = vadd.f32 %v4880, %v4949
      %v4982 = vadd.f32 %v4881, %v4950
      %v4983 = vadd.f32 %v4882, %v4951
      %v4984 = vadd.f32 %v4883, %v4952
      %v4985 = vadd.f32 %v4884, %v4953
      %v4986 = vadd.f32 %v4885, %v4954
      %v4987 = vld [vmem:[%s6 + $0x4] sm:$0x1]
      %v4989 = vlaneseq
      %v4990 = vshrl.u32 %v4989, 7
      %v4991 = vsub.s32 0, %v4990
      %v4992 = vrot.slane %v4987, %v4991
      %v4994 = vadd.f32 %v4955, %v4992
      %v4995 = vadd.f32 %v4956, %v4992
      %v4996 = vadd.f32 %v4957, %v4992
      %v4997 = vadd.f32 %v4958, %v4992
      %v4998 = vadd.f32 %v4959, %v4992
      %v4999 = vadd.f32 %v4960, %v4992
      %v5000 = vadd.f32 %v4961, %v4992
      %v5001 = vadd.f32 %v4962, %v4992
      %v5002 = vadd.f32 %v4963, %v4992
      %v5003 = vadd.f32 %v4964, %v4992
      %v5004 = vadd.f32 %v4965, %v4992
      %v5005 = vadd.f32 %v4966, %v4992
      %v5006 = vadd.f32 %v4967, %v4992
      %v5007 = vadd.f32 %v4968, %v4992
      %v5008 = vadd.f32 %v4969, %v4992
      %v5009 = vadd.f32 %v4970, %v4992
      %v5010 = vadd.f32 %v4971, %v4992
      %v5011 = vadd.f32 %v4972, %v4992
      %v5012 = vadd.f32 %v4973, %v4992
      %v5013 = vadd.f32 %v4974, %v4992
      %v5014 = vadd.f32 %v4975, %v4992
      %v5015 = vadd.f32 %v4976, %v4992
      %v5016 = vadd.f32 %v4977, %v4992
      %v5017 = vadd.f32 %v4978, %v4992
      %v5018 = vadd.f32 %v4979, %v4992
      %v5019 = vadd.f32 %v4980, %v4992
      %v5020 = vadd.f32 %v4981, %v4992
      %v5021 = vadd.f32 %v4982, %v4992
      %v5022 = vadd.f32 %v4983, %v4992
      %v5023 = vadd.f32 %v4984, %v4992
      %v5024 = vadd.f32 %v4985, %v4992
      %v5025 = vadd.f32 %v4986, %v4992
      %v5026 = vmax.f32 %v4994, 0.0
      %v5027 = vmax.f32 %v4995, 0.0
      %v5028 = vmax.f32 %v4996, 0.0
      %v5029 = vmax.f32 %v4997, 0.0
      %v5030 = vmax.f32 %v4998, 0.0
      %v5031 = vmax.f32 %v4999, 0.0
      %v5032 = vmax.f32 %v5000, 0.0
      %v5033 = vmax.f32 %v5001, 0.0
      %v5034 = vmax.f32 %v5002, 0.0
      %v5035 = vmax.f32 %v5003, 0.0
      %v5036 = vmax.f32 %v5004, 0.0
      %v5037 = vmax.f32 %v5005, 0.0
      %v5038 = vmax.f32 %v5006, 0.0
      %v5039 = vmax.f32 %v5007, 0.0
      %v5040 = vmax.f32 %v5008, 0.0
      %v5041 = vmax.f32 %v5009, 0.0
      %v5042 = vmax.f32 %v5010, 0.0
      %v5043 = vmax.f32 %v5011, 0.0
      %v5044 = vmax.f32 %v5012, 0.0
      %v5045 = vmax.f32 %v5013, 0.0
      %v5046 = vmax.f32 %v5014, 0.0
      %v5047 = vmax.f32 %v5015, 0.0
      %v5048 = vmax.f32 %v5016, 0.0
      %v5049 = vmax.f32 %v5017, 0.0
      %v5050 = vmax.f32 %v5018, 0.0
      %v5051 = vmax.f32 %v5019, 0.0
      %v5052 = vmax.f32 %v5020, 0.0
      %v5053 = vmax.f32 %v5021, 0.0
      %v5054 = vmax.f32 %v5022, 0.0
      %v5055 = vmax.f32 %v5023, 0.0
      %v5056 = vmax.f32 %v5024, 0.0
      %v5057 = vmax.f32 %v5025, 0.0
      %v5058 = vpack.c.bf16 %v5027, %v5026
      %v5059 = vpack.c.bf16 %v5029, %v5028
      %v5060 = vpack.c.bf16 %v5031, %v5030
      %v5061 = vpack.c.bf16 %v5033, %v5032
      %v5062 = vpack.c.bf16 %v5035, %v5034
      %v5063 = vpack.c.bf16 %v5037, %v5036
      %v5064 = vpack.c.bf16 %v5039, %v5038
      %v5065 = vpack.c.bf16 %v5041, %v5040
      %v5066 = vpack.c.bf16 %v5043, %v5042
      %v5067 = vpack.c.bf16 %v5045, %v5044
      %v5068 = vpack.c.bf16 %v5047, %v5046
      %v5069 = vpack.c.bf16 %v5049, %v5048
      %v5070 = vpack.c.bf16 %v5051, %v5050
      %v5071 = vpack.c.bf16 %v5053, %v5052
      %v5072 = vpack.c.bf16 %v5055, %v5054
      %v5073 = vpack.c.bf16 %v5057, %v5056
      %v5074 = vld [vmem:[%s12] sm:$0xf]
      %v5075 = vld [vmem:[%s12 + $0x4] sm:$0xf]
      %v5076 = vld [vmem:[%s12 + $0x8] sm:$0xf]
      %v5077 = vld [vmem:[%s12 + $0xc] sm:$0xf]
      %v5078 = vld [vmem:[%s12 + $0x10] sm:$0xf]
      %v5079 = vld [vmem:[%s12 + $0x14] sm:$0xf]
      %v5080 = vld [vmem:[%s12 + $0x18] sm:$0xf]
      %v5081 = vld [vmem:[%s12 + $0x1c] sm:$0xf]
      %v5082 = vld [vmem:[%s6 + $0x5] sm:$0x1]
      %v5084 = vlaneseq
      %v5085 = vshrl.u32 %v5084, 7
      %v5086 = vsub.s32 0, %v5085
      %v5087 = vrot.slane %v5082, %v5086
      %v5097 = vunpack.c.l.b16 %v5074
      %v5098 = vunpack.c.l.b16 %v5075
      %v5099 = vunpack.c.l.b16 %v5076
      %v5100 = vunpack.c.l.b16 %v5077
      %v5101 = vunpack.c.l.b16 %v5078
      %v5102 = vunpack.c.l.b16 %v5079
      %v5103 = vunpack.c.l.b16 %v5080
      %v5104 = vunpack.c.l.b16 %v5081
      %v5105 = vpack.c.b16 %v5098, %v5097
      %v5106 = vpack.c.b16 %v5100, %v5099
      %v5107 = vpack.c.b16 %v5102, %v5101
      %v5108 = vpack.c.b16 %v5104, %v5103
      %vm5113 = vcmask 523264
      %v5115 = vsel %vm5113, %v5058, 0
      %v5118 = vsel %vm5113, %v5059, 0
      %v5121 = vsel %vm5113, %v5060, 0
      %v5124 = vsel %vm5113, %v5061, 0
      %v5127 = vsel %vm5113, %v5062, 0
      %v5130 = vsel %vm5113, %v5063, 0
      %v5133 = vsel %vm5113, %v5064, 0
      %v5136 = vsel %vm5113, %v5065, 0
      %v5139 = vsel %vm5113, %v5066, 0
      %v5142 = vsel %vm5113, %v5067, 0
      %v5145 = vsel %vm5113, %v5068, 0
      %v5148 = vsel %vm5113, %v5069, 0
      %v5151 = vsel %vm5113, %v5070, 0
      %v5154 = vsel %vm5113, %v5071, 0
      %v5157 = vsel %vm5113, %v5072, 0
      %v5160 = vsel %vm5113, %v5073, 0
      %5162 = vmatprep.subr.bf16.mxu0 0
      %5163 = vmatpush1.bf16.msra.mxu0 0
      %5164 = vmatprep.subr.bf16.mxu0 0
      %5165 = vmatpush1.bf16.msra.mxu0 0
      %5166 = vmatprep.subr.bf16.mxu0 0
      %5167 = vmatpush1.bf16.msra.mxu0 0
      %5168 = vmatprep.subr.bf16.mxu0 0
      %5169 = vmatpush1.bf16.msra.mxu0 0
      %5170 = vmatprep.subr.bf16.mxu0 0
      %5171 = vmatpush1.bf16.msra.mxu0 %v5108
      %5172 = vmatprep.subr.bf16.mxu0 0
      %5173 = vmatpush1.bf16.msra.mxu0 %v5107
      %5174 = vmatprep.subr.bf16.mxu0 0
      %5175 = vmatpush1.bf16.msra.mxu0 %v5106
      %5176 = vmatprep.subr.bf16.mxu0 0
      %5177 = vmatpush1.bf16.msra.mxu0 %v5105
      %5178 = vmatprep.subr.bf16.mxu0 0
      %5179 = vmatpush2.bf16.msra.mxu0 0
      %5180 = vmatprep.subr.bf16.mxu0 0
      %5181 = vmatpush2.bf16.msra.mxu0 0
      %5182 = vmatprep.subr.bf16.mxu0 0
      %5183 = vmatpush2.bf16.msra.mxu0 0
      %5184 = vmatprep.subr.bf16.mxu0 0
      %5185 = vmatpush2.bf16.msra.mxu0 0
      %5186 = vmatprep.subr.bf16.mxu0 0
      %5187 = vmatpush2.bf16.msra.mxu0 0
      %5188 = vmatprep.subr.bf16.mxu0 0
      %5189 = vmatpush2.bf16.msra.mxu0 0
      %5190 = vmatprep.subr.bf16.mxu0 0
      %5191 = vmatpush2.bf16.msra.mxu0 0
      %5192 = vmatprep.subr.bf16.mxu0 0
      %5193 = vmatpush2.bf16.msra.mxu0 0
      %5194 = vmatprep.mubr.bf16.mxu0 0
      %5195 = vmatmul.mubr.bf16.gmra.mxu0 %v5115
      %v5196 = vpop.f32.mrf.mxu0
      %v5197 = vadd.f32 %v5087, %v5196
      %v5198 = vpop.f32.mrf.mxu0
      %v5199 = vpop.f32.mrf.mxu0
      %v5200 = vadd.f32 %v5087, %v5199
      %v5201 = vpop.f32.mrf.mxu0
      %5202 = vmatprep.mubr.bf16.mxu0 0
      %5203 = vmatmul.mubr.bf16.gmra.mxu0 %v5118
      %v5204 = vpop.f32.mrf.mxu0
      %v5205 = vadd.f32 %v5087, %v5204
      %v5206 = vpop.f32.mrf.mxu0
      %v5207 = vpop.f32.mrf.mxu0
      %v5208 = vadd.f32 %v5087, %v5207
      %v5209 = vpop.f32.mrf.mxu0
      %5210 = vmatprep.mubr.bf16.mxu0 0
      %5211 = vmatmul.mubr.bf16.gmra.mxu0 %v5121
      %v5212 = vpop.f32.mrf.mxu0
      %v5213 = vadd.f32 %v5087, %v5212
      %v5214 = vpop.f32.mrf.mxu0
      %v5215 = vpop.f32.mrf.mxu0
      %v5216 = vadd.f32 %v5087, %v5215
      %v5217 = vpop.f32.mrf.mxu0
      %5218 = vmatprep.mubr.bf16.mxu0 0
      %5219 = vmatmul.mubr.bf16.gmra.mxu0 %v5124
      %v5220 = vpop.f32.mrf.mxu0
      %v5221 = vadd.f32 %v5087, %v5220
      %v5222 = vpop.f32.mrf.mxu0
      %v5223 = vpop.f32.mrf.mxu0
      %v5224 = vadd.f32 %v5087, %v5223
      %v5225 = vpop.f32.mrf.mxu0
      %5226 = vmatprep.mubr.bf16.mxu0 0
      %5227 = vmatmul.mubr.bf16.gmra.mxu0 %v5127
      %v5228 = vpop.f32.mrf.mxu0
      %v5229 = vadd.f32 %v5087, %v5228
      %v5230 = vpop.f32.mrf.mxu0
      %v5231 = vpop.f32.mrf.mxu0
      %v5232 = vadd.f32 %v5087, %v5231
      %v5233 = vpop.f32.mrf.mxu0
      %5234 = vmatprep.mubr.bf16.mxu0 0
      %5235 = vmatmul.mubr.bf16.gmra.mxu0 %v5130
      %v5236 = vpop.f32.mrf.mxu0
      %v5237 = vadd.f32 %v5087, %v5236
      %v5238 = vpop.f32.mrf.mxu0
      %v5239 = vpop.f32.mrf.mxu0
      %v5240 = vadd.f32 %v5087, %v5239
      %v5241 = vpop.f32.mrf.mxu0
      %5242 = vmatprep.mubr.bf16.mxu0 0
      %5243 = vmatmul.mubr.bf16.gmra.mxu0 %v5133
      %v5244 = vpop.f32.mrf.mxu0
      %v5245 = vadd.f32 %v5087, %v5244
      %v5246 = vpop.f32.mrf.mxu0
      %v5247 = vpop.f32.mrf.mxu0
      %v5248 = vadd.f32 %v5087, %v5247
      %v5249 = vpop.f32.mrf.mxu0
      %5250 = vmatprep.mubr.bf16.mxu0 0
      %5251 = vmatmul.mubr.bf16.gmra.mxu0 %v5136
      %v5252 = vpop.f32.mrf.mxu0
      %v5253 = vadd.f32 %v5087, %v5252
      %v5254 = vpop.f32.mrf.mxu0
      %v5255 = vpop.f32.mrf.mxu0
      %v5256 = vadd.f32 %v5087, %v5255
      %v5257 = vpop.f32.mrf.mxu0
      %5258 = vmatprep.mubr.bf16.mxu0 0
      %5259 = vmatmul.mubr.bf16.gmra.mxu0 %v5139
      %v5260 = vpop.f32.mrf.mxu0
      %v5261 = vadd.f32 %v5087, %v5260
      %v5262 = vpop.f32.mrf.mxu0
      %v5263 = vpop.f32.mrf.mxu0
      %v5264 = vadd.f32 %v5087, %v5263
      %v5265 = vpop.f32.mrf.mxu0
      %5266 = vmatprep.mubr.bf16.mxu0 0
      %5267 = vmatmul.mubr.bf16.gmra.mxu0 %v5142
      %v5268 = vpop.f32.mrf.mxu0
      %v5269 = vadd.f32 %v5087, %v5268
      %v5270 = vpop.f32.mrf.mxu0
      %v5271 = vpop.f32.mrf.mxu0
      %v5272 = vadd.f32 %v5087, %v5271
      %v5273 = vpop.f32.mrf.mxu0
      %5274 = vmatprep.mubr.bf16.mxu0 0
      %5275 = vmatmul.mubr.bf16.gmra.mxu0 %v5145
      %v5276 = vpop.f32.mrf.mxu0
      %v5277 = vadd.f32 %v5087, %v5276
      %v5278 = vpop.f32.mrf.mxu0
      %v5279 = vpop.f32.mrf.mxu0
      %v5280 = vadd.f32 %v5087, %v5279
      %v5281 = vpop.f32.mrf.mxu0
      %5282 = vmatprep.mubr.bf16.mxu0 0
      %5283 = vmatmul.mubr.bf16.gmra.mxu0 %v5148
      %v5284 = vpop.f32.mrf.mxu0
      %v5285 = vadd.f32 %v5087, %v5284
      %v5286 = vpop.f32.mrf.mxu0
      %v5287 = vpop.f32.mrf.mxu0
      %v5288 = vadd.f32 %v5087, %v5287
      %v5289 = vpop.f32.mrf.mxu0
      %5290 = vmatprep.mubr.bf16.mxu0 0
      %5291 = vmatmul.mubr.bf16.gmra.mxu0 %v5151
      %v5292 = vpop.f32.mrf.mxu0
      %v5293 = vadd.f32 %v5087, %v5292
      %v5294 = vpop.f32.mrf.mxu0
      %v5295 = vpop.f32.mrf.mxu0
      %v5296 = vadd.f32 %v5087, %v5295
      %v5297 = vpop.f32.mrf.mxu0
      %5298 = vmatprep.mubr.bf16.mxu0 0
      %5299 = vmatmul.mubr.bf16.gmra.mxu0 %v5154
      %v5300 = vpop.f32.mrf.mxu0
      %v5301 = vadd.f32 %v5087, %v5300
      %v5302 = vpop.f32.mrf.mxu0
      %v5303 = vpop.f32.mrf.mxu0
      %v5304 = vadd.f32 %v5087, %v5303
      %v5305 = vpop.f32.mrf.mxu0
      %5306 = vmatprep.mubr.bf16.mxu0 0
      %5307 = vmatmul.mubr.bf16.gmra.mxu0 %v5157
      %v5308 = vpop.f32.mrf.mxu0
      %v5309 = vadd.f32 %v5087, %v5308
      %v5310 = vpop.f32.mrf.mxu0
      %v5311 = vpop.f32.mrf.mxu0
      %v5312 = vadd.f32 %v5087, %v5311
      %v5313 = vpop.f32.mrf.mxu0
      %5314 = vmatprep.mubr.bf16.mxu0 0
      %5315 = vmatmul.mubr.bf16.gmra.mxu0 %v5160
      %v5316 = vpop.f32.mrf.mxu0
      %v5317 = vadd.f32 %v5087, %v5316
      %v5318 = vpop.f32.mrf.mxu0
      %v5319 = vpop.f32.mrf.mxu0
      %v5320 = vadd.f32 %v5087, %v5319
      %v5321 = vpop.f32.mrf.mxu0
      %5322 = vdwg.mxu0
      %v5323 = vld [vmem:[%s4] sm:$0xff]
      %v5324 = vld [vmem:[%s4 + $0x8] sm:$0xff]
      %v5325 = vld [vmem:[%s4 + $0x10] sm:$0xff]
      %v5326 = vld [vmem:[%s4 + $0x18] sm:$0xff]
      %v5327 = vld [vmem:[%s4 + $0x20] sm:$0xff]
      %v5328 = vld [vmem:[%s4 + $0x28] sm:$0xff]
      %v5329 = vld [vmem:[%s4 + $0x30] sm:$0xff]
      %v5330 = vld [vmem:[%s4 + $0x38] sm:$0xff]
      %v5331 = vpack.c.bf16 %v5200, %v5197
      %v5332 = vpack.c.bf16 %v5208, %v5205
      %v5333 = vpack.c.bf16 %v5216, %v5213
      %v5334 = vpack.c.bf16 %v5224, %v5221
      %v5335 = vpack.c.bf16 %v5232, %v5229
      %v5336 = vpack.c.bf16 %v5240, %v5237
      %v5337 = vpack.c.bf16 %v5248, %v5245
      %v5338 = vpack.c.bf16 %v5256, %v5253
      %v5339 = vpack.c.bf16 %v5264, %v5261
      %v5340 = vpack.c.bf16 %v5272, %v5269
      %v5341 = vpack.c.bf16 %v5280, %v5277
      %v5342 = vpack.c.bf16 %v5288, %v5285
      %v5343 = vpack.c.bf16 %v5296, %v5293
      %v5344 = vpack.c.bf16 %v5304, %v5301
      %v5345 = vpack.c.bf16 %v5312, %v5309
      %v5346 = vpack.c.bf16 %v5320, %v5317
      %v5355 = vunpack.c.l.b16 %v5323
      %v5356 = vunpack.c.h.b16 %v5323
      %v5357 = vunpack.c.l.b16 %v5324
      %v5358 = vunpack.c.h.b16 %v5324
      %v5359 = vunpack.c.l.b16 %v5325
      %v5360 = vunpack.c.h.b16 %v5325
      %v5361 = vunpack.c.l.b16 %v5326
      %v5362 = vunpack.c.h.b16 %v5326
      %v5363 = vunpack.c.l.b16 %v5327
      %v5364 = vunpack.c.h.b16 %v5327
      %v5365 = vunpack.c.l.b16 %v5328
      %v5366 = vunpack.c.h.b16 %v5328
      %v5367 = vunpack.c.l.b16 %v5329
      %v5368 = vunpack.c.h.b16 %v5329
      %v5369 = vunpack.c.l.b16 %v5330
      %v5370 = vunpack.c.h.b16 %v5330
      %v5371 = vpack.c.b16 %v5357, %v5355
      %v5372 = vpack.c.b16 %v5358, %v5356
      %v5373 = vpack.c.b16 %v5361, %v5359
      %v5374 = vpack.c.b16 %v5362, %v5360
      %v5375 = vpack.c.b16 %v5365, %v5363
      %v5376 = vpack.c.b16 %v5366, %v5364
      %v5377 = vpack.c.b16 %v5369, %v5367
      %v5378 = vpack.c.b16 %v5370, %v5368
      %5387 = vmatprep.subr.bf16.mxu0 0
      %5388 = vmatpush1.bf16.msra.mxu0 %v5338
      %5389 = vmatprep.subr.bf16.mxu0 0
      %5390 = vmatpush1.bf16.msra.mxu0 %v5337
      %5391 = vmatprep.subr.bf16.mxu0 0
      %5392 = vmatpush1.bf16.msra.mxu0 %v5336
      %5393 = vmatprep.subr.bf16.mxu0 0
      %5394 = vmatpush1.bf16.msra.mxu0 %v5335
      %5395 = vmatprep.subr.bf16.mxu0 0
      %5396 = vmatpush1.bf16.msra.mxu0 %v5334
      %5397 = vmatprep.subr.bf16.mxu0 0
      %5398 = vmatpush1.bf16.msra.mxu0 %v5333
      %5399 = vmatprep.subr.bf16.mxu0 0
      %5400 = vmatpush1.bf16.msra.mxu0 %v5332
      %5401 = vmatprep.subr.bf16.mxu0 0
      %5402 = vmatpush1.bf16.msra.mxu0 %v5331
      %5403 = vmatprep.subr.bf16.mxu0 0
      %5404 = vmatpush2.bf16.msra.mxu0 %v5346
      %5405 = vmatprep.subr.bf16.mxu0 0
      %5406 = vmatpush2.bf16.msra.mxu0 %v5345
      %5407 = vmatprep.subr.bf16.mxu0 0
      %5408 = vmatpush2.bf16.msra.mxu0 %v5344
      %5409 = vmatprep.subr.bf16.mxu0 0
      %5410 = vmatpush2.bf16.msra.mxu0 %v5343
      %5411 = vmatprep.subr.bf16.mxu0 0
      %5412 = vmatpush2.bf16.msra.mxu0 %v5342
      %5413 = vmatprep.subr.bf16.mxu0 0
      %5414 = vmatpush2.bf16.msra.mxu0 %v5341
      %5415 = vmatprep.subr.bf16.mxu0 0
      %5416 = vmatpush2.bf16.msra.mxu0 %v5340
      %5417 = vmatprep.subr.bf16.mxu0 0
      %5418 = vmatpush2.bf16.msra.mxu0 %v5339
      %5419 = vmatprep.mubr.bf16.mxu0 %v5372
      %5420 = vmatmul.mubr.bf16.gmra.mxu0 %v5371
      %v5421 = vpop.f32.mrf.mxu0
      %v5422 = vadd.f32 0.0, %v5421
      %v5423 = vpop.f32.mrf.mxu0
      %v5424 = vpop.f32.mrf.mxu0
      %v5425 = vadd.f32 0.0, %v5424
      %v5426 = vpop.f32.mrf.mxu0
      %5427 = vmatprep.mubr.bf16.mxu0 %v5374
      %5428 = vmatmul.mubr.bf16.gmra.mxu0 %v5373
      %v5429 = vpop.f32.mrf.mxu0
      %v5430 = vadd.f32 0.0, %v5429
      %v5431 = vpop.f32.mrf.mxu0
      %v5432 = vpop.f32.mrf.mxu0
      %v5433 = vadd.f32 0.0, %v5432
      %v5434 = vpop.f32.mrf.mxu0
      %5435 = vmatprep.mubr.bf16.mxu0 %v5376
      %5436 = vmatmul.mubr.bf16.gmra.mxu0 %v5375
      %v5437 = vpop.f32.mrf.mxu0
      %v5438 = vadd.f32 0.0, %v5437
      %v5439 = vpop.f32.mrf.mxu0
      %v5440 = vpop.f32.mrf.mxu0
      %v5441 = vadd.f32 0.0, %v5440
      %v5442 = vpop.f32.mrf.mxu0
      %5443 = vmatprep.mubr.bf16.mxu0 %v5378
      %5444 = vmatmul.mubr.bf16.gmra.mxu0 %v5377
      %v5445 = vpop.f32.mrf.mxu0
      %v5446 = vadd.f32 0.0, %v5445
      %v5447 = vpop.f32.mrf.mxu0
      %v5448 = vpop.f32.mrf.mxu0
      %v5449 = vadd.f32 0.0, %v5448
      %v5450 = vpop.f32.mrf.mxu0
      %5451 = vdwg.mxu0
      %v5452 = vpack.c.bf16 %v5425, %v5422
      %v5453 = vpack.c.bf16 %v5433, %v5430
      %v5454 = vpack.c.bf16 %v5441, %v5438
      %v5455 = vpack.c.bf16 %v5449, %v5446
      %v5456 = vld [vmem:[%s13] sm:$0xf]
      %v5457 = vld [vmem:[%s13 + $0x4] sm:$0xf]
      %v5458 = vld [vmem:[%s13 + $0x8] sm:$0xf]
      %v5459 = vld [vmem:[%s6 + $0x6] sm:$0x1]
      %v5461 = vlaneseq
      %v5462 = vshrl.u32 %v5461, 7
      %v5463 = vsub.s32 0, %v5462
      %v5464 = vrot.slane %v5459, %v5463
      %v5469 = vunpack.c.l.b16 %v5456
      %v5470 = vunpack.c.l.b16 %v5457
      %v5471 = vunpack.c.l.b16 %v5458
      %v5472 = vpack.c.b16 %v5470, %v5469
      %v5473 = vpack.c.b16 %v5471, %v5471
      %vm5475 = vcmask 195584
      %v5477 = vsel %vm5475, %v5452, 0
      %v5480 = vsel %vm5475, %v5453, 0
      %v5483 = vsel %vm5475, %v5454, 0
      %v5486 = vsel %vm5475, %v5455, 0
      %vm5488 = vcmask 1043456
      %v5490 = vsel %vm5488, %v5473, 0
      %5492 = vmatprep.subr.bf16.mxu0 0
      %5493 = vmatpush1.bf16.msra.mxu0 0
      %5494 = vmatprep.subr.bf16.mxu0 0
      %5495 = vmatpush1.bf16.msra.mxu0 0
      %5496 = vmatprep.subr.bf16.mxu0 0
      %5497 = vmatpush1.bf16.msra.mxu0 0
      %5498 = vmatprep.subr.bf16.mxu0 0
      %5499 = vmatpush1.bf16.msra.mxu0 0
      %5500 = vmatprep.subr.bf16.mxu0 0
      %5501 = vmatpush1.bf16.msra.mxu0 0
      %5502 = vmatprep.subr.bf16.mxu0 0
      %5503 = vmatpush1.bf16.msra.mxu0 0
      %5504 = vmatprep.subr.bf16.mxu0 0
      %5505 = vmatpush1.bf16.msra.mxu0 %v5490
      %5506 = vmatprep.subr.bf16.mxu0 0
      %5507 = vmatpush1.bf16.msra.mxu0 %v5472
      %5508 = vmatprep.subr.bf16.mxu0 0
      %5509 = vmatpush2.bf16.msra.mxu0 0
      %5510 = vmatprep.subr.bf16.mxu0 0
      %5511 = vmatpush2.bf16.msra.mxu0 0
      %5512 = vmatprep.subr.bf16.mxu0 0
      %5513 = vmatpush2.bf16.msra.mxu0 0
      %5514 = vmatprep.subr.bf16.mxu0 0
      %5515 = vmatpush2.bf16.msra.mxu0 0
      %5516 = vmatprep.subr.bf16.mxu0 0
      %5517 = vmatpush2.bf16.msra.mxu0 0
      %5518 = vmatprep.subr.bf16.mxu0 0
      %5519 = vmatpush2.bf16.msra.mxu0 0
      %5520 = vmatprep.subr.bf16.mxu0 0
      %5521 = vmatpush2.bf16.msra.mxu0 0
      %5522 = vmatprep.subr.bf16.mxu0 0
      %5523 = vmatpush2.bf16.msra.mxu0 0
      %5524 = vmatprep.mubr.bf16.mxu0 0
      %5525 = vmatmul.mubr.bf16.gmra.mxu0 %v5477
      %v5526 = vpop.f32.mrf.mxu0
      %v5527 = vadd.f32 %v5464, %v5526
      %v5528 = vpop.f32.mrf.mxu0
      %v5529 = vpop.f32.mrf.mxu0
      %v5530 = vadd.f32 %v5464, %v5529
      %v5531 = vpop.f32.mrf.mxu0
      %5532 = vmatprep.mubr.bf16.mxu0 0
      %5533 = vmatmul.mubr.bf16.gmra.mxu0 %v5480
      %v5534 = vpop.f32.mrf.mxu0
      %v5535 = vadd.f32 %v5464, %v5534
      %v5536 = vpop.f32.mrf.mxu0
      %v5537 = vpop.f32.mrf.mxu0
      %v5538 = vadd.f32 %v5464, %v5537
      %v5539 = vpop.f32.mrf.mxu0
      %5540 = vmatprep.mubr.bf16.mxu0 0
      %5541 = vmatmul.mubr.bf16.gmra.mxu0 %v5483
      %v5542 = vpop.f32.mrf.mxu0
      %v5543 = vadd.f32 %v5464, %v5542
      %v5544 = vpop.f32.mrf.mxu0
      %v5545 = vpop.f32.mrf.mxu0
      %v5546 = vadd.f32 %v5464, %v5545
      %v5547 = vpop.f32.mrf.mxu0
      %5548 = vmatprep.mubr.bf16.mxu0 0
      %5549 = vmatmul.mubr.bf16.gmra.mxu0 %v5486
      %v5550 = vpop.f32.mrf.mxu0
      %v5551 = vadd.f32 %v5464, %v5550
      %v5552 = vpop.f32.mrf.mxu0
      %v5553 = vpop.f32.mrf.mxu0
      %v5554 = vadd.f32 %v5464, %v5553
      %v5555 = vpop.f32.mrf.mxu0
      %5556 = vdwg.mxu0
      %v5557 = vmax.f32 %v5527, 0.0
      %v5558 = vmax.f32 %v5530, 0.0
      %v5559 = vmax.f32 %v5535, 0.0
      %v5560 = vmax.f32 %v5538, 0.0
      %v5561 = vmax.f32 %v5543, 0.0
      %v5562 = vmax.f32 %v5546, 0.0
      %v5563 = vmax.f32 %v5551, 0.0
      %v5564 = vmax.f32 %v5554, 0.0
      %v5565 = vld [vmem:[%s14 + $0x4] sm:$0x1]
      %v5566 = vlaneseq
      %v5567 = vshrl.u32 %v5566, 7
      %v5568 = vsub.s32 0, %v5567
      %v5569 = vrot.slane %v5565, %v5568
      %v5570 = vmul.f32 %v5557, %v5569
      %v5571 = vmul.f32 %v5558, %v5569
      %v5572 = vmul.f32 %v5559, %v5569
      %v5573 = vmul.f32 %v5560, %v5569
      %v5574 = vmul.f32 %v5561, %v5569
      %v5575 = vmul.f32 %v5562, %v5569
      %v5576 = vmul.f32 %v5563, %v5569
      %v5577 = vmul.f32 %v5564, %v5569
      %v5578 = vrot.slane %v5557, 7
      %v5579 = vrot.slane %v5558, 7
      %v5580 = vrot.slane %v5559, 7
      %v5581 = vrot.slane %v5560, 7
      %v5582 = vrot.slane %v5561, 7
      %v5583 = vrot.slane %v5562, 7
      %v5584 = vrot.slane %v5563, 7
      %v5585 = vrot.slane %v5564, 7
      %v5586 = vsel %vm1404, %v5584, %v5585
      %v5587 = vsel %vm1404, %v5583, %v5584
      %v5588 = vsel %vm1404, %v5582, %v5583
      %v5589 = vsel %vm1404, %v5581, %v5582
      %v5590 = vsel %vm1404, %v5580, %v5581
      %v5591 = vsel %vm1404, %v5579, %v5580
      %v5592 = vsel %vm1404, %v5578, %v5579
      %v5593 = vsel %vm1404, %v5585, %v5578
      %v5594 = vld [vmem:[%s2] sm:$0xff]
      %v5595 = vld [vmem:[%s2 + $0x8] sm:$0xff]
      %v5596 = vld [vmem:[%s2 + $0x10] sm:$0xff]
      %v5597 = vld [vmem:[%s2 + $0x18] sm:$0xff]
      %v5598 = vld [vmem:[%s2 + $0x20] sm:$0xff]
      %v5599 = vld [vmem:[%s2 + $0x28] sm:$0xff]
      %v5600 = vld [vmem:[%s2 + $0x30] sm:$0xff]
      %v5601 = vld [vmem:[%s2 + $0x38] sm:$0xff]
      %5603 = vset.pattern.permute.xlu0 0
      %5604 = vperm.xlu0 %5603, %v5594
      %v5605 = vpop.permute.xlu0 %5604
      %5608 = vset.pattern.permute.xlu0 0
      %5609 = vperm.xlu0 %5608, %v5595
      %v5610 = vpop.permute.xlu0 %5609
      %5613 = vset.pattern.permute.xlu0 0
      %5614 = vperm.xlu0 %5613, %v5596
      %v5615 = vpop.permute.xlu0 %5614
      %5618 = vset.pattern.permute.xlu0 0
      %5619 = vperm.xlu0 %5618, %v5597
      %v5620 = vpop.permute.xlu0 %5619
      %5623 = vset.pattern.permute.xlu0 0
      %5624 = vperm.xlu0 %5623, %v5598
      %v5625 = vpop.permute.xlu0 %5624
      %5628 = vset.pattern.permute.xlu0 0
      %5629 = vperm.xlu0 %5628, %v5599
      %v5630 = vpop.permute.xlu0 %5629
      %5633 = vset.pattern.permute.xlu0 0
      %5634 = vperm.xlu0 %5633, %v5600
      %v5635 = vpop.permute.xlu0 %5634
      %5638 = vset.pattern.permute.xlu0 0
      %5639 = vperm.xlu0 %5638, %v5601
      %v5640 = vpop.permute.xlu0 %5639
      %v5642 = vmul.f32 %v5586, %v5605
      %v5643 = vmul.f32 %v5593, %v5610
      %v5644 = vmul.f32 %v5592, %v5615
      %v5645 = vmul.f32 %v5591, %v5620
      %v5646 = vmul.f32 %v5590, %v5625
      %v5647 = vmul.f32 %v5589, %v5630
      %v5648 = vmul.f32 %v5588, %v5635
      %v5649 = vmul.f32 %v5587, %v5640
      %v5650 = vld [vmem:[%s14] sm:$0x1]
      %v5651 = vlaneseq
      %v5652 = vshrl.u32 %v5651, 7
      %v5653 = vsub.s32 0, %v5652
      %v5654 = vrot.slane %v5650, %v5653
      %v5655 = vmul.f32 %v5642, %v5654
      %v5656 = vmul.f32 %v5643, %v5654
      %v5657 = vmul.f32 %v5644, %v5654
      %v5658 = vmul.f32 %v5645, %v5654
      %v5659 = vmul.f32 %v5646, %v5654
      %v5660 = vmul.f32 %v5647, %v5654
      %v5661 = vmul.f32 %v5648, %v5654
      %v5662 = vmul.f32 %v5649, %v5654
      %v5663 = vadd.f32 %v5570, %v5655
      %v5664 = vadd.f32 %v5571, %v5656
      %v5665 = vadd.f32 %v5572, %v5657
      %v5666 = vadd.f32 %v5573, %v5658
      %v5667 = vadd.f32 %v5574, %v5659
      %v5668 = vadd.f32 %v5575, %v5660
      %v5669 = vadd.f32 %v5576, %v5661
      %v5670 = vadd.f32 %v5577, %v5662
      %5671 = vset.pattern.permute.xlu0 1
      %5672 = vperm.xlu0 %5671, %v5594
      %v5673 = vpop.permute.xlu0 %5672
      %5675 = vset.pattern.permute.xlu0 1
      %5676 = vperm.xlu0 %5675, %v5595
      %v5677 = vpop.permute.xlu0 %5676
      %5679 = vset.pattern.permute.xlu0 1
      %5680 = vperm.xlu0 %5679, %v5596
      %v5681 = vpop.permute.xlu0 %5680
      %5683 = vset.pattern.permute.xlu0 1
      %5684 = vperm.xlu0 %5683, %v5597
      %v5685 = vpop.permute.xlu0 %5684
      %5687 = vset.pattern.permute.xlu0 1
      %5688 = vperm.xlu0 %5687, %v5598
      %v5689 = vpop.permute.xlu0 %5688
      %5691 = vset.pattern.permute.xlu0 1
      %5692 = vperm.xlu0 %5691, %v5599
      %v5693 = vpop.permute.xlu0 %5692
      %5695 = vset.pattern.permute.xlu0 1
      %5696 = vperm.xlu0 %5695, %v5600
      %v5697 = vpop.permute.xlu0 %5696
      %5699 = vset.pattern.permute.xlu0 1
      %5700 = vperm.xlu0 %5699, %v5601
      %v5701 = vpop.permute.xlu0 %5700
      %v5703 = vmul.f32 %v5564, %v5673
      %v5704 = vmul.f32 %v5557, %v5677
      %v5705 = vmul.f32 %v5558, %v5681
      %v5706 = vmul.f32 %v5559, %v5685
      %v5707 = vmul.f32 %v5560, %v5689
      %v5708 = vmul.f32 %v5561, %v5693
      %v5709 = vmul.f32 %v5562, %v5697
      %v5710 = vmul.f32 %v5563, %v5701
      %v5711 = vld [vmem:[%s14 + $0x1] sm:$0x1]
      %v5712 = vlaneseq
      %v5713 = vshrl.u32 %v5712, 7
      %v5714 = vsub.s32 0, %v5713
      %v5715 = vrot.slane %v5711, %v5714
      %v5716 = vmul.f32 %v5703, %v5715
      %v5717 = vmul.f32 %v5704, %v5715
      %v5718 = vmul.f32 %v5705, %v5715
      %v5719 = vmul.f32 %v5706, %v5715
      %v5720 = vmul.f32 %v5707, %v5715
      %v5721 = vmul.f32 %v5708, %v5715
      %v5722 = vmul.f32 %v5709, %v5715
      %v5723 = vmul.f32 %v5710, %v5715
      %v5724 = vadd.f32 %v5663, %v5716
      %v5725 = vadd.f32 %v5664, %v5717
      %v5726 = vadd.f32 %v5665, %v5718
      %v5727 = vadd.f32 %v5666, %v5719
      %v5728 = vadd.f32 %v5667, %v5720
      %v5729 = vadd.f32 %v5668, %v5721
      %v5730 = vadd.f32 %v5669, %v5722
      %v5731 = vadd.f32 %v5670, %v5723
      %v5732 = vrot.slane %v5557, 1
      %v5733 = vrot.slane %v5558, 1
      %v5734 = vrot.slane %v5559, 1
      %v5735 = vrot.slane %v5560, 1
      %v5736 = vrot.slane %v5561, 1
      %v5737 = vrot.slane %v5562, 1
      %v5738 = vrot.slane %v5563, 1
      %v5739 = vrot.slane %v5564, 1
      %v5740 = vsel %vm1991, %v5738, %v5739
      %v5741 = vsel %vm1991, %v5737, %v5738
      %v5742 = vsel %vm1991, %v5736, %v5737
      %v5743 = vsel %vm1991, %v5735, %v5736
      %v5744 = vsel %vm1991, %v5734, %v5735
      %v5745 = vsel %vm1991, %v5733, %v5734
      %v5746 = vsel %vm1991, %v5732, %v5733
      %v5747 = vsel %vm1991, %v5739, %v5732
      %5748 = vset.pattern.permute.xlu0 2
      %5749 = vperm.xlu0 %5748, %v5594
      %v5750 = vpop.permute.xlu0 %5749
      %5752 = vset.pattern.permute.xlu0 2
      %5753 = vperm.xlu0 %5752, %v5595
      %v5754 = vpop.permute.xlu0 %5753
      %5756 = vset.pattern.permute.xlu0 2
      %5757 = vperm.xlu0 %5756, %v5596
      %v5758 = vpop.permute.xlu0 %5757
      %5760 = vset.pattern.permute.xlu0 2
      %5761 = vperm.xlu0 %5760, %v5597
      %v5762 = vpop.permute.xlu0 %5761
      %5764 = vset.pattern.permute.xlu0 2
      %5765 = vperm.xlu0 %5764, %v5598
      %v5766 = vpop.permute.xlu0 %5765
      %5768 = vset.pattern.permute.xlu0 2
      %5769 = vperm.xlu0 %5768, %v5599
      %v5770 = vpop.permute.xlu0 %5769
      %5772 = vset.pattern.permute.xlu0 2
      %5773 = vperm.xlu0 %5772, %v5600
      %v5774 = vpop.permute.xlu0 %5773
      %5776 = vset.pattern.permute.xlu0 2
      %5777 = vperm.xlu0 %5776, %v5601
      %v5778 = vpop.permute.xlu0 %5777
      %v5780 = vmul.f32 %v5747, %v5750
      %v5781 = vmul.f32 %v5746, %v5754
      %v5782 = vmul.f32 %v5745, %v5758
      %v5783 = vmul.f32 %v5744, %v5762
      %v5784 = vmul.f32 %v5743, %v5766
      %v5785 = vmul.f32 %v5742, %v5770
      %v5786 = vmul.f32 %v5741, %v5774
      %v5787 = vmul.f32 %v5740, %v5778
      %v5788 = vld [vmem:[%s14 + $0x2] sm:$0x1]
      %v5789 = vlaneseq
      %v5790 = vshrl.u32 %v5789, 7
      %v5791 = vsub.s32 0, %v5790
      %v5792 = vrot.slane %v5788, %v5791
      %v5793 = vmul.f32 %v5780, %v5792
      %v5794 = vmul.f32 %v5781, %v5792
      %v5795 = vmul.f32 %v5782, %v5792
      %v5796 = vmul.f32 %v5783, %v5792
      %v5797 = vmul.f32 %v5784, %v5792
      %v5798 = vmul.f32 %v5785, %v5792
      %v5799 = vmul.f32 %v5786, %v5792
      %v5800 = vmul.f32 %v5787, %v5792
      %v5801 = vadd.f32 %v5724, %v5793
      %v5802 = vadd.f32 %v5725, %v5794
      %v5803 = vadd.f32 %v5726, %v5795
      %v5804 = vadd.f32 %v5727, %v5796
      %v5805 = vadd.f32 %v5728, %v5797
      %v5806 = vadd.f32 %v5729, %v5798
      %v5807 = vadd.f32 %v5730, %v5799
      %v5808 = vadd.f32 %v5731, %v5800
      %5809 = vset.pattern.permute.xlu0 3
      %5810 = vperm.xlu0 %5809, %v5594
      %v5811 = vpop.permute.xlu0 %5810
      %5813 = vset.pattern.permute.xlu0 3
      %5814 = vperm.xlu0 %5813, %v5595
      %v5815 = vpop.permute.xlu0 %5814
      %5817 = vset.pattern.permute.xlu0 3
      %5818 = vperm.xlu0 %5817, %v5596
      %v5819 = vpop.permute.xlu0 %5818
      %5821 = vset.pattern.permute.xlu0 3
      %5822 = vperm.xlu0 %5821, %v5597
      %v5823 = vpop.permute.xlu0 %5822
      %5825 = vset.pattern.permute.xlu0 3
      %5826 = vperm.xlu0 %5825, %v5598
      %v5827 = vpop.permute.xlu0 %5826
      %5829 = vset.pattern.permute.xlu0 3
      %5830 = vperm.xlu0 %5829, %v5599
      %v5831 = vpop.permute.xlu0 %5830
      %5833 = vset.pattern.permute.xlu0 3
      %5834 = vperm.xlu0 %5833, %v5600
      %v5835 = vpop.permute.xlu0 %5834
      %5837 = vset.pattern.permute.xlu0 3
      %5838 = vperm.xlu0 %5837, %v5601
      %v5839 = vpop.permute.xlu0 %5838
      %v5841 = vmul.f32 %v5593, %v5811
      %v5842 = vmul.f32 %v5592, %v5815
      %v5843 = vmul.f32 %v5591, %v5819
      %v5844 = vmul.f32 %v5590, %v5823
      %v5845 = vmul.f32 %v5589, %v5827
      %v5846 = vmul.f32 %v5588, %v5831
      %v5847 = vmul.f32 %v5587, %v5835
      %v5848 = vmul.f32 %v5586, %v5839
      %v5849 = vld [vmem:[%s14 + $0x3] sm:$0x1]
      %v5850 = vlaneseq
      %v5851 = vshrl.u32 %v5850, 7
      %v5852 = vsub.s32 0, %v5851
      %v5853 = vrot.slane %v5849, %v5852
      %v5854 = vmul.f32 %v5841, %v5853
      %v5855 = vmul.f32 %v5842, %v5853
      %v5856 = vmul.f32 %v5843, %v5853
      %v5857 = vmul.f32 %v5844, %v5853
      %v5858 = vmul.f32 %v5845, %v5853
      %v5859 = vmul.f32 %v5846, %v5853
      %v5860 = vmul.f32 %v5847, %v5853
      %v5861 = vmul.f32 %v5848, %v5853
      %v5862 = vadd.f32 %v5801, %v5854
      %v5863 = vadd.f32 %v5802, %v5855
      %v5864 = vadd.f32 %v5803, %v5856
      %v5865 = vadd.f32 %v5804, %v5857
      %v5866 = vadd.f32 %v5805, %v5858
      %v5867 = vadd.f32 %v5806, %v5859
      %v5868 = vadd.f32 %v5807, %v5860
      %v5869 = vadd.f32 %v5808, %v5861
      %5870 = vset.pattern.permute.xlu0 5
      %5871 = vperm.xlu0 %5870, %v5594
      %v5872 = vpop.permute.xlu0 %5871
      %5874 = vset.pattern.permute.xlu0 5
      %5875 = vperm.xlu0 %5874, %v5595
      %v5876 = vpop.permute.xlu0 %5875
      %5878 = vset.pattern.permute.xlu0 5
      %5879 = vperm.xlu0 %5878, %v5596
      %v5880 = vpop.permute.xlu0 %5879
      %5882 = vset.pattern.permute.xlu0 5
      %5883 = vperm.xlu0 %5882, %v5597
      %v5884 = vpop.permute.xlu0 %5883
      %5886 = vset.pattern.permute.xlu0 5
      %5887 = vperm.xlu0 %5886, %v5598
      %v5888 = vpop.permute.xlu0 %5887
      %5890 = vset.pattern.permute.xlu0 5
      %5891 = vperm.xlu0 %5890, %v5599
      %v5892 = vpop.permute.xlu0 %5891
      %5894 = vset.pattern.permute.xlu0 5
      %5895 = vperm.xlu0 %5894, %v5600
      %v5896 = vpop.permute.xlu0 %5895
      %5898 = vset.pattern.permute.xlu0 5
      %5899 = vperm.xlu0 %5898, %v5601
      %v5900 = vpop.permute.xlu0 %5899
      %v5902 = vmul.f32 %v5746, %v5872
      %v5903 = vmul.f32 %v5745, %v5876
      %v5904 = vmul.f32 %v5744, %v5880
      %v5905 = vmul.f32 %v5743, %v5884
      %v5906 = vmul.f32 %v5742, %v5888
      %v5907 = vmul.f32 %v5741, %v5892
      %v5908 = vmul.f32 %v5740, %v5896
      %v5909 = vmul.f32 %v5747, %v5900
      %v5910 = vld [vmem:[%s14 + $0x5] sm:$0x1]
      %v5911 = vlaneseq
      %v5912 = vshrl.u32 %v5911, 7
      %v5913 = vsub.s32 0, %v5912
      %v5914 = vrot.slane %v5910, %v5913
      %v5915 = vmul.f32 %v5902, %v5914
      %v5916 = vmul.f32 %v5903, %v5914
      %v5917 = vmul.f32 %v5904, %v5914
      %v5918 = vmul.f32 %v5905, %v5914
      %v5919 = vmul.f32 %v5906, %v5914
      %v5920 = vmul.f32 %v5907, %v5914
      %v5921 = vmul.f32 %v5908, %v5914
      %v5922 = vmul.f32 %v5909, %v5914
      %v5923 = vadd.f32 %v5862, %v5915
      %v5924 = vadd.f32 %v5863, %v5916
      %v5925 = vadd.f32 %v5864, %v5917
      %v5926 = vadd.f32 %v5865, %v5918
      %v5927 = vadd.f32 %v5866, %v5919
      %v5928 = vadd.f32 %v5867, %v5920
      %v5929 = vadd.f32 %v5868, %v5921
      %v5930 = vadd.f32 %v5869, %v5922
      %5931 = vset.pattern.permute.xlu0 6
      %5932 = vperm.xlu0 %5931, %v5594
      %v5933 = vpop.permute.xlu0 %5932
      %5935 = vset.pattern.permute.xlu0 6
      %5936 = vperm.xlu0 %5935, %v5595
      %v5937 = vpop.permute.xlu0 %5936
      %5939 = vset.pattern.permute.xlu0 6
      %5940 = vperm.xlu0 %5939, %v5596
      %v5941 = vpop.permute.xlu0 %5940
      %5943 = vset.pattern.permute.xlu0 6
      %5944 = vperm.xlu0 %5943, %v5597
      %v5945 = vpop.permute.xlu0 %5944
      %5947 = vset.pattern.permute.xlu0 6
      %5948 = vperm.xlu0 %5947, %v5598
      %v5949 = vpop.permute.xlu0 %5948
      %5951 = vset.pattern.permute.xlu0 6
      %5952 = vperm.xlu0 %5951, %v5599
      %v5953 = vpop.permute.xlu0 %5952
      %5955 = vset.pattern.permute.xlu0 6
      %5956 = vperm.xlu0 %5955, %v5600
      %v5957 = vpop.permute.xlu0 %5956
      %5959 = vset.pattern.permute.xlu0 6
      %5960 = vperm.xlu0 %5959, %v5601
      %v5961 = vpop.permute.xlu0 %5960
      %v5963 = vmul.f32 %v5592, %v5933
      %v5964 = vmul.f32 %v5591, %v5937
      %v5965 = vmul.f32 %v5590, %v5941
      %v5966 = vmul.f32 %v5589, %v5945
      %v5967 = vmul.f32 %v5588, %v5949
      %v5968 = vmul.f32 %v5587, %v5953
      %v5969 = vmul.f32 %v5586, %v5957
      %v5970 = vmul.f32 %v5593, %v5961
      %v5971 = vld [vmem:[%s14 + $0x6] sm:$0x1]
      %v5972 = vlaneseq
      %v5973 = vshrl.u32 %v5972, 7
      %v5974 = vsub.s32 0, %v5973
      %v5975 = vrot.slane %v5971, %v5974
      %v5976 = vmul.f32 %v5963, %v5975
      %v5977 = vmul.f32 %v5964, %v5975
      %v5978 = vmul.f32 %v5965, %v5975
      %v5979 = vmul.f32 %v5966, %v5975
      %v5980 = vmul.f32 %v5967, %v5975
      %v5981 = vmul.f32 %v5968, %v5975
      %v5982 = vmul.f32 %v5969, %v5975
      %v5983 = vmul.f32 %v5970, %v5975
      %v5984 = vadd.f32 %v5923, %v5976
      %v5985 = vadd.f32 %v5924, %v5977
      %v5986 = vadd.f32 %v5925, %v5978
      %v5987 = vadd.f32 %v5926, %v5979
      %v5988 = vadd.f32 %v5927, %v5980
      %v5989 = vadd.f32 %v5928, %v5981
      %v5990 = vadd.f32 %v5929, %v5982
      %v5991 = vadd.f32 %v5930, %v5983
      %5992 = vset.pattern.permute.xlu0 7
      %5993 = vperm.xlu0 %5992, %v5594
      %v5994 = vpop.permute.xlu0 %5993
      %5996 = vset.pattern.permute.xlu0 7
      %5997 = vperm.xlu0 %5996, %v5595
      %v5998 = vpop.permute.xlu0 %5997
      %6000 = vset.pattern.permute.xlu0 7
      %6001 = vperm.xlu0 %6000, %v5596
      %v6002 = vpop.permute.xlu0 %6001
      %6004 = vset.pattern.permute.xlu0 7
      %6005 = vperm.xlu0 %6004, %v5597
      %v6006 = vpop.permute.xlu0 %6005
      %6008 = vset.pattern.permute.xlu0 7
      %6009 = vperm.xlu0 %6008, %v5598
      %v6010 = vpop.permute.xlu0 %6009
      %6012 = vset.pattern.permute.xlu0 7
      %6013 = vperm.xlu0 %6012, %v5599
      %v6014 = vpop.permute.xlu0 %6013
      %6016 = vset.pattern.permute.xlu0 7
      %6017 = vperm.xlu0 %6016, %v5600
      %v6018 = vpop.permute.xlu0 %6017
      %6020 = vset.pattern.permute.xlu0 7
      %6021 = vperm.xlu0 %6020, %v5601
      %v6022 = vpop.permute.xlu0 %6021
      %v6024 = vmul.f32 %v5558, %v5994
      %v6025 = vmul.f32 %v5559, %v5998
      %v6026 = vmul.f32 %v5560, %v6002
      %v6027 = vmul.f32 %v5561, %v6006
      %v6028 = vmul.f32 %v5562, %v6010
      %v6029 = vmul.f32 %v5563, %v6014
      %v6030 = vmul.f32 %v5564, %v6018
      %v6031 = vmul.f32 %v5557, %v6022
      %v6032 = vld [vmem:[%s14 + $0x7] sm:$0x1]
      %v6033 = vlaneseq
      %v6034 = vshrl.u32 %v6033, 7
      %v6035 = vsub.s32 0, %v6034
      %v6036 = vrot.slane %v6032, %v6035
      %v6037 = vmul.f32 %v6024, %v6036
      %v6038 = vmul.f32 %v6025, %v6036
      %v6039 = vmul.f32 %v6026, %v6036
      %v6040 = vmul.f32 %v6027, %v6036
      %v6041 = vmul.f32 %v6028, %v6036
      %v6042 = vmul.f32 %v6029, %v6036
      %v6043 = vmul.f32 %v6030, %v6036
      %v6044 = vmul.f32 %v6031, %v6036
      %v6045 = vadd.f32 %v5984, %v6037
      %v6046 = vadd.f32 %v5985, %v6038
      %v6047 = vadd.f32 %v5986, %v6039
      %v6048 = vadd.f32 %v5987, %v6040
      %v6049 = vadd.f32 %v5988, %v6041
      %v6050 = vadd.f32 %v5989, %v6042
      %v6051 = vadd.f32 %v5990, %v6043
      %v6052 = vadd.f32 %v5991, %v6044
      %6053 = vset.pattern.permute.xlu0 8
      %6054 = vperm.xlu0 %6053, %v5594
      %v6055 = vpop.permute.xlu0 %6054
      %6057 = vset.pattern.permute.xlu0 8
      %6058 = vperm.xlu0 %6057, %v5595
      %v6059 = vpop.permute.xlu0 %6058
      %6061 = vset.pattern.permute.xlu0 8
      %6062 = vperm.xlu0 %6061, %v5596
      %v6063 = vpop.permute.xlu0 %6062
      %6065 = vset.pattern.permute.xlu0 8
      %6066 = vperm.xlu0 %6065, %v5597
      %v6067 = vpop.permute.xlu0 %6066
      %6069 = vset.pattern.permute.xlu0 8
      %6070 = vperm.xlu0 %6069, %v5598
      %v6071 = vpop.permute.xlu0 %6070
      %6073 = vset.pattern.permute.xlu0 8
      %6074 = vperm.xlu0 %6073, %v5599
      %v6075 = vpop.permute.xlu0 %6074
      %6077 = vset.pattern.permute.xlu0 8
      %6078 = vperm.xlu0 %6077, %v5600
      %v6079 = vpop.permute.xlu0 %6078
      %6081 = vset.pattern.permute.xlu0 8
      %6082 = vperm.xlu0 %6081, %v5601
      %v6083 = vpop.permute.xlu0 %6082
      %v6085 = vmul.f32 %v5745, %v6055
      %v6086 = vmul.f32 %v5744, %v6059
      %v6087 = vmul.f32 %v5743, %v6063
      %v6088 = vmul.f32 %v5742, %v6067
      %v6089 = vmul.f32 %v5741, %v6071
      %v6090 = vmul.f32 %v5740, %v6075
      %v6091 = vmul.f32 %v5747, %v6079
      %v6092 = vmul.f32 %v5746, %v6083
      %v6093 = vld [vmem:[%s14 + $0x8] sm:$0x1]
      %v6094 = vlaneseq
      %v6095 = vshrl.u32 %v6094, 7
      %v6096 = vsub.s32 0, %v6095
      %v6097 = vrot.slane %v6093, %v6096
      %v6098 = vmul.f32 %v6085, %v6097
      %v6099 = vmul.f32 %v6086, %v6097
      %v6100 = vmul.f32 %v6087, %v6097
      %v6101 = vmul.f32 %v6088, %v6097
      %v6102 = vmul.f32 %v6089, %v6097
      %v6103 = vmul.f32 %v6090, %v6097
      %v6104 = vmul.f32 %v6091, %v6097
      %v6105 = vmul.f32 %v6092, %v6097
      %v6106 = vadd.f32 %v6045, %v6098
      %v6107 = vadd.f32 %v6046, %v6099
      %v6108 = vadd.f32 %v6047, %v6100
      %v6109 = vadd.f32 %v6048, %v6101
      %v6110 = vadd.f32 %v6049, %v6102
      %v6111 = vadd.f32 %v6050, %v6103
      %v6112 = vadd.f32 %v6051, %v6104
      %v6113 = vadd.f32 %v6052, %v6105
      %v6114 = vld [vmem:[%s6 + $0x7] sm:$0x1]
      %v6116 = vlaneseq
      %v6117 = vshrl.u32 %v6116, 7
      %v6118 = vsub.s32 0, %v6117
      %v6119 = vrot.slane %v6114, %v6118
      %v6121 = vadd.f32 %v6106, %v6119
      %v6122 = vadd.f32 %v6107, %v6119
      %v6123 = vadd.f32 %v6108, %v6119
      %v6124 = vadd.f32 %v6109, %v6119
      %v6125 = vadd.f32 %v6110, %v6119
      %v6126 = vadd.f32 %v6111, %v6119
      %v6127 = vadd.f32 %v6112, %v6119
      %v6128 = vadd.f32 %v6113, %v6119
      %v6129 = vmax.f32 %v6121, 0.0
      %v6130 = vmax.f32 %v6122, 0.0
      %v6131 = vmax.f32 %v6123, 0.0
      %v6132 = vmax.f32 %v6124, 0.0
      %v6133 = vmax.f32 %v6125, 0.0
      %v6134 = vmax.f32 %v6126, 0.0
      %v6135 = vmax.f32 %v6127, 0.0
      %v6136 = vmax.f32 %v6128, 0.0
      %v6137 = vpack.c.bf16 %v6130, %v6129
      %v6138 = vpack.c.bf16 %v6132, %v6131
      %v6139 = vpack.c.bf16 %v6134, %v6133
      %v6140 = vpack.c.bf16 %v6136, %v6135
      %v6141 = vld [vmem:[%s15] sm:$0xf]
      %v6142 = vld [vmem:[%s15 + $0x4] sm:$0xf]
      %v6143 = vld [vmem:[%s15 + $0x8] sm:$0xf]
      %v6144 = vld [vmem:[%s15 + $0xc] sm:$0xf]
      %v6145 = vld [vmem:[%s15 + $0x10] sm:$0xf]
      %v6146 = vld [vmem:[%s15 + $0x14] sm:$0xf]
      %v6147 = vld [vmem:[%s15 + $0x18] sm:$0xf]
      %v6148 = vld [vmem:[%s15 + $0x1c] sm:$0xf]
      %v6149 = vld [vmem:[%s15 + $0x20] sm:$0xf]
      %v6159 = vunpack.c.l.b16 %v6141
      %v6160 = vunpack.c.l.b16 %v6142
      %v6161 = vunpack.c.l.b16 %v6143
      %v6162 = vunpack.c.l.b16 %v6144
      %v6163 = vunpack.c.l.b16 %v6145
      %v6164 = vunpack.c.l.b16 %v6146
      %v6165 = vunpack.c.l.b16 %v6147
      %v6166 = vunpack.c.l.b16 %v6148
      %v6167 = vunpack.c.l.b16 %v6149
      %v6168 = vpack.c.b16 %v6160, %v6159
      %v6169 = vpack.c.b16 %v6162, %v6161
      %v6170 = vpack.c.b16 %v6164, %v6163
      %v6171 = vpack.c.b16 %v6166, %v6165
      %v6172 = vpack.c.b16 %v6167, %v6167
      %vm6177 = vcmask 588800
      %v6179 = vsel %vm6177, %v6137, 0
      %v6182 = vsel %vm6177, %v6138, 0
      %v6185 = vsel %vm6177, %v6139, 0
      %v6188 = vsel %vm6177, %v6140, 0
      %v6191 = vsel %vm5488, %v6172, 0
      %6193 = vmatprep.subr.bf16.mxu0 0
      %6194 = vmatpush1.bf16.msra.mxu0 0
      %6195 = vmatprep.subr.bf16.mxu0 0
      %6196 = vmatpush1.bf16.msra.mxu0 0
      %6197 = vmatprep.subr.bf16.mxu0 0
      %6198 = vmatpush1.bf16.msra.mxu0 0
      %6199 = vmatprep.subr.bf16.mxu0 0
      %6200 = vmatpush1.bf16.msra.mxu0 %v6191
      %6201 = vmatprep.subr.bf16.mxu0 0
      %6202 = vmatpush1.bf16.msra.mxu0 %v6171
      %6203 = vmatprep.subr.bf16.mxu0 0
      %6204 = vmatpush1.bf16.msra.mxu0 %v6170
      %6205 = vmatprep.subr.bf16.mxu0 0
      %6206 = vmatpush1.bf16.msra.mxu0 %v6169
      %6207 = vmatprep.subr.bf16.mxu0 0
      %6208 = vmatpush1.bf16.msra.mxu0 %v6168
      %6209 = vmatprep.subr.bf16.mxu0 0
      %6210 = vmatpush2.bf16.msra.mxu0 0
      %6211 = vmatprep.subr.bf16.mxu0 0
      %6212 = vmatpush2.bf16.msra.mxu0 0
      %6213 = vmatprep.subr.bf16.mxu0 0
      %6214 = vmatpush2.bf16.msra.mxu0 0
      %6215 = vmatprep.subr.bf16.mxu0 0
      %6216 = vmatpush2.bf16.msra.mxu0 0
      %6217 = vmatprep.subr.bf16.mxu0 0
      %6218 = vmatpush2.bf16.msra.mxu0 0
      %6219 = vmatprep.subr.bf16.mxu0 0
      %6220 = vmatpush2.bf16.msra.mxu0 0
      %6221 = vmatprep.subr.bf16.mxu0 0
      %6222 = vmatpush2.bf16.msra.mxu0 0
      %6223 = vmatprep.subr.bf16.mxu0 0
      %6224 = vmatpush2.bf16.msra.mxu0 0
      %6225 = vmatprep.mubr.bf16.mxu0 0
      %6226 = vmatmul.mubr.bf16.gmra.mxu0 %v6179
      %v6227 = vpop.f32.mrf.mxu0
      %v6228 = vadd.f32 0.0, %v6227
      %v6229 = vpop.f32.mrf.mxu0
      %v6230 = vpop.f32.mrf.mxu0
      %v6231 = vadd.f32 0.0, %v6230
      %v6232 = vpop.f32.mrf.mxu0
      %6233 = vmatprep.mubr.bf16.mxu0 0
      %6234 = vmatmul.mubr.bf16.gmra.mxu0 %v6182
      %v6235 = vpop.f32.mrf.mxu0
      %v6236 = vadd.f32 0.0, %v6235
      %v6237 = vpop.f32.mrf.mxu0
      %v6238 = vpop.f32.mrf.mxu0
      %v6239 = vadd.f32 0.0, %v6238
      %v6240 = vpop.f32.mrf.mxu0
      %6241 = vmatprep.mubr.bf16.mxu0 0
      %6242 = vmatmul.mubr.bf16.gmra.mxu0 %v6185
      %v6243 = vpop.f32.mrf.mxu0
      %v6244 = vadd.f32 0.0, %v6243
      %v6245 = vpop.f32.mrf.mxu0
      %v6246 = vpop.f32.mrf.mxu0
      %v6247 = vadd.f32 0.0, %v6246
      %v6248 = vpop.f32.mrf.mxu0
      %6249 = vmatprep.mubr.bf16.mxu0 0
      %6250 = vmatmul.mubr.bf16.gmra.mxu0 %v6188
      %v6251 = vpop.f32.mrf.mxu0
      %v6252 = vadd.f32 0.0, %v6251
      %v6253 = vpop.f32.mrf.mxu0
      %v6254 = vpop.f32.mrf.mxu0
      %v6255 = vadd.f32 0.0, %v6254
      %v6256 = vpop.f32.mrf.mxu0
      %6257 = vdwg.mxu0
      %v6258 = vadd.f32 %v5422, %v6228
      %v6259 = vadd.f32 %v5425, %v6231
      %v6260 = vadd.f32 %v5430, %v6236
      %v6261 = vadd.f32 %v5433, %v6239
      %v6262 = vadd.f32 %v5438, %v6244
      %v6263 = vadd.f32 %v5441, %v6247
      %v6264 = vadd.f32 %v5446, %v6252
      %v6265 = vadd.f32 %v5449, %v6255
      %v6266 = vld [vmem:[%s6 + $0x8] sm:$0x1]
      %v6268 = vlaneseq
      %v6269 = vshrl.u32 %v6268, 7
      %v6270 = vsub.s32 0, %v6269
      %v6271 = vrot.slane %v6266, %v6270
      %v6273 = vadd.f32 %v6258, %v6271
      %v6274 = vadd.f32 %v6259, %v6271
      %v6275 = vadd.f32 %v6260, %v6271
      %v6276 = vadd.f32 %v6261, %v6271
      %v6277 = vadd.f32 %v6262, %v6271
      %v6278 = vadd.f32 %v6263, %v6271
      %v6279 = vadd.f32 %v6264, %v6271
      %v6280 = vadd.f32 %v6265, %v6271
      %v6281 = vpack.c.bf16 %v6274, %v6273
      %v6282 = vpack.c.bf16 %v6276, %v6275
      %v6283 = vpack.c.bf16 %v6278, %v6277
      %v6284 = vpack.c.bf16 %v6280, %v6279
      %v6285 = vld [vmem:[%s16] sm:$0xf]
      %v6286 = vld [vmem:[%s16 + $0x4] sm:$0xf]
      %v6287 = vld [vmem:[%s16 + $0x8] sm:$0xf]
      %v6288 = vld [vmem:[%s6 + $0x9] sm:$0x1]
      %v6290 = vlaneseq
      %v6291 = vshrl.u32 %v6290, 7
      %v6292 = vsub.s32 0, %v6291
      %v6293 = vrot.slane %v6288, %v6292
      %v6298 = vunpack.c.l.b16 %v6285
      %v6299 = vunpack.c.l.b16 %v6286
      %v6300 = vunpack.c.l.b16 %v6287
      %v6301 = vpack.c.b16 %v6299, %v6298
      %v6302 = vpack.c.b16 %v6300, %v6300
      %v6305 = vsel %vm5475, %v6281, 0
      %v6308 = vsel %vm5475, %v6282, 0
      %v6311 = vsel %vm5475, %v6283, 0
      %v6314 = vsel %vm5475, %v6284, 0
      %v6317 = vsel %vm5488, %v6302, 0
      %6319 = vmatprep.subr.bf16.mxu0 0
      %6320 = vmatpush1.bf16.msra.mxu0 0
      %6321 = vmatprep.subr.bf16.mxu0 0
      %6322 = vmatpush1.bf16.msra.mxu0 0
      %6323 = vmatprep.subr.bf16.mxu0 0
      %6324 = vmatpush1.bf16.msra.mxu0 0
      %6325 = vmatprep.subr.bf16.mxu0 0
      %6326 = vmatpush1.bf16.msra.mxu0 0
      %6327 = vmatprep.subr.bf16.mxu0 0
      %6328 = vmatpush1.bf16.msra.mxu0 0
      %6329 = vmatprep.subr.bf16.mxu0 0
      %6330 = vmatpush1.bf16.msra.mxu0 0
      %6331 = vmatprep.subr.bf16.mxu0 0
      %6332 = vmatpush1.bf16.msra.mxu0 %v6317
      %6333 = vmatprep.subr.bf16.mxu0 0
      %6334 = vmatpush1.bf16.msra.mxu0 %v6301
      %6335 = vmatprep.subr.bf16.mxu0 0
      %6336 = vmatpush2.bf16.msra.mxu0 0
      %6337 = vmatprep.subr.bf16.mxu0 0
      %6338 = vmatpush2.bf16.msra.mxu0 0
      %6339 = vmatprep.subr.bf16.mxu0 0
      %6340 = vmatpush2.bf16.msra.mxu0 0
      %6341 = vmatprep.subr.bf16.mxu0 0
      %6342 = vmatpush2.bf16.msra.mxu0 0
      %6343 = vmatprep.subr.bf16.mxu0 0
      %6344 = vmatpush2.bf16.msra.mxu0 0
      %6345 = vmatprep.subr.bf16.mxu0 0
      %6346 = vmatpush2.bf16.msra.mxu0 0
      %6347 = vmatprep.subr.bf16.mxu0 0
      %6348 = vmatpush2.bf16.msra.mxu0 0
      %6349 = vmatprep.subr.bf16.mxu0 0
      %6350 = vmatpush2.bf16.msra.mxu0 0
      %6351 = vmatprep.mubr.bf16.mxu0 0
      %6352 = vmatmul.mubr.bf16.gmra.mxu0 %v6305
      %v6353 = vpop.f32.mrf.mxu0
      %v6354 = vadd.f32 %v6293, %v6353
      %v6355 = vpop.f32.mrf.mxu0
      %v6356 = vpop.f32.mrf.mxu0
      %v6357 = vadd.f32 %v6293, %v6356
      %v6358 = vpop.f32.mrf.mxu0
      %6359 = vmatprep.mubr.bf16.mxu0 0
      %6360 = vmatmul.mubr.bf16.gmra.mxu0 %v6308
      %v6361 = vpop.f32.mrf.mxu0
      %v6362 = vadd.f32 %v6293, %v6361
      %v6363 = vpop.f32.mrf.mxu0
      %v6364 = vpop.f32.mrf.mxu0
      %v6365 = vadd.f32 %v6293, %v6364
      %v6366 = vpop.f32.mrf.mxu0
      %6367 = vmatprep.mubr.bf16.mxu0 0
      %6368 = vmatmul.mubr.bf16.gmra.mxu0 %v6311
      %v6369 = vpop.f32.mrf.mxu0
      %v6370 = vadd.f32 %v6293, %v6369
      %v6371 = vpop.f32.mrf.mxu0
      %v6372 = vpop.f32.mrf.mxu0
      %v6373 = vadd.f32 %v6293, %v6372
      %v6374 = vpop.f32.mrf.mxu0
      %6375 = vmatprep.mubr.bf16.mxu0 0
      %6376 = vmatmul.mubr.bf16.gmra.mxu0 %v6314
      %v6377 = vpop.f32.mrf.mxu0
      %v6378 = vadd.f32 %v6293, %v6377
      %v6379 = vpop.f32.mrf.mxu0
      %v6380 = vpop.f32.mrf.mxu0
      %v6381 = vadd.f32 %v6293, %v6380
      %v6382 = vpop.f32.mrf.mxu0
      %6383 = vdwg.mxu0
      %v6384 = vadd.f32 %v6354, 3.0
      %v6385 = vadd.f32 %v6357, 3.0
      %v6386 = vadd.f32 %v6362, 3.0
      %v6387 = vadd.f32 %v6365, 3.0
      %v6388 = vadd.f32 %v6370, 3.0
      %v6389 = vadd.f32 %v6373, 3.0
      %v6390 = vadd.f32 %v6378, 3.0
      %v6391 = vadd.f32 %v6381, 3.0
      %v6392 = vmax.f32 %v6384, 0.0
      %v6393 = vmax.f32 %v6385, 0.0
      %v6394 = vmax.f32 %v6386, 0.0
      %v6395 = vmax.f32 %v6387, 0.0
      %v6396 = vmax.f32 %v6388, 0.0
      %v6397 = vmax.f32 %v6389, 0.0
      %v6398 = vmax.f32 %v6390, 0.0
      %v6399 = vmax.f32 %v6391, 0.0
      %v6400 = vmin.f32 %v6392, 6.0
      %v6401 = vmin.f32 %v6393, 6.0
      %v6402 = vmin.f32 %v6394, 6.0
      %v6403 = vmin.f32 %v6395, 6.0
      %v6404 = vmin.f32 %v6396, 6.0
      %v6405 = vmin.f32 %v6397, 6.0
      %v6406 = vmin.f32 %v6398, 6.0
      %v6407 = vmin.f32 %v6399, 6.0
      %v6408 = vmul.f32 %v6354, %v6400
      %v6409 = vmul.f32 %v6357, %v6401
      %v6410 = vmul.f32 %v6362, %v6402
      %v6411 = vmul.f32 %v6365, %v6403
      %v6412 = vmul.f32 %v6370, %v6404
      %v6413 = vmul.f32 %v6373, %v6405
      %v6414 = vmul.f32 %v6378, %v6406
      %v6415 = vmul.f32 %v6381, %v6407
      %v6416 = vmul.f32 %v6408, 0.16666667
      %v6417 = vmul.f32 %v6409, 0.16666667
      %v6418 = vmul.f32 %v6410, 0.16666667
      %v6419 = vmul.f32 %v6411, 0.16666667
      %v6420 = vmul.f32 %v6412, 0.16666667
      %v6421 = vmul.f32 %v6413, 0.16666667
      %v6422 = vmul.f32 %v6414, 0.16666667
      %v6423 = vmul.f32 %v6415, 0.16666667
      %v6424 = vld [vmem:[%s17 + $0x4] sm:$0x1]
      %v6425 = vlaneseq
      %v6426 = vshrl.u32 %v6425, 7
      %v6427 = vsub.s32 0, %v6426
      %v6428 = vrot.slane %v6424, %v6427
      %v6429 = vmul.f32 %v6416, %v6428
      %v6430 = vmul.f32 %v6417, %v6428
      %v6431 = vmul.f32 %v6418, %v6428
      %v6432 = vmul.f32 %v6419, %v6428
      %v6433 = vmul.f32 %v6420, %v6428
      %v6434 = vmul.f32 %v6421, %v6428
      %v6435 = vmul.f32 %v6422, %v6428
      %v6436 = vmul.f32 %v6423, %v6428
      %v6437 = vrot.slane %v6416, 7
      %v6438 = vrot.slane %v6417, 7
      %v6439 = vrot.slane %v6418, 7
      %v6440 = vrot.slane %v6419, 7
      %v6441 = vrot.slane %v6420, 7
      %v6442 = vrot.slane %v6421, 7
      %v6443 = vrot.slane %v6422, 7
      %v6444 = vrot.slane %v6423, 7
      %v6445 = vsel %vm1404, %v6443, %v6444
      %v6446 = vsel %vm1404, %v6442, %v6443
      %v6447 = vsel %vm1404, %v6441, %v6442
      %v6448 = vsel %vm1404, %v6440, %v6441
      %v6449 = vsel %vm1404, %v6439, %v6440
      %v6450 = vsel %vm1404, %v6438, %v6439
      %v6451 = vsel %vm1404, %v6437, %v6438
      %v6452 = vsel %vm1404, %v6444, %v6437
      %v6453 = vmul.f32 %v6445, %v5605
      %v6454 = vmul.f32 %v6452, %v5610
      %v6455 = vmul.f32 %v6451, %v5615
      %v6456 = vmul.f32 %v6450, %v5620
      %v6457 = vmul.f32 %v6449, %v5625
      %v6458 = vmul.f32 %v6448, %v5630
      %v6459 = vmul.f32 %v6447, %v5635
      %v6460 = vmul.f32 %v6446, %v5640
      %v6461 = vld [vmem:[%s17] sm:$0x1]
      %v6462 = vlaneseq
      %v6463 = vshrl.u32 %v6462, 7
      %v6464 = vsub.s32 0, %v6463
      %v6465 = vrot.slane %v6461, %v6464
      %v6466 = vmul.f32 %v6453, %v6465
      %v6467 = vmul.f32 %v6454, %v6465
      %v6468 = vmul.f32 %v6455, %v6465
      %v6469 = vmul.f32 %v6456, %v6465
      %v6470 = vmul.f32 %v6457, %v6465
      %v6471 = vmul.f32 %v6458, %v6465
      %v6472 = vmul.f32 %v6459, %v6465
      %v6473 = vmul.f32 %v6460, %v6465
      %v6474 = vadd.f32 %v6429, %v6466
      %v6475 = vadd.f32 %v6430, %v6467
      %v6476 = vadd.f32 %v6431, %v6468
      %v6477 = vadd.f32 %v6432, %v6469
      %v6478 = vadd.f32 %v6433, %v6470
      %v6479 = vadd.f32 %v6434, %v6471
      %v6480 = vadd.f32 %v6435, %v6472
      %v6481 = vadd.f32 %v6436, %v6473
      %v6482 = vmul.f32 %v6423, %v5673
      %v6483 = vmul.f32 %v6416, %v5677
      %v6484 = vmul.f32 %v6417, %v5681
      %v6485 = vmul.f32 %v6418, %v5685
      %v6486 = vmul.f32 %v6419, %v5689
      %v6487 = vmul.f32 %v6420, %v5693
      %v6488 = vmul.f32 %v6421, %v5697
      %v6489 = vmul.f32 %v6422, %v5701
      %v6490 = vld [vmem:[%s17 + $0x1] sm:$0x1]
      %v6491 = vlaneseq
      %v6492 = vshrl.u32 %v6491, 7
      %v6493 = vsub.s32 0, %v6492
      %v6494 = vrot.slane %v6490, %v6493
      %v6495 = vmul.f32 %v6482, %v6494
      %v6496 = vmul.f32 %v6483, %v6494
      %v6497 = vmul.f32 %v6484, %v6494
      %v6498 = vmul.f32 %v6485, %v6494
      %v6499 = vmul.f32 %v6486, %v6494
      %v6500 = vmul.f32 %v6487, %v6494
      %v6501 = vmul.f32 %v6488, %v6494
      %v6502 = vmul.f32 %v6489, %v6494
      %v6503 = vadd.f32 %v6474, %v6495
      %v6504 = vadd.f32 %v6475, %v6496
      %v6505 = vadd.f32 %v6476, %v6497
      %v6506 = vadd.f32 %v6477, %v6498
      %v6507 = vadd.f32 %v6478, %v6499
      %v6508 = vadd.f32 %v6479, %v6500
      %v6509 = vadd.f32 %v6480, %v6501
      %v6510 = vadd.f32 %v6481, %v6502
      %v6511 = vrot.slane %v6416, 1
      %v6512 = vrot.slane %v6417, 1
      %v6513 = vrot.slane %v6418, 1
      %v6514 = vrot.slane %v6419, 1
      %v6515 = vrot.slane %v6420, 1
      %v6516 = vrot.slane %v6421, 1
      %v6517 = vrot.slane %v6422, 1
      %v6518 = vrot.slane %v6423, 1
      %v6519 = vsel %vm1991, %v6517, %v6518
      %v6520 = vsel %vm1991, %v6516, %v6517
      %v6521 = vsel %vm1991, %v6515, %v6516
      %v6522 = vsel %vm1991, %v6514, %v6515
      %v6523 = vsel %vm1991, %v6513, %v6514
      %v6524 = vsel %vm1991, %v6512, %v6513
      %v6525 = vsel %vm1991, %v6511, %v6512
      %v6526 = vsel %vm1991, %v6518, %v6511
      %v6527 = vmul.f32 %v6526, %v5750
      %v6528 = vmul.f32 %v6525, %v5754
      %v6529 = vmul.f32 %v6524, %v5758
      %v6530 = vmul.f32 %v6523, %v5762
      %v6531 = vmul.f32 %v6522, %v5766
      %v6532 = vmul.f32 %v6521, %v5770
      %v6533 = vmul.f32 %v6520, %v5774
      %v6534 = vmul.f32 %v6519, %v5778
      %v6535 = vld [vmem:[%s17 + $0x2] sm:$0x1]
      %v6536 = vlaneseq
      %v6537 = vshrl.u32 %v6536, 7
      %v6538 = vsub.s32 0, %v6537
      %v6539 = vrot.slane %v6535, %v6538
      %v6540 = vmul.f32 %v6527, %v6539
      %v6541 = vmul.f32 %v6528, %v6539
      %v6542 = vmul.f32 %v6529, %v6539
      %v6543 = vmul.f32 %v6530, %v6539
      %v6544 = vmul.f32 %v6531, %v6539
      %v6545 = vmul.f32 %v6532, %v6539
      %v6546 = vmul.f32 %v6533, %v6539
      %v6547 = vmul.f32 %v6534, %v6539
      %v6548 = vadd.f32 %v6503, %v6540
      %v6549 = vadd.f32 %v6504, %v6541
      %v6550 = vadd.f32 %v6505, %v6542
      %v6551 = vadd.f32 %v6506, %v6543
      %v6552 = vadd.f32 %v6507, %v6544
      %v6553 = vadd.f32 %v6508, %v6545
      %v6554 = vadd.f32 %v6509, %v6546
      %v6555 = vadd.f32 %v6510, %v6547
      %v6556 = vmul.f32 %v6452, %v5811
      %v6557 = vmul.f32 %v6451, %v5815
      %v6558 = vmul.f32 %v6450, %v5819
      %v6559 = vmul.f32 %v6449, %v5823
      %v6560 = vmul.f32 %v6448, %v5827
      %v6561 = vmul.f32 %v6447, %v5831
      %v6562 = vmul.f32 %v6446, %v5835
      %v6563 = vmul.f32 %v6445, %v5839
      %v6564 = vld [vmem:[%s17 + $0x3] sm:$0x1]
      %v6565 = vlaneseq
      %v6566 = vshrl.u32 %v6565, 7
      %v6567 = vsub.s32 0, %v6566
      %v6568 = vrot.slane %v6564, %v6567
      %v6569 = vmul.f32 %v6556, %v6568
      %v6570 = vmul.f32 %v6557, %v6568
      %v6571 = vmul.f32 %v6558, %v6568
      %v6572 = vmul.f32 %v6559, %v6568
      %v6573 = vmul.f32 %v6560, %v6568
      %v6574 = vmul.f32 %v6561, %v6568
      %v6575 = vmul.f32 %v6562, %v6568
      %v6576 = vmul.f32 %v6563, %v6568
      %v6577 = vadd.f32 %v6548, %v6569
      %v6578 = vadd.f32 %v6549, %v6570
      %v6579 = vadd.f32 %v6550, %v6571
      %v6580 = vadd.f32 %v6551, %v6572
      %v6581 = vadd.f32 %v6552, %v6573
      %v6582 = vadd.f32 %v6553, %v6574
      %v6583 = vadd.f32 %v6554, %v6575
      %v6584 = vadd.f32 %v6555, %v6576
      %v6585 = vmul.f32 %v6525, %v5872
      %v6586 = vmul.f32 %v6524, %v5876
      %v6587 = vmul.f32 %v6523, %v5880
      %v6588 = vmul.f32 %v6522, %v5884
      %v6589 = vmul.f32 %v6521, %v5888
      %v6590 = vmul.f32 %v6520, %v5892
      %v6591 = vmul.f32 %v6519, %v5896
      %v6592 = vmul.f32 %v6526, %v5900
      %v6593 = vld [vmem:[%s17 + $0x5] sm:$0x1]
      %v6594 = vlaneseq
      %v6595 = vshrl.u32 %v6594, 7
      %v6596 = vsub.s32 0, %v6595
      %v6597 = vrot.slane %v6593, %v6596
      %v6598 = vmul.f32 %v6585, %v6597
      %v6599 = vmul.f32 %v6586, %v6597
      %v6600 = vmul.f32 %v6587, %v6597
      %v6601 = vmul.f32 %v6588, %v6597
      %v6602 = vmul.f32 %v6589, %v6597
      %v6603 = vmul.f32 %v6590, %v6597
      %v6604 = vmul.f32 %v6591, %v6597
      %v6605 = vmul.f32 %v6592, %v6597
      %v6606 = vadd.f32 %v6577, %v6598
      %v6607 = vadd.f32 %v6578, %v6599
      %v6608 = vadd.f32 %v6579, %v6600
      %v6609 = vadd.f32 %v6580, %v6601
      %v6610 = vadd.f32 %v6581, %v6602
      %v6611 = vadd.f32 %v6582, %v6603
      %v6612 = vadd.f32 %v6583, %v6604
      %v6613 = vadd.f32 %v6584, %v6605
      %v6614 = vmul.f32 %v6451, %v5933
      %v6615 = vmul.f32 %v6450, %v5937
      %v6616 = vmul.f32 %v6449, %v5941
      %v6617 = vmul.f32 %v6448, %v5945
      %v6618 = vmul.f32 %v6447, %v5949
      %v6619 = vmul.f32 %v6446, %v5953
      %v6620 = vmul.f32 %v6445, %v5957
      %v6621 = vmul.f32 %v6452, %v5961
      %v6622 = vld [vmem:[%s17 + $0x6] sm:$0x1]
      %v6623 = vlaneseq
      %v6624 = vshrl.u32 %v6623, 7
      %v6625 = vsub.s32 0, %v6624
      %v6626 = vrot.slane %v6622, %v6625
      %v6627 = vmul.f32 %v6614, %v6626
      %v6628 = vmul.f32 %v6615, %v6626
      %v6629 = vmul.f32 %v6616, %v6626
      %v6630 = vmul.f32 %v6617, %v6626
      %v6631 = vmul.f32 %v6618, %v6626
      %v6632 = vmul.f32 %v6619, %v6626
      %v6633 = vmul.f32 %v6620, %v6626
      %v6634 = vmul.f32 %v6621, %v6626
      %v6635 = vadd.f32 %v6606, %v6627
      %v6636 = vadd.f32 %v6607, %v6628
      %v6637 = vadd.f32 %v6608, %v6629
      %v6638 = vadd.f32 %v6609, %v6630
      %v6639 = vadd.f32 %v6610, %v6631
      %v6640 = vadd.f32 %v6611, %v6632
      %v6641 = vadd.f32 %v6612, %v6633
      %v6642 = vadd.f32 %v6613, %v6634
      %v6643 = vmul.f32 %v6417, %v5994
      %v6644 = vmul.f32 %v6418, %v5998
      %v6645 = vmul.f32 %v6419, %v6002
      %v6646 = vmul.f32 %v6420, %v6006
      %v6647 = vmul.f32 %v6421, %v6010
      %v6648 = vmul.f32 %v6422, %v6014
      %v6649 = vmul.f32 %v6423, %v6018
      %v6650 = vmul.f32 %v6416, %v6022
      %v6651 = vld [vmem:[%s17 + $0x7] sm:$0x1]
      %v6652 = vlaneseq
      %v6653 = vshrl.u32 %v6652, 7
      %v6654 = vsub.s32 0, %v6653
      %v6655 = vrot.slane %v6651, %v6654
      %v6656 = vmul.f32 %v6643, %v6655
      %v6657 = vmul.f32 %v6644, %v6655
      %v6658 = vmul.f32 %v6645, %v6655
      %v6659 = vmul.f32 %v6646, %v6655
      %v6660 = vmul.f32 %v6647, %v6655
      %v6661 = vmul.f32 %v6648, %v6655
      %v6662 = vmul.f32 %v6649, %v6655
      %v6663 = vmul.f32 %v6650, %v6655
      %v6664 = vadd.f32 %v6635, %v6656
      %v6665 = vadd.f32 %v6636, %v6657
      %v6666 = vadd.f32 %v6637, %v6658
      %v6667 = vadd.f32 %v6638, %v6659
      %v6668 = vadd.f32 %v6639, %v6660
      %v6669 = vadd.f32 %v6640, %v6661
      %v6670 = vadd.f32 %v6641, %v6662
      %v6671 = vadd.f32 %v6642, %v6663
      %v6672 = vmul.f32 %v6524, %v6055
      %v6673 = vmul.f32 %v6523, %v6059
      %v6674 = vmul.f32 %v6522, %v6063
      %v6675 = vmul.f32 %v6521, %v6067
      %v6676 = vmul.f32 %v6520, %v6071
      %v6677 = vmul.f32 %v6519, %v6075
      %v6678 = vmul.f32 %v6526, %v6079
      %v6679 = vmul.f32 %v6525, %v6083
      %v6680 = vld [vmem:[%s17 + $0x8] sm:$0x1]
      %v6681 = vlaneseq
      %v6682 = vshrl.u32 %v6681, 7
      %v6683 = vsub.s32 0, %v6682
      %v6684 = vrot.slane %v6680, %v6683
      %v6685 = vmul.f32 %v6672, %v6684
      %v6686 = vmul.f32 %v6673, %v6684
      %v6687 = vmul.f32 %v6674, %v6684
      %v6688 = vmul.f32 %v6675, %v6684
      %v6689 = vmul.f32 %v6676, %v6684
      %v6690 = vmul.f32 %v6677, %v6684
      %v6691 = vmul.f32 %v6678, %v6684
      %v6692 = vmul.f32 %v6679, %v6684
      %v6693 = vadd.f32 %v6664, %v6685
      %v6694 = vadd.f32 %v6665, %v6686
      %v6695 = vadd.f32 %v6666, %v6687
      %v6696 = vadd.f32 %v6667, %v6688
      %v6697 = vadd.f32 %v6668, %v6689
      %v6698 = vadd.f32 %v6669, %v6690
      %v6699 = vadd.f32 %v6670, %v6691
      %v6700 = vadd.f32 %v6671, %v6692
      %v6701 = vld [vmem:[%s5] sm:$0xf]
      %v6702 = vld [vmem:[%s5 + $0x4] sm:$0xf]
      %v6703 = vpack.c.bf16 %v6694, %v6693
      %v6704 = vpack.c.bf16 %v6696, %v6695
      %v6705 = vpack.c.bf16 %v6698, %v6697
      %v6706 = vpack.c.bf16 %v6700, %v6699
      %v6707 = vld [vmem:[%s6 + $0xa] sm:$0x1]
      %v6709 = vlaneseq
      %v6710 = vshrl.u32 %v6709, 7
      %v6711 = vsub.s32 0, %v6710
      %v6712 = vrot.slane %v6707, %v6711
      %v6716 = vunpack.c.l.b16 %v6701
      %v6717 = vunpack.c.l.b16 %v6702
      %v6718 = vpack.c.b16 %v6717, %v6716
      %v6720 = vsel %vm5113, %v6718, 0
      %6722 = vmatprep.subr.bf16.mxu0 0
      %6723 = vmatpush1.bf16.msra.mxu0 0
      %6724 = vmatprep.subr.bf16.mxu0 0
      %6725 = vmatpush1.bf16.msra.mxu0 0
      %6726 = vmatprep.subr.bf16.mxu0 0
      %6727 = vmatpush1.bf16.msra.mxu0 0
      %6728 = vmatprep.subr.bf16.mxu0 0
      %6729 = vmatpush1.bf16.msra.mxu0 0
      %6730 = vmatprep.subr.bf16.mxu0 0
      %6731 = vmatpush1.bf16.msra.mxu0 %v6706
      %6732 = vmatprep.subr.bf16.mxu0 0
      %6733 = vmatpush1.bf16.msra.mxu0 %v6705
      %6734 = vmatprep.subr.bf16.mxu0 0
      %6735 = vmatpush1.bf16.msra.mxu0 %v6704
      %6736 = vmatprep.subr.bf16.mxu0 0
      %6737 = vmatpush1.bf16.msra.mxu0 %v6703
      %6738 = vmatprep.subr.bf16.mxu0 0
      %6739 = vmatpush2.bf16.msra.mxu0 0
      %6740 = vmatprep.subr.bf16.mxu0 0
      %6741 = vmatpush2.bf16.msra.mxu0 0
      %6742 = vmatprep.subr.bf16.mxu0 0
      %6743 = vmatpush2.bf16.msra.mxu0 0
      %6744 = vmatprep.subr.bf16.mxu0 0
      %6745 = vmatpush2.bf16.msra.mxu0 0
      %6746 = vmatprep.subr.bf16.mxu0 0
      %6747 = vmatpush2.bf16.msra.mxu0 0
      %6748 = vmatprep.subr.bf16.mxu0 0
      %6749 = vmatpush2.bf16.msra.mxu0 0
      %6750 = vmatprep.subr.bf16.mxu0 0
      %6751 = vmatpush2.bf16.msra.mxu0 0
      %6752 = vmatprep.subr.bf16.mxu0 0
      %6753 = vmatpush2.bf16.msra.mxu0 0
      %6754 = vmatprep.mubr.bf16.mxu0 0
      %6755 = vmatmul.mubr.bf16.gmra.mxu0 %v6720
      %v6756 = vpop.f32.mrf.mxu0
      %v6757 = vadd.f32 %v6712, %v6756
      %v6758 = vpop.f32.mrf.mxu0
      %v6759 = vpop.f32.mrf.mxu0
      %v6760 = vadd.f32 %v6712, %v6759
      %v6761 = vpop.f32.mrf.mxu0
      %6762 = vdwg.mxu0
      %v6763 = vadd.f32 %v6757, 3.0
      %v6764 = vadd.f32 %v6760, 3.0
      %v6765 = vmax.f32 %v6763, 0.0
      %v6766 = vmax.f32 %v6764, 0.0
      %v6767 = vmin.f32 %v6765, 6.0
      %v6768 = vmin.f32 %v6766, 6.0
      %v6769 = vmul.f32 %v6757, %v6767
      %v6770 = vmul.f32 %v6760, %v6768
      %v6771 = vmul.f32 %v6769, 0.16666667
      %v6772 = vmul.f32 %v6770, 0.16666667
      %v6773 = vld [vmem:[%s6 + $0xb] sm:$0x1]
      %v6774 = vld [vmem:[%s6 + $0xc] sm:$0x1]
      %vm6775 = vcmask 785408
      %v6776 = vsel %vm6775, %v6771, 0.0
      %v6777 = vsel %vm6775, %v6772, 0.0
      %v6778 = vadd.f32 %v6776, %v6777
      %v6779 = vrot.slane %v6778, 4
      %v6780 = vadd.f32 %v6778, %v6779
      %v6781 = vrot.slane %v6780, 2
      %v6782 = vadd.f32 %v6780, %v6781
      %v6783 = vrot.slane %v6782, 1
      %v6784 = vadd.f32 %v6782, %v6783
      %v6785 = vmul.f32 %v6784, 0.0625
      %v6786 = vpack.c.bf16 %v6785, %v6785
      %v6787 = vld [vmem:[%s18] sm:$0xf]
      %v6788 = vld [vmem:[%s18 + $0x4] sm:$0xf]
      %v6789 = vld [vmem:[%s18 + $0x8] sm:$0xf]
      %v6790 = vld [vmem:[%s18 + $0xc] sm:$0xf]
      %v6791 = vld [vmem:[%s18 + $0x10] sm:$0xf]
      %v6792 = vld [vmem:[%s18 + $0x14] sm:$0xf]
      %v6793 = vld [vmem:[%s18 + $0x18] sm:$0xf]
      %v6794 = vld [vmem:[%s18 + $0x1c] sm:$0xf]
      %v6795 = vld [vmem:[%s18 + $0x20] sm:$0xf]
      %v6796 = vld [vmem:[%s18 + $0x24] sm:$0xf]
      %v6797 = vld [vmem:[%s18 + $0x28] sm:$0xf]
      %v6798 = vld [vmem:[%s18 + $0x2c] sm:$0xf]
      %v6811 = vunpack.c.l.b16 %v6787
      %v6812 = vunpack.c.l.b16 %v6788
      %v6813 = vunpack.c.l.b16 %v6789
      %v6814 = vunpack.c.l.b16 %v6790
      %v6815 = vunpack.c.l.b16 %v6791
      %v6816 = vunpack.c.l.b16 %v6792
      %v6817 = vunpack.c.l.b16 %v6793
      %v6818 = vunpack.c.l.b16 %v6794
      %v6819 = vunpack.c.l.b16 %v6795
      %v6820 = vunpack.c.l.b16 %v6796
      %v6821 = vunpack.c.l.b16 %v6797
      %v6822 = vunpack.c.l.b16 %v6798
      %v6823 = vpack.c.b16 %v6812, %v6811
      %v6824 = vpack.c.b16 %v6814, %v6813
      %v6825 = vpack.c.b16 %v6816, %v6815
      %v6826 = vpack.c.b16 %v6818, %v6817
      %v6827 = vpack.c.b16 %v6820, %v6819
      %v6828 = vpack.c.b16 %v6822, %v6821
      %v6836 = vsel %vm6775, %v6786, 0
      %6838 = vmatprep.subr.bf16.mxu0 0
      %6839 = vmatpush1.bf16.msra.mxu0 0
      %6840 = vmatprep.subr.bf16.mxu0 0
      %6841 = vmatpush1.bf16.msra.mxu0 0
      %6842 = vmatprep.subr.bf16.mxu0 0
      %6843 = vmatpush1.bf16.msra.mxu0 %v6828
      %6844 = vmatprep.subr.bf16.mxu0 0
      %6845 = vmatpush1.bf16.msra.mxu0 %v6827
      %6846 = vmatprep.subr.bf16.mxu0 0
      %6847 = vmatpush1.bf16.msra.mxu0 %v6826
      %6848 = vmatprep.subr.bf16.mxu0 0
      %6849 = vmatpush1.bf16.msra.mxu0 %v6825
      %6850 = vmatprep.subr.bf16.mxu0 0
      %6851 = vmatpush1.bf16.msra.mxu0 %v6824
      %6852 = vmatprep.subr.bf16.mxu0 0
      %6853 = vmatpush1.bf16.msra.mxu0 %v6823
      %6854 = vmatprep.subr.bf16.mxu0 0
      %6855 = vmatpush2.bf16.msra.mxu0 0
      %6856 = vmatprep.subr.bf16.mxu0 0
      %6857 = vmatpush2.bf16.msra.mxu0 0
      %6858 = vmatprep.subr.bf16.mxu0 0
      %6859 = vmatpush2.bf16.msra.mxu0 0
      %6860 = vmatprep.subr.bf16.mxu0 0
      %6861 = vmatpush2.bf16.msra.mxu0 0
      %6862 = vmatprep.subr.bf16.mxu0 0
      %6863 = vmatpush2.bf16.msra.mxu0 0
      %6864 = vmatprep.subr.bf16.mxu0 0
      %6865 = vmatpush2.bf16.msra.mxu0 0
      %6866 = vmatprep.subr.bf16.mxu0 0
      %6867 = vmatpush2.bf16.msra.mxu0 0
      %6868 = vmatprep.subr.bf16.mxu0 0
      %6869 = vmatpush2.bf16.msra.mxu0 0
      %6870 = vmatprep.mubr.bf16.mxu0 0
      %6871 = vmatmul.mubr.bf16.gmra.mxu0 %v6836
      %v6872 = vpop.f32.mrf.mxu0
      %v6873 = vadd.f32 %v6773, %v6872
      %v6874 = vpop.f32.mrf.mxu0
      %v6875 = vpop.f32.mrf.mxu0
      %v6876 = vpop.f32.mrf.mxu0
      %6877 = vdwg.mxu0
      %v6878 = vmax.f32 %v6873, 0.0
      %v6879 = vpack.c.bf16 %v6878, %v6878
      %v6880 = vld [vmem:[%s19] sm:$0xf]
      %v6881 = vld [vmem:[%s19 + $0x4] sm:$0xf]
      %v6882 = vld [vmem:[%s19 + $0x8] sm:$0xf]
      %v6886 = vunpack.c.l.b16 %v6880
      %v6887 = vunpack.c.l.b16 %v6881
      %v6888 = vunpack.c.l.b16 %v6882
      %v6889 = vpack.c.b16 %v6887, %v6886
      %v6890 = vpack.c.b16 %v6888, %v6888
      %v6893 = vsel %vm5475, %v6879, 0
      %v6896 = vsel %vm5488, %v6890, 0
      %6898 = vmatprep.subr.bf16.mxu0 0
      %6899 = vmatpush1.bf16.msra.mxu0 0
      %6900 = vmatprep.subr.bf16.mxu0 0
      %6901 = vmatpush1.bf16.msra.mxu0 0
      %6902 = vmatprep.subr.bf16.mxu0 0
      %6903 = vmatpush1.bf16.msra.mxu0 0
      %6904 = vmatprep.subr.bf16.mxu0 0
      %6905 = vmatpush1.bf16.msra.mxu0 0
      %6906 = vmatprep.subr.bf16.mxu0 0
      %6907 = vmatpush1.bf16.msra.mxu0 0
      %6908 = vmatprep.subr.bf16.mxu0 0
      %6909 = vmatpush1.bf16.msra.mxu0 0
      %6910 = vmatprep.subr.bf16.mxu0 0
      %6911 = vmatpush1.bf16.msra.mxu0 %v6896
      %6912 = vmatprep.subr.bf16.mxu0 0
      %6913 = vmatpush1.bf16.msra.mxu0 %v6889
      %6914 = vmatprep.subr.bf16.mxu0 0
      %6915 = vmatpush2.bf16.msra.mxu0 0
      %6916 = vmatprep.subr.bf16.mxu0 0
      %6917 = vmatpush2.bf16.msra.mxu0 0
      %6918 = vmatprep.subr.bf16.mxu0 0
      %6919 = vmatpush2.bf16.msra.mxu0 0
      %6920 = vmatprep.subr.bf16.mxu0 0
      %6921 = vmatpush2.bf16.msra.mxu0 0
      %6922 = vmatprep.subr.bf16.mxu0 0
      %6923 = vmatpush2.bf16.msra.mxu0 0
      %6924 = vmatprep.subr.bf16.mxu0 0
      %6925 = vmatpush2.bf16.msra.mxu0 0
      %6926 = vmatprep.subr.bf16.mxu0 0
      %6927 = vmatpush2.bf16.msra.mxu0 0
      %6928 = vmatprep.subr.bf16.mxu0 0
      %6929 = vmatpush2.bf16.msra.mxu0 0
      %6930 = vmatprep.mubr.bf16.mxu0 0
      %6931 = vmatmul.mubr.bf16.gmra.mxu0 %v6893
      %v6932 = vpop.f32.mrf.mxu0
      %v6933 = vadd.f32 %v6774, %v6932
      %v6934 = vpop.f32.mrf.mxu0
      %v6935 = vpop.f32.mrf.mxu0
      %v6936 = vpop.f32.mrf.mxu0
      %6937 = vdwg.mxu0
      %v6938 = vadd.f32 %v6933, 3.0
      %v6939 = vmax.f32 %v6938, 0.0
      %v6940 = vmin.f32 %v6939, 6.0
      %v6941 = vmul.f32 %v6940, 0.16666667
      %v6942 = vlaneseq
      %v6943 = vshrl.u32 %v6942, 7
      %v6944 = vsub.s32 0, %v6943
      %v6945 = vrot.slane %v6941, %v6944
      %v6946 = vmul.f32 %v6771, %v6945
      %v6947 = vmul.f32 %v6772, %v6945
      %v6948 = vpack.c.bf16 %v6947, %v6946
      %v6949 = vld [vmem:[%s20] sm:$0xf]
      %v6950 = vld [vmem:[%s20 + $0x4] sm:$0xf]
      %v6951 = vld [vmem:[%s20 + $0x8] sm:$0xf]
      %v6952 = vld [vmem:[%s20 + $0xc] sm:$0xf]
      %v6953 = vld [vmem:[%s20 + $0x10] sm:$0xf]
      %v6954 = vld [vmem:[%s20 + $0x14] sm:$0xf]
      %v6955 = vld [vmem:[%s20 + $0x18] sm:$0xf]
      %v6956 = vld [vmem:[%s20 + $0x1c] sm:$0xf]
      %v6957 = vld [vmem:[%s20 + $0x20] sm:$0xf]
      %v6958 = vld [vmem:[%s20 + $0x24] sm:$0xf]
      %v6959 = vld [vmem:[%s20 + $0x28] sm:$0xf]
      %v6960 = vld [vmem:[%s20 + $0x2c] sm:$0xf]
      %v6961 = vld [vmem:[%s6 + $0xd] sm:$0x1]
      %v6963 = vlaneseq
      %v6964 = vshrl.u32 %v6963, 7
      %v6965 = vsub.s32 0, %v6964
      %v6966 = vrot.slane %v6961, %v6965
      %v6980 = vunpack.c.l.b16 %v6949
      %v6981 = vunpack.c.l.b16 %v6950
      %v6982 = vunpack.c.l.b16 %v6951
      %v6983 = vunpack.c.l.b16 %v6952
      %v6984 = vunpack.c.l.b16 %v6953
      %v6985 = vunpack.c.l.b16 %v6954
      %v6986 = vunpack.c.l.b16 %v6955
      %v6987 = vunpack.c.l.b16 %v6956
      %v6988 = vunpack.c.l.b16 %v6957
      %v6989 = vunpack.c.l.b16 %v6958
      %v6990 = vunpack.c.l.b16 %v6959
      %v6991 = vunpack.c.l.b16 %v6960
      %v6992 = vpack.c.b16 %v6981, %v6980
      %v6993 = vpack.c.b16 %v6983, %v6982
      %v6994 = vpack.c.b16 %v6985, %v6984
      %v6995 = vpack.c.b16 %v6987, %v6986
      %v6996 = vpack.c.b16 %v6989, %v6988
      %v6997 = vpack.c.b16 %v6991, %v6990
      %v7005 = vsel %vm6775, %v6948, 0
      %7007 = vmatprep.subr.bf16.mxu0 0
      %7008 = vmatpush1.bf16.msra.mxu0 0
      %7009 = vmatprep.subr.bf16.mxu0 0
      %7010 = vmatpush1.bf16.msra.mxu0 0
      %7011 = vmatprep.subr.bf16.mxu0 0
      %7012 = vmatpush1.bf16.msra.mxu0 %v6997
      %7013 = vmatprep.subr.bf16.mxu0 0
      %7014 = vmatpush1.bf16.msra.mxu0 %v6996
      %7015 = vmatprep.subr.bf16.mxu0 0
      %7016 = vmatpush1.bf16.msra.mxu0 %v6995
      %7017 = vmatprep.subr.bf16.mxu0 0
      %7018 = vmatpush1.bf16.msra.mxu0 %v6994
      %7019 = vmatprep.subr.bf16.mxu0 0
      %7020 = vmatpush1.bf16.msra.mxu0 %v6993
      %7021 = vmatprep.subr.bf16.mxu0 0
      %7022 = vmatpush1.bf16.msra.mxu0 %v6992
      %7023 = vmatprep.subr.bf16.mxu0 0
      %7024 = vmatpush2.bf16.msra.mxu0 0
      %7025 = vmatprep.subr.bf16.mxu0 0
      %7026 = vmatpush2.bf16.msra.mxu0 0
      %7027 = vmatprep.subr.bf16.mxu0 0
      %7028 = vmatpush2.bf16.msra.mxu0 0
      %7029 = vmatprep.subr.bf16.mxu0 0
      %7030 = vmatpush2.bf16.msra.mxu0 0
      %7031 = vmatprep.subr.bf16.mxu0 0
      %7032 = vmatpush2.bf16.msra.mxu0 0
      %7033 = vmatprep.subr.bf16.mxu0 0
      %7034 = vmatpush2.bf16.msra.mxu0 0
      %7035 = vmatprep.subr.bf16.mxu0 0
      %7036 = vmatpush2.bf16.msra.mxu0 0
      %7037 = vmatprep.subr.bf16.mxu0 0
      %7038 = vmatpush2.bf16.msra.mxu0 0
      %7039 = vmatprep.mubr.bf16.mxu0 0
      %7040 = vmatmul.mubr.bf16.gmra.mxu0 %v7005
      %v7041 = vpop.f32.mrf.mxu0
      %v7042 = vadd.f32 %v6966, %v7041
      %v7043 = vpop.f32.mrf.mxu0
      %v7044 = vpop.f32.mrf.mxu0
      %v7045 = vadd.f32 %v6966, %v7044
      %v7046 = vpop.f32.mrf.mxu0
      %7047 = vdwg.mxu0
      %v7048 = vpack.c.bf16 %v7045, %v7042
      %v7049 = vld [vmem:[%s21] sm:$0xf]
      %v7050 = vld [vmem:[%s21 + $0x4] sm:$0xf]
      %v7051 = vld [vmem:[%s21 + $0x8] sm:$0xf]
      %v7052 = vld [vmem:[%s21 + $0xc] sm:$0xf]
      %v7053 = vld [vmem:[%s21 + $0x10] sm:$0xf]
      %v7054 = vld [vmem:[%s6 + $0xe] sm:$0x1]
      %v7056 = vlaneseq
      %v7057 = vshrl.u32 %v7056, 7
      %v7058 = vsub.s32 0, %v7057
      %v7059 = vrot.slane %v7054, %v7058
      %v7066 = vunpack.c.l.b16 %v7049
      %v7067 = vunpack.c.l.b16 %v7050
      %v7068 = vunpack.c.l.b16 %v7051
      %v7069 = vunpack.c.l.b16 %v7052
      %v7070 = vunpack.c.l.b16 %v7053
      %v7071 = vpack.c.b16 %v7067, %v7066
      %v7072 = vpack.c.b16 %v7069, %v7068
      %v7073 = vpack.c.b16 %v7070, %v7070
      %vm7076 = vcmask 326656
      %v7078 = vsel %vm7076, %v7048, 0
      %v7081 = vsel %vm5488, %v7073, 0
      %7083 = vmatprep.subr.bf16.mxu0 0
      %7084 = vmatpush1.bf16.msra.mxu0 0
      %7085 = vmatprep.subr.bf16.mxu0 0
      %7086 = vmatpush1.bf16.msra.mxu0 0
      %7087 = vmatprep.subr.bf16.mxu0 0
      %7088 = vmatpush1.bf16.msra.mxu0 0
      %7089 = vmatprep.subr.bf16.mxu0 0
      %7090 = vmatpush1.bf16.msra.mxu0 0
      %7091 = vmatprep.subr.bf16.mxu0 0
      %7092 = vmatpush1.bf16.msra.mxu0 0
      %7093 = vmatprep.subr.bf16.mxu0 0
      %7094 = vmatpush1.bf16.msra.mxu0 %v7081
      %7095 = vmatprep.subr.bf16.mxu0 0
      %7096 = vmatpush1.bf16.msra.mxu0 %v7072
      %7097 = vmatprep.subr.bf16.mxu0 0
      %7098 = vmatpush1.bf16.msra.mxu0 %v7071
      %7099 = vmatprep.subr.bf16.mxu0 0
      %7100 = vmatpush2.bf16.msra.mxu0 0
      %7101 = vmatprep.subr.bf16.mxu0 0
      %7102 = vmatpush2.bf16.msra.mxu0 0
      %7103 = vmatprep.subr.bf16.mxu0 0
      %7104 = vmatpush2.bf16.msra.mxu0 0
      %7105 = vmatprep.subr.bf16.mxu0 0
      %7106 = vmatpush2.bf16.msra.mxu0 0
      %7107 = vmatprep.subr.bf16.mxu0 0
      %7108 = vmatpush2.bf16.msra.mxu0 0
      %7109 = vmatprep.subr.bf16.mxu0 0
      %7110 = vmatpush2.bf16.msra.mxu0 0
      %7111 = vmatprep.subr.bf16.mxu0 0
      %7112 = vmatpush2.bf16.msra.mxu0 0
      %7113 = vmatprep.subr.bf16.mxu0 0
      %7114 = vmatpush2.bf16.msra.mxu0 0
      %7115 = vmatprep.mubr.bf16.mxu0 0
      %7116 = vmatmul.mubr.bf16.gmra.mxu0 %v7078
      %v7117 = vpop.f32.mrf.mxu0
      %v7118 = vadd.f32 %v7059, %v7117
      %v7119 = vpop.f32.mrf.mxu0
      %v7120 = vpop.f32.mrf.mxu0
      %v7121 = vadd.f32 %v7059, %v7120
      %v7122 = vpop.f32.mrf.mxu0
      %7123 = vdwg.mxu0
      %v7124 = vadd.f32 %v7118, 3.0
      %v7125 = vadd.f32 %v7121, 3.0
      %v7126 = vmax.f32 %v7124, 0.0
      %v7127 = vmax.f32 %v7125, 0.0
      %v7128 = vmin.f32 %v7126, 6.0
      %v7129 = vmin.f32 %v7127, 6.0
      %v7130 = vmul.f32 %v7118, %v7128
      %v7131 = vmul.f32 %v7121, %v7129
      %v7132 = vmul.f32 %v7130, 0.16666667
      %v7133 = vmul.f32 %v7131, 0.16666667
      %v7134 = vld [vmem:[%s22 + $0x4] sm:$0x1]
      %v7135 = vlaneseq
      %v7136 = vshrl.u32 %v7135, 7
      %v7137 = vsub.s32 0, %v7136
      %v7138 = vrot.slane %v7134, %v7137
      %v7139 = vmul.f32 %v7132, %v7138
      %v7140 = vmul.f32 %v7133, %v7138
      %v7141 = vrot.slane %v7132, 3
      %v7142 = vrot.slane %v7133, 3
      %vm7143 = vcmp.lt.s32.totalorder %v1403, 5
      %v7144 = vsel %vm7143, %v7141, %v7142
      %v7145 = vsel %vm7143, %v7142, %v7141
      %v7146 = vld [vmem:[%s3] sm:$0xff]
      %v7147 = vld [vmem:[%s3 + $0x8] sm:$0xff]
      %7149 = vset.pattern.permute.xlu0 0
      %7150 = vperm.xlu0 %7149, %v7146
      %v7151 = vpop.permute.xlu0 %7150
      %7154 = vset.pattern.permute.xlu0 0
      %7155 = vperm.xlu0 %7154, %v7147
      %v7156 = vpop.permute.xlu0 %7155
      %v7158 = vmul.f32 %v7145, %v7151
      %v7159 = vmul.f32 %v7144, %v7156
      %v7160 = vld [vmem:[%s22] sm:$0x1]
      %v7161 = vlaneseq
      %v7162 = vshrl.u32 %v7161, 7
      %v7163 = vsub.s32 0, %v7162
      %v7164 = vrot.slane %v7160, %v7163
      %v7165 = vmul.f32 %v7158, %v7164
      %v7166 = vmul.f32 %v7159, %v7164
      %v7167 = vadd.f32 %v7139, %v7165
      %v7168 = vadd.f32 %v7140, %v7166
      %v7169 = vrot.slane %v7132, 4
      %v7170 = vrot.slane %v7133, 4
      %vm7171 = vcmp.lt.s32.totalorder %v1403, 4
      %v7172 = vsel %vm7171, %v7169, %v7170
      %v7173 = vsel %vm7171, %v7170, %v7169
      %7174 = vset.pattern.permute.xlu0 1
      %7175 = vperm.xlu0 %7174, %v7146
      %v7176 = vpop.permute.xlu0 %7175
      %7178 = vset.pattern.permute.xlu0 1
      %7179 = vperm.xlu0 %7178, %v7147
      %v7180 = vpop.permute.xlu0 %7179
      %v7182 = vmul.f32 %v7173, %v7176
      %v7183 = vmul.f32 %v7172, %v7180
      %v7184 = vld [vmem:[%s22 + $0x1] sm:$0x1]
      %v7185 = vlaneseq
      %v7186 = vshrl.u32 %v7185, 7
      %v7187 = vsub.s32 0, %v7186
      %v7188 = vrot.slane %v7184, %v7187
      %v7189 = vmul.f32 %v7182, %v7188
      %v7190 = vmul.f32 %v7183, %v7188
      %v7191 = vadd.f32 %v7167, %v7189
      %v7192 = vadd.f32 %v7168, %v7190
      %v7193 = vrot.slane %v7132, 5
      %v7194 = vrot.slane %v7133, 5
      %vm7195 = vcmp.lt.s32.totalorder %v1403, 3
      %v7196 = vsel %vm7195, %v7193, %v7194
      %v7197 = vsel %vm7195, %v7194, %v7193
      %7198 = vset.pattern.permute.xlu0 2
      %7199 = vperm.xlu0 %7198, %v7146
      %v7200 = vpop.permute.xlu0 %7199
      %7202 = vset.pattern.permute.xlu0 2
      %7203 = vperm.xlu0 %7202, %v7147
      %v7204 = vpop.permute.xlu0 %7203
      %v7206 = vmul.f32 %v7197, %v7200
      %v7207 = vmul.f32 %v7196, %v7204
      %v7208 = vld [vmem:[%s22 + $0x2] sm:$0x1]
      %v7209 = vlaneseq
      %v7210 = vshrl.u32 %v7209, 7
      %v7211 = vsub.s32 0, %v7210
      %v7212 = vrot.slane %v7208, %v7211
      %v7213 = vmul.f32 %v7206, %v7212
      %v7214 = vmul.f32 %v7207, %v7212
      %v7215 = vadd.f32 %v7191, %v7213
      %v7216 = vadd.f32 %v7192, %v7214
      %v7217 = vrot.slane %v7132, 7
      %v7218 = vrot.slane %v7133, 7
      %v7219 = vsel %vm1404, %v7217, %v7218
      %v7220 = vsel %vm1404, %v7218, %v7217
      %7221 = vset.pattern.permute.xlu0 3
      %7222 = vperm.xlu0 %7221, %v7146
      %v7223 = vpop.permute.xlu0 %7222
      %7225 = vset.pattern.permute.xlu0 3
      %7226 = vperm.xlu0 %7225, %v7147
      %v7227 = vpop.permute.xlu0 %7226
      %v7229 = vmul.f32 %v7220, %v7223
      %v7230 = vmul.f32 %v7219, %v7227
      %v7231 = vld [vmem:[%s22 + $0x3] sm:$0x1]
      %v7232 = vlaneseq
      %v7233 = vshrl.u32 %v7232, 7
      %v7234 = vsub.s32 0, %v7233
      %v7235 = vrot.slane %v7231, %v7234
      %v7236 = vmul.f32 %v7229, %v7235
      %v7237 = vmul.f32 %v7230, %v7235
      %v7238 = vadd.f32 %v7215, %v7236
      %v7239 = vadd.f32 %v7216, %v7237
      %v7240 = vrot.slane %v7132, 1
      %v7241 = vrot.slane %v7133, 1
      %v7242 = vsel %vm1991, %v7240, %v7241
      %v7243 = vsel %vm1991, %v7241, %v7240
      %7244 = vset.pattern.permute.xlu0 5
      %7245 = vperm.xlu0 %7244, %v7146
      %v7246 = vpop.permute.xlu0 %7245
      %7248 = vset.pattern.permute.xlu0 5
      %7249 = vperm.xlu0 %7248, %v7147
      %v7250 = vpop.permute.xlu0 %7249
      %v7252 = vmul.f32 %v7242, %v7246
      %v7253 = vmul.f32 %v7243, %v7250
      %v7254 = vld [vmem:[%s22 + $0x5] sm:$0x1]
      %v7255 = vlaneseq
      %v7256 = vshrl.u32 %v7255, 7
      %v7257 = vsub.s32 0, %v7256
      %v7258 = vrot.slane %v7254, %v7257
      %v7259 = vmul.f32 %v7252, %v7258
      %v7260 = vmul.f32 %v7253, %v7258
      %v7261 = vadd.f32 %v7238, %v7259
      %v7262 = vadd.f32 %v7239, %v7260
      %7263 = vset.pattern.permute.xlu0 6
      %7264 = vperm.xlu0 %7263, %v7146
      %v7265 = vpop.permute.xlu0 %7264
      %7267 = vset.pattern.permute.xlu0 6
      %7268 = vperm.xlu0 %7267, %v7147
      %v7269 = vpop.permute.xlu0 %7268
      %v7271 = vmul.f32 %v7144, %v7265
      %v7272 = vmul.f32 %v7145, %v7269
      %v7273 = vld [vmem:[%s22 + $0x6] sm:$0x1]
      %v7274 = vlaneseq
      %v7275 = vshrl.u32 %v7274, 7
      %v7276 = vsub.s32 0, %v7275
      %v7277 = vrot.slane %v7273, %v7276
      %v7278 = vmul.f32 %v7271, %v7277
      %v7279 = vmul.f32 %v7272, %v7277
      %v7280 = vadd.f32 %v7261, %v7278
      %v7281 = vadd.f32 %v7262, %v7279
      %7282 = vset.pattern.permute.xlu0 7
      %7283 = vperm.xlu0 %7282, %v7146
      %v7284 = vpop.permute.xlu0 %7283
      %7286 = vset.pattern.permute.xlu0 7
      %7287 = vperm.xlu0 %7286, %v7147
      %v7288 = vpop.permute.xlu0 %7287
      %v7290 = vmul.f32 %v7172, %v7284
      %v7291 = vmul.f32 %v7173, %v7288
      %v7292 = vld [vmem:[%s22 + $0x7] sm:$0x1]
      %v7293 = vlaneseq
      %v7294 = vshrl.u32 %v7293, 7
      %v7295 = vsub.s32 0, %v7294
      %v7296 = vrot.slane %v7292, %v7295
      %v7297 = vmul.f32 %v7290, %v7296
      %v7298 = vmul.f32 %v7291, %v7296
      %v7299 = vadd.f32 %v7280, %v7297
      %v7300 = vadd.f32 %v7281, %v7298
      %7301 = vset.pattern.permute.xlu0 8
      %7302 = vperm.xlu0 %7301, %v7146
      %v7303 = vpop.permute.xlu0 %7302
      %7305 = vset.pattern.permute.xlu0 8
      %7306 = vperm.xlu0 %7305, %v7147
      %v7307 = vpop.permute.xlu0 %7306
      %v7309 = vmul.f32 %v7196, %v7303
      %v7310 = vmul.f32 %v7197, %v7307
      %v7311 = vld [vmem:[%s22 + $0x8] sm:$0x1]
      %v7312 = vlaneseq
      %v7313 = vshrl.u32 %v7312, 7
      %v7314 = vsub.s32 0, %v7313
      %v7315 = vrot.slane %v7311, %v7314
      %v7316 = vmul.f32 %v7309, %v7315
      %v7317 = vmul.f32 %v7310, %v7315
      %v7318 = vadd.f32 %v7299, %v7316
      %v7319 = vadd.f32 %v7300, %v7317
      %v7320 = vld [vmem:[%s6 + $0xf] sm:$0x1]
      %v7322 = vlaneseq
      %v7323 = vshrl.u32 %v7322, 7
      %v7324 = vsub.s32 0, %v7323
      %v7325 = vrot.slane %v7320, %v7324
      %v7327 = vadd.f32 %v7318, %v7325
      %v7328 = vadd.f32 %v7319, %v7325
      %v7329 = vadd.f32 %v7327, 3.0
      %v7330 = vadd.f32 %v7328, 3.0
      %v7331 = vmax.f32 %v7329, 0.0
      %v7332 = vmax.f32 %v7330, 0.0
      %v7333 = vmin.f32 %v7331, 6.0
      %v7334 = vmin.f32 %v7332, 6.0
      %v7335 = vmul.f32 %v7327, %v7333
      %v7336 = vmul.f32 %v7328, %v7334
      %v7337 = vmul.f32 %v7335, 0.16666667
      %v7338 = vmul.f32 %v7336, 0.16666667
      %v7339 = vld [vmem:[%s6 + $0x10] sm:$0x1]
      %v7340 = vld [vmem:[%s6 + $0x11] sm:$0x1]
      %vm7341 = vcmask 982016
      %v7342 = vsel %vm7341, %v7337, 0.0
      %v7343 = vsel %vm7341, %v7338, 0.0
      %v7344 = vadd.f32 %v7342, %v7343
      %v7345 = vrot.slane %v7344, 4
      %v7346 = vadd.f32 %v7344, %v7345
      %v7347 = vrot.slane %v7346, 2
      %v7348 = vadd.f32 %v7346, %v7347
      %v7349 = vrot.slane %v7348, 1
      %v7350 = vadd.f32 %v7348, %v7349
      %v7351 = vmul.f32 %v7350, 0.0625
      %v7352 = vpack.c.bf16 %v7351, %v7351
      %v7353 = vld [vmem:[%s23] sm:$0xf]
      %v7354 = vld [vmem:[%s23 + $0x4] sm:$0xf]
      %v7355 = vld [vmem:[%s23 + $0x8] sm:$0xf]
      %v7356 = vld [vmem:[%s23 + $0xc] sm:$0xf]
      %v7357 = vld [vmem:[%s23 + $0x10] sm:$0xf]
      %v7358 = vld [vmem:[%s23 + $0x14] sm:$0xf]
      %v7359 = vld [vmem:[%s23 + $0x18] sm:$0xf]
      %v7360 = vld [vmem:[%s23 + $0x1c] sm:$0xf]
      %v7361 = vld [vmem:[%s23 + $0x20] sm:$0xf]
      %v7362 = vld [vmem:[%s23 + $0x24] sm:$0xf]
      %v7363 = vld [vmem:[%s23 + $0x28] sm:$0xf]
      %v7364 = vld [vmem:[%s23 + $0x2c] sm:$0xf]
      %v7365 = vld [vmem:[%s23 + $0x30] sm:$0xf]
      %v7366 = vld [vmem:[%s23 + $0x34] sm:$0xf]
      %v7367 = vld [vmem:[%s23 + $0x38] sm:$0xf]
      %v7383 = vunpack.c.l.b16 %v7353
      %v7384 = vunpack.c.l.b16 %v7354
      %v7385 = vunpack.c.l.b16 %v7355
      %v7386 = vunpack.c.l.b16 %v7356
      %v7387 = vunpack.c.l.b16 %v7357
      %v7388 = vunpack.c.l.b16 %v7358
      %v7389 = vunpack.c.l.b16 %v7359
      %v7390 = vunpack.c.l.b16 %v7360
      %v7391 = vunpack.c.l.b16 %v7361
      %v7392 = vunpack.c.l.b16 %v7362
      %v7393 = vunpack.c.l.b16 %v7363
      %v7394 = vunpack.c.l.b16 %v7364
      %v7395 = vunpack.c.l.b16 %v7365
      %v7396 = vunpack.c.l.b16 %v7366
      %v7397 = vunpack.c.l.b16 %v7367
      %v7398 = vpack.c.b16 %v7384, %v7383
      %v7399 = vpack.c.b16 %v7386, %v7385
      %v7400 = vpack.c.b16 %v7388, %v7387
      %v7401 = vpack.c.b16 %v7390, %v7389
      %v7402 = vpack.c.b16 %v7392, %v7391
      %v7403 = vpack.c.b16 %v7394, %v7393
      %v7404 = vpack.c.b16 %v7396, %v7395
      %v7405 = vpack.c.b16 %v7397, %v7397
      %v7414 = vsel %vm7341, %v7352, 0
      %v7417 = vsel %vm5488, %v7405, 0
      %7419 = vmatprep.subr.bf16.mxu0 0
      %7420 = vmatpush1.bf16.msra.mxu0 %v7417
      %7421 = vmatprep.subr.bf16.mxu0 0
      %7422 = vmatpush1.bf16.msra.mxu0 %v7404
      %7423 = vmatprep.subr.bf16.mxu0 0
      %7424 = vmatpush1.bf16.msra.mxu0 %v7403
      %7425 = vmatprep.subr.bf16.mxu0 0
      %7426 = vmatpush1.bf16.msra.mxu0 %v7402
      %7427 = vmatprep.subr.bf16.mxu0 0
      %7428 = vmatpush1.bf16.msra.mxu0 %v7401
      %7429 = vmatprep.subr.bf16.mxu0 0
      %7430 = vmatpush1.bf16.msra.mxu0 %v7400
      %7431 = vmatprep.subr.bf16.mxu0 0
      %7432 = vmatpush1.bf16.msra.mxu0 %v7399
      %7433 = vmatprep.subr.bf16.mxu0 0
      %7434 = vmatpush1.bf16.msra.mxu0 %v7398
      %7435 = vmatprep.subr.bf16.mxu0 0
      %7436 = vmatpush2.bf16.msra.mxu0 0
      %7437 = vmatprep.subr.bf16.mxu0 0
      %7438 = vmatpush2.bf16.msra.mxu0 0
      %7439 = vmatprep.subr.bf16.mxu0 0
      %7440 = vmatpush2.bf16.msra.mxu0 0
      %7441 = vmatprep.subr.bf16.mxu0 0
      %7442 = vmatpush2.bf16.msra.mxu0 0
      %7443 = vmatprep.subr.bf16.mxu0 0
      %7444 = vmatpush2.bf16.msra.mxu0 0
      %7445 = vmatprep.subr.bf16.mxu0 0
      %7446 = vmatpush2.bf16.msra.mxu0 0
      %7447 = vmatprep.subr.bf16.mxu0 0
      %7448 = vmatpush2.bf16.msra.mxu0 0
      %7449 = vmatprep.subr.bf16.mxu0 0
      %7450 = vmatpush2.bf16.msra.mxu0 0
      %7451 = vmatprep.mubr.bf16.mxu0 0
      %7452 = vmatmul.mubr.bf16.gmra.mxu0 %v7414
      %v7453 = vpop.f32.mrf.mxu0
      %v7454 = vadd.f32 %v7339, %v7453
      %v7455 = vpop.f32.mrf.mxu0
      %v7456 = vpop.f32.mrf.mxu0
      %v7457 = vpop.f32.mrf.mxu0
      %7458 = vdwg.mxu0
      %v7459 = vmax.f32 %v7454, 0.0
      %v7460 = vpack.c.bf16 %v7459, %v7459
      %v7461 = vld [vmem:[%s24] sm:$0xf]
      %v7462 = vld [vmem:[%s24 + $0x4] sm:$0xf]
      %v7463 = vld [vmem:[%s24 + $0x8] sm:$0xf]
      %v7464 = vld [vmem:[%s24 + $0xc] sm:$0xf]
      %v7469 = vunpack.c.l.b16 %v7461
      %v7470 = vunpack.c.l.b16 %v7462
      %v7471 = vunpack.c.l.b16 %v7463
      %v7472 = vunpack.c.l.b16 %v7464
      %v7473 = vpack.c.b16 %v7470, %v7469
      %v7474 = vpack.c.b16 %v7472, %v7471
      %vm7477 = vcmask 261120
      %v7479 = vsel %vm7477, %v7460, 0
      %7481 = vmatprep.subr.bf16.mxu0 0
      %7482 = vmatpush1.bf16.msra.mxu0 0
      %7483 = vmatprep.subr.bf16.mxu0 0
      %7484 = vmatpush1.bf16.msra.mxu0 0
      %7485 = vmatprep.subr.bf16.mxu0 0
      %7486 = vmatpush1.bf16.msra.mxu0 0
      %7487 = vmatprep.subr.bf16.mxu0 0
      %7488 = vmatpush1.bf16.msra.mxu0 0
      %7489 = vmatprep.subr.bf16.mxu0 0
      %7490 = vmatpush1.bf16.msra.mxu0 0
      %7491 = vmatprep.subr.bf16.mxu0 0
      %7492 = vmatpush1.bf16.msra.mxu0 0
      %7493 = vmatprep.subr.bf16.mxu0 0
      %7494 = vmatpush1.bf16.msra.mxu0 %v7474
      %7495 = vmatprep.subr.bf16.mxu0 0
      %7496 = vmatpush1.bf16.msra.mxu0 %v7473
      %7497 = vmatprep.subr.bf16.mxu0 0
      %7498 = vmatpush2.bf16.msra.mxu0 0
      %7499 = vmatprep.subr.bf16.mxu0 0
      %7500 = vmatpush2.bf16.msra.mxu0 0
      %7501 = vmatprep.subr.bf16.mxu0 0
      %7502 = vmatpush2.bf16.msra.mxu0 0
      %7503 = vmatprep.subr.bf16.mxu0 0
      %7504 = vmatpush2.bf16.msra.mxu0 0
      %7505 = vmatprep.subr.bf16.mxu0 0
      %7506 = vmatpush2.bf16.msra.mxu0 0
      %7507 = vmatprep.subr.bf16.mxu0 0
      %7508 = vmatpush2.bf16.msra.mxu0 0
      %7509 = vmatprep.subr.bf16.mxu0 0
      %7510 = vmatpush2.bf16.msra.mxu0 0
      %7511 = vmatprep.subr.bf16.mxu0 0
      %7512 = vmatpush2.bf16.msra.mxu0 0
      %7513 = vmatprep.mubr.bf16.mxu0 0
      %7514 = vmatmul.mubr.bf16.gmra.mxu0 %v7479
      %v7515 = vpop.f32.mrf.mxu0
      %v7516 = vadd.f32 %v7340, %v7515
      %v7517 = vpop.f32.mrf.mxu0
      %v7518 = vpop.f32.mrf.mxu0
      %v7519 = vpop.f32.mrf.mxu0
      %7520 = vdwg.mxu0
      %v7521 = vadd.f32 %v7516, 3.0
      %v7522 = vmax.f32 %v7521, 0.0
      %v7523 = vmin.f32 %v7522, 6.0
      %v7524 = vmul.f32 %v7523, 0.16666667
      %v7525 = vlaneseq
      %v7526 = vshrl.u32 %v7525, 7
      %v7527 = vsub.s32 0, %v7526
      %v7528 = vrot.slane %v7524, %v7527
      %v7529 = vmul.f32 %v7337, %v7528
      %v7530 = vmul.f32 %v7338, %v7528
      %v7531 = vpack.c.bf16 %v7530, %v7529
      %v7532 = vld [vmem:[%s25] sm:$0xf]
      %v7533 = vld [vmem:[%s25 + $0x4] sm:$0xf]
      %v7534 = vld [vmem:[%s25 + $0x8] sm:$0xf]
      %v7535 = vld [vmem:[%s25 + $0xc] sm:$0xf]
      %v7536 = vld [vmem:[%s25 + $0x10] sm:$0xf]
      %v7537 = vld [vmem:[%s25 + $0x14] sm:$0xf]
      %v7538 = vld [vmem:[%s25 + $0x18] sm:$0xf]
      %v7539 = vld [vmem:[%s25 + $0x1c] sm:$0xf]
      %v7540 = vld [vmem:[%s25 + $0x20] sm:$0xf]
      %v7541 = vld [vmem:[%s25 + $0x24] sm:$0xf]
      %v7542 = vld [vmem:[%s25 + $0x28] sm:$0xf]
      %v7543 = vld [vmem:[%s25 + $0x2c] sm:$0xf]
      %v7544 = vld [vmem:[%s25 + $0x30] sm:$0xf]
      %v7545 = vld [vmem:[%s25 + $0x34] sm:$0xf]
      %v7546 = vld [vmem:[%s25 + $0x38] sm:$0xf]
      %v7562 = vunpack.c.l.b16 %v7532
      %v7563 = vunpack.c.l.b16 %v7533
      %v7564 = vunpack.c.l.b16 %v7534
      %v7565 = vunpack.c.l.b16 %v7535
      %v7566 = vunpack.c.l.b16 %v7536
      %v7567 = vunpack.c.l.b16 %v7537
      %v7568 = vunpack.c.l.b16 %v7538
      %v7569 = vunpack.c.l.b16 %v7539
      %v7570 = vunpack.c.l.b16 %v7540
      %v7571 = vunpack.c.l.b16 %v7541
      %v7572 = vunpack.c.l.b16 %v7542
      %v7573 = vunpack.c.l.b16 %v7543
      %v7574 = vunpack.c.l.b16 %v7544
      %v7575 = vunpack.c.l.b16 %v7545
      %v7576 = vunpack.c.l.b16 %v7546
      %v7577 = vpack.c.b16 %v7563, %v7562
      %v7578 = vpack.c.b16 %v7565, %v7564
      %v7579 = vpack.c.b16 %v7567, %v7566
      %v7580 = vpack.c.b16 %v7569, %v7568
      %v7581 = vpack.c.b16 %v7571, %v7570
      %v7582 = vpack.c.b16 %v7573, %v7572
      %v7583 = vpack.c.b16 %v7575, %v7574
      %v7584 = vpack.c.b16 %v7576, %v7576
      %v7593 = vsel %vm7341, %v7531, 0
      %v7596 = vsel %vm5488, %v7584, 0
      %7598 = vmatprep.subr.bf16.mxu0 0
      %7599 = vmatpush1.bf16.msra.mxu0 %v7596
      %7600 = vmatprep.subr.bf16.mxu0 0
      %7601 = vmatpush1.bf16.msra.mxu0 %v7583
      %7602 = vmatprep.subr.bf16.mxu0 0
      %7603 = vmatpush1.bf16.msra.mxu0 %v7582
      %7604 = vmatprep.subr.bf16.mxu0 0
      %7605 = vmatpush1.bf16.msra.mxu0 %v7581
      %7606 = vmatprep.subr.bf16.mxu0 0
      %7607 = vmatpush1.bf16.msra.mxu0 %v7580
      %7608 = vmatprep.subr.bf16.mxu0 0
      %7609 = vmatpush1.bf16.msra.mxu0 %v7579
      %7610 = vmatprep.subr.bf16.mxu0 0
      %7611 = vmatpush1.bf16.msra.mxu0 %v7578
      %7612 = vmatprep.subr.bf16.mxu0 0
      %7613 = vmatpush1.bf16.msra.mxu0 %v7577
      %7614 = vmatprep.subr.bf16.mxu0 0
      %7615 = vmatpush2.bf16.msra.mxu0 0
      %7616 = vmatprep.subr.bf16.mxu0 0
      %7617 = vmatpush2.bf16.msra.mxu0 0
      %7618 = vmatprep.subr.bf16.mxu0 0
      %7619 = vmatpush2.bf16.msra.mxu0 0
      %7620 = vmatprep.subr.bf16.mxu0 0
      %7621 = vmatpush2.bf16.msra.mxu0 0
      %7622 = vmatprep.subr.bf16.mxu0 0
      %7623 = vmatpush2.bf16.msra.mxu0 0
      %7624 = vmatprep.subr.bf16.mxu0 0
      %7625 = vmatpush2.bf16.msra.mxu0 0
      %7626 = vmatprep.subr.bf16.mxu0 0
      %7627 = vmatpush2.bf16.msra.mxu0 0
      %7628 = vmatprep.subr.bf16.mxu0 0
      %7629 = vmatpush2.bf16.msra.mxu0 0
      %7630 = vmatprep.mubr.bf16.mxu0 0
      %7631 = vmatmul.mubr.bf16.gmra.mxu0 %v7593
      %v7632 = vpop.f32.mrf.mxu0
      %v7633 = vadd.f32 0.0, %v7632
      %v7634 = vpop.f32.mrf.mxu0
      %v7635 = vpop.f32.mrf.mxu0
      %v7636 = vadd.f32 0.0, %v7635
      %v7637 = vpop.f32.mrf.mxu0
      %7638 = vdwg.mxu0
      %v7639 = vadd.f32 %v7042, %v7633
      %v7640 = vadd.f32 %v7045, %v7636
      %v7641 = vld [vmem:[%s6 + $0x12] sm:$0x1]
      %v7643 = vlaneseq
      %v7644 = vshrl.u32 %v7643, 7
      %v7645 = vsub.s32 0, %v7644
      %v7646 = vrot.slane %v7641, %v7645
      %v7648 = vadd.f32 %v7639, %v7646
      %v7649 = vadd.f32 %v7640, %v7646
      %v7650 = vpack.c.bf16 %v7649, %v7648
      %v7651 = vld [vmem:[%s26] sm:$0xff]
      %v7652 = vld [vmem:[%s26 + $0x8] sm:$0xff]
      %v7653 = vld [vmem:[%s26 + $0x10] sm:$0xff]
      %v7654 = vld [vmem:[%s26 + $0x18] sm:$0xff]
      %v7655 = vld [vmem:[%s26 + $0x20] sm:$0xff]
      %v7656 = vld [vmem:[%s26 + $0x28] sm:$0xff]
      %v7657 = vld [vmem:[%s26 + $0x30] sm:$0xff]
      %v7658 = vld [vmem:[%s26 + $0x38] sm:$0xff]
      %v7659 = vld [vmem:[%s26 + $0x40] sm:$0xff]
      %v7660 = vld [vmem:[%s26 + $0x48] sm:$0xff]
      %v7661 = vld [vmem:[%s26 + $0x50] sm:$0xff]
      %v7662 = vld [vmem:[%s26 + $0x58] sm:$0xff]
      %v7663 = vld [vmem:[%s26 + $0x60] sm:$0xff]
      %v7664 = vld [vmem:[%s26 + $0x68] sm:$0xff]
      %v7665 = vld [vmem:[%s26 + $0x70] sm:$0xff]
      %v7666 = vld [vmem:[%s26 + $0x78] sm:$0xff]
      %v7667 = vld [vmem:[%s26 + $0x80] sm:$0xff]
      %v7668 = vld [vmem:[%s26 + $0x88] sm:$0xff]
      %v7669 = vld [vmem:[%s26 + $0x90] sm:$0xff]
      %v7670 = vld [vmem:[%s26 + $0x98] sm:$0xff]
      %v7671 = vld [vmem:[%s6 + $0x13] sm:$0xff]
      %v7673 = vlaneseq
      %v7674 = vshrl.u32 %v7673, 7
      %v7675 = vsub.s32 0, %v7674
      %v7676 = vrot.slane %v7671, %v7675
      %v7677 = vlaneseq
      %v7678 = vshrl.u32 %v7677, 7
      %v7679 = vsub.s32 1, %v7678
      %v7680 = vrot.slane %v7671, %v7679
      %v7681 = vlaneseq
      %v7682 = vshrl.u32 %v7681, 7
      %v7683 = vsub.s32 2, %v7682
      %v7684 = vrot.slane %v7671, %v7683
      %v7685 = vlaneseq
      %v7686 = vshrl.u32 %v7685, 7
      %v7687 = vsub.s32 3, %v7686
      %v7688 = vrot.slane %v7671, %v7687
      %v7689 = vlaneseq
      %v7690 = vshrl.u32 %v7689, 7
      %v7691 = vsub.s32 4, %v7690
      %v7692 = vrot.slane %v7671, %v7691
      %v7693 = vlaneseq
      %v7694 = vshrl.u32 %v7693, 7
      %v7695 = vsub.s32 5, %v7694
      %v7696 = vrot.slane %v7671, %v7695
      %v7697 = vlaneseq
      %v7698 = vshrl.u32 %v7697, 7
      %v7699 = vsub.s32 6, %v7698
      %v7700 = vrot.slane %v7671, %v7699
      %v7701 = vlaneseq
      %v7702 = vshrl.u32 %v7701, 7
      %v7703 = vsub.s32 7, %v7702
      %v7704 = vrot.slane %v7671, %v7703
      %v7733 = vunpack.c.l.b16 %v7651
      %v7734 = vunpack.c.h.b16 %v7651
      %v7735 = vunpack.c.l.b16 %v7652
      %v7736 = vunpack.c.h.b16 %v7652
      %v7737 = vunpack.c.l.b16 %v7653
      %v7738 = vunpack.c.h.b16 %v7653
      %v7739 = vunpack.c.l.b16 %v7654
      %v7740 = vunpack.c.h.b16 %v7654
      %v7741 = vunpack.c.l.b16 %v7655
      %v7742 = vunpack.c.h.b16 %v7655
      %v7743 = vunpack.c.l.b16 %v7656
      %v7744 = vunpack.c.h.b16 %v7656
      %v7745 = vunpack.c.l.b16 %v7657
      %v7746 = vunpack.c.h.b16 %v7657
      %v7747 = vunpack.c.l.b16 %v7658
      %v7748 = vunpack.c.h.b16 %v7658
      %v7749 = vunpack.c.l.b16 %v7659
      %v7750 = vunpack.c.h.b16 %v7659
      %v7751 = vunpack.c.l.b16 %v7660
      %v7752 = vunpack.c.h.b16 %v7660
      %v7753 = vunpack.c.l.b16 %v7661
      %v7754 = vunpack.c.h.b16 %v7661
      %v7755 = vunpack.c.l.b16 %v7662
      %v7756 = vunpack.c.h.b16 %v7662
      %v7757 = vunpack.c.l.b16 %v7663
      %v7758 = vunpack.c.h.b16 %v7663
      %v7759 = vunpack.c.l.b16 %v7664
      %v7760 = vunpack.c.h.b16 %v7664
      %v7761 = vunpack.c.l.b16 %v7665
      %v7762 = vunpack.c.h.b16 %v7665
      %v7763 = vunpack.c.l.b16 %v7666
      %v7764 = vunpack.c.h.b16 %v7666
      %v7765 = vunpack.c.l.b16 %v7667
      %v7766 = vunpack.c.h.b16 %v7667
      %v7767 = vunpack.c.l.b16 %v7668
      %v7768 = vunpack.c.h.b16 %v7668
      %v7769 = vunpack.c.l.b16 %v7669
      %v7770 = vunpack.c.h.b16 %v7669
      %v7771 = vunpack.c.l.b16 %v7670
      %v7772 = vunpack.c.h.b16 %v7670
      %v7773 = vpack.c.b16 %v7741, %v7733
      %v7774 = vpack.c.b16 %v7742, %v7734
      %v7775 = vpack.c.b16 %v7743, %v7735
      %v7776 = vpack.c.b16 %v7744, %v7736
      %v7777 = vpack.c.b16 %v7745, %v7737
      %v7778 = vpack.c.b16 %v7746, %v7738
      %v7779 = vpack.c.b16 %v7747, %v7739
      %v7780 = vpack.c.b16 %v7748, %v7740
      %v7781 = vpack.c.b16 %v7757, %v7749
      %v7782 = vpack.c.b16 %v7758, %v7750
      %v7783 = vpack.c.b16 %v7759, %v7751
      %v7784 = vpack.c.b16 %v7760, %v7752
      %v7785 = vpack.c.b16 %v7761, %v7753
      %v7786 = vpack.c.b16 %v7762, %v7754
      %v7787 = vpack.c.b16 %v7763, %v7755
      %v7788 = vpack.c.b16 %v7764, %v7756
      %v7789 = vpack.c.b16 %v7765, %v7765
      %v7790 = vpack.c.b16 %v7766, %v7766
      %v7791 = vpack.c.b16 %v7767, %v7767
      %v7792 = vpack.c.b16 %v7768, %v7768
      %v7793 = vpack.c.b16 %v7769, %v7769
      %v7794 = vpack.c.b16 %v7770, %v7770
      %v7795 = vpack.c.b16 %v7771, %v7771
      %v7796 = vpack.c.b16 %v7772, %v7772
      %v7814 = vsel %vm7076, %v7650, 0
      %v7817 = vsel %vm5488, %v7789, 0
      %v7820 = vsel %vm5488, %v7790, 0
      %v7823 = vsel %vm5488, %v7791, 0
      %v7826 = vsel %vm5488, %v7792, 0
      %v7829 = vsel %vm5488, %v7793, 0
      %v7832 = vsel %vm5488, %v7794, 0
      %v7835 = vsel %vm5488, %v7795, 0
      %v7838 = vsel %vm5488, %v7796, 0
      %7840 = vmatprep.subr.bf16.mxu0 0
      %7841 = vmatpush1.bf16.msra.mxu0 0
      %7842 = vmatprep.subr.bf16.mxu0 0
      %7843 = vmatpush1.bf16.msra.mxu0 0
      %7844 = vmatprep.subr.bf16.mxu0 0
      %7845 = vmatpush1.bf16.msra.mxu0 0
      %7846 = vmatprep.subr.bf16.mxu0 0
      %7847 = vmatpush1.bf16.msra.mxu0 0
      %7848 = vmatprep.subr.bf16.mxu0 0
      %7849 = vmatpush1.bf16.msra.mxu0 0
      %7850 = vmatprep.subr.bf16.mxu0 %v7820
      %7851 = vmatpush1.bf16.msra.mxu0 %v7817
      %7852 = vmatprep.subr.bf16.mxu0 %v7782
      %7853 = vmatpush1.bf16.msra.mxu0 %v7781
      %7854 = vmatprep.subr.bf16.mxu0 %v7774
      %7855 = vmatpush1.bf16.msra.mxu0 %v7773
      %7856 = vmatprep.subr.bf16.mxu0 0
      %7857 = vmatpush2.bf16.msra.mxu0 0
      %7858 = vmatprep.subr.bf16.mxu0 0
      %7859 = vmatpush2.bf16.msra.mxu0 0
      %7860 = vmatprep.subr.bf16.mxu0 0
      %7861 = vmatpush2.bf16.msra.mxu0 0
      %7862 = vmatprep.subr.bf16.mxu0 0
      %7863 = vmatpush2.bf16.msra.mxu0 0
      %7864 = vmatprep.subr.bf16.mxu0 0
      %7865 = vmatpush2.bf16.msra.mxu0 0
      %7866 = vmatprep.subr.bf16.mxu0 0
      %7867 = vmatpush2.bf16.msra.mxu0 0
      %7868 = vmatprep.subr.bf16.mxu0 0
      %7869 = vmatpush2.bf16.msra.mxu0 0
      %7870 = vmatprep.subr.bf16.mxu0 0
      %7871 = vmatpush2.bf16.msra.mxu0 0
      %7872 = vmatprep.mubr.bf16.mxu0 0
      %7873 = vmatmul.mubr.bf16.gmra.mxu0 %v7814
      %v7874 = vpop.f32.mrf.mxu0
      %v7875 = vadd.f32 %v7676, %v7874
      %v7876 = vpop.f32.mrf.mxu0
      %v7877 = vadd.f32 %v7680, %v7876
      %v7878 = vpop.f32.mrf.mxu0
      %v7879 = vadd.f32 %v7676, %v7878
      %v7880 = vpop.f32.mrf.mxu0
      %v7881 = vadd.f32 %v7680, %v7880
      %7882 = vdwg.mxu0
      %7883 = vmatprep.subr.bf16.mxu0 0
      %7884 = vmatpush1.bf16.msra.mxu0 0
      %7885 = vmatprep.subr.bf16.mxu0 0
      %7886 = vmatpush1.bf16.msra.mxu0 0
      %7887 = vmatprep.subr.bf16.mxu0 0
      %7888 = vmatpush1.bf16.msra.mxu0 0
      %7889 = vmatprep.subr.bf16.mxu0 0
      %7890 = vmatpush1.bf16.msra.mxu0 0
      %7891 = vmatprep.subr.bf16.mxu0 0
      %7892 = vmatpush1.bf16.msra.mxu0 0
      %7893 = vmatprep.subr.bf16.mxu0 %v7826
      %7894 = vmatpush1.bf16.msra.mxu0 %v7823
      %7895 = vmatprep.subr.bf16.mxu0 %v7784
      %7896 = vmatpush1.bf16.msra.mxu0 %v7783
      %7897 = vmatprep.subr.bf16.mxu0 %v7776
      %7898 = vmatpush1.bf16.msra.mxu0 %v7775
      %7899 = vmatprep.subr.bf16.mxu0 0
      %7900 = vmatpush2.bf16.msra.mxu0 0
      %7901 = vmatprep.subr.bf16.mxu0 0
      %7902 = vmatpush2.bf16.msra.mxu0 0
      %7903 = vmatprep.subr.bf16.mxu0 0
      %7904 = vmatpush2.bf16.msra.mxu0 0
      %7905 = vmatprep.subr.bf16.mxu0 0
      %7906 = vmatpush2.bf16.msra.mxu0 0
      %7907 = vmatprep.subr.bf16.mxu0 0
      %7908 = vmatpush2.bf16.msra.mxu0 0
      %7909 = vmatprep.subr.bf16.mxu0 0
      %7910 = vmatpush2.bf16.msra.mxu0 0
      %7911 = vmatprep.subr.bf16.mxu0 0
      %7912 = vmatpush2.bf16.msra.mxu0 0
      %7913 = vmatprep.subr.bf16.mxu0 0
      %7914 = vmatpush2.bf16.msra.mxu0 0
      %7915 = vmatprep.mubr.bf16.mxu0 0
      %7916 = vmatmul.mubr.bf16.gmra.mxu0 %v7814
      %v7917 = vpop.f32.mrf.mxu0
      %v7918 = vadd.f32 %v7684, %v7917
      %v7919 = vpop.f32.mrf.mxu0
      %v7920 = vadd.f32 %v7688, %v7919
      %v7921 = vpop.f32.mrf.mxu0
      %v7922 = vadd.f32 %v7684, %v7921
      %v7923 = vpop.f32.mrf.mxu0
      %v7924 = vadd.f32 %v7688, %v7923
      %7925 = vdwg.mxu0
      %7926 = vmatprep.subr.bf16.mxu0 0
      %7927 = vmatpush1.bf16.msra.mxu0 0
      %7928 = vmatprep.subr.bf16.mxu0 0
      %7929 = vmatpush1.bf16.msra.mxu0 0
      %7930 = vmatprep.subr.bf16.mxu0 0
      %7931 = vmatpush1.bf16.msra.mxu0 0
      %7932 = vmatprep.subr.bf16.mxu0 0
      %7933 = vmatpush1.bf16.msra.mxu0 0
      %7934 = vmatprep.subr.bf16.mxu0 0
      %7935 = vmatpush1.bf16.msra.mxu0 0
      %7936 = vmatprep.subr.bf16.mxu0 %v7832
      %7937 = vmatpush1.bf16.msra.mxu0 %v7829
      %7938 = vmatprep.subr.bf16.mxu0 %v7786
      %7939 = vmatpush1.bf16.msra.mxu0 %v7785
      %7940 = vmatprep.subr.bf16.mxu0 %v7778
      %7941 = vmatpush1.bf16.msra.mxu0 %v7777
      %7942 = vmatprep.subr.bf16.mxu0 0
      %7943 = vmatpush2.bf16.msra.mxu0 0
      %7944 = vmatprep.subr.bf16.mxu0 0
      %7945 = vmatpush2.bf16.msra.mxu0 0
      %7946 = vmatprep.subr.bf16.mxu0 0
      %7947 = vmatpush2.bf16.msra.mxu0 0
      %7948 = vmatprep.subr.bf16.mxu0 0
      %7949 = vmatpush2.bf16.msra.mxu0 0
      %7950 = vmatprep.subr.bf16.mxu0 0
      %7951 = vmatpush2.bf16.msra.mxu0 0
      %7952 = vmatprep.subr.bf16.mxu0 0
      %7953 = vmatpush2.bf16.msra.mxu0 0
      %7954 = vmatprep.subr.bf16.mxu0 0
      %7955 = vmatpush2.bf16.msra.mxu0 0
      %7956 = vmatprep.subr.bf16.mxu0 0
      %7957 = vmatpush2.bf16.msra.mxu0 0
      %7958 = vmatprep.mubr.bf16.mxu0 0
      %7959 = vmatmul.mubr.bf16.gmra.mxu0 %v7814
      %v7960 = vpop.f32.mrf.mxu0
      %v7961 = vadd.f32 %v7692, %v7960
      %v7962 = vpop.f32.mrf.mxu0
      %v7963 = vadd.f32 %v7696, %v7962
      %v7964 = vpop.f32.mrf.mxu0
      %v7965 = vadd.f32 %v7692, %v7964
      %v7966 = vpop.f32.mrf.mxu0
      %v7967 = vadd.f32 %v7696, %v7966
      %7968 = vdwg.mxu0
      %7969 = vmatprep.subr.bf16.mxu0 0
      %7970 = vmatpush1.bf16.msra.mxu0 0
      %7971 = vmatprep.subr.bf16.mxu0 0
      %7972 = vmatpush1.bf16.msra.mxu0 0
      %7973 = vmatprep.subr.bf16.mxu0 0
      %7974 = vmatpush1.bf16.msra.mxu0 0
      %7975 = vmatprep.subr.bf16.mxu0 0
      %7976 = vmatpush1.bf16.msra.mxu0 0
      %7977 = vmatprep.subr.bf16.mxu0 0
      %7978 = vmatpush1.bf16.msra.mxu0 0
      %7979 = vmatprep.subr.bf16.mxu0 %v7838
      %7980 = vmatpush1.bf16.msra.mxu0 %v7835
      %7981 = vmatprep.subr.bf16.mxu0 %v7788
      %7982 = vmatpush1.bf16.msra.mxu0 %v7787
      %7983 = vmatprep.subr.bf16.mxu0 %v7780
      %7984 = vmatpush1.bf16.msra.mxu0 %v7779
      %7985 = vmatprep.subr.bf16.mxu0 0
      %7986 = vmatpush2.bf16.msra.mxu0 0
      %7987 = vmatprep.subr.bf16.mxu0 0
      %7988 = vmatpush2.bf16.msra.mxu0 0
      %7989 = vmatprep.subr.bf16.mxu0 0
      %7990 = vmatpush2.bf16.msra.mxu0 0
      %7991 = vmatprep.subr.bf16.mxu0 0
      %7992 = vmatpush2.bf16.msra.mxu0 0
      %7993 = vmatprep.subr.bf16.mxu0 0
      %7994 = vmatpush2.bf16.msra.mxu0 0
      %7995 = vmatprep.subr.bf16.mxu0 0
      %7996 = vmatpush2.bf16.msra.mxu0 0
      %7997 = vmatprep.subr.bf16.mxu0 0
      %7998 = vmatpush2.bf16.msra.mxu0 0
      %7999 = vmatprep.subr.bf16.mxu0 0
      %8000 = vmatpush2.bf16.msra.mxu0 0
      %8001 = vmatprep.mubr.bf16.mxu0 0
      %8002 = vmatmul.mubr.bf16.gmra.mxu0 %v7814
      %v8003 = vpop.f32.mrf.mxu0
      %v8004 = vadd.f32 %v7700, %v8003
      %v8005 = vpop.f32.mrf.mxu0
      %v8006 = vadd.f32 %v7704, %v8005
      %v8007 = vpop.f32.mrf.mxu0
      %v8008 = vadd.f32 %v7700, %v8007
      %v8009 = vpop.f32.mrf.mxu0
      %v8010 = vadd.f32 %v7704, %v8009
      %8011 = vdwg.mxu0
      %v8012 = vadd.f32 %v7875, 3.0
      %v8013 = vadd.f32 %v7877, 3.0
      %v8014 = vadd.f32 %v7918, 3.0
      %v8015 = vadd.f32 %v7920, 3.0
      %v8016 = vadd.f32 %v7961, 3.0
      %v8017 = vadd.f32 %v7963, 3.0
      %v8018 = vadd.f32 %v8004, 3.0
      %v8019 = vadd.f32 %v8006, 3.0
      %v8020 = vadd.f32 %v7879, 3.0
      %v8021 = vadd.f32 %v7881, 3.0
      %v8022 = vadd.f32 %v7922, 3.0
      %v8023 = vadd.f32 %v7924, 3.0
      %v8024 = vadd.f32 %v7965, 3.0
      %v8025 = vadd.f32 %v7967, 3.0
      %v8026 = vadd.f32 %v8008, 3.0
      %v8027 = vadd.f32 %v8010, 3.0
      %v8028 = vmax.f32 %v8012, 0.0
      %v8029 = vmax.f32 %v8013, 0.0
      %v8030 = vmax.f32 %v8014, 0.0
      %v8031 = vmax.f32 %v8015, 0.0
      %v8032 = vmax.f32 %v8016, 0.0
      %v8033 = vmax.f32 %v8017, 0.0
      %v8034 = vmax.f32 %v8018, 0.0
      %v8035 = vmax.f32 %v8019, 0.0
      %v8036 = vmax.f32 %v8020, 0.0
      %v8037 = vmax.f32 %v8021, 0.0
      %v8038 = vmax.f32 %v8022, 0.0
      %v8039 = vmax.f32 %v8023, 0.0
      %v8040 = vmax.f32 %v8024, 0.0
      %v8041 = vmax.f32 %v8025, 0.0
      %v8042 = vmax.f32 %v8026, 0.0
      %v8043 = vmax.f32 %v8027, 0.0
      %v8044 = vmin.f32 %v8028, 6.0
      %v8045 = vmin.f32 %v8029, 6.0
      %v8046 = vmin.f32 %v8030, 6.0
      %v8047 = vmin.f32 %v8031, 6.0
      %v8048 = vmin.f32 %v8032, 6.0
      %v8049 = vmin.f32 %v8033, 6.0
      %v8050 = vmin.f32 %v8034, 6.0
      %v8051 = vmin.f32 %v8035, 6.0
      %v8052 = vmin.f32 %v8036, 6.0
      %v8053 = vmin.f32 %v8037, 6.0
      %v8054 = vmin.f32 %v8038, 6.0
      %v8055 = vmin.f32 %v8039, 6.0
      %v8056 = vmin.f32 %v8040, 6.0
      %v8057 = vmin.f32 %v8041, 6.0
      %v8058 = vmin.f32 %v8042, 6.0
      %v8059 = vmin.f32 %v8043, 6.0
      %v8060 = vmul.f32 %v7875, %v8044
      %v8061 = vmul.f32 %v7877, %v8045
      %v8062 = vmul.f32 %v7918, %v8046
      %v8063 = vmul.f32 %v7920, %v8047
      %v8064 = vmul.f32 %v7961, %v8048
      %v8065 = vmul.f32 %v7963, %v8049
      %v8066 = vmul.f32 %v8004, %v8050
      %v8067 = vmul.f32 %v8006, %v8051
      %v8068 = vmul.f32 %v7879, %v8052
      %v8069 = vmul.f32 %v7881, %v8053
      %v8070 = vmul.f32 %v7922, %v8054
      %v8071 = vmul.f32 %v7924, %v8055
      %v8072 = vmul.f32 %v7965, %v8056
      %v8073 = vmul.f32 %v7967, %v8057
      %v8074 = vmul.f32 %v8008, %v8058
      %v8075 = vmul.f32 %v8010, %v8059
      %v8076 = vmul.f32 %v8060, 0.16666667
      %v8077 = vmul.f32 %v8061, 0.16666667
      %v8078 = vmul.f32 %v8062, 0.16666667
      %v8079 = vmul.f32 %v8063, 0.16666667
      %v8080 = vmul.f32 %v8064, 0.16666667
      %v8081 = vmul.f32 %v8065, 0.16666667
      %v8082 = vmul.f32 %v8066, 0.16666667
      %v8083 = vmul.f32 %v8067, 0.16666667
      %v8084 = vmul.f32 %v8068, 0.16666667
      %v8085 = vmul.f32 %v8069, 0.16666667
      %v8086 = vmul.f32 %v8070, 0.16666667
      %v8087 = vmul.f32 %v8071, 0.16666667
      %v8088 = vmul.f32 %v8072, 0.16666667
      %v8089 = vmul.f32 %v8073, 0.16666667
      %v8090 = vmul.f32 %v8074, 0.16666667
      %v8091 = vmul.f32 %v8075, 0.16666667
      %v8092 = vadd.f32 %v8076, %v8084
      %v8093 = vrot.slane %v8092, 4
      %v8094 = vadd.f32 %v8092, %v8093
      %v8095 = vrot.slane %v8094, 2
      %v8096 = vadd.f32 %v8094, %v8095
      %v8097 = vrot.slane %v8096, 1
      %v8098 = vadd.f32 %v8096, %v8097
      %v8099 = vadd.f32 %v8077, %v8085
      %v8100 = vrot.slane %v8099, 4
      %v8101 = vadd.f32 %v8099, %v8100
      %v8102 = vrot.slane %v8101, 2
      %v8103 = vadd.f32 %v8101, %v8102
      %v8104 = vrot.slane %v8103, 1
      %v8105 = vadd.f32 %v8103, %v8104
      %v8106 = vadd.f32 %v8078, %v8086
      %v8107 = vrot.slane %v8106, 4
      %v8108 = vadd.f32 %v8106, %v8107
      %v8109 = vrot.slane %v8108, 2
      %v8110 = vadd.f32 %v8108, %v8109
      %v8111 = vrot.slane %v8110, 1
      %v8112 = vadd.f32 %v8110, %v8111
      %v8113 = vadd.f32 %v8079, %v8087
      %v8114 = vrot.slane %v8113, 4
      %v8115 = vadd.f32 %v8113, %v8114
      %v8116 = vrot.slane %v8115, 2
      %v8117 = vadd.f32 %v8115, %v8116
      %v8118 = vrot.slane %v8117, 1
      %v8119 = vadd.f32 %v8117, %v8118
      %v8120 = vadd.f32 %v8080, %v8088
      %v8121 = vrot.slane %v8120, 4
      %v8122 = vadd.f32 %v8120, %v8121
      %v8123 = vrot.slane %v8122, 2
      %v8124 = vadd.f32 %v8122, %v8123
      %v8125 = vrot.slane %v8124, 1
      %v8126 = vadd.f32 %v8124, %v8125
      %v8127 = vadd.f32 %v8081, %v8089
      %v8128 = vrot.slane %v8127, 4
      %v8129 = vadd.f32 %v8127, %v8128
      %v8130 = vrot.slane %v8129, 2
      %v8131 = vadd.f32 %v8129, %v8130
      %v8132 = vrot.slane %v8131, 1
      %v8133 = vadd.f32 %v8131, %v8132
      %v8134 = vadd.f32 %v8082, %v8090
      %v8135 = vrot.slane %v8134, 4
      %v8136 = vadd.f32 %v8134, %v8135
      %v8137 = vrot.slane %v8136, 2
      %v8138 = vadd.f32 %v8136, %v8137
      %v8139 = vrot.slane %v8138, 1
      %v8140 = vadd.f32 %v8138, %v8139
      %v8141 = vsel %vm5113, %v8083, 0.0
      %v8142 = vsel %vm5113, %v8091, 0.0
      %v8143 = vadd.f32 %v8141, %v8142
      %v8144 = vrot.slane %v8143, 4
      %v8145 = vadd.f32 %v8143, %v8144
      %v8146 = vrot.slane %v8145, 2
      %v8147 = vadd.f32 %v8145, %v8146
      %v8148 = vrot.slane %v8147, 1
      %v8149 = vadd.f32 %v8147, %v8148
      %v8150 = vmul.f32 %v8098, 0.0625
      %v8151 = vmul.f32 %v8105, 0.0625
      %v8152 = vmul.f32 %v8112, 0.0625
      %v8153 = vmul.f32 %v8119, 0.0625
      %v8154 = vmul.f32 %v8126, 0.0625
      %v8155 = vmul.f32 %v8133, 0.0625
      %v8156 = vmul.f32 %v8140, 0.0625
      %v8157 = vmul.f32 %v8149, 0.0625
      %8158 = vst [vmem:[%s820] sm:$0xff] %v8150
      %8159 = vst [vmem:[%s820 + $0x8] sm:$0xff] %v8151
      %8160 = vst [vmem:[%s820 + $0x10] sm:$0xff] %v8152
      %8161 = vst [vmem:[%s820 + $0x18] sm:$0xff] %v8153
      %8162 = vst [vmem:[%s820 + $0x20] sm:$0xff] %v8154
      %8163 = vst [vmem:[%s820 + $0x28] sm:$0xff] %v8155
      %8164 = vst [vmem:[%s820 + $0x30] sm:$0xff] %v8156
      %8165 = vst.msk [vmem:[%s820 + $0x38] sm:$0xff] %vm5113, %v8157
      %p8166 = scmp.lt.s32.totalorder %s38, 1
      %s8167 = scalar_select %p8166, %s38, 1
      %s8168 = smul.addr %s8167, 8
      %s8169 = smul.addr %s8168, 8
      %s8170 = scalar_lea.vmem %s27, %s8169
      // Predicated region
      $region129: #{mobilenet_forward.1} parent=127 // pred_check
        %p8171 = pneg %p628
      $region130: #{mobilenet_forward.1} parent=127 // pred_check_branch
        %8173 = sbr.rel (%p8171) target = $region132
      $region131: #{mobilenet_forward.1} parent=127 // pred_region
        _
      $region132: #{mobilenet_forward.1} parent=127 // pred_fallthru
        _
    $region128: #{mobilenet_forward.1} parent=5 // pred_fallthru
      _
    %p8174 = scmp.le.s32.totalorder 2, %s33
    // Predicated region
    $region133: #{mobilenet_forward.1} parent=5 // pred_check
      %p8175 = pneg %p8174
    $region134: #{mobilenet_forward.1} parent=5 // pred_check_branch
      %8177 = sbr.rel (%p8175) target = $region136
    $region135: #{mobilenet_forward.1} parent=5 // pred_region
      %s8178 = ssub.s32 %s33, 2
      // Predicated region
      $region137: #{mobilenet_forward.1} parent=135 // pred_check
        %p8179 = pneg %p634
      $region138: #{mobilenet_forward.1} parent=135 // pred_check_branch
        %8181 = sbr.rel (%p8179) target = $region140
      $region139: #{mobilenet_forward.1} parent=135 // pred_region
        %p8182 = scmp.lt.s32.totalorder %s39, 1
        %s8183 = scalar_select %p8182, %s39, 1
        %s8184 = smul.addr %s8183, 8
        %s8185 = smul.addr %s8184, 8
        %s8186 = scalar_lea.vmem %s27, %s8185
      $region140: #{mobilenet_forward.1} parent=135 // pred_fallthru
        _
    $region136: #{mobilenet_forward.1} parent=5 // pred_fallthru
      _
  $region6: #{mobilenet_forward.1} parent=0 // loop_footer
    %s37 = sadd.s32 1, %s33
  $region7: #{mobilenet_forward.1} parent=0 // loop_footer_branch
    %32 = sbr.rel target = $region3
  $region8: #{mobilenet_forward.1} parent=0 // loop_exit
    _

</llo_original>
